<compile_context>
chip_gen: v7x
topology: tpu7x:2x2x1
jax: 0.10.0
libtpu: 0.0.40
codegen_flags: <defaults>
</compile_context>

<pallas_src>
import jax
import jax.numpy as jnp
from jax.experimental import pallas as pl
from jax.experimental.pallas import tpu as pltpu

# ----------------------------- model dims ---------------------------------
INPUT_DIM = 128
LATENT_DIM = 32
GENRE_DIM = 16
H1 = 512          # encoder hidden 1
H2 = 256          # encoder hidden 2 / decoder hidden
NUM_HEADS = 4     # heads are irrelevant at seq_len == 1 (folded away)
MULV_PAD = 128    # mu|logvar head padded from 64 to a full 128-lane store

BATCH = 512       # rows per call (amortizes weight DMA; MXU M-dim stays full)
TILE_M = BATCH    # grid=(1,): no serial extra grid steps on v5e/v6e

WDT = jnp.bfloat16  # weight / matmul-input storage dtype (f32 accumulation)


# ------------------------------ kernel ------------------------------------
def cvae_kernel(
    x_ref, g_ref, eps_ref,
    we1x_ref, we1g_ref, be1_ref,
    we2_ref, be2_ref,
    wmulv_ref, bmulv_ref,
    wd1z_ref, wd1g_ref, bd1_ref,
    wd2_ref, bd2_ref,
    recon_ref, mulv_ref,
):
    x = x_ref[...].astype(WDT)
    g = g_ref[...].astype(WDT)

    # ---- encoder: [x | genre] @ We1 + b  ==  x @ We1_x + g @ We1_g + b ----
    h = (jnp.dot(x, we1x_ref[...], preferred_element_type=jnp.float32)
         + jnp.dot(g, we1g_ref[...], preferred_element_type=jnp.float32)
         + be1_ref[...])
    h = jnp.maximum(h, 0.0)
    h = (jnp.dot(h.astype(WDT), we2_ref[...], preferred_element_type=jnp.float32)
         + be2_ref[...])
    h = jnp.maximum(h, 0.0)

    # ---- fused, lane-padded mu/logvar head: one N=128 matmul, unmasked store ----
    mulv = (jnp.dot(h.astype(WDT), wmulv_ref[...], preferred_element_type=jnp.float32)
            + bmulv_ref[...])
    mulv_ref[...] = mulv
    mu = mulv[:, :LATENT_DIM]
    logvar = mulv[:, LATENT_DIM:2 * LATENT_DIM]

    # ---- reparameterize: z = mu + eps * exp(0.5 * logvar)  (f32) ----
    z = mu + eps_ref[...] * jnp.exp(0.5 * logvar)

    # ---- decoder layer 1 (length-1 attention affine pre-folded into wd1_z/bd1) ----
    d = (jnp.dot(z.astype(WDT), wd1z_ref[...], preferred_element_type=jnp.float32)
         + jnp.dot(g, wd1g_ref[...], preferred_element_type=jnp.float32)
         + bd1_ref[...])
    d = jnp.maximum(d, 0.0)
    logits = (jnp.dot(d.astype(WDT), wd2_ref[...], preferred_element_type=jnp.float32)
              + bd2_ref[...])
    recon_ref[...] = jax.nn.sigmoid(logits)   # EUP logistic path


# --------------------------- parameter prep --------------------------------
def prepare_kernel_params(p):
    """One-time split / fold / cast of PyTorch-layout params into kernel layout."""
    hi = jax.lax.Precision.HIGHEST
    kp = {}
    # encoder layer 1: split the concat dimension
    kp["we1_x"] = p["we1"][:INPUT_DIM].astype(WDT)       # (128, 512)
    kp["we1_g"] = p["we1"][INPUT_DIM:].astype(WDT)       # (16, 512)
    kp["be1"] = p["be1"]
    kp["we2"] = p["we2"].astype(WDT)
    kp["be2"] = p["be2"]
    # fused mu/logvar head, zero-padded to 128 lanes for unmasked stores
    wmulv = jnp.concatenate([p["wmu"], p["wlv"]], axis=1)              # (256, 64)
    bmulv = jnp.concatenate([p["bmu"], p["blv"]], axis=1)              # (1, 64)
    kp["wmulv"] = jnp.pad(wmulv, ((0, 0), (0, MULV_PAD - 2 * LATENT_DIM))).astype(WDT)
    kp["bmulv"] = jnp.pad(bmulv, ((0, 0), (0, MULV_PAD - 2 * LATENT_DIM)))
    # seq-len-1 attention == out_proj(v_proj(z)); fold it into decoder layer 1
    wattn = jnp.dot(p["wv"], p["wo"], precision=hi)                    # (32, 32)
    battn = jnp.dot(p["bv"], p["wo"], precision=hi) + p["bo"]          # (1, 32)
    wd1_z = p["wd1"][:LATENT_DIM]                                      # (32, 256)
    kp["wd1_z"] = jnp.dot(wattn, wd1_z, precision=hi).astype(WDT)      # (32, 256)
    kp["wd1_g"] = p["wd1"][LATENT_DIM:].astype(WDT)                    # (16, 256)
    kp["bd1"] = jnp.dot(battn, wd1_z, precision=hi) + p["bd1"]         # (1, 256)
    kp["wd2"] = p["wd2"].astype(WDT)
    kp["bd2"] = p["bd2"]
    return kp


# ------------------------------ wrapper ------------------------------------
def _cost_estimate(batch):
    mm = ((INPUT_DIM + GENRE_DIM) * H1 + H1 * H2 + H2 * MULV_PAD
          + (LATENT_DIM + GENRE_DIM) * H2 + H2 * INPUT_DIM)
    flops = 2 * batch * mm
    transcendentals = batch * (LATENT_DIM + INPUT_DIM)   # exp + sigmoid
    weight_bytes = 2 * mm                                 # bf16 weights
    bias_bytes = 4 * (H1 + H2 + MULV_PAD + H2 + INPUT_DIM)
    act_bytes = 4 * batch * (INPUT_DIM + GENRE_DIM + LATENT_DIM   # inputs
                             + INPUT_DIM + MULV_PAD)              # outputs
    return pl.CostEstimate(flops=flops, transcendentals=transcendentals,
                           bytes_accessed=weight_bytes + bias_bytes + act_bytes)


@jax.jit
def music_cvae_forward(x, genre, eps, kp):
    batch = x.shape[0]
    assert batch % TILE_M == 0, "batch must be a multiple of TILE_M"
    grid = (batch // TILE_M,)

    def batch_spec(feat):
        return pl.BlockSpec((TILE_M, feat), lambda i: (i, 0))

    def resident_spec(arr):
        # full-array block + constant index map: DMA'd once, resident in VMEM.
        return pl.BlockSpec(arr.shape, lambda i: (0, 0))

    weights = (
        kp["we1_x"], kp["we1_g"], kp["be1"],
        kp["we2"], kp["be2"],
        kp["wmulv"], kp["bmulv"],
        kp["wd1_z"], kp["wd1_g"], kp["bd1"],
        kp["wd2"], kp["bd2"],
    )
    in_specs = (
        [batch_spec(INPUT_DIM), batch_spec(GENRE_DIM), batch_spec(LATENT_DIM)]
        + [resident_spec(w) for w in weights]
    )

    recon, mulv = pl.pallas_call(
        cvae_kernel,
        grid=grid,
        out_shape=(
            jax.ShapeDtypeStruct((batch, INPUT_DIM), jnp.float32),   # reconstructed
            jax.ShapeDtypeStruct((batch, MULV_PAD), jnp.float32),    # [mu | logvar | pad]
        ),
        in_specs=in_specs,
        out_specs=(batch_spec(INPUT_DIM), batch_spec(MULV_PAD)),
        compiler_params=pltpu.CompilerParams(
            dimension_semantics=("arbitrary",)),
        cost_estimate=_cost_estimate(batch),
    )(x, genre, eps, *weights)

    mu = mulv[:, :LATENT_DIM]
    logvar = mulv[:, LATENT_DIM:2 * LATENT_DIM]
    return recon, mu, logvar


# ----------------------- pure-JAX reference (check) -------------------------
def music_cvae_reference(x, genre, eps, p):
    xg = jnp.concatenate([x, genre], axis=-1)
    h = jnp.maximum(xg @ p["we1"] + p["be1"], 0.0)
    h = jnp.maximum(h @ p["we2"] + p["be2"], 0.0)
    mu = h @ p["wmu"] + p["bmu"]
    logvar = h @ p["wlv"] + p["blv"]
    z = mu + eps * jnp.exp(0.5 * logvar)
    attn = (z @ p["wv"] + p["bv"]) @ p["wo"] + p["bo"]   # length-1 MHA == out_proj(v_proj(z))
    zg = jnp.concatenate([attn, genre], axis=-1)
    d = jnp.maximum(zg @ p["wd1"] + p["bd1"], 0.0)
    recon = jax.nn.sigmoid(d @ p["wd2"] + p["bd2"])
    return recon, mu, logvar


# --------------------------- parameter init --------------------------------
def init_params(key):
    def dense(k, fan_in, fan_out):
        kw, kb = jax.random.split(k)
        scale = 1.0 / jnp.sqrt(jnp.float32(fan_in))
        w = jax.random.uniform(kw, (fan_in, fan_out), jnp.float32, -scale, scale)
        b = jax.random.uniform(kb, (1, fan_out), jnp.float32, -scale, scale)
        return w, b

    keys = jax.random.split(key, 8)
    p = {}
    p["we1"], p["be1"] = dense(keys[0], INPUT_DIM + GENRE_DIM, H1)
    p["we2"], p["be2"] = dense(keys[1], H1, H2)
    p["wmu"], p["bmu"] = dense(keys[2], H2, LATENT_DIM)
    p["wlv"], p["blv"] = dense(keys[3], H2, LATENT_DIM)
    # attention: only the v-projection / out-projection matter at seq_len == 1
    p["wv"], p["bv"] = dense(keys[4], LATENT_DIM, LATENT_DIM)
    p["wo"], p["bo"] = dense(keys[5], LATENT_DIM, LATENT_DIM)
    p["wd1"], p["bd1"] = dense(keys[6], LATENT_DIM + GENRE_DIM, H2)
    p["wd2"], p["bd2"] = dense(keys[7], H2, INPUT_DIM)
    return p


# --------------------------------- main -------------------------------------
if __name__ == "__main__":
    key = jax.random.PRNGKey(0)
    kx, kg, keps, kp_key = jax.random.split(key, 4)

    x = jax.random.uniform(kx, (BATCH, INPUT_DIM), jnp.float32)        # "music" features
    genre = jax.random.normal(kg, (BATCH, GENRE_DIM), jnp.float32)     # genre embedding
    eps = jax.random.normal(keps, (BATCH, LATENT_DIM), jnp.float32)    # reparam noise
    params = init_params(kp_key)
    kernel_params = prepare_kernel_params(params)

    recon, mu, logvar = music_cvae_forward(x, genre, eps, kernel_params)
    jax.block_until_ready((recon, mu, logvar))

    r_ref, mu_ref, lv_ref = music_cvae_reference(x, genre, eps, params)
    assert recon.shape == (BATCH, INPUT_DIM)
    assert mu.shape == (BATCH, LATENT_DIM) and logvar.shape == (BATCH, LATENT_DIM)
    # bf16 weights / bf16 MXU inputs with f32 accumulation -> 1e-2 tolerance
    assert jnp.allclose(recon, r_ref, atol=1e-2, rtol=1e-2)
    assert jnp.allclose(mu, mu_ref, atol=1e-2, rtol=1e-2)
    assert jnp.allclose(logvar, lv_ref, atol=1e-2, rtol=1e-2)

    print("KERNEL_OK")
</pallas_src>

<mosaic_0001>
module attributes {stable_mosaic.version = 11 : i64} {
  func.func @cvae_kernel(%arg0: i32, %arg1: memref<512x128xf32, #tpu.memory_space<vmem>>, %arg2: memref<512x16xf32, #tpu.memory_space<vmem>>, %arg3: memref<512x32xf32, #tpu.memory_space<vmem>>, %arg4: memref<128x512xbf16, #tpu.memory_space<vmem>>, %arg5: memref<16x512xbf16, #tpu.memory_space<vmem>>, %arg6: memref<1x512xf32, #tpu.memory_space<vmem>>, %arg7: memref<512x256xbf16, #tpu.memory_space<vmem>>, %arg8: memref<1x256xf32, #tpu.memory_space<vmem>>, %arg9: memref<256x128xbf16, #tpu.memory_space<vmem>>, %arg10: memref<1x128xf32, #tpu.memory_space<vmem>>, %arg11: memref<32x256xbf16, #tpu.memory_space<vmem>>, %arg12: memref<16x256xbf16, #tpu.memory_space<vmem>>, %arg13: memref<1x256xf32, #tpu.memory_space<vmem>>, %arg14: memref<256x128xbf16, #tpu.memory_space<vmem>>, %arg15: memref<1x128xf32, #tpu.memory_space<vmem>>, %arg16: memref<512x128xf32, #tpu.memory_space<vmem>>, %arg17: memref<512x128xf32, #tpu.memory_space<vmem>>) attributes {dimension_semantics = [#tpu.dimension_semantics<arbitrary>], iteration_bounds = array<i64: 1>, scalar_prefetch = 0 : i64, scratch_operands = 0 : i64, tpu.core_type = #tpu.core_type<tc>, window_params = [{transform_indices = @transform_0, window_bounds = array<i64: 512, 128>}, {transform_indices = @transform_1, window_bounds = array<i64: 512, 16>}, {transform_indices = @transform_2, window_bounds = array<i64: 512, 32>}, {pipeline_mode = #tpu.pipeline_mode<synchronous>, transform_indices = @transform_3, window_bounds = array<i64: 128, 512>}, {pipeline_mode = #tpu.pipeline_mode<synchronous>, transform_indices = @transform_4, window_bounds = array<i64: 16, 512>}, {pipeline_mode = #tpu.pipeline_mode<synchronous>, transform_indices = @transform_5, window_bounds = array<i64: 1, 512>}, {pipeline_mode = #tpu.pipeline_mode<synchronous>, transform_indices = @transform_6, window_bounds = array<i64: 512, 256>}, {pipeline_mode = #tpu.pipeline_mode<synchronous>, transform_indices = @transform_7, window_bounds = array<i64: 1, 256>}, {pipeline_mode = #tpu.pipeline_mode<synchronous>, transform_indices = @transform_8, window_bounds = array<i64: 256, 128>}, {pipeline_mode = #tpu.pipeline_mode<synchronous>, transform_indices = @transform_9, window_bounds = array<i64: 1, 128>}, {pipeline_mode = #tpu.pipeline_mode<synchronous>, transform_indices = @transform_10, window_bounds = array<i64: 32, 256>}, {pipeline_mode = #tpu.pipeline_mode<synchronous>, transform_indices = @transform_11, window_bounds = array<i64: 16, 256>}, {pipeline_mode = #tpu.pipeline_mode<synchronous>, transform_indices = @transform_12, window_bounds = array<i64: 1, 256>}, {pipeline_mode = #tpu.pipeline_mode<synchronous>, transform_indices = @transform_13, window_bounds = array<i64: 256, 128>}, {pipeline_mode = #tpu.pipeline_mode<synchronous>, transform_indices = @transform_14, window_bounds = array<i64: 1, 128>}, {transform_indices = @transform_15, window_bounds = array<i64: 512, 128>}, {transform_indices = @transform_16, window_bounds = array<i64: 512, 128>}]} {
    %c0 = arith.constant 0 : index
    %c0_0 = arith.constant 0 : index
    %0 = vector.load %arg1[%c0, %c0_0] : memref<512x128xf32, #tpu.memory_space<vmem>>, vector<512x128xf32>
    %1 = arith.truncf %0 : vector<512x128xf32> to vector<512x128xbf16>
    %c0_1 = arith.constant 0 : index
    %c0_2 = arith.constant 0 : index
    %2 = vector.load %arg2[%c0_1, %c0_2] : memref<512x16xf32, #tpu.memory_space<vmem>>, vector<512x16xf32>
    %3 = arith.truncf %2 : vector<512x16xf32> to vector<512x16xbf16>
    %c0_3 = arith.constant 0 : index
    %c0_4 = arith.constant 0 : index
    %4 = vector.load %arg4[%c0_3, %c0_4] : memref<128x512xbf16, #tpu.memory_space<vmem>>, vector<128x512xbf16>
    %cst = arith.constant dense<0.000000e+00> : vector<512x512xf32>
    %5 = tpu.matmul %1, %4, %cst {dimension_numbers = #tpu.dot_dimension_numbers<[1], [0], [0], [1], [0, 0, 1, 1], [], []>} : vector<512x128xbf16>, vector<128x512xbf16>, vector<512x512xf32> -> vector<512x512xf32>
    %c0_5 = arith.constant 0 : index
    %c0_6 = arith.constant 0 : index
    %6 = vector.load %arg5[%c0_5, %c0_6] : memref<16x512xbf16, #tpu.memory_space<vmem>>, vector<16x512xbf16>
    %cst_7 = arith.constant dense<0.000000e+00> : vector<512x512xf32>
    %7 = tpu.matmul %3, %6, %cst_7 {dimension_numbers = #tpu.dot_dimension_numbers<[1], [0], [0], [1], [0, 0, 1, 1], [], []>} : vector<512x16xbf16>, vector<16x512xbf16>, vector<512x512xf32> -> vector<512x512xf32>
    %8 = arith.addf %5, %7 : vector<512x512xf32>
    %c0_8 = arith.constant 0 : index
    %c0_9 = arith.constant 0 : index
    %9 = vector.load %arg6[%c0_8, %c0_9] : memref<1x512xf32, #tpu.memory_space<vmem>>, vector<1x512xf32>
    %10 = vector.broadcast %9 : vector<1x512xf32> to vector<512x512xf32>
    %11 = arith.addf %8, %10 : vector<512x512xf32>
    %cst_10 = arith.constant 0.000000e+00 : f32
    %12 = vector.broadcast %cst_10 : f32 to vector<512x512xf32>
    %13 = arith.maximumf %11, %12 : vector<512x512xf32>
    %14 = arith.truncf %13 : vector<512x512xf32> to vector<512x512xbf16>
    %c0_11 = arith.constant 0 : index
    %c0_12 = arith.constant 0 : index
    %15 = vector.load %arg7[%c0_11, %c0_12] : memref<512x256xbf16, #tpu.memory_space<vmem>>, vector<512x256xbf16>
    %cst_13 = arith.constant dense<0.000000e+00> : vector<512x256xf32>
    %16 = tpu.matmul %14, %15, %cst_13 {dimension_numbers = #tpu.dot_dimension_numbers<[1], [0], [0], [1], [0, 0, 1, 1], [], []>} : vector<512x512xbf16>, vector<512x256xbf16>, vector<512x256xf32> -> vector<512x256xf32>
    %c0_14 = arith.constant 0 : index
    %c0_15 = arith.constant 0 : index
    %17 = vector.load %arg8[%c0_14, %c0_15] : memref<1x256xf32, #tpu.memory_space<vmem>>, vector<1x256xf32>
    %18 = vector.broadcast %17 : vector<1x256xf32> to vector<512x256xf32>
    %19 = arith.addf %16, %18 : vector<512x256xf32>
    %cst_16 = arith.constant 0.000000e+00 : f32
    %20 = vector.broadcast %cst_16 : f32 to vector<512x256xf32>
    %21 = arith.maximumf %19, %20 : vector<512x256xf32>
    %22 = arith.truncf %21 : vector<512x256xf32> to vector<512x256xbf16>
    %c0_17 = arith.constant 0 : index
    %c0_18 = arith.constant 0 : index
    %23 = vector.load %arg9[%c0_17, %c0_18] : memref<256x128xbf16, #tpu.memory_space<vmem>>, vector<256x128xbf16>
    %cst_19 = arith.constant dense<0.000000e+00> : vector<512x128xf32>
    %24 = tpu.matmul %22, %23, %cst_19 {dimension_numbers = #tpu.dot_dimension_numbers<[1], [0], [0], [1], [0, 0, 1, 1], [], []>} : vector<512x256xbf16>, vector<256x128xbf16>, vector<512x128xf32> -> vector<512x128xf32>
    %c0_20 = arith.constant 0 : index
    %c0_21 = arith.constant 0 : index
    %25 = vector.load %arg10[%c0_20, %c0_21] : memref<1x128xf32, #tpu.memory_space<vmem>>, vector<1x128xf32>
    %26 = vector.broadcast %25 : vector<1x128xf32> to vector<512x128xf32>
    %27 = arith.addf %24, %26 : vector<512x128xf32>
    %c0_22 = arith.constant 0 : index
    %c0_23 = arith.constant 0 : index
    %28 = vector.load %arg17[%c0_22, %c0_23] : memref<512x128xf32, #tpu.memory_space<vmem>>, vector<512x128xf32>
    tpu.vector_store %arg17[%c0_22, %c0_23], %27 {strides = array<i32>} : memref<512x128xf32, #tpu.memory_space<vmem>>, vector<512x128xf32>,
    %29 = vector.extract_strided_slice %27 {offsets = [0, 0], sizes = [512, 32], strides = [1, 1]} : vector<512x128xf32> to vector<512x32xf32>
    %30 = vector.extract_strided_slice %27 {offsets = [0, 32], sizes = [512, 32], strides = [1, 1]} : vector<512x128xf32> to vector<512x32xf32>
    %c0_24 = arith.constant 0 : index
    %c0_25 = arith.constant 0 : index
    %31 = vector.load %arg3[%c0_24, %c0_25] : memref<512x32xf32, #tpu.memory_space<vmem>>, vector<512x32xf32>
    %cst_26 = arith.constant 5.000000e-01 : f32
    %32 = vector.broadcast %cst_26 : f32 to vector<512x32xf32>
    %33 = arith.mulf %32, %30 : vector<512x32xf32>
    %34 = math.exp %33 : vector<512x32xf32>
    %35 = arith.mulf %31, %34 : vector<512x32xf32>
    %36 = arith.addf %29, %35 : vector<512x32xf32>
    %37 = arith.truncf %36 : vector<512x32xf32> to vector<512x32xbf16>
    %c0_27 = arith.constant 0 : index
    %c0_28 = arith.constant 0 : index
    %38 = vector.load %arg11[%c0_27, %c0_28] : memref<32x256xbf16, #tpu.memory_space<vmem>>, vector<32x256xbf16>
    %cst_29 = arith.constant dense<0.000000e+00> : vector<512x256xf32>
    %39 = tpu.matmul %37, %38, %cst_29 {dimension_numbers = #tpu.dot_dimension_numbers<[1], [0], [0], [1], [0, 0, 1, 1], [], []>} : vector<512x32xbf16>, vector<32x256xbf16>, vector<512x256xf32> -> vector<512x256xf32>
    %c0_30 = arith.constant 0 : index
    %c0_31 = arith.constant 0 : index
    %40 = vector.load %arg12[%c0_30, %c0_31] : memref<16x256xbf16, #tpu.memory_space<vmem>>, vector<16x256xbf16>
    %cst_32 = arith.constant dense<0.000000e+00> : vector<512x256xf32>
    %41 = tpu.matmul %3, %40, %cst_32 {dimension_numbers = #tpu.dot_dimension_numbers<[1], [0], [0], [1], [0, 0, 1, 1], [], []>} : vector<512x16xbf16>, vector<16x256xbf16>, vector<512x256xf32> -> vector<512x256xf32>
    %42 = arith.addf %39, %41 : vector<512x256xf32>
    %c0_33 = arith.constant 0 : index
    %c0_34 = arith.constant 0 : index
    %43 = vector.load %arg13[%c0_33, %c0_34] : memref<1x256xf32, #tpu.memory_space<vmem>>, vector<1x256xf32>
    %44 = vector.broadcast %43 : vector<1x256xf32> to vector<512x256xf32>
    %45 = arith.addf %42, %44 : vector<512x256xf32>
    %cst_35 = arith.constant 0.000000e+00 : f32
    %46 = vector.broadcast %cst_35 : f32 to vector<512x256xf32>
    %47 = arith.maximumf %45, %46 : vector<512x256xf32>
    %48 = arith.truncf %47 : vector<512x256xf32> to vector<512x256xbf16>
    %c0_36 = arith.constant 0 : index
    %c0_37 = arith.constant 0 : index
    %49 = vector.load %arg14[%c0_36, %c0_37] : memref<256x128xbf16, #tpu.memory_space<vmem>>, vector<256x128xbf16>
    %cst_38 = arith.constant dense<0.000000e+00> : vector<512x128xf32>
    %50 = tpu.matmul %48, %49, %cst_38 {dimension_numbers = #tpu.dot_dimension_numbers<[1], [0], [0], [1], [0, 0, 1, 1], [], []>} : vector<512x256xbf16>, vector<256x128xbf16>, vector<512x128xf32> -> vector<512x128xf32>
    %c0_39 = arith.constant 0 : index
    %c0_40 = arith.constant 0 : index
    %51 = vector.load %arg15[%c0_39, %c0_40] : memref<1x128xf32, #tpu.memory_space<vmem>>, vector<1x128xf32>
    %52 = vector.broadcast %51 : vector<1x128xf32> to vector<512x128xf32>
    %53 = arith.addf %50, %52 : vector<512x128xf32>
    %54 = arith.negf %53 : vector<512x128xf32>
    %55 = math.exp %54 : vector<512x128xf32>
    %cst_41 = arith.constant 1.000000e+00 : f32
    %56 = vector.broadcast %cst_41 : f32 to vector<512x128xf32>
    %57 = arith.addf %56, %55 : vector<512x128xf32>
    %58 = arith.divf %56, %57 : vector<512x128xf32>
    %c0_42 = arith.constant 0 : index
    %c0_43 = arith.constant 0 : index
    %59 = vector.load %arg16[%c0_42, %c0_43] : memref<512x128xf32, #tpu.memory_space<vmem>>, vector<512x128xf32>
    tpu.vector_store %arg16[%c0_42, %c0_43], %58 {strides = array<i32>} : memref<512x128xf32, #tpu.memory_space<vmem>>, vector<512x128xf32>,
    return
  }
  func.func @transform_0(%arg0: i32) -> (i32, i32) {
    %c0_i32 = arith.constant 0 : i32
    %c0_i32_0 = arith.constant 0 : i32
    return %arg0, %c0_i32 : i32, i32
  }
  func.func @transform_1(%arg0: i32) -> (i32, i32) {
    %c0_i32 = arith.constant 0 : i32
    %c0_i32_0 = arith.constant 0 : i32
    return %arg0, %c0_i32 : i32, i32
  }
  func.func @transform_2(%arg0: i32) -> (i32, i32) {
    %c0_i32 = arith.constant 0 : i32
    %c0_i32_0 = arith.constant 0 : i32
    return %arg0, %c0_i32 : i32, i32
  }
  func.func @transform_3(%arg0: i32) -> (i32, i32) {
    %c0_i32 = arith.constant 0 : i32
    %c0_i32_0 = arith.constant 0 : i32
    %c0_i32_1 = arith.constant 0 : i32
    return %c0_i32, %c0_i32_0 : i32, i32
  }
  func.func @transform_4(%arg0: i32) -> (i32, i32) {
    %c0_i32 = arith.constant 0 : i32
    %c0_i32_0 = arith.constant 0 : i32
    %c0_i32_1 = arith.constant 0 : i32
    return %c0_i32, %c0_i32_0 : i32, i32
  }
  func.func @transform_5(%arg0: i32) -> (i32, i32) {
    %c0_i32 = arith.constant 0 : i32
    %c0_i32_0 = arith.constant 0 : i32
    %c0_i32_1 = arith.constant 0 : i32
    return %c0_i32, %c0_i32_0 : i32, i32
  }
  func.func @transform_6(%arg0: i32) -> (i32, i32) {
    %c0_i32 = arith.constant 0 : i32
    %c0_i32_0 = arith.constant 0 : i32
    %c0_i32_1 = arith.constant 0 : i32
    return %c0_i32, %c0_i32_0 : i32, i32
  }
  func.func @transform_7(%arg0: i32) -> (i32, i32) {
    %c0_i32 = arith.constant 0 : i32
    %c0_i32_0 = arith.constant 0 : i32
    %c0_i32_1 = arith.constant 0 : i32
    return %c0_i32, %c0_i32_0 : i32, i32
  }
  func.func @transform_8(%arg0: i32) -> (i32, i32) {
    %c0_i32 = arith.constant 0 : i32
    %c0_i32_0 = arith.constant 0 : i32
    %c0_i32_1 = arith.constant 0 : i32
    return %c0_i32, %c0_i32_0 : i32, i32
  }
  func.func @transform_9(%arg0: i32) -> (i32, i32) {
    %c0_i32 = arith.constant 0 : i32
    %c0_i32_0 = arith.constant 0 : i32
    %c0_i32_1 = arith.constant 0 : i32
    return %c0_i32, %c0_i32_0 : i32, i32
  }
  func.func @transform_10(%arg0: i32) -> (i32, i32) {
    %c0_i32 = arith.constant 0 : i32
    %c0_i32_0 = arith.constant 0 : i32
    %c0_i32_1 = arith.constant 0 : i32
    return %c0_i32, %c0_i32_0 : i32, i32
  }
  func.func @transform_11(%arg0: i32) -> (i32, i32) {
    %c0_i32 = arith.constant 0 : i32
    %c0_i32_0 = arith.constant 0 : i32
    %c0_i32_1 = arith.constant 0 : i32
    return %c0_i32, %c0_i32_0 : i32, i32
  }
  func.func @transform_12(%arg0: i32) -> (i32, i32) {
    %c0_i32 = arith.constant 0 : i32
    %c0_i32_0 = arith.constant 0 : i32
    %c0_i32_1 = arith.constant 0 : i32
    return %c0_i32, %c0_i32_0 : i32, i32
  }
  func.func @transform_13(%arg0: i32) -> (i32, i32) {
    %c0_i32 = arith.constant 0 : i32
    %c0_i32_0 = arith.constant 0 : i32
    %c0_i32_1 = arith.constant 0 : i32
    return %c0_i32, %c0_i32_0 : i32, i32
  }
  func.func @transform_14(%arg0: i32) -> (i32, i32) {
    %c0_i32 = arith.constant 0 : i32
    %c0_i32_0 = arith.constant 0 : i32
    %c0_i32_1 = arith.constant 0 : i32
    return %c0_i32, %c0_i32_0 : i32, i32
  }
  func.func @transform_15(%arg0: i32) -> (i32, i32) {
    %c0_i32 = arith.constant 0 : i32
    %c0_i32_0 = arith.constant 0 : i32
    return %arg0, %c0_i32 : i32, i32
  }
  func.func @transform_16(%arg0: i32) -> (i32, i32) {
    %c0_i32 = arith.constant 0 : i32
    %c0_i32_0 = arith.constant 0 : i32
    return %arg0, %c0_i32 : i32, i32
  }
}

</mosaic_0001>

<llo_original>
// kernel: music_cvae_forward.1
$region0: #{music_cvae_forward.1}
  #allocation0 [shape = 'u32[]', space=smem, size = 0x4, offset = 0x4, fixed_abs, tag = 'smem constant byte address 0x4 - core index']
  #allocation1 [shape = 'u32[144,128]{1,0:T(1,128)}', space=vmem, size = 0x12000, scoped, tag = 'internal scratch']
  %s0 = inlined_call_operand.vmem [shape: f32[512,128], index: 0, kind: input, shape index: {}]
  %s1 = inlined_call_operand.vmem [shape: f32[512,16], index: 1, kind: input, shape index: {}]
  %s2 = inlined_call_operand.vmem [shape: f32[512,32], index: 2, kind: input, shape index: {}]
  %s3 = inlined_call_operand.hbm [shape: bf16[128,512], index: 3, kind: input, shape index: {}]
  %s4 = inlined_call_operand.vmem [shape: bf16[16,512], index: 4, kind: input, shape index: {}]
  %s5 = inlined_call_operand.vmem [shape: f32[1,512], index: 5, kind: input, shape index: {}]
  %s6 = inlined_call_operand.vmem [shape: bf16[512,256], index: 6, kind: input, shape index: {}]
  %s7 = inlined_call_operand.vmem [shape: f32[1,256], index: 7, kind: input, shape index: {}]
  %s8 = inlined_call_operand.hbm [shape: bf16[256,128], index: 8, kind: input, shape index: {}]
  %s9 = inlined_call_operand.vmem [shape: f32[1,128], index: 9, kind: input, shape index: {}]
  %s10 = inlined_call_operand.vmem [shape: bf16[32,256], index: 10, kind: input, shape index: {}]
  %s11 = inlined_call_operand.vmem [shape: bf16[16,256], index: 11, kind: input, shape index: {}]
  %s12 = inlined_call_operand.hbm [shape: f32[1,256], index: 12, kind: input, shape index: {}]
  %s13 = inlined_call_operand.hbm [shape: bf16[256,128], index: 13, kind: input, shape index: {}]
  %s14 = inlined_call_operand.vmem [shape: f32[1,128], index: 14, kind: input, shape index: {}]
  %s15 = inlined_call_operand.hbm [shape: f32[512,128], index: 15, kind: output, shape index: {0}]
  %s16 = inlined_call_operand.vmem [shape: f32[512,128], index: 16, kind: output, shape index: {1}]
  %17 = xla_tuple %s15, %s16
  %s18 = sld [smem:[#allocation0]]
  $region94: #{music_cvae_forward.1} parent=0
    _
  %s20 = ssub.s32 1, %s18
  %s21 = scalar_select 0, %s20, %s18
  $region1: #{music_cvae_forward.1} parent=0
    #allocation2 [shape = 'u8[131072]{0}', space=vmem, size = 0x20000, scoped, tag = 'input window, operand 3, single buffered']
    #allocation3 [shape = 's32[1]{0}', space=sflag, size = 0x4, scoped, tag = 'scoped memory for music_cvae_forward.1']
    #allocation4 [shape = 's32[1]{0}', space=sflag, size = 0x4, scoped, tag = 'scoped memory for music_cvae_forward.1']
    #allocation5 [shape = 'u8[65536]{0}', space=vmem, size = 0x10000, scoped, tag = 'input window, operand 8, single buffered']
    #allocation6 [shape = 's32[1]{0}', space=sflag, size = 0x4, scoped, tag = 'scoped memory for music_cvae_forward.1']
    #allocation7 [shape = 'u8[1024]{0}', space=vmem, size = 0x400, scoped, tag = 'input window, operand 12, single buffered']
    #allocation8 [shape = 'u8[65536]{0}', space=vmem, size = 0x10000, scoped, tag = 'input window, operand 13, single buffered']
    #allocation9 [shape = 's32[1]{0}', space=sflag, size = 0x4, scoped, tag = 'scoped memory for music_cvae_forward.1']
    #allocation10 [shape = 'u8[262144]{0}', space=vmem, size = 0x40000, scoped, tag = 'output window, operand 0, single buffered']
    %22 = vsyncpa [#allocation3], 0
    %23 = vsyncpa [#allocation6], 0
    %24 = vsyncpa [#allocation9], 0
    %25 = vsyncpa [#allocation4], 0
    // Predicated region
    $region2: #{music_cvae_forward.1} parent=1 // pred_check
      _
    $region3: #{music_cvae_forward.1} parent=1 // pred_check_branch
      %27 = sbr.rel (0) target = $region5
    $region4: #{music_cvae_forward.1} parent=1 // pred_region
      _
    $region5: #{music_cvae_forward.1} parent=1 // pred_fallthru
      _
    // Predicated region
    $region6: #{music_cvae_forward.1} parent=1 // pred_check
      _
    $region7: #{music_cvae_forward.1} parent=1 // pred_check_branch
      %29 = sbr.rel (0) target = $region9
    $region8: #{music_cvae_forward.1} parent=1 // pred_region
      _
    $region9: #{music_cvae_forward.1} parent=1 // pred_fallthru
      _
    // Predicated region
    $region10: #{music_cvae_forward.1} parent=1 // pred_check
      _
    $region11: #{music_cvae_forward.1} parent=1 // pred_check_branch
      %31 = sbr.rel (0) target = $region13
    $region12: #{music_cvae_forward.1} parent=1 // pred_region
      _
    $region13: #{music_cvae_forward.1} parent=1 // pred_fallthru
      _
    // Predicated region
    $region14: #{music_cvae_forward.1} parent=1 // pred_check
      _
    $region15: #{music_cvae_forward.1} parent=1 // pred_check_branch
      %33 = sbr.rel (0) target = $region17
    $region16: #{music_cvae_forward.1} parent=1 // pred_region
      %s35 = ssub.s32 4096, 4096
      %36 = vsyncadd [#allocation3], %s35
      %s37 = sshll.u32 [#allocation2], 4
      %s38 = int_to_ptr.vmem [resolvable:$true] %s37
      %43 = dma.hbm_to_vmem [thread:$0]  %s3, 4096, %s38, [#allocation3], 256, 256, 16
    $region17: #{music_cvae_forward.1} parent=1 // pred_fallthru
      _
    // Predicated region
    $region18: #{music_cvae_forward.1} parent=1 // pred_check
      _
    $region19: #{music_cvae_forward.1} parent=1 // pred_check_branch
      %45 = sbr.rel (0) target = $region21
    $region20: #{music_cvae_forward.1} parent=1 // pred_region
      _
    $region21: #{music_cvae_forward.1} parent=1 // pred_fallthru
      _
    // Predicated region
    $region22: #{music_cvae_forward.1} parent=1 // pred_check
      _
    $region23: #{music_cvae_forward.1} parent=1 // pred_check_branch
      %47 = sbr.rel (0) target = $region25
    $region24: #{music_cvae_forward.1} parent=1 // pred_region
      _
    $region25: #{music_cvae_forward.1} parent=1 // pred_fallthru
      _
    // Predicated region
    $region26: #{music_cvae_forward.1} parent=1 // pred_check
      _
    $region27: #{music_cvae_forward.1} parent=1 // pred_check_branch
      %49 = sbr.rel (0) target = $region29
    $region28: #{music_cvae_forward.1} parent=1 // pred_region
      _
    $region29: #{music_cvae_forward.1} parent=1 // pred_fallthru
      _
    // Predicated region
    $region30: #{music_cvae_forward.1} parent=1 // pred_check
      _
    $region31: #{music_cvae_forward.1} parent=1 // pred_check_branch
      %51 = sbr.rel (0) target = $region33
    $region32: #{music_cvae_forward.1} parent=1 // pred_region
      _
    $region33: #{music_cvae_forward.1} parent=1 // pred_fallthru
      _
    // Predicated region
    $region34: #{music_cvae_forward.1} parent=1 // pred_check
      _
    $region35: #{music_cvae_forward.1} parent=1 // pred_check_branch
      %53 = sbr.rel (0) target = $region37
    $region36: #{music_cvae_forward.1} parent=1 // pred_region
      %s55 = ssub.s32 2048, 2048
      %56 = vsyncadd [#allocation6], %s55
      %s57 = sshll.u32 [#allocation5], 4
      %s58 = int_to_ptr.vmem [resolvable:$true] %s57
      %63 = dma.hbm_to_vmem [thread:$0]  %s8, 2048, %s58, [#allocation6], 64, 64, 4
    $region37: #{music_cvae_forward.1} parent=1 // pred_fallthru
      _
    // Predicated region
    $region38: #{music_cvae_forward.1} parent=1 // pred_check
      _
    $region39: #{music_cvae_forward.1} parent=1 // pred_check_branch
      %65 = sbr.rel (0) target = $region41
    $region40: #{music_cvae_forward.1} parent=1 // pred_region
      _
    $region41: #{music_cvae_forward.1} parent=1 // pred_fallthru
      _
    // Predicated region
    $region42: #{music_cvae_forward.1} parent=1 // pred_check
      _
    $region43: #{music_cvae_forward.1} parent=1 // pred_check_branch
      %67 = sbr.rel (0) target = $region45
    $region44: #{music_cvae_forward.1} parent=1 // pred_region
      _
    $region45: #{music_cvae_forward.1} parent=1 // pred_fallthru
      _
    // Predicated region
    $region46: #{music_cvae_forward.1} parent=1 // pred_check
      _
    $region47: #{music_cvae_forward.1} parent=1 // pred_check_branch
      %69 = sbr.rel (0) target = $region49
    $region48: #{music_cvae_forward.1} parent=1 // pred_region
      _
    $region49: #{music_cvae_forward.1} parent=1 // pred_fallthru
      _
    // Predicated region
    $region50: #{music_cvae_forward.1} parent=1 // pred_check
      _
    $region51: #{music_cvae_forward.1} parent=1 // pred_check_branch
      %71 = sbr.rel (0) target = $region53
    $region52: #{music_cvae_forward.1} parent=1 // pred_region
      %s73 = ssub.s32 32, 32
      %74 = vsyncadd [#allocation6], %s73
      %s76 = sshll.u32 [#allocation7], 4
      %s77 = int_to_ptr.vmem [resolvable:$true] %s76
      %79 = dma.hbm_to_vmem [thread:$0]  %s12, 32, %s77, [#allocation6]
    $region53: #{music_cvae_forward.1} parent=1 // pred_fallthru
      _
    // Predicated region
    $region54: #{music_cvae_forward.1} parent=1 // pred_check
      _
    $region55: #{music_cvae_forward.1} parent=1 // pred_check_branch
      %81 = sbr.rel (0) target = $region57
    $region56: #{music_cvae_forward.1} parent=1 // pred_region
      %s83 = ssub.s32 2048, 2048
      %84 = vsyncadd [#allocation9], %s83
      %s85 = sshll.u32 [#allocation8], 4
      %s86 = int_to_ptr.vmem [resolvable:$true] %s85
      %91 = dma.hbm_to_vmem [thread:$0]  %s13, 2048, %s86, [#allocation9], 64, 64, 4
    $region57: #{music_cvae_forward.1} parent=1 // pred_fallthru
      _
    // Predicated region
    $region58: #{music_cvae_forward.1} parent=1 // pred_check
      _
    $region59: #{music_cvae_forward.1} parent=1 // pred_check_branch
      %93 = sbr.rel (0) target = $region61
    $region60: #{music_cvae_forward.1} parent=1 // pred_region
      _
    $region61: #{music_cvae_forward.1} parent=1 // pred_fallthru
      _
    // Predicated region
    $region62: #{music_cvae_forward.1} parent=1 // pred_check
      _
    $region63: #{music_cvae_forward.1} parent=1 // pred_check_branch
      %95 = sbr.rel (0) target = $region65
    $region64: #{music_cvae_forward.1} parent=1 // pred_region
      %96 = dma.done [#allocation3], 4096
    $region65: #{music_cvae_forward.1} parent=1 // pred_fallthru
      _
    // Predicated region
    $region66: #{music_cvae_forward.1} parent=1 // pred_check
      _
    $region67: #{music_cvae_forward.1} parent=1 // pred_check_branch
      %98 = sbr.rel (0) target = $region69
    $region68: #{music_cvae_forward.1} parent=1 // pred_region
      %99 = dma.done [#allocation6], 2048
    $region69: #{music_cvae_forward.1} parent=1 // pred_fallthru
      _
    // Predicated region
    $region70: #{music_cvae_forward.1} parent=1 // pred_check
      _
    $region71: #{music_cvae_forward.1} parent=1 // pred_check_branch
      %101 = sbr.rel (0) target = $region73
    $region72: #{music_cvae_forward.1} parent=1 // pred_region
      %102 = dma.done [#allocation6], 32
    $region73: #{music_cvae_forward.1} parent=1 // pred_fallthru
      _
    // Predicated region
    $region74: #{music_cvae_forward.1} parent=1 // pred_check
      _
    $region75: #{music_cvae_forward.1} parent=1 // pred_check_branch
      %104 = sbr.rel (0) target = $region77
    $region76: #{music_cvae_forward.1} parent=1 // pred_region
      %105 = dma.done [#allocation9], 2048
    $region77: #{music_cvae_forward.1} parent=1 // pred_fallthru
      _
    %v107 = vld [vmem:[%s0] sm:$0xff]
    %v108 = vld [vmem:[%s0 + $0x8] sm:$0xff]
    %v109 = vld [vmem:[%s0 + $0x10] sm:$0xff]
    %v110 = vld [vmem:[%s0 + $0x18] sm:$0xff]
    %v111 = vld [vmem:[%s0 + $0x20] sm:$0xff]
    %v112 = vld [vmem:[%s0 + $0x28] sm:$0xff]
    %v113 = vld [vmem:[%s0 + $0x30] sm:$0xff]
    %v114 = vld [vmem:[%s0 + $0x38] sm:$0xff]
    %v115 = vld [vmem:[%s0 + $0x40] sm:$0xff]
    %v116 = vld [vmem:[%s0 + $0x48] sm:$0xff]
    %v117 = vld [vmem:[%s0 + $0x50] sm:$0xff]
    %v118 = vld [vmem:[%s0 + $0x58] sm:$0xff]
    %v119 = vld [vmem:[%s0 + $0x60] sm:$0xff]
    %v120 = vld [vmem:[%s0 + $0x68] sm:$0xff]
    %v121 = vld [vmem:[%s0 + $0x70] sm:$0xff]
    %v122 = vld [vmem:[%s0 + $0x78] sm:$0xff]
    %v123 = vld [vmem:[%s0 + $0x80] sm:$0xff]
    %v124 = vld [vmem:[%s0 + $0x88] sm:$0xff]
    %v125 = vld [vmem:[%s0 + $0x90] sm:$0xff]
    %v126 = vld [vmem:[%s0 + $0x98] sm:$0xff]
    %v127 = vld [vmem:[%s0 + $0xa0] sm:$0xff]
    %v128 = vld [vmem:[%s0 + $0xa8] sm:$0xff]
    %v129 = vld [vmem:[%s0 + $0xb0] sm:$0xff]
    %v130 = vld [vmem:[%s0 + $0xb8] sm:$0xff]
    %v131 = vld [vmem:[%s0 + $0xc0] sm:$0xff]
    %v132 = vld [vmem:[%s0 + $0xc8] sm:$0xff]
    %v133 = vld [vmem:[%s0 + $0xd0] sm:$0xff]
    %v134 = vld [vmem:[%s0 + $0xd8] sm:$0xff]
    %v135 = vld [vmem:[%s0 + $0xe0] sm:$0xff]
    %v136 = vld [vmem:[%s0 + $0xe8] sm:$0xff]
    %v137 = vld [vmem:[%s0 + $0xf0] sm:$0xff]
    %v138 = vld [vmem:[%s0 + $0xf8] sm:$0xff]
    %v139 = vld [vmem:[%s0 + $0x100] sm:$0xff]
    %v140 = vld [vmem:[%s0 + $0x108] sm:$0xff]
    %v141 = vld [vmem:[%s0 + $0x110] sm:$0xff]
    %v142 = vld [vmem:[%s0 + $0x118] sm:$0xff]
    %v143 = vld [vmem:[%s0 + $0x120] sm:$0xff]
    %v144 = vld [vmem:[%s0 + $0x128] sm:$0xff]
    %v145 = vld [vmem:[%s0 + $0x130] sm:$0xff]
    %v146 = vld [vmem:[%s0 + $0x138] sm:$0xff]
    %v147 = vld [vmem:[%s0 + $0x140] sm:$0xff]
    %v148 = vld [vmem:[%s0 + $0x148] sm:$0xff]
    %v149 = vld [vmem:[%s0 + $0x150] sm:$0xff]
    %v150 = vld [vmem:[%s0 + $0x158] sm:$0xff]
    %v151 = vld [vmem:[%s0 + $0x160] sm:$0xff]
    %v152 = vld [vmem:[%s0 + $0x168] sm:$0xff]
    %v153 = vld [vmem:[%s0 + $0x170] sm:$0xff]
    %v154 = vld [vmem:[%s0 + $0x178] sm:$0xff]
    %v155 = vld [vmem:[%s0 + $0x180] sm:$0xff]
    %v156 = vld [vmem:[%s0 + $0x188] sm:$0xff]
    %v157 = vld [vmem:[%s0 + $0x190] sm:$0xff]
    %v158 = vld [vmem:[%s0 + $0x198] sm:$0xff]
    %v159 = vld [vmem:[%s0 + $0x1a0] sm:$0xff]
    %v160 = vld [vmem:[%s0 + $0x1a8] sm:$0xff]
    %v161 = vld [vmem:[%s0 + $0x1b0] sm:$0xff]
    %v162 = vld [vmem:[%s0 + $0x1b8] sm:$0xff]
    %v163 = vld [vmem:[%s0 + $0x1c0] sm:$0xff]
    %v164 = vld [vmem:[%s0 + $0x1c8] sm:$0xff]
    %v165 = vld [vmem:[%s0 + $0x1d0] sm:$0xff]
    %v166 = vld [vmem:[%s0 + $0x1d8] sm:$0xff]
    %v167 = vld [vmem:[%s0 + $0x1e0] sm:$0xff]
    %v168 = vld [vmem:[%s0 + $0x1e8] sm:$0xff]
    %v169 = vld [vmem:[%s0 + $0x1f0] sm:$0xff]
    %v170 = vld [vmem:[%s0 + $0x1f8] sm:$0xff]
    %v171 = vpack.c.bf16 %v108, %v107
    %v172 = vpack.c.bf16 %v110, %v109
    %v173 = vpack.c.bf16 %v112, %v111
    %v174 = vpack.c.bf16 %v114, %v113
    %v175 = vpack.c.bf16 %v116, %v115
    %v176 = vpack.c.bf16 %v118, %v117
    %v177 = vpack.c.bf16 %v120, %v119
    %v178 = vpack.c.bf16 %v122, %v121
    %v179 = vpack.c.bf16 %v124, %v123
    %v180 = vpack.c.bf16 %v126, %v125
    %v181 = vpack.c.bf16 %v128, %v127
    %v182 = vpack.c.bf16 %v130, %v129
    %v183 = vpack.c.bf16 %v132, %v131
    %v184 = vpack.c.bf16 %v134, %v133
    %v185 = vpack.c.bf16 %v136, %v135
    %v186 = vpack.c.bf16 %v138, %v137
    %v187 = vpack.c.bf16 %v140, %v139
    %v188 = vpack.c.bf16 %v142, %v141
    %v189 = vpack.c.bf16 %v144, %v143
    %v190 = vpack.c.bf16 %v146, %v145
    %v191 = vpack.c.bf16 %v148, %v147
    %v192 = vpack.c.bf16 %v150, %v149
    %v193 = vpack.c.bf16 %v152, %v151
    %v194 = vpack.c.bf16 %v154, %v153
    %v195 = vpack.c.bf16 %v156, %v155
    %v196 = vpack.c.bf16 %v158, %v157
    %v197 = vpack.c.bf16 %v160, %v159
    %v198 = vpack.c.bf16 %v162, %v161
    %v199 = vpack.c.bf16 %v164, %v163
    %v200 = vpack.c.bf16 %v166, %v165
    %v201 = vpack.c.bf16 %v168, %v167
    %v202 = vpack.c.bf16 %v170, %v169
    %v203 = vld [vmem:[%s1] sm:$0xff]
    %v204 = vld [vmem:[%s1 + $0x8] sm:$0xff]
    %v205 = vld [vmem:[%s1 + $0x10] sm:$0xff]
    %v206 = vld [vmem:[%s1 + $0x18] sm:$0xff]
    %v207 = vld [vmem:[%s1 + $0x20] sm:$0xff]
    %v208 = vld [vmem:[%s1 + $0x28] sm:$0xff]
    %v209 = vld [vmem:[%s1 + $0x30] sm:$0xff]
    %v210 = vld [vmem:[%s1 + $0x38] sm:$0xff]
    %v211 = vld [vmem:[%s1 + $0x40] sm:$0xff]
    %v212 = vld [vmem:[%s1 + $0x48] sm:$0xff]
    %v213 = vld [vmem:[%s1 + $0x50] sm:$0xff]
    %v214 = vld [vmem:[%s1 + $0x58] sm:$0xff]
    %v215 = vld [vmem:[%s1 + $0x60] sm:$0xff]
    %v216 = vld [vmem:[%s1 + $0x68] sm:$0xff]
    %v217 = vld [vmem:[%s1 + $0x70] sm:$0xff]
    %v218 = vld [vmem:[%s1 + $0x78] sm:$0xff]
    %v219 = vld [vmem:[%s1 + $0x80] sm:$0xff]
    %v220 = vld [vmem:[%s1 + $0x88] sm:$0xff]
    %v221 = vld [vmem:[%s1 + $0x90] sm:$0xff]
    %v222 = vld [vmem:[%s1 + $0x98] sm:$0xff]
    %v223 = vld [vmem:[%s1 + $0xa0] sm:$0xff]
    %v224 = vld [vmem:[%s1 + $0xa8] sm:$0xff]
    %v225 = vld [vmem:[%s1 + $0xb0] sm:$0xff]
    %v226 = vld [vmem:[%s1 + $0xb8] sm:$0xff]
    %v227 = vld [vmem:[%s1 + $0xc0] sm:$0xff]
    %v228 = vld [vmem:[%s1 + $0xc8] sm:$0xff]
    %v229 = vld [vmem:[%s1 + $0xd0] sm:$0xff]
    %v230 = vld [vmem:[%s1 + $0xd8] sm:$0xff]
    %v231 = vld [vmem:[%s1 + $0xe0] sm:$0xff]
    %v232 = vld [vmem:[%s1 + $0xe8] sm:$0xff]
    %v233 = vld [vmem:[%s1 + $0xf0] sm:$0xff]
    %v234 = vld [vmem:[%s1 + $0xf8] sm:$0xff]
    %v235 = vld [vmem:[%s1 + $0x100] sm:$0xff]
    %v236 = vld [vmem:[%s1 + $0x108] sm:$0xff]
    %v237 = vld [vmem:[%s1 + $0x110] sm:$0xff]
    %v238 = vld [vmem:[%s1 + $0x118] sm:$0xff]
    %v239 = vld [vmem:[%s1 + $0x120] sm:$0xff]
    %v240 = vld [vmem:[%s1 + $0x128] sm:$0xff]
    %v241 = vld [vmem:[%s1 + $0x130] sm:$0xff]
    %v242 = vld [vmem:[%s1 + $0x138] sm:$0xff]
    %v243 = vld [vmem:[%s1 + $0x140] sm:$0xff]
    %v244 = vld [vmem:[%s1 + $0x148] sm:$0xff]
    %v245 = vld [vmem:[%s1 + $0x150] sm:$0xff]
    %v246 = vld [vmem:[%s1 + $0x158] sm:$0xff]
    %v247 = vld [vmem:[%s1 + $0x160] sm:$0xff]
    %v248 = vld [vmem:[%s1 + $0x168] sm:$0xff]
    %v249 = vld [vmem:[%s1 + $0x170] sm:$0xff]
    %v250 = vld [vmem:[%s1 + $0x178] sm:$0xff]
    %v251 = vld [vmem:[%s1 + $0x180] sm:$0xff]
    %v252 = vld [vmem:[%s1 + $0x188] sm:$0xff]
    %v253 = vld [vmem:[%s1 + $0x190] sm:$0xff]
    %v254 = vld [vmem:[%s1 + $0x198] sm:$0xff]
    %v255 = vld [vmem:[%s1 + $0x1a0] sm:$0xff]
    %v256 = vld [vmem:[%s1 + $0x1a8] sm:$0xff]
    %v257 = vld [vmem:[%s1 + $0x1b0] sm:$0xff]
    %v258 = vld [vmem:[%s1 + $0x1b8] sm:$0xff]
    %v259 = vld [vmem:[%s1 + $0x1c0] sm:$0xff]
    %v260 = vld [vmem:[%s1 + $0x1c8] sm:$0xff]
    %v261 = vld [vmem:[%s1 + $0x1d0] sm:$0xff]
    %v262 = vld [vmem:[%s1 + $0x1d8] sm:$0xff]
    %v263 = vld [vmem:[%s1 + $0x1e0] sm:$0xff]
    %v264 = vld [vmem:[%s1 + $0x1e8] sm:$0xff]
    %v265 = vld [vmem:[%s1 + $0x1f0] sm:$0xff]
    %v266 = vld [vmem:[%s1 + $0x1f8] sm:$0xff]
    %v267 = vpack.c.bf16 %v204, %v203
    %v268 = vpack.c.bf16 %v206, %v205
    %v269 = vpack.c.bf16 %v208, %v207
    %v270 = vpack.c.bf16 %v210, %v209
    %v271 = vpack.c.bf16 %v212, %v211
    %v272 = vpack.c.bf16 %v214, %v213
    %v273 = vpack.c.bf16 %v216, %v215
    %v274 = vpack.c.bf16 %v218, %v217
    %v275 = vpack.c.bf16 %v220, %v219
    %v276 = vpack.c.bf16 %v222, %v221
    %v277 = vpack.c.bf16 %v224, %v223
    %v278 = vpack.c.bf16 %v226, %v225
    %v279 = vpack.c.bf16 %v228, %v227
    %v280 = vpack.c.bf16 %v230, %v229
    %v281 = vpack.c.bf16 %v232, %v231
    %v282 = vpack.c.bf16 %v234, %v233
    %v283 = vpack.c.bf16 %v236, %v235
    %v284 = vpack.c.bf16 %v238, %v237
    %v285 = vpack.c.bf16 %v240, %v239
    %v286 = vpack.c.bf16 %v242, %v241
    %v287 = vpack.c.bf16 %v244, %v243
    %v288 = vpack.c.bf16 %v246, %v245
    %v289 = vpack.c.bf16 %v248, %v247
    %v290 = vpack.c.bf16 %v250, %v249
    %v291 = vpack.c.bf16 %v252, %v251
    %v292 = vpack.c.bf16 %v254, %v253
    %v293 = vpack.c.bf16 %v256, %v255
    %v294 = vpack.c.bf16 %v258, %v257
    %v295 = vpack.c.bf16 %v260, %v259
    %v296 = vpack.c.bf16 %v262, %v261
    %v297 = vpack.c.bf16 %v264, %v263
    %v298 = vpack.c.bf16 %v266, %v265
    %v299 = vld [vmem:[#allocation2] sm:$0xff]
    %v300 = vld [vmem:[#allocation2 + $0x8] sm:$0xff]
    %v301 = vld [vmem:[#allocation2 + $0x10] sm:$0xff]
    %v302 = vld [vmem:[#allocation2 + $0x18] sm:$0xff]
    %v303 = vld [vmem:[#allocation2 + $0x20] sm:$0xff]
    %v304 = vld [vmem:[#allocation2 + $0x28] sm:$0xff]
    %v305 = vld [vmem:[#allocation2 + $0x30] sm:$0xff]
    %v306 = vld [vmem:[#allocation2 + $0x38] sm:$0xff]
    %v307 = vld [vmem:[#allocation2 + $0x40] sm:$0xff]
    %v308 = vld [vmem:[#allocation2 + $0x48] sm:$0xff]
    %v309 = vld [vmem:[#allocation2 + $0x50] sm:$0xff]
    %v310 = vld [vmem:[#allocation2 + $0x58] sm:$0xff]
    %v311 = vld [vmem:[#allocation2 + $0x60] sm:$0xff]
    %v312 = vld [vmem:[#allocation2 + $0x68] sm:$0xff]
    %v313 = vld [vmem:[#allocation2 + $0x70] sm:$0xff]
    %v314 = vld [vmem:[#allocation2 + $0x78] sm:$0xff]
    %v315 = vld [vmem:[#allocation2 + $0x80] sm:$0xff]
    %v316 = vld [vmem:[#allocation2 + $0x88] sm:$0xff]
    %v317 = vld [vmem:[#allocation2 + $0x90] sm:$0xff]
    %v318 = vld [vmem:[#allocation2 + $0x98] sm:$0xff]
    %v319 = vld [vmem:[#allocation2 + $0xa0] sm:$0xff]
    %v320 = vld [vmem:[#allocation2 + $0xa8] sm:$0xff]
    %v321 = vld [vmem:[#allocation2 + $0xb0] sm:$0xff]
    %v322 = vld [vmem:[#allocation2 + $0xb8] sm:$0xff]
    %v323 = vld [vmem:[#allocation2 + $0xc0] sm:$0xff]
    %v324 = vld [vmem:[#allocation2 + $0xc8] sm:$0xff]
    %v325 = vld [vmem:[#allocation2 + $0xd0] sm:$0xff]
    %v326 = vld [vmem:[#allocation2 + $0xd8] sm:$0xff]
    %v327 = vld [vmem:[#allocation2 + $0xe0] sm:$0xff]
    %v328 = vld [vmem:[#allocation2 + $0xe8] sm:$0xff]
    %v329 = vld [vmem:[#allocation2 + $0xf0] sm:$0xff]
    %v330 = vld [vmem:[#allocation2 + $0xf8] sm:$0xff]
    %v331 = vld [vmem:[%s4] sm:$0xff]
    %v332 = vld [vmem:[%s4 + $0x8] sm:$0xff]
    %v333 = vld [vmem:[%s4 + $0x10] sm:$0xff]
    %v334 = vld [vmem:[%s4 + $0x18] sm:$0xff]
    %v339 = vunpack.c.l.b16 %v331
    %v340 = vunpack.c.h.b16 %v331
    %v341 = vunpack.c.l.b16 %v332
    %v342 = vunpack.c.h.b16 %v332
    %v343 = vunpack.c.l.b16 %v333
    %v344 = vunpack.c.h.b16 %v333
    %v345 = vunpack.c.l.b16 %v334
    %v346 = vunpack.c.h.b16 %v334
    %v347 = vpack.c.b16 %v343, %v339
    %v348 = vpack.c.b16 %v344, %v340
    %v349 = vpack.c.b16 %v345, %v341
    %v350 = vpack.c.b16 %v346, %v342
    %vm355 = vcmask 130048
    %v357 = vsel %vm355, %v267, 0
    %v360 = vsel %vm355, %v268, 0
    %v363 = vsel %vm355, %v269, 0
    %v366 = vsel %vm355, %v270, 0
    %v369 = vsel %vm355, %v271, 0
    %v372 = vsel %vm355, %v272, 0
    %v375 = vsel %vm355, %v273, 0
    %v378 = vsel %vm355, %v274, 0
    %v381 = vsel %vm355, %v275, 0
    %v384 = vsel %vm355, %v276, 0
    %v387 = vsel %vm355, %v277, 0
    %v390 = vsel %vm355, %v278, 0
    %v393 = vsel %vm355, %v279, 0
    %v396 = vsel %vm355, %v280, 0
    %v399 = vsel %vm355, %v281, 0
    %v402 = vsel %vm355, %v282, 0
    %v405 = vsel %vm355, %v283, 0
    %v408 = vsel %vm355, %v284, 0
    %v411 = vsel %vm355, %v285, 0
    %v414 = vsel %vm355, %v286, 0
    %v417 = vsel %vm355, %v287, 0
    %v420 = vsel %vm355, %v288, 0
    %v423 = vsel %vm355, %v289, 0
    %v426 = vsel %vm355, %v290, 0
    %v429 = vsel %vm355, %v291, 0
    %v432 = vsel %vm355, %v292, 0
    %v435 = vsel %vm355, %v293, 0
    %v438 = vsel %vm355, %v294, 0
    %v441 = vsel %vm355, %v295, 0
    %v444 = vsel %vm355, %v296, 0
    %v447 = vsel %vm355, %v297, 0
    %v450 = vsel %vm355, %v298, 0
    %452 = vmatprep.subr.bf16.mxu0 %v348
    %453 = vmatpush1.bf16.msra.mxu0 %v347
    %454 = vmatprep.subr.bf16.mxu0 0
    %455 = vmatpush1.bf16.msra.mxu0 0
    %456 = vmatprep.subr.bf16.mxu0 0
    %457 = vmatpush1.bf16.msra.mxu0 0
    %458 = vmatprep.subr.bf16.mxu0 0
    %459 = vmatpush1.bf16.msra.mxu0 0
    %460 = vmatprep.subr.bf16.mxu0 0
    %461 = vmatpush1.bf16.msra.mxu0 0
    %462 = vmatprep.subr.bf16.mxu0 0
    %463 = vmatpush1.bf16.msra.mxu0 0
    %464 = vmatprep.subr.bf16.mxu0 0
    %465 = vmatpush1.bf16.msra.mxu0 0
    %466 = vmatprep.subr.bf16.mxu0 0
    %467 = vmatpush1.bf16.msra.mxu0 0
    %468 = vmatprep.subr.bf16.mxu0 0
    %469 = vmatpush1.bf16.msra.mxu0 0
    %470 = vmatprep.subr.bf16.mxu0 0
    %471 = vmatpush1.bf16.msra.mxu0 0
    %472 = vmatprep.subr.bf16.mxu0 0
    %473 = vmatpush1.bf16.msra.mxu0 0
    %474 = vmatprep.subr.bf16.mxu0 0
    %475 = vmatpush1.bf16.msra.mxu0 0
    %476 = vmatprep.subr.bf16.mxu0 0
    %477 = vmatpush1.bf16.msra.mxu0 0
    %478 = vmatprep.subr.bf16.mxu0 0
    %479 = vmatpush1.bf16.msra.mxu0 0
    %480 = vmatprep.subr.bf16.mxu0 0
    %481 = vmatpush1.bf16.msra.mxu0 0
    %482 = vmatprep.subr.bf16.mxu0 0
    %483 = vmatpush1.bf16.msra.mxu0 0
    %484 = vmatprep.mubr.bf16.mxu0 0
    %485 = vmatmul.mubr.bf16.gmra.mrb[0].mxu0 %v357
    %v486 = vpop.f32.mrb[0].mxu0
    %v487 = vadd.f32 0.0, %v486
    %v488 = vpop.f32.mrb[0].mxu0
    %v489 = vadd.f32 0.0, %v488
    %v490 = vpop.f32.mrb[0].mxu0
    %v491 = vadd.f32 0.0, %v490
    %v492 = vpop.f32.mrb[0].mxu0
    %v493 = vadd.f32 0.0, %v492
    %494 = vmatprep.mubr.bf16.mxu0 0
    %495 = vmatmul.mubr.bf16.gmra.mrb[0].mxu0 %v360
    %v496 = vpop.f32.mrb[0].mxu0
    %v497 = vadd.f32 0.0, %v496
    %v498 = vpop.f32.mrb[0].mxu0
    %v499 = vadd.f32 0.0, %v498
    %v500 = vpop.f32.mrb[0].mxu0
    %v501 = vadd.f32 0.0, %v500
    %v502 = vpop.f32.mrb[0].mxu0
    %v503 = vadd.f32 0.0, %v502
    %504 = vmatprep.mubr.bf16.mxu0 0
    %505 = vmatmul.mubr.bf16.gmra.mrb[0].mxu0 %v363
    %v506 = vpop.f32.mrb[0].mxu0
    %v507 = vadd.f32 0.0, %v506
    %v508 = vpop.f32.mrb[0].mxu0
    %v509 = vadd.f32 0.0, %v508
    %v510 = vpop.f32.mrb[0].mxu0
    %v511 = vadd.f32 0.0, %v510
    %v512 = vpop.f32.mrb[0].mxu0
    %v513 = vadd.f32 0.0, %v512
    %514 = vmatprep.mubr.bf16.mxu0 0
    %515 = vmatmul.mubr.bf16.gmra.mrb[0].mxu0 %v366
    %v516 = vpop.f32.mrb[0].mxu0
    %v517 = vadd.f32 0.0, %v516
    %v518 = vpop.f32.mrb[0].mxu0
    %v519 = vadd.f32 0.0, %v518
    %v520 = vpop.f32.mrb[0].mxu0
    %v521 = vadd.f32 0.0, %v520
    %v522 = vpop.f32.mrb[0].mxu0
    %v523 = vadd.f32 0.0, %v522
    %524 = vmatprep.mubr.bf16.mxu0 0
    %525 = vmatmul.mubr.bf16.gmra.mrb[0].mxu0 %v369
    %v526 = vpop.f32.mrb[0].mxu0
    %v527 = vadd.f32 0.0, %v526
    %v528 = vpop.f32.mrb[0].mxu0
    %v529 = vadd.f32 0.0, %v528
    %v530 = vpop.f32.mrb[0].mxu0
    %v531 = vadd.f32 0.0, %v530
    %v532 = vpop.f32.mrb[0].mxu0
    %v533 = vadd.f32 0.0, %v532
    %534 = vmatprep.mubr.bf16.mxu0 0
    %535 = vmatmul.mubr.bf16.gmra.mrb[0].mxu0 %v372
    %v536 = vpop.f32.mrb[0].mxu0
    %v537 = vadd.f32 0.0, %v536
    %v538 = vpop.f32.mrb[0].mxu0
    %v539 = vadd.f32 0.0, %v538
    %v540 = vpop.f32.mrb[0].mxu0
    %v541 = vadd.f32 0.0, %v540
    %v542 = vpop.f32.mrb[0].mxu0
    %v543 = vadd.f32 0.0, %v542
    %544 = vmatprep.mubr.bf16.mxu0 0
    %545 = vmatmul.mubr.bf16.gmra.mrb[0].mxu0 %v375
    %v546 = vpop.f32.mrb[0].mxu0
    %v547 = vadd.f32 0.0, %v546
    %v548 = vpop.f32.mrb[0].mxu0
    %v549 = vadd.f32 0.0, %v548
    %v550 = vpop.f32.mrb[0].mxu0
    %v551 = vadd.f32 0.0, %v550
    %v552 = vpop.f32.mrb[0].mxu0
    %v553 = vadd.f32 0.0, %v552
    %554 = vmatprep.mubr.bf16.mxu0 0
    %555 = vmatmul.mubr.bf16.gmra.mrb[0].mxu0 %v378
    %v556 = vpop.f32.mrb[0].mxu0
    %v557 = vadd.f32 0.0, %v556
    %v558 = vpop.f32.mrb[0].mxu0
    %v559 = vadd.f32 0.0, %v558
    %v560 = vpop.f32.mrb[0].mxu0
    %v561 = vadd.f32 0.0, %v560
    %v562 = vpop.f32.mrb[0].mxu0
    %v563 = vadd.f32 0.0, %v562
    %564 = vmatprep.mubr.bf16.mxu0 0
    %565 = vmatmul.mubr.bf16.gmra.mrb[0].mxu0 %v381
    %v566 = vpop.f32.mrb[0].mxu0
    %v567 = vadd.f32 0.0, %v566
    %v568 = vpop.f32.mrb[0].mxu0
    %v569 = vadd.f32 0.0, %v568
    %v570 = vpop.f32.mrb[0].mxu0
    %v571 = vadd.f32 0.0, %v570
    %v572 = vpop.f32.mrb[0].mxu0
    %v573 = vadd.f32 0.0, %v572
    %574 = vmatprep.mubr.bf16.mxu0 0
    %575 = vmatmul.mubr.bf16.gmra.mrb[0].mxu0 %v384
    %v576 = vpop.f32.mrb[0].mxu0
    %v577 = vadd.f32 0.0, %v576
    %v578 = vpop.f32.mrb[0].mxu0
    %v579 = vadd.f32 0.0, %v578
    %v580 = vpop.f32.mrb[0].mxu0
    %v581 = vadd.f32 0.0, %v580
    %v582 = vpop.f32.mrb[0].mxu0
    %v583 = vadd.f32 0.0, %v582
    %584 = vmatprep.mubr.bf16.mxu0 0
    %585 = vmatmul.mubr.bf16.gmra.mrb[0].mxu0 %v387
    %v586 = vpop.f32.mrb[0].mxu0
    %v587 = vadd.f32 0.0, %v586
    %v588 = vpop.f32.mrb[0].mxu0
    %v589 = vadd.f32 0.0, %v588
    %v590 = vpop.f32.mrb[0].mxu0
    %v591 = vadd.f32 0.0, %v590
    %v592 = vpop.f32.mrb[0].mxu0
    %v593 = vadd.f32 0.0, %v592
    %594 = vmatprep.mubr.bf16.mxu0 0
    %595 = vmatmul.mubr.bf16.gmra.mrb[0].mxu0 %v390
    %v596 = vpop.f32.mrb[0].mxu0
    %v597 = vadd.f32 0.0, %v596
    %v598 = vpop.f32.mrb[0].mxu0
    %v599 = vadd.f32 0.0, %v598
    %v600 = vpop.f32.mrb[0].mxu0
    %v601 = vadd.f32 0.0, %v600
    %v602 = vpop.f32.mrb[0].mxu0
    %v603 = vadd.f32 0.0, %v602
    %604 = vmatprep.mubr.bf16.mxu0 0
    %605 = vmatmul.mubr.bf16.gmra.mrb[0].mxu0 %v393
    %v606 = vpop.f32.mrb[0].mxu0
    %v607 = vadd.f32 0.0, %v606
    %v608 = vpop.f32.mrb[0].mxu0
    %v609 = vadd.f32 0.0, %v608
    %v610 = vpop.f32.mrb[0].mxu0
    %v611 = vadd.f32 0.0, %v610
    %v612 = vpop.f32.mrb[0].mxu0
    %v613 = vadd.f32 0.0, %v612
    %614 = vmatprep.mubr.bf16.mxu0 0
    %615 = vmatmul.mubr.bf16.gmra.mrb[0].mxu0 %v396
    %v616 = vpop.f32.mrb[0].mxu0
    %v617 = vadd.f32 0.0, %v616
    %v618 = vpop.f32.mrb[0].mxu0
    %v619 = vadd.f32 0.0, %v618
    %v620 = vpop.f32.mrb[0].mxu0
    %v621 = vadd.f32 0.0, %v620
    %v622 = vpop.f32.mrb[0].mxu0
    %v623 = vadd.f32 0.0, %v622
    %624 = vmatprep.mubr.bf16.mxu0 0
    %625 = vmatmul.mubr.bf16.gmra.mrb[0].mxu0 %v399
    %v626 = vpop.f32.mrb[0].mxu0
    %v627 = vadd.f32 0.0, %v626
    %v628 = vpop.f32.mrb[0].mxu0
    %v629 = vadd.f32 0.0, %v628
    %v630 = vpop.f32.mrb[0].mxu0
    %v631 = vadd.f32 0.0, %v630
    %v632 = vpop.f32.mrb[0].mxu0
    %v633 = vadd.f32 0.0, %v632
    %634 = vmatprep.mubr.bf16.mxu0 0
    %635 = vmatmul.mubr.bf16.gmra.mrb[0].mxu0 %v402
    %v636 = vpop.f32.mrb[0].mxu0
    %v637 = vadd.f32 0.0, %v636
    %v638 = vpop.f32.mrb[0].mxu0
    %v639 = vadd.f32 0.0, %v638
    %v640 = vpop.f32.mrb[0].mxu0
    %v641 = vadd.f32 0.0, %v640
    %v642 = vpop.f32.mrb[0].mxu0
    %v643 = vadd.f32 0.0, %v642
    %644 = vmatprep.mubr.bf16.mxu0 0
    %645 = vmatmul.mubr.bf16.gmra.mrb[0].mxu0 %v405
    %v646 = vpop.f32.mrb[0].mxu0
    %v647 = vadd.f32 0.0, %v646
    %v648 = vpop.f32.mrb[0].mxu0
    %v649 = vadd.f32 0.0, %v648
    %v650 = vpop.f32.mrb[0].mxu0
    %v651 = vadd.f32 0.0, %v650
    %v652 = vpop.f32.mrb[0].mxu0
    %v653 = vadd.f32 0.0, %v652
    %654 = vmatprep.mubr.bf16.mxu0 0
    %655 = vmatmul.mubr.bf16.gmra.mrb[0].mxu0 %v408
    %v656 = vpop.f32.mrb[0].mxu0
    %v657 = vadd.f32 0.0, %v656
    %v658 = vpop.f32.mrb[0].mxu0
    %v659 = vadd.f32 0.0, %v658
    %v660 = vpop.f32.mrb[0].mxu0
    %v661 = vadd.f32 0.0, %v660
    %v662 = vpop.f32.mrb[0].mxu0
    %v663 = vadd.f32 0.0, %v662
    %664 = vmatprep.mubr.bf16.mxu0 0
    %665 = vmatmul.mubr.bf16.gmra.mrb[0].mxu0 %v411
    %v666 = vpop.f32.mrb[0].mxu0
    %v667 = vadd.f32 0.0, %v666
    %v668 = vpop.f32.mrb[0].mxu0
    %v669 = vadd.f32 0.0, %v668
    %v670 = vpop.f32.mrb[0].mxu0
    %v671 = vadd.f32 0.0, %v670
    %v672 = vpop.f32.mrb[0].mxu0
    %v673 = vadd.f32 0.0, %v672
    %674 = vmatprep.mubr.bf16.mxu0 0
    %675 = vmatmul.mubr.bf16.gmra.mrb[0].mxu0 %v414
    %v676 = vpop.f32.mrb[0].mxu0
    %v677 = vadd.f32 0.0, %v676
    %v678 = vpop.f32.mrb[0].mxu0
    %v679 = vadd.f32 0.0, %v678
    %v680 = vpop.f32.mrb[0].mxu0
    %v681 = vadd.f32 0.0, %v680
    %v682 = vpop.f32.mrb[0].mxu0
    %v683 = vadd.f32 0.0, %v682
    %684 = vmatprep.mubr.bf16.mxu0 0
    %685 = vmatmul.mubr.bf16.gmra.mrb[0].mxu0 %v417
    %v686 = vpop.f32.mrb[0].mxu0
    %v687 = vadd.f32 0.0, %v686
    %v688 = vpop.f32.mrb[0].mxu0
    %v689 = vadd.f32 0.0, %v688
    %v690 = vpop.f32.mrb[0].mxu0
    %v691 = vadd.f32 0.0, %v690
    %v692 = vpop.f32.mrb[0].mxu0
    %v693 = vadd.f32 0.0, %v692
    %694 = vmatprep.mubr.bf16.mxu0 0
    %695 = vmatmul.mubr.bf16.gmra.mrb[0].mxu0 %v420
    %v696 = vpop.f32.mrb[0].mxu0
    %v697 = vadd.f32 0.0, %v696
    %v698 = vpop.f32.mrb[0].mxu0
    %v699 = vadd.f32 0.0, %v698
    %v700 = vpop.f32.mrb[0].mxu0
    %v701 = vadd.f32 0.0, %v700
    %v702 = vpop.f32.mrb[0].mxu0
    %v703 = vadd.f32 0.0, %v702
    %704 = vmatprep.mubr.bf16.mxu0 0
    %705 = vmatmul.mubr.bf16.gmra.mrb[0].mxu0 %v423
    %v706 = vpop.f32.mrb[0].mxu0
    %v707 = vadd.f32 0.0, %v706
    %v708 = vpop.f32.mrb[0].mxu0
    %v709 = vadd.f32 0.0, %v708
    %v710 = vpop.f32.mrb[0].mxu0
    %v711 = vadd.f32 0.0, %v710
    %v712 = vpop.f32.mrb[0].mxu0
    %v713 = vadd.f32 0.0, %v712
    %714 = vmatprep.mubr.bf16.mxu0 0
    %715 = vmatmul.mubr.bf16.gmra.mrb[0].mxu0 %v426
    %v716 = vpop.f32.mrb[0].mxu0
    %v717 = vadd.f32 0.0, %v716
    %v718 = vpop.f32.mrb[0].mxu0
    %v719 = vadd.f32 0.0, %v718
    %v720 = vpop.f32.mrb[0].mxu0
    %v721 = vadd.f32 0.0, %v720
    %v722 = vpop.f32.mrb[0].mxu0
    %v723 = vadd.f32 0.0, %v722
    %724 = vmatprep.mubr.bf16.mxu0 0
    %725 = vmatmul.mubr.bf16.gmra.mrb[0].mxu0 %v429
    %v726 = vpop.f32.mrb[0].mxu0
    %v727 = vadd.f32 0.0, %v726
    %v728 = vpop.f32.mrb[0].mxu0
    %v729 = vadd.f32 0.0, %v728
    %v730 = vpop.f32.mrb[0].mxu0
    %v731 = vadd.f32 0.0, %v730
    %v732 = vpop.f32.mrb[0].mxu0
    %v733 = vadd.f32 0.0, %v732
    %734 = vmatprep.mubr.bf16.mxu0 0
    %735 = vmatmul.mubr.bf16.gmra.mrb[0].mxu0 %v432
    %v736 = vpop.f32.mrb[0].mxu0
    %v737 = vadd.f32 0.0, %v736
    %v738 = vpop.f32.mrb[0].mxu0
    %v739 = vadd.f32 0.0, %v738
    %v740 = vpop.f32.mrb[0].mxu0
    %v741 = vadd.f32 0.0, %v740
    %v742 = vpop.f32.mrb[0].mxu0
    %v743 = vadd.f32 0.0, %v742
    %744 = vmatprep.mubr.bf16.mxu0 0
    %745 = vmatmul.mubr.bf16.gmra.mrb[0].mxu0 %v435
    %v746 = vpop.f32.mrb[0].mxu0
    %v747 = vadd.f32 0.0, %v746
    %v748 = vpop.f32.mrb[0].mxu0
    %v749 = vadd.f32 0.0, %v748
    %v750 = vpop.f32.mrb[0].mxu0
    %v751 = vadd.f32 0.0, %v750
    %v752 = vpop.f32.mrb[0].mxu0
    %v753 = vadd.f32 0.0, %v752
    %754 = vmatprep.mubr.bf16.mxu0 0
    %755 = vmatmul.mubr.bf16.gmra.mrb[0].mxu0 %v438
    %v756 = vpop.f32.mrb[0].mxu0
    %v757 = vadd.f32 0.0, %v756
    %v758 = vpop.f32.mrb[0].mxu0
    %v759 = vadd.f32 0.0, %v758
    %v760 = vpop.f32.mrb[0].mxu0
    %v761 = vadd.f32 0.0, %v760
    %v762 = vpop.f32.mrb[0].mxu0
    %v763 = vadd.f32 0.0, %v762
    %764 = vmatprep.mubr.bf16.mxu0 0
    %765 = vmatmul.mubr.bf16.gmra.mrb[0].mxu0 %v441
    %v766 = vpop.f32.mrb[0].mxu0
    %v767 = vadd.f32 0.0, %v766
    %v768 = vpop.f32.mrb[0].mxu0
    %v769 = vadd.f32 0.0, %v768
    %v770 = vpop.f32.mrb[0].mxu0
    %v771 = vadd.f32 0.0, %v770
    %v772 = vpop.f32.mrb[0].mxu0
    %v773 = vadd.f32 0.0, %v772
    %774 = vmatprep.mubr.bf16.mxu0 0
    %775 = vmatmul.mubr.bf16.gmra.mrb[0].mxu0 %v444
    %v776 = vpop.f32.mrb[0].mxu0
    %v777 = vadd.f32 0.0, %v776
    %v778 = vpop.f32.mrb[0].mxu0
    %v779 = vadd.f32 0.0, %v778
    %v780 = vpop.f32.mrb[0].mxu0
    %v781 = vadd.f32 0.0, %v780
    %v782 = vpop.f32.mrb[0].mxu0
    %v783 = vadd.f32 0.0, %v782
    %784 = vmatprep.mubr.bf16.mxu0 0
    %785 = vmatmul.mubr.bf16.gmra.mrb[0].mxu0 %v447
    %v786 = vpop.f32.mrb[0].mxu0
    %v787 = vadd.f32 0.0, %v786
    %v788 = vpop.f32.mrb[0].mxu0
    %v789 = vadd.f32 0.0, %v788
    %v790 = vpop.f32.mrb[0].mxu0
    %v791 = vadd.f32 0.0, %v790
    %v792 = vpop.f32.mrb[0].mxu0
    %v793 = vadd.f32 0.0, %v792
    %794 = vmatprep.mubr.bf16.mxu0 0
    %795 = vmatmul.mubr.bf16.gmra.mrb[0].mxu0 %v450
    %v796 = vpop.f32.mrb[0].mxu0
    %v797 = vadd.f32 0.0, %v796
    %v798 = vpop.f32.mrb[0].mxu0
    %v799 = vadd.f32 0.0, %v798
    %v800 = vpop.f32.mrb[0].mxu0
    %v801 = vadd.f32 0.0, %v800
    %v802 = vpop.f32.mrb[0].mxu0
    %v803 = vadd.f32 0.0, %v802
    %804 = vdwg.mxu0
    %805 = vmatprep.subr.bf16.mxu0 %v350
    %806 = vmatpush1.bf16.msra.mxu0 %v349
    %807 = vmatprep.subr.bf16.mxu0 0
    %808 = vmatpush1.bf16.msra.mxu0 0
    %809 = vmatprep.subr.bf16.mxu0 0
    %810 = vmatpush1.bf16.msra.mxu0 0
    %811 = vmatprep.subr.bf16.mxu0 0
    %812 = vmatpush1.bf16.msra.mxu0 0
    %813 = vmatprep.subr.bf16.mxu0 0
    %814 = vmatpush1.bf16.msra.mxu0 0
    %815 = vmatprep.subr.bf16.mxu0 0
    %816 = vmatpush1.bf16.msra.mxu0 0
    %817 = vmatprep.subr.bf16.mxu0 0
    %818 = vmatpush1.bf16.msra.mxu0 0
    %819 = vmatprep.subr.bf16.mxu0 0
    %820 = vmatpush1.bf16.msra.mxu0 0
    %821 = vmatprep.subr.bf16.mxu0 0
    %822 = vmatpush1.bf16.msra.mxu0 0
    %823 = vmatprep.subr.bf16.mxu0 0
    %824 = vmatpush1.bf16.msra.mxu0 0
    %825 = vmatprep.subr.bf16.mxu0 0
    %826 = vmatpush1.bf16.msra.mxu0 0
    %827 = vmatprep.subr.bf16.mxu0 0
    %828 = vmatpush1.bf16.msra.mxu0 0
    %829 = vmatprep.subr.bf16.mxu0 0
    %830 = vmatpush1.bf16.msra.mxu0 0
    %831 = vmatprep.subr.bf16.mxu0 0
    %832 = vmatpush1.bf16.msra.mxu0 0
    %833 = vmatprep.subr.bf16.mxu0 0
    %834 = vmatpush1.bf16.msra.mxu0 0
    %835 = vmatprep.subr.bf16.mxu0 0
    %836 = vmatpush1.bf16.msra.mxu0 0
    %837 = vmatprep.mubr.bf16.mxu0 0
    %838 = vmatmul.mubr.bf16.gmra.mrb[0].mxu0 %v357
    %v839 = vpop.f32.mrb[0].mxu0
    %v840 = vadd.f32 0.0, %v839
    %v841 = vpop.f32.mrb[0].mxu0
    %v842 = vadd.f32 0.0, %v841
    %v843 = vpop.f32.mrb[0].mxu0
    %v844 = vadd.f32 0.0, %v843
    %v845 = vpop.f32.mrb[0].mxu0
    %v846 = vadd.f32 0.0, %v845
    %847 = vmatprep.mubr.bf16.mxu0 0
    %848 = vmatmul.mubr.bf16.gmra.mrb[0].mxu0 %v360
    %v849 = vpop.f32.mrb[0].mxu0
    %v850 = vadd.f32 0.0, %v849
    %v851 = vpop.f32.mrb[0].mxu0
    %v852 = vadd.f32 0.0, %v851
    %v853 = vpop.f32.mrb[0].mxu0
    %v854 = vadd.f32 0.0, %v853
    %v855 = vpop.f32.mrb[0].mxu0
    %v856 = vadd.f32 0.0, %v855
    %857 = vmatprep.mubr.bf16.mxu0 0
    %858 = vmatmul.mubr.bf16.gmra.mrb[0].mxu0 %v363
    %v859 = vpop.f32.mrb[0].mxu0
    %v860 = vadd.f32 0.0, %v859
    %v861 = vpop.f32.mrb[0].mxu0
    %v862 = vadd.f32 0.0, %v861
    %v863 = vpop.f32.mrb[0].mxu0
    %v864 = vadd.f32 0.0, %v863
    %v865 = vpop.f32.mrb[0].mxu0
    %v866 = vadd.f32 0.0, %v865
    %867 = vmatprep.mubr.bf16.mxu0 0
    %868 = vmatmul.mubr.bf16.gmra.mrb[0].mxu0 %v366
    %v869 = vpop.f32.mrb[0].mxu0
    %v870 = vadd.f32 0.0, %v869
    %v871 = vpop.f32.mrb[0].mxu0
    %v872 = vadd.f32 0.0, %v871
    %v873 = vpop.f32.mrb[0].mxu0
    %v874 = vadd.f32 0.0, %v873
    %v875 = vpop.f32.mrb[0].mxu0
    %v876 = vadd.f32 0.0, %v875
    %877 = vmatprep.mubr.bf16.mxu0 0
    %878 = vmatmul.mubr.bf16.gmra.mrb[0].mxu0 %v369
    %v879 = vpop.f32.mrb[0].mxu0
    %v880 = vadd.f32 0.0, %v879
    %v881 = vpop.f32.mrb[0].mxu0
    %v882 = vadd.f32 0.0, %v881
    %v883 = vpop.f32.mrb[0].mxu0
    %v884 = vadd.f32 0.0, %v883
    %v885 = vpop.f32.mrb[0].mxu0
    %v886 = vadd.f32 0.0, %v885
    %887 = vmatprep.mubr.bf16.mxu0 0
    %888 = vmatmul.mubr.bf16.gmra.mrb[0].mxu0 %v372
    %v889 = vpop.f32.mrb[0].mxu0
    %v890 = vadd.f32 0.0, %v889
    %v891 = vpop.f32.mrb[0].mxu0
    %v892 = vadd.f32 0.0, %v891
    %v893 = vpop.f32.mrb[0].mxu0
    %v894 = vadd.f32 0.0, %v893
    %v895 = vpop.f32.mrb[0].mxu0
    %v896 = vadd.f32 0.0, %v895
    %897 = vmatprep.mubr.bf16.mxu0 0
    %898 = vmatmul.mubr.bf16.gmra.mrb[0].mxu0 %v375
    %v899 = vpop.f32.mrb[0].mxu0
    %v900 = vadd.f32 0.0, %v899
    %v901 = vpop.f32.mrb[0].mxu0
    %v902 = vadd.f32 0.0, %v901
    %v903 = vpop.f32.mrb[0].mxu0
    %v904 = vadd.f32 0.0, %v903
    %v905 = vpop.f32.mrb[0].mxu0
    %v906 = vadd.f32 0.0, %v905
    %907 = vmatprep.mubr.bf16.mxu0 0
    %908 = vmatmul.mubr.bf16.gmra.mrb[0].mxu0 %v378
    %v909 = vpop.f32.mrb[0].mxu0
    %v910 = vadd.f32 0.0, %v909
    %v911 = vpop.f32.mrb[0].mxu0
    %v912 = vadd.f32 0.0, %v911
    %v913 = vpop.f32.mrb[0].mxu0
    %v914 = vadd.f32 0.0, %v913
    %v915 = vpop.f32.mrb[0].mxu0
    %v916 = vadd.f32 0.0, %v915
    %917 = vmatprep.mubr.bf16.mxu0 0
    %918 = vmatmul.mubr.bf16.gmra.mrb[0].mxu0 %v381
    %v919 = vpop.f32.mrb[0].mxu0
    %v920 = vadd.f32 0.0, %v919
    %v921 = vpop.f32.mrb[0].mxu0
    %v922 = vadd.f32 0.0, %v921
    %v923 = vpop.f32.mrb[0].mxu0
    %v924 = vadd.f32 0.0, %v923
    %v925 = vpop.f32.mrb[0].mxu0
    %v926 = vadd.f32 0.0, %v925
    %927 = vmatprep.mubr.bf16.mxu0 0
    %928 = vmatmul.mubr.bf16.gmra.mrb[0].mxu0 %v384
    %v929 = vpop.f32.mrb[0].mxu0
    %v930 = vadd.f32 0.0, %v929
    %v931 = vpop.f32.mrb[0].mxu0
    %v932 = vadd.f32 0.0, %v931
    %v933 = vpop.f32.mrb[0].mxu0
    %v934 = vadd.f32 0.0, %v933
    %v935 = vpop.f32.mrb[0].mxu0
    %v936 = vadd.f32 0.0, %v935
    %937 = vmatprep.mubr.bf16.mxu0 0
    %938 = vmatmul.mubr.bf16.gmra.mrb[0].mxu0 %v387
    %v939 = vpop.f32.mrb[0].mxu0
    %v940 = vadd.f32 0.0, %v939
    %v941 = vpop.f32.mrb[0].mxu0
    %v942 = vadd.f32 0.0, %v941
    %v943 = vpop.f32.mrb[0].mxu0
    %v944 = vadd.f32 0.0, %v943
    %v945 = vpop.f32.mrb[0].mxu0
    %v946 = vadd.f32 0.0, %v945
    %947 = vmatprep.mubr.bf16.mxu0 0
    %948 = vmatmul.mubr.bf16.gmra.mrb[0].mxu0 %v390
    %v949 = vpop.f32.mrb[0].mxu0
    %v950 = vadd.f32 0.0, %v949
    %v951 = vpop.f32.mrb[0].mxu0
    %v952 = vadd.f32 0.0, %v951
    %v953 = vpop.f32.mrb[0].mxu0
    %v954 = vadd.f32 0.0, %v953
    %v955 = vpop.f32.mrb[0].mxu0
    %v956 = vadd.f32 0.0, %v955
    %957 = vmatprep.mubr.bf16.mxu0 0
    %958 = vmatmul.mubr.bf16.gmra.mrb[0].mxu0 %v393
    %v959 = vpop.f32.mrb[0].mxu0
    %v960 = vadd.f32 0.0, %v959
    %v961 = vpop.f32.mrb[0].mxu0
    %v962 = vadd.f32 0.0, %v961
    %v963 = vpop.f32.mrb[0].mxu0
    %v964 = vadd.f32 0.0, %v963
    %v965 = vpop.f32.mrb[0].mxu0
    %v966 = vadd.f32 0.0, %v965
    %967 = vmatprep.mubr.bf16.mxu0 0
    %968 = vmatmul.mubr.bf16.gmra.mrb[0].mxu0 %v396
    %v969 = vpop.f32.mrb[0].mxu0
    %v970 = vadd.f32 0.0, %v969
    %v971 = vpop.f32.mrb[0].mxu0
    %v972 = vadd.f32 0.0, %v971
    %v973 = vpop.f32.mrb[0].mxu0
    %v974 = vadd.f32 0.0, %v973
    %v975 = vpop.f32.mrb[0].mxu0
    %v976 = vadd.f32 0.0, %v975
    %977 = vmatprep.mubr.bf16.mxu0 0
    %978 = vmatmul.mubr.bf16.gmra.mrb[0].mxu0 %v399
    %v979 = vpop.f32.mrb[0].mxu0
    %v980 = vadd.f32 0.0, %v979
    %v981 = vpop.f32.mrb[0].mxu0
    %v982 = vadd.f32 0.0, %v981
    %v983 = vpop.f32.mrb[0].mxu0
    %v984 = vadd.f32 0.0, %v983
    %v985 = vpop.f32.mrb[0].mxu0
    %v986 = vadd.f32 0.0, %v985
    %987 = vmatprep.mubr.bf16.mxu0 0
    %988 = vmatmul.mubr.bf16.gmra.mrb[0].mxu0 %v402
    %v989 = vpop.f32.mrb[0].mxu0
    %v990 = vadd.f32 0.0, %v989
    %v991 = vpop.f32.mrb[0].mxu0
    %v992 = vadd.f32 0.0, %v991
    %v993 = vpop.f32.mrb[0].mxu0
    %v994 = vadd.f32 0.0, %v993
    %v995 = vpop.f32.mrb[0].mxu0
    %v996 = vadd.f32 0.0, %v995
    %997 = vmatprep.mubr.bf16.mxu0 0
    %998 = vmatmul.mubr.bf16.gmra.mrb[0].mxu0 %v405
    %v999 = vpop.f32.mrb[0].mxu0
    %v1000 = vadd.f32 0.0, %v999
    %v1001 = vpop.f32.mrb[0].mxu0
    %v1002 = vadd.f32 0.0, %v1001
    %v1003 = vpop.f32.mrb[0].mxu0
    %v1004 = vadd.f32 0.0, %v1003
    %v1005 = vpop.f32.mrb[0].mxu0
    %v1006 = vadd.f32 0.0, %v1005
    %1007 = vmatprep.mubr.bf16.mxu0 0
    %1008 = vmatmul.mubr.bf16.gmra.mrb[0].mxu0 %v408
    %v1009 = vpop.f32.mrb[0].mxu0
    %v1010 = vadd.f32 0.0, %v1009
    %v1011 = vpop.f32.mrb[0].mxu0
    %v1012 = vadd.f32 0.0, %v1011
    %v1013 = vpop.f32.mrb[0].mxu0
    %v1014 = vadd.f32 0.0, %v1013
    %v1015 = vpop.f32.mrb[0].mxu0
    %v1016 = vadd.f32 0.0, %v1015
    %1017 = vmatprep.mubr.bf16.mxu0 0
    %1018 = vmatmul.mubr.bf16.gmra.mrb[0].mxu0 %v411
    %v1019 = vpop.f32.mrb[0].mxu0
    %v1020 = vadd.f32 0.0, %v1019
    %v1021 = vpop.f32.mrb[0].mxu0
    %v1022 = vadd.f32 0.0, %v1021
    %v1023 = vpop.f32.mrb[0].mxu0
    %v1024 = vadd.f32 0.0, %v1023
    %v1025 = vpop.f32.mrb[0].mxu0
    %v1026 = vadd.f32 0.0, %v1025
    %1027 = vmatprep.mubr.bf16.mxu0 0
    %1028 = vmatmul.mubr.bf16.gmra.mrb[0].mxu0 %v414
    %v1029 = vpop.f32.mrb[0].mxu0
    %v1030 = vadd.f32 0.0, %v1029
    %v1031 = vpop.f32.mrb[0].mxu0
    %v1032 = vadd.f32 0.0, %v1031
    %v1033 = vpop.f32.mrb[0].mxu0
    %v1034 = vadd.f32 0.0, %v1033
    %v1035 = vpop.f32.mrb[0].mxu0
    %v1036 = vadd.f32 0.0, %v1035
    %1037 = vmatprep.mubr.bf16.mxu0 0
    %1038 = vmatmul.mubr.bf16.gmra.mrb[0].mxu0 %v417
    %v1039 = vpop.f32.mrb[0].mxu0
    %v1040 = vadd.f32 0.0, %v1039
    %v1041 = vpop.f32.mrb[0].mxu0
    %v1042 = vadd.f32 0.0, %v1041
    %v1043 = vpop.f32.mrb[0].mxu0
    %v1044 = vadd.f32 0.0, %v1043
    %v1045 = vpop.f32.mrb[0].mxu0
    %v1046 = vadd.f32 0.0, %v1045
    %1047 = vmatprep.mubr.bf16.mxu0 0
    %1048 = vmatmul.mubr.bf16.gmra.mrb[0].mxu0 %v420
    %v1049 = vpop.f32.mrb[0].mxu0
    %v1050 = vadd.f32 0.0, %v1049
    %v1051 = vpop.f32.mrb[0].mxu0
    %v1052 = vadd.f32 0.0, %v1051
    %v1053 = vpop.f32.mrb[0].mxu0
    %v1054 = vadd.f32 0.0, %v1053
    %v1055 = vpop.f32.mrb[0].mxu0
    %v1056 = vadd.f32 0.0, %v1055
    %1057 = vmatprep.mubr.bf16.mxu0 0
    %1058 = vmatmul.mubr.bf16.gmra.mrb[0].mxu0 %v423
    %v1059 = vpop.f32.mrb[0].mxu0
    %v1060 = vadd.f32 0.0, %v1059
    %v1061 = vpop.f32.mrb[0].mxu0
    %v1062 = vadd.f32 0.0, %v1061
    %v1063 = vpop.f32.mrb[0].mxu0
    %v1064 = vadd.f32 0.0, %v1063
    %v1065 = vpop.f32.mrb[0].mxu0
    %v1066 = vadd.f32 0.0, %v1065
    %1067 = vmatprep.mubr.bf16.mxu0 0
    %1068 = vmatmul.mubr.bf16.gmra.mrb[0].mxu0 %v426
    %v1069 = vpop.f32.mrb[0].mxu0
    %v1070 = vadd.f32 0.0, %v1069
    %v1071 = vpop.f32.mrb[0].mxu0
    %v1072 = vadd.f32 0.0, %v1071
    %v1073 = vpop.f32.mrb[0].mxu0
    %v1074 = vadd.f32 0.0, %v1073
    %v1075 = vpop.f32.mrb[0].mxu0
    %v1076 = vadd.f32 0.0, %v1075
    %1077 = vmatprep.mubr.bf16.mxu0 0
    %1078 = vmatmul.mubr.bf16.gmra.mrb[0].mxu0 %v429
    %v1079 = vpop.f32.mrb[0].mxu0
    %v1080 = vadd.f32 0.0, %v1079
    %v1081 = vpop.f32.mrb[0].mxu0
    %v1082 = vadd.f32 0.0, %v1081
    %v1083 = vpop.f32.mrb[0].mxu0
    %v1084 = vadd.f32 0.0, %v1083
    %v1085 = vpop.f32.mrb[0].mxu0
    %v1086 = vadd.f32 0.0, %v1085
    %1087 = vmatprep.mubr.bf16.mxu0 0
    %1088 = vmatmul.mubr.bf16.gmra.mrb[0].mxu0 %v432
    %v1089 = vpop.f32.mrb[0].mxu0
    %v1090 = vadd.f32 0.0, %v1089
    %v1091 = vpop.f32.mrb[0].mxu0
    %v1092 = vadd.f32 0.0, %v1091
    %v1093 = vpop.f32.mrb[0].mxu0
    %v1094 = vadd.f32 0.0, %v1093
    %v1095 = vpop.f32.mrb[0].mxu0
    %v1096 = vadd.f32 0.0, %v1095
    %1097 = vmatprep.mubr.bf16.mxu0 0
    %1098 = vmatmul.mubr.bf16.gmra.mrb[0].mxu0 %v435
    %v1099 = vpop.f32.mrb[0].mxu0
    %v1100 = vadd.f32 0.0, %v1099
    %v1101 = vpop.f32.mrb[0].mxu0
    %v1102 = vadd.f32 0.0, %v1101
    %v1103 = vpop.f32.mrb[0].mxu0
    %v1104 = vadd.f32 0.0, %v1103
    %v1105 = vpop.f32.mrb[0].mxu0
    %v1106 = vadd.f32 0.0, %v1105
    %1107 = vmatprep.mubr.bf16.mxu0 0
    %1108 = vmatmul.mubr.bf16.gmra.mrb[0].mxu0 %v438
    %v1109 = vpop.f32.mrb[0].mxu0
    %v1110 = vadd.f32 0.0, %v1109
    %v1111 = vpop.f32.mrb[0].mxu0
    %v1112 = vadd.f32 0.0, %v1111
    %v1113 = vpop.f32.mrb[0].mxu0
    %v1114 = vadd.f32 0.0, %v1113
    %v1115 = vpop.f32.mrb[0].mxu0
    %v1116 = vadd.f32 0.0, %v1115
    %1117 = vmatprep.mubr.bf16.mxu0 0
    %1118 = vmatmul.mubr.bf16.gmra.mrb[0].mxu0 %v441
    %v1119 = vpop.f32.mrb[0].mxu0
    %v1120 = vadd.f32 0.0, %v1119
    %v1121 = vpop.f32.mrb[0].mxu0
    %v1122 = vadd.f32 0.0, %v1121
    %v1123 = vpop.f32.mrb[0].mxu0
    %v1124 = vadd.f32 0.0, %v1123
    %v1125 = vpop.f32.mrb[0].mxu0
    %v1126 = vadd.f32 0.0, %v1125
    %1127 = vmatprep.mubr.bf16.mxu0 0
    %1128 = vmatmul.mubr.bf16.gmra.mrb[0].mxu0 %v444
    %v1129 = vpop.f32.mrb[0].mxu0
    %v1130 = vadd.f32 0.0, %v1129
    %v1131 = vpop.f32.mrb[0].mxu0
    %v1132 = vadd.f32 0.0, %v1131
    %v1133 = vpop.f32.mrb[0].mxu0
    %v1134 = vadd.f32 0.0, %v1133
    %v1135 = vpop.f32.mrb[0].mxu0
    %v1136 = vadd.f32 0.0, %v1135
    %1137 = vmatprep.mubr.bf16.mxu0 0
    %1138 = vmatmul.mubr.bf16.gmra.mrb[0].mxu0 %v447
    %v1139 = vpop.f32.mrb[0].mxu0
    %v1140 = vadd.f32 0.0, %v1139
    %v1141 = vpop.f32.mrb[0].mxu0
    %v1142 = vadd.f32 0.0, %v1141
    %v1143 = vpop.f32.mrb[0].mxu0
    %v1144 = vadd.f32 0.0, %v1143
    %v1145 = vpop.f32.mrb[0].mxu0
    %v1146 = vadd.f32 0.0, %v1145
    %1147 = vmatprep.mubr.bf16.mxu0 0
    %1148 = vmatmul.mubr.bf16.gmra.mrb[0].mxu0 %v450
    %v1149 = vpop.f32.mrb[0].mxu0
    %v1150 = vadd.f32 0.0, %v1149
    %v1151 = vpop.f32.mrb[0].mxu0
    %v1152 = vadd.f32 0.0, %v1151
    %v1153 = vpop.f32.mrb[0].mxu0
    %v1154 = vadd.f32 0.0, %v1153
    %v1155 = vpop.f32.mrb[0].mxu0
    %v1156 = vadd.f32 0.0, %v1155
    %1157 = vdwg.mxu0
    %v1190 = vunpack.c.l.b16 %v299
    %v1191 = vunpack.c.h.b16 %v299
    %v1192 = vunpack.c.l.b16 %v300
    %v1193 = vunpack.c.h.b16 %v300
    %v1194 = vunpack.c.l.b16 %v301
    %v1195 = vunpack.c.h.b16 %v301
    %v1196 = vunpack.c.l.b16 %v302
    %v1197 = vunpack.c.h.b16 %v302
    %v1198 = vunpack.c.l.b16 %v303
    %v1199 = vunpack.c.h.b16 %v303
    %v1200 = vunpack.c.l.b16 %v304
    %v1201 = vunpack.c.h.b16 %v304
    %v1202 = vunpack.c.l.b16 %v305
    %v1203 = vunpack.c.h.b16 %v305
    %v1204 = vunpack.c.l.b16 %v306
    %v1205 = vunpack.c.h.b16 %v306
    %v1206 = vunpack.c.l.b16 %v307
    %v1207 = vunpack.c.h.b16 %v307
    %v1208 = vunpack.c.l.b16 %v308
    %v1209 = vunpack.c.h.b16 %v308
    %v1210 = vunpack.c.l.b16 %v309
    %v1211 = vunpack.c.h.b16 %v309
    %v1212 = vunpack.c.l.b16 %v310
    %v1213 = vunpack.c.h.b16 %v310
    %v1214 = vunpack.c.l.b16 %v311
    %v1215 = vunpack.c.h.b16 %v311
    %v1216 = vunpack.c.l.b16 %v312
    %v1217 = vunpack.c.h.b16 %v312
    %v1218 = vunpack.c.l.b16 %v313
    %v1219 = vunpack.c.h.b16 %v313
    %v1220 = vunpack.c.l.b16 %v314
    %v1221 = vunpack.c.h.b16 %v314
    %v1222 = vunpack.c.l.b16 %v315
    %v1223 = vunpack.c.h.b16 %v315
    %v1224 = vunpack.c.l.b16 %v316
    %v1225 = vunpack.c.h.b16 %v316
    %v1226 = vunpack.c.l.b16 %v317
    %v1227 = vunpack.c.h.b16 %v317
    %v1228 = vunpack.c.l.b16 %v318
    %v1229 = vunpack.c.h.b16 %v318
    %v1230 = vunpack.c.l.b16 %v319
    %v1231 = vunpack.c.h.b16 %v319
    %v1232 = vunpack.c.l.b16 %v320
    %v1233 = vunpack.c.h.b16 %v320
    %v1234 = vunpack.c.l.b16 %v321
    %v1235 = vunpack.c.h.b16 %v321
    %v1236 = vunpack.c.l.b16 %v322
    %v1237 = vunpack.c.h.b16 %v322
    %v1238 = vunpack.c.l.b16 %v323
    %v1239 = vunpack.c.h.b16 %v323
    %v1240 = vunpack.c.l.b16 %v324
    %v1241 = vunpack.c.h.b16 %v324
    %v1242 = vunpack.c.l.b16 %v325
    %v1243 = vunpack.c.h.b16 %v325
    %v1244 = vunpack.c.l.b16 %v326
    %v1245 = vunpack.c.h.b16 %v326
    %v1246 = vunpack.c.l.b16 %v327
    %v1247 = vunpack.c.h.b16 %v327
    %v1248 = vunpack.c.l.b16 %v328
    %v1249 = vunpack.c.h.b16 %v328
    %v1250 = vunpack.c.l.b16 %v329
    %v1251 = vunpack.c.h.b16 %v329
    %v1252 = vunpack.c.l.b16 %v330
    %v1253 = vunpack.c.h.b16 %v330
    %v1254 = vpack.c.b16 %v1194, %v1190
    %v1255 = vpack.c.b16 %v1195, %v1191
    %v1256 = vpack.c.b16 %v1196, %v1192
    %v1257 = vpack.c.b16 %v1197, %v1193
    %v1258 = vpack.c.b16 %v1202, %v1198
    %v1259 = vpack.c.b16 %v1203, %v1199
    %v1260 = vpack.c.b16 %v1204, %v1200
    %v1261 = vpack.c.b16 %v1205, %v1201
    %v1262 = vpack.c.b16 %v1210, %v1206
    %v1263 = vpack.c.b16 %v1211, %v1207
    %v1264 = vpack.c.b16 %v1212, %v1208
    %v1265 = vpack.c.b16 %v1213, %v1209
    %v1266 = vpack.c.b16 %v1218, %v1214
    %v1267 = vpack.c.b16 %v1219, %v1215
    %v1268 = vpack.c.b16 %v1220, %v1216
    %v1269 = vpack.c.b16 %v1221, %v1217
    %v1270 = vpack.c.b16 %v1226, %v1222
    %v1271 = vpack.c.b16 %v1227, %v1223
    %v1272 = vpack.c.b16 %v1228, %v1224
    %v1273 = vpack.c.b16 %v1229, %v1225
    %v1274 = vpack.c.b16 %v1234, %v1230
    %v1275 = vpack.c.b16 %v1235, %v1231
    %v1276 = vpack.c.b16 %v1236, %v1232
    %v1277 = vpack.c.b16 %v1237, %v1233
    %v1278 = vpack.c.b16 %v1242, %v1238
    %v1279 = vpack.c.b16 %v1243, %v1239
    %v1280 = vpack.c.b16 %v1244, %v1240
    %v1281 = vpack.c.b16 %v1245, %v1241
    %v1282 = vpack.c.b16 %v1250, %v1246
    %v1283 = vpack.c.b16 %v1251, %v1247
    %v1284 = vpack.c.b16 %v1252, %v1248
    %v1285 = vpack.c.b16 %v1253, %v1249
    %1318 = vmatprep.subr.bf16.mxu0 %v1255
    %1319 = vmatpush1.bf16.msra.mxu0 %v1254
    %1320 = vmatprep.subr.bf16.mxu0 %v1259
    %1321 = vmatpush1.bf16.msra.mxu0 %v1258
    %1322 = vmatprep.subr.bf16.mxu0 %v1263
    %1323 = vmatpush1.bf16.msra.mxu0 %v1262
    %1324 = vmatprep.subr.bf16.mxu0 %v1267
    %1325 = vmatpush1.bf16.msra.mxu0 %v1266
    %1326 = vmatprep.subr.bf16.mxu0 %v1271
    %1327 = vmatpush1.bf16.msra.mxu0 %v1270
    %1328 = vmatprep.subr.bf16.mxu0 %v1275
    %1329 = vmatpush1.bf16.msra.mxu0 %v1274
    %1330 = vmatprep.subr.bf16.mxu0 %v1279
    %1331 = vmatpush1.bf16.msra.mxu0 %v1278
    %1332 = vmatprep.subr.bf16.mxu0 %v1283
    %1333 = vmatpush1.bf16.msra.mxu0 %v1282
    %1334 = vmatprep.subr.bf16.mxu0 0
    %1335 = vmatpush1.bf16.msra.mxu0 0
    %1336 = vmatprep.subr.bf16.mxu0 0
    %1337 = vmatpush1.bf16.msra.mxu0 0
    %1338 = vmatprep.subr.bf16.mxu0 0
    %1339 = vmatpush1.bf16.msra.mxu0 0
    %1340 = vmatprep.subr.bf16.mxu0 0
    %1341 = vmatpush1.bf16.msra.mxu0 0
    %1342 = vmatprep.subr.bf16.mxu0 0
    %1343 = vmatpush1.bf16.msra.mxu0 0
    %1344 = vmatprep.subr.bf16.mxu0 0
    %1345 = vmatpush1.bf16.msra.mxu0 0
    %1346 = vmatprep.subr.bf16.mxu0 0
    %1347 = vmatpush1.bf16.msra.mxu0 0
    %1348 = vmatprep.subr.bf16.mxu0 0
    %1349 = vmatpush1.bf16.msra.mxu0 0
    %1350 = vmatprep.mubr.bf16.mxu0 0
    %1351 = vmatmul.mubr.bf16.gmra.mrb[0].mxu0 %v171
    %v1352 = vpop.f32.mrb[0].mxu0
    %v1353 = vadd.f32 %v487, %v1352
    %v1354 = vpop.f32.mrb[0].mxu0
    %v1355 = vadd.f32 %v489, %v1354
    %v1356 = vpop.f32.mrb[0].mxu0
    %v1357 = vadd.f32 %v491, %v1356
    %v1358 = vpop.f32.mrb[0].mxu0
    %v1359 = vadd.f32 %v493, %v1358
    %1360 = vmatprep.mubr.bf16.mxu0 0
    %1361 = vmatmul.mubr.bf16.gmra.mrb[0].mxu0 %v172
    %v1362 = vpop.f32.mrb[0].mxu0
    %v1363 = vadd.f32 %v497, %v1362
    %v1364 = vpop.f32.mrb[0].mxu0
    %v1365 = vadd.f32 %v499, %v1364
    %v1366 = vpop.f32.mrb[0].mxu0
    %v1367 = vadd.f32 %v501, %v1366
    %v1368 = vpop.f32.mrb[0].mxu0
    %v1369 = vadd.f32 %v503, %v1368
    %1370 = vmatprep.mubr.bf16.mxu0 0
    %1371 = vmatmul.mubr.bf16.gmra.mrb[0].mxu0 %v173
    %v1372 = vpop.f32.mrb[0].mxu0
    %v1373 = vadd.f32 %v507, %v1372
    %v1374 = vpop.f32.mrb[0].mxu0
    %v1375 = vadd.f32 %v509, %v1374
    %v1376 = vpop.f32.mrb[0].mxu0
    %v1377 = vadd.f32 %v511, %v1376
    %v1378 = vpop.f32.mrb[0].mxu0
    %v1379 = vadd.f32 %v513, %v1378
    %1380 = vmatprep.mubr.bf16.mxu0 0
    %1381 = vmatmul.mubr.bf16.gmra.mrb[0].mxu0 %v174
    %v1382 = vpop.f32.mrb[0].mxu0
    %v1383 = vadd.f32 %v517, %v1382
    %v1384 = vpop.f32.mrb[0].mxu0
    %v1385 = vadd.f32 %v519, %v1384
    %v1386 = vpop.f32.mrb[0].mxu0
    %v1387 = vadd.f32 %v521, %v1386
    %v1388 = vpop.f32.mrb[0].mxu0
    %v1389 = vadd.f32 %v523, %v1388
    %1390 = vmatprep.mubr.bf16.mxu0 0
    %1391 = vmatmul.mubr.bf16.gmra.mrb[0].mxu0 %v175
    %v1392 = vpop.f32.mrb[0].mxu0
    %v1393 = vadd.f32 %v527, %v1392
    %v1394 = vpop.f32.mrb[0].mxu0
    %v1395 = vadd.f32 %v529, %v1394
    %v1396 = vpop.f32.mrb[0].mxu0
    %v1397 = vadd.f32 %v531, %v1396
    %v1398 = vpop.f32.mrb[0].mxu0
    %v1399 = vadd.f32 %v533, %v1398
    %1400 = vmatprep.mubr.bf16.mxu0 0
    %1401 = vmatmul.mubr.bf16.gmra.mrb[0].mxu0 %v176
    %v1402 = vpop.f32.mrb[0].mxu0
    %v1403 = vadd.f32 %v537, %v1402
    %v1404 = vpop.f32.mrb[0].mxu0
    %v1405 = vadd.f32 %v539, %v1404
    %v1406 = vpop.f32.mrb[0].mxu0
    %v1407 = vadd.f32 %v541, %v1406
    %v1408 = vpop.f32.mrb[0].mxu0
    %v1409 = vadd.f32 %v543, %v1408
    %1410 = vmatprep.mubr.bf16.mxu0 0
    %1411 = vmatmul.mubr.bf16.gmra.mrb[0].mxu0 %v177
    %v1412 = vpop.f32.mrb[0].mxu0
    %v1413 = vadd.f32 %v547, %v1412
    %v1414 = vpop.f32.mrb[0].mxu0
    %v1415 = vadd.f32 %v549, %v1414
    %v1416 = vpop.f32.mrb[0].mxu0
    %v1417 = vadd.f32 %v551, %v1416
    %v1418 = vpop.f32.mrb[0].mxu0
    %v1419 = vadd.f32 %v553, %v1418
    %1420 = vmatprep.mubr.bf16.mxu0 0
    %1421 = vmatmul.mubr.bf16.gmra.mrb[0].mxu0 %v178
    %v1422 = vpop.f32.mrb[0].mxu0
    %v1423 = vadd.f32 %v557, %v1422
    %v1424 = vpop.f32.mrb[0].mxu0
    %v1425 = vadd.f32 %v559, %v1424
    %v1426 = vpop.f32.mrb[0].mxu0
    %v1427 = vadd.f32 %v561, %v1426
    %v1428 = vpop.f32.mrb[0].mxu0
    %v1429 = vadd.f32 %v563, %v1428
    %1430 = vmatprep.mubr.bf16.mxu0 0
    %1431 = vmatmul.mubr.bf16.gmra.mrb[0].mxu0 %v179
    %v1432 = vpop.f32.mrb[0].mxu0
    %v1433 = vadd.f32 %v567, %v1432
    %v1434 = vpop.f32.mrb[0].mxu0
    %v1435 = vadd.f32 %v569, %v1434
    %v1436 = vpop.f32.mrb[0].mxu0
    %v1437 = vadd.f32 %v571, %v1436
    %v1438 = vpop.f32.mrb[0].mxu0
    %v1439 = vadd.f32 %v573, %v1438
    %1440 = vmatprep.mubr.bf16.mxu0 0
    %1441 = vmatmul.mubr.bf16.gmra.mrb[0].mxu0 %v180
    %v1442 = vpop.f32.mrb[0].mxu0
    %v1443 = vadd.f32 %v577, %v1442
    %v1444 = vpop.f32.mrb[0].mxu0
    %v1445 = vadd.f32 %v579, %v1444
    %v1446 = vpop.f32.mrb[0].mxu0
    %v1447 = vadd.f32 %v581, %v1446
    %v1448 = vpop.f32.mrb[0].mxu0
    %v1449 = vadd.f32 %v583, %v1448
    %1450 = vmatprep.mubr.bf16.mxu0 0
    %1451 = vmatmul.mubr.bf16.gmra.mrb[0].mxu0 %v181
    %v1452 = vpop.f32.mrb[0].mxu0
    %v1453 = vadd.f32 %v587, %v1452
    %v1454 = vpop.f32.mrb[0].mxu0
    %v1455 = vadd.f32 %v589, %v1454
    %v1456 = vpop.f32.mrb[0].mxu0
    %v1457 = vadd.f32 %v591, %v1456
    %v1458 = vpop.f32.mrb[0].mxu0
    %v1459 = vadd.f32 %v593, %v1458
    %1460 = vmatprep.mubr.bf16.mxu0 0
    %1461 = vmatmul.mubr.bf16.gmra.mrb[0].mxu0 %v182
    %v1462 = vpop.f32.mrb[0].mxu0
    %v1463 = vadd.f32 %v597, %v1462
    %v1464 = vpop.f32.mrb[0].mxu0
    %v1465 = vadd.f32 %v599, %v1464
    %v1466 = vpop.f32.mrb[0].mxu0
    %v1467 = vadd.f32 %v601, %v1466
    %v1468 = vpop.f32.mrb[0].mxu0
    %v1469 = vadd.f32 %v603, %v1468
    %1470 = vmatprep.mubr.bf16.mxu0 0
    %1471 = vmatmul.mubr.bf16.gmra.mrb[0].mxu0 %v183
    %v1472 = vpop.f32.mrb[0].mxu0
    %v1473 = vadd.f32 %v607, %v1472
    %v1474 = vpop.f32.mrb[0].mxu0
    %v1475 = vadd.f32 %v609, %v1474
    %v1476 = vpop.f32.mrb[0].mxu0
    %v1477 = vadd.f32 %v611, %v1476
    %v1478 = vpop.f32.mrb[0].mxu0
    %v1479 = vadd.f32 %v613, %v1478
    %1480 = vmatprep.mubr.bf16.mxu0 0
    %1481 = vmatmul.mubr.bf16.gmra.mrb[0].mxu0 %v184
    %v1482 = vpop.f32.mrb[0].mxu0
    %v1483 = vadd.f32 %v617, %v1482
    %v1484 = vpop.f32.mrb[0].mxu0
    %v1485 = vadd.f32 %v619, %v1484
    %v1486 = vpop.f32.mrb[0].mxu0
    %v1487 = vadd.f32 %v621, %v1486
    %v1488 = vpop.f32.mrb[0].mxu0
    %v1489 = vadd.f32 %v623, %v1488
    %1490 = vmatprep.mubr.bf16.mxu0 0
    %1491 = vmatmul.mubr.bf16.gmra.mrb[0].mxu0 %v185
    %v1492 = vpop.f32.mrb[0].mxu0
    %v1493 = vadd.f32 %v627, %v1492
    %v1494 = vpop.f32.mrb[0].mxu0
    %v1495 = vadd.f32 %v629, %v1494
    %v1496 = vpop.f32.mrb[0].mxu0
    %v1497 = vadd.f32 %v631, %v1496
    %v1498 = vpop.f32.mrb[0].mxu0
    %v1499 = vadd.f32 %v633, %v1498
    %1500 = vmatprep.mubr.bf16.mxu0 0
    %1501 = vmatmul.mubr.bf16.gmra.mrb[0].mxu0 %v186
    %v1502 = vpop.f32.mrb[0].mxu0
    %v1503 = vadd.f32 %v637, %v1502
    %v1504 = vpop.f32.mrb[0].mxu0
    %v1505 = vadd.f32 %v639, %v1504
    %v1506 = vpop.f32.mrb[0].mxu0
    %v1507 = vadd.f32 %v641, %v1506
    %v1508 = vpop.f32.mrb[0].mxu0
    %v1509 = vadd.f32 %v643, %v1508
    %1510 = vmatprep.mubr.bf16.mxu0 0
    %1511 = vmatmul.mubr.bf16.gmra.mrb[0].mxu0 %v187
    %v1512 = vpop.f32.mrb[0].mxu0
    %v1513 = vadd.f32 %v647, %v1512
    %v1514 = vpop.f32.mrb[0].mxu0
    %v1515 = vadd.f32 %v649, %v1514
    %v1516 = vpop.f32.mrb[0].mxu0
    %v1517 = vadd.f32 %v651, %v1516
    %v1518 = vpop.f32.mrb[0].mxu0
    %v1519 = vadd.f32 %v653, %v1518
    %1520 = vmatprep.mubr.bf16.mxu0 0
    %1521 = vmatmul.mubr.bf16.gmra.mrb[0].mxu0 %v188
    %v1522 = vpop.f32.mrb[0].mxu0
    %v1523 = vadd.f32 %v657, %v1522
    %v1524 = vpop.f32.mrb[0].mxu0
    %v1525 = vadd.f32 %v659, %v1524
    %v1526 = vpop.f32.mrb[0].mxu0
    %v1527 = vadd.f32 %v661, %v1526
    %v1528 = vpop.f32.mrb[0].mxu0
    %v1529 = vadd.f32 %v663, %v1528
    %1530 = vmatprep.mubr.bf16.mxu0 0
    %1531 = vmatmul.mubr.bf16.gmra.mrb[0].mxu0 %v189
    %v1532 = vpop.f32.mrb[0].mxu0
    %v1533 = vadd.f32 %v667, %v1532
    %v1534 = vpop.f32.mrb[0].mxu0
    %v1535 = vadd.f32 %v669, %v1534
    %v1536 = vpop.f32.mrb[0].mxu0
    %v1537 = vadd.f32 %v671, %v1536
    %v1538 = vpop.f32.mrb[0].mxu0
    %v1539 = vadd.f32 %v673, %v1538
    %1540 = vmatprep.mubr.bf16.mxu0 0
    %1541 = vmatmul.mubr.bf16.gmra.mrb[0].mxu0 %v190
    %v1542 = vpop.f32.mrb[0].mxu0
    %v1543 = vadd.f32 %v677, %v1542
    %v1544 = vpop.f32.mrb[0].mxu0
    %v1545 = vadd.f32 %v679, %v1544
    %v1546 = vpop.f32.mrb[0].mxu0
    %v1547 = vadd.f32 %v681, %v1546
    %v1548 = vpop.f32.mrb[0].mxu0
    %v1549 = vadd.f32 %v683, %v1548
    %1550 = vmatprep.mubr.bf16.mxu0 0
    %1551 = vmatmul.mubr.bf16.gmra.mrb[0].mxu0 %v191
    %v1552 = vpop.f32.mrb[0].mxu0
    %v1553 = vadd.f32 %v687, %v1552
    %v1554 = vpop.f32.mrb[0].mxu0
    %v1555 = vadd.f32 %v689, %v1554
    %v1556 = vpop.f32.mrb[0].mxu0
    %v1557 = vadd.f32 %v691, %v1556
    %v1558 = vpop.f32.mrb[0].mxu0
    %v1559 = vadd.f32 %v693, %v1558
    %1560 = vmatprep.mubr.bf16.mxu0 0
    %1561 = vmatmul.mubr.bf16.gmra.mrb[0].mxu0 %v192
    %v1562 = vpop.f32.mrb[0].mxu0
    %v1563 = vadd.f32 %v697, %v1562
    %v1564 = vpop.f32.mrb[0].mxu0
    %v1565 = vadd.f32 %v699, %v1564
    %v1566 = vpop.f32.mrb[0].mxu0
    %v1567 = vadd.f32 %v701, %v1566
    %v1568 = vpop.f32.mrb[0].mxu0
    %v1569 = vadd.f32 %v703, %v1568
    %1570 = vmatprep.mubr.bf16.mxu0 0
    %1571 = vmatmul.mubr.bf16.gmra.mrb[0].mxu0 %v193
    %v1572 = vpop.f32.mrb[0].mxu0
    %v1573 = vadd.f32 %v707, %v1572
    %v1574 = vpop.f32.mrb[0].mxu0
    %v1575 = vadd.f32 %v709, %v1574
    %v1576 = vpop.f32.mrb[0].mxu0
    %v1577 = vadd.f32 %v711, %v1576
    %v1578 = vpop.f32.mrb[0].mxu0
    %v1579 = vadd.f32 %v713, %v1578
    %1580 = vmatprep.mubr.bf16.mxu0 0
    %1581 = vmatmul.mubr.bf16.gmra.mrb[0].mxu0 %v194
    %v1582 = vpop.f32.mrb[0].mxu0
    %v1583 = vadd.f32 %v717, %v1582
    %v1584 = vpop.f32.mrb[0].mxu0
    %v1585 = vadd.f32 %v719, %v1584
    %v1586 = vpop.f32.mrb[0].mxu0
    %v1587 = vadd.f32 %v721, %v1586
    %v1588 = vpop.f32.mrb[0].mxu0
    %v1589 = vadd.f32 %v723, %v1588
    %1590 = vmatprep.mubr.bf16.mxu0 0
    %1591 = vmatmul.mubr.bf16.gmra.mrb[0].mxu0 %v195
    %v1592 = vpop.f32.mrb[0].mxu0
    %v1593 = vadd.f32 %v727, %v1592
    %v1594 = vpop.f32.mrb[0].mxu0
    %v1595 = vadd.f32 %v729, %v1594
    %v1596 = vpop.f32.mrb[0].mxu0
    %v1597 = vadd.f32 %v731, %v1596
    %v1598 = vpop.f32.mrb[0].mxu0
    %v1599 = vadd.f32 %v733, %v1598
    %1600 = vmatprep.mubr.bf16.mxu0 0
    %1601 = vmatmul.mubr.bf16.gmra.mrb[0].mxu0 %v196
    %v1602 = vpop.f32.mrb[0].mxu0
    %v1603 = vadd.f32 %v737, %v1602
    %v1604 = vpop.f32.mrb[0].mxu0
    %v1605 = vadd.f32 %v739, %v1604
    %v1606 = vpop.f32.mrb[0].mxu0
    %v1607 = vadd.f32 %v741, %v1606
    %v1608 = vpop.f32.mrb[0].mxu0
    %v1609 = vadd.f32 %v743, %v1608
    %1610 = vmatprep.mubr.bf16.mxu0 0
    %1611 = vmatmul.mubr.bf16.gmra.mrb[0].mxu0 %v197
    %v1612 = vpop.f32.mrb[0].mxu0
    %v1613 = vadd.f32 %v747, %v1612
    %v1614 = vpop.f32.mrb[0].mxu0
    %v1615 = vadd.f32 %v749, %v1614
    %v1616 = vpop.f32.mrb[0].mxu0
    %v1617 = vadd.f32 %v751, %v1616
    %v1618 = vpop.f32.mrb[0].mxu0
    %v1619 = vadd.f32 %v753, %v1618
    %1620 = vmatprep.mubr.bf16.mxu0 0
    %1621 = vmatmul.mubr.bf16.gmra.mrb[0].mxu0 %v198
    %v1622 = vpop.f32.mrb[0].mxu0
    %v1623 = vadd.f32 %v757, %v1622
    %v1624 = vpop.f32.mrb[0].mxu0
    %v1625 = vadd.f32 %v759, %v1624
    %v1626 = vpop.f32.mrb[0].mxu0
    %v1627 = vadd.f32 %v761, %v1626
    %v1628 = vpop.f32.mrb[0].mxu0
    %v1629 = vadd.f32 %v763, %v1628
    %1630 = vmatprep.mubr.bf16.mxu0 0
    %1631 = vmatmul.mubr.bf16.gmra.mrb[0].mxu0 %v199
    %v1632 = vpop.f32.mrb[0].mxu0
    %v1633 = vadd.f32 %v767, %v1632
    %v1634 = vpop.f32.mrb[0].mxu0
    %v1635 = vadd.f32 %v769, %v1634
    %v1636 = vpop.f32.mrb[0].mxu0
    %v1637 = vadd.f32 %v771, %v1636
    %v1638 = vpop.f32.mrb[0].mxu0
    %v1639 = vadd.f32 %v773, %v1638
    %1640 = vmatprep.mubr.bf16.mxu0 0
    %1641 = vmatmul.mubr.bf16.gmra.mrb[0].mxu0 %v200
    %v1642 = vpop.f32.mrb[0].mxu0
    %v1643 = vadd.f32 %v777, %v1642
    %v1644 = vpop.f32.mrb[0].mxu0
    %v1645 = vadd.f32 %v779, %v1644
    %v1646 = vpop.f32.mrb[0].mxu0
    %v1647 = vadd.f32 %v781, %v1646
    %v1648 = vpop.f32.mrb[0].mxu0
    %v1649 = vadd.f32 %v783, %v1648
    %1650 = vmatprep.mubr.bf16.mxu0 0
    %1651 = vmatmul.mubr.bf16.gmra.mrb[0].mxu0 %v201
    %v1652 = vpop.f32.mrb[0].mxu0
    %v1653 = vadd.f32 %v787, %v1652
    %v1654 = vpop.f32.mrb[0].mxu0
    %v1655 = vadd.f32 %v789, %v1654
    %v1656 = vpop.f32.mrb[0].mxu0
    %v1657 = vadd.f32 %v791, %v1656
    %v1658 = vpop.f32.mrb[0].mxu0
    %v1659 = vadd.f32 %v793, %v1658
    %1660 = vmatprep.mubr.bf16.mxu0 0
    %1661 = vmatmul.mubr.bf16.gmra.mrb[0].mxu0 %v202
    %v1662 = vpop.f32.mrb[0].mxu0
    %v1663 = vadd.f32 %v797, %v1662
    %v1664 = vpop.f32.mrb[0].mxu0
    %v1665 = vadd.f32 %v799, %v1664
    %v1666 = vpop.f32.mrb[0].mxu0
    %v1667 = vadd.f32 %v801, %v1666
    %v1668 = vpop.f32.mrb[0].mxu0
    %v1669 = vadd.f32 %v803, %v1668
    %1670 = vdwg.mxu0
    %1671 = vmatprep.subr.bf16.mxu0 %v1257
    %1672 = vmatpush1.bf16.msra.mxu0 %v1256
    %1673 = vmatprep.subr.bf16.mxu0 %v1261
    %1674 = vmatpush1.bf16.msra.mxu0 %v1260
    %1675 = vmatprep.subr.bf16.mxu0 %v1265
    %1676 = vmatpush1.bf16.msra.mxu0 %v1264
    %1677 = vmatprep.subr.bf16.mxu0 %v1269
    %1678 = vmatpush1.bf16.msra.mxu0 %v1268
    %1679 = vmatprep.subr.bf16.mxu0 %v1273
    %1680 = vmatpush1.bf16.msra.mxu0 %v1272
    %1681 = vmatprep.subr.bf16.mxu0 %v1277
    %1682 = vmatpush1.bf16.msra.mxu0 %v1276
    %1683 = vmatprep.subr.bf16.mxu0 %v1281
    %1684 = vmatpush1.bf16.msra.mxu0 %v1280
    %1685 = vmatprep.subr.bf16.mxu0 %v1285
    %1686 = vmatpush1.bf16.msra.mxu0 %v1284
    %1687 = vmatprep.subr.bf16.mxu0 0
    %1688 = vmatpush1.bf16.msra.mxu0 0
    %1689 = vmatprep.subr.bf16.mxu0 0
    %1690 = vmatpush1.bf16.msra.mxu0 0
    %1691 = vmatprep.subr.bf16.mxu0 0
    %1692 = vmatpush1.bf16.msra.mxu0 0
    %1693 = vmatprep.subr.bf16.mxu0 0
    %1694 = vmatpush1.bf16.msra.mxu0 0
    %1695 = vmatprep.subr.bf16.mxu0 0
    %1696 = vmatpush1.bf16.msra.mxu0 0
    %1697 = vmatprep.subr.bf16.mxu0 0
    %1698 = vmatpush1.bf16.msra.mxu0 0
    %1699 = vmatprep.subr.bf16.mxu0 0
    %1700 = vmatpush1.bf16.msra.mxu0 0
    %1701 = vmatprep.subr.bf16.mxu0 0
    %1702 = vmatpush1.bf16.msra.mxu0 0
    %1703 = vmatprep.mubr.bf16.mxu0 0
    %1704 = vmatmul.mubr.bf16.gmra.mrb[0].mxu0 %v171
    %v1705 = vpop.f32.mrb[0].mxu0
    %v1706 = vadd.f32 %v840, %v1705
    %v1707 = vpop.f32.mrb[0].mxu0
    %v1708 = vadd.f32 %v842, %v1707
    %v1709 = vpop.f32.mrb[0].mxu0
    %v1710 = vadd.f32 %v844, %v1709
    %v1711 = vpop.f32.mrb[0].mxu0
    %v1712 = vadd.f32 %v846, %v1711
    %1713 = vmatprep.mubr.bf16.mxu0 0
    %1714 = vmatmul.mubr.bf16.gmra.mrb[0].mxu0 %v172
    %v1715 = vpop.f32.mrb[0].mxu0
    %v1716 = vadd.f32 %v850, %v1715
    %v1717 = vpop.f32.mrb[0].mxu0
    %v1718 = vadd.f32 %v852, %v1717
    %v1719 = vpop.f32.mrb[0].mxu0
    %v1720 = vadd.f32 %v854, %v1719
    %v1721 = vpop.f32.mrb[0].mxu0
    %v1722 = vadd.f32 %v856, %v1721
    %1723 = vmatprep.mubr.bf16.mxu0 0
    %1724 = vmatmul.mubr.bf16.gmra.mrb[0].mxu0 %v173
    %v1725 = vpop.f32.mrb[0].mxu0
    %v1726 = vadd.f32 %v860, %v1725
    %v1727 = vpop.f32.mrb[0].mxu0
    %v1728 = vadd.f32 %v862, %v1727
    %v1729 = vpop.f32.mrb[0].mxu0
    %v1730 = vadd.f32 %v864, %v1729
    %v1731 = vpop.f32.mrb[0].mxu0
    %v1732 = vadd.f32 %v866, %v1731
    %1733 = vmatprep.mubr.bf16.mxu0 0
    %1734 = vmatmul.mubr.bf16.gmra.mrb[0].mxu0 %v174
    %v1735 = vpop.f32.mrb[0].mxu0
    %v1736 = vadd.f32 %v870, %v1735
    %v1737 = vpop.f32.mrb[0].mxu0
    %v1738 = vadd.f32 %v872, %v1737
    %v1739 = vpop.f32.mrb[0].mxu0
    %v1740 = vadd.f32 %v874, %v1739
    %v1741 = vpop.f32.mrb[0].mxu0
    %v1742 = vadd.f32 %v876, %v1741
    %1743 = vmatprep.mubr.bf16.mxu0 0
    %1744 = vmatmul.mubr.bf16.gmra.mrb[0].mxu0 %v175
    %v1745 = vpop.f32.mrb[0].mxu0
    %v1746 = vadd.f32 %v880, %v1745
    %v1747 = vpop.f32.mrb[0].mxu0
    %v1748 = vadd.f32 %v882, %v1747
    %v1749 = vpop.f32.mrb[0].mxu0
    %v1750 = vadd.f32 %v884, %v1749
    %v1751 = vpop.f32.mrb[0].mxu0
    %v1752 = vadd.f32 %v886, %v1751
    %1753 = vmatprep.mubr.bf16.mxu0 0
    %1754 = vmatmul.mubr.bf16.gmra.mrb[0].mxu0 %v176
    %v1755 = vpop.f32.mrb[0].mxu0
    %v1756 = vadd.f32 %v890, %v1755
    %v1757 = vpop.f32.mrb[0].mxu0
    %v1758 = vadd.f32 %v892, %v1757
    %v1759 = vpop.f32.mrb[0].mxu0
    %v1760 = vadd.f32 %v894, %v1759
    %v1761 = vpop.f32.mrb[0].mxu0
    %v1762 = vadd.f32 %v896, %v1761
    %1763 = vmatprep.mubr.bf16.mxu0 0
    %1764 = vmatmul.mubr.bf16.gmra.mrb[0].mxu0 %v177
    %v1765 = vpop.f32.mrb[0].mxu0
    %v1766 = vadd.f32 %v900, %v1765
    %v1767 = vpop.f32.mrb[0].mxu0
    %v1768 = vadd.f32 %v902, %v1767
    %v1769 = vpop.f32.mrb[0].mxu0
    %v1770 = vadd.f32 %v904, %v1769
    %v1771 = vpop.f32.mrb[0].mxu0
    %v1772 = vadd.f32 %v906, %v1771
    %1773 = vmatprep.mubr.bf16.mxu0 0
    %1774 = vmatmul.mubr.bf16.gmra.mrb[0].mxu0 %v178
    %v1775 = vpop.f32.mrb[0].mxu0
    %v1776 = vadd.f32 %v910, %v1775
    %v1777 = vpop.f32.mrb[0].mxu0
    %v1778 = vadd.f32 %v912, %v1777
    %v1779 = vpop.f32.mrb[0].mxu0
    %v1780 = vadd.f32 %v914, %v1779
    %v1781 = vpop.f32.mrb[0].mxu0
    %v1782 = vadd.f32 %v916, %v1781
    %1783 = vmatprep.mubr.bf16.mxu0 0
    %1784 = vmatmul.mubr.bf16.gmra.mrb[0].mxu0 %v179
    %v1785 = vpop.f32.mrb[0].mxu0
    %v1786 = vadd.f32 %v920, %v1785
    %v1787 = vpop.f32.mrb[0].mxu0
    %v1788 = vadd.f32 %v922, %v1787
    %v1789 = vpop.f32.mrb[0].mxu0
    %v1790 = vadd.f32 %v924, %v1789
    %v1791 = vpop.f32.mrb[0].mxu0
    %v1792 = vadd.f32 %v926, %v1791
    %1793 = vmatprep.mubr.bf16.mxu0 0
    %1794 = vmatmul.mubr.bf16.gmra.mrb[0].mxu0 %v180
    %v1795 = vpop.f32.mrb[0].mxu0
    %v1796 = vadd.f32 %v930, %v1795
    %v1797 = vpop.f32.mrb[0].mxu0
    %v1798 = vadd.f32 %v932, %v1797
    %v1799 = vpop.f32.mrb[0].mxu0
    %v1800 = vadd.f32 %v934, %v1799
    %v1801 = vpop.f32.mrb[0].mxu0
    %v1802 = vadd.f32 %v936, %v1801
    %1803 = vmatprep.mubr.bf16.mxu0 0
    %1804 = vmatmul.mubr.bf16.gmra.mrb[0].mxu0 %v181
    %v1805 = vpop.f32.mrb[0].mxu0
    %v1806 = vadd.f32 %v940, %v1805
    %v1807 = vpop.f32.mrb[0].mxu0
    %v1808 = vadd.f32 %v942, %v1807
    %v1809 = vpop.f32.mrb[0].mxu0
    %v1810 = vadd.f32 %v944, %v1809
    %v1811 = vpop.f32.mrb[0].mxu0
    %v1812 = vadd.f32 %v946, %v1811
    %1813 = vmatprep.mubr.bf16.mxu0 0
    %1814 = vmatmul.mubr.bf16.gmra.mrb[0].mxu0 %v182
    %v1815 = vpop.f32.mrb[0].mxu0
    %v1816 = vadd.f32 %v950, %v1815
    %v1817 = vpop.f32.mrb[0].mxu0
    %v1818 = vadd.f32 %v952, %v1817
    %v1819 = vpop.f32.mrb[0].mxu0
    %v1820 = vadd.f32 %v954, %v1819
    %v1821 = vpop.f32.mrb[0].mxu0
    %v1822 = vadd.f32 %v956, %v1821
    %1823 = vmatprep.mubr.bf16.mxu0 0
    %1824 = vmatmul.mubr.bf16.gmra.mrb[0].mxu0 %v183
    %v1825 = vpop.f32.mrb[0].mxu0
    %v1826 = vadd.f32 %v960, %v1825
    %v1827 = vpop.f32.mrb[0].mxu0
    %v1828 = vadd.f32 %v962, %v1827
    %v1829 = vpop.f32.mrb[0].mxu0
    %v1830 = vadd.f32 %v964, %v1829
    %v1831 = vpop.f32.mrb[0].mxu0
    %v1832 = vadd.f32 %v966, %v1831
    %1833 = vmatprep.mubr.bf16.mxu0 0
    %1834 = vmatmul.mubr.bf16.gmra.mrb[0].mxu0 %v184
    %v1835 = vpop.f32.mrb[0].mxu0
    %v1836 = vadd.f32 %v970, %v1835
    %v1837 = vpop.f32.mrb[0].mxu0
    %v1838 = vadd.f32 %v972, %v1837
    %v1839 = vpop.f32.mrb[0].mxu0
    %v1840 = vadd.f32 %v974, %v1839
    %v1841 = vpop.f32.mrb[0].mxu0
    %v1842 = vadd.f32 %v976, %v1841
    %1843 = vmatprep.mubr.bf16.mxu0 0
    %1844 = vmatmul.mubr.bf16.gmra.mrb[0].mxu0 %v185
    %v1845 = vpop.f32.mrb[0].mxu0
    %v1846 = vadd.f32 %v980, %v1845
    %v1847 = vpop.f32.mrb[0].mxu0
    %v1848 = vadd.f32 %v982, %v1847
    %v1849 = vpop.f32.mrb[0].mxu0
    %v1850 = vadd.f32 %v984, %v1849
    %v1851 = vpop.f32.mrb[0].mxu0
    %v1852 = vadd.f32 %v986, %v1851
    %1853 = vmatprep.mubr.bf16.mxu0 0
    %1854 = vmatmul.mubr.bf16.gmra.mrb[0].mxu0 %v186
    %v1855 = vpop.f32.mrb[0].mxu0
    %v1856 = vadd.f32 %v990, %v1855
    %v1857 = vpop.f32.mrb[0].mxu0
    %v1858 = vadd.f32 %v992, %v1857
    %v1859 = vpop.f32.mrb[0].mxu0
    %v1860 = vadd.f32 %v994, %v1859
    %v1861 = vpop.f32.mrb[0].mxu0
    %v1862 = vadd.f32 %v996, %v1861
    %1863 = vmatprep.mubr.bf16.mxu0 0
    %1864 = vmatmul.mubr.bf16.gmra.mrb[0].mxu0 %v187
    %v1865 = vpop.f32.mrb[0].mxu0
    %v1866 = vadd.f32 %v1000, %v1865
    %v1867 = vpop.f32.mrb[0].mxu0
    %v1868 = vadd.f32 %v1002, %v1867
    %v1869 = vpop.f32.mrb[0].mxu0
    %v1870 = vadd.f32 %v1004, %v1869
    %v1871 = vpop.f32.mrb[0].mxu0
    %v1872 = vadd.f32 %v1006, %v1871
    %1873 = vmatprep.mubr.bf16.mxu0 0
    %1874 = vmatmul.mubr.bf16.gmra.mrb[0].mxu0 %v188
    %v1875 = vpop.f32.mrb[0].mxu0
    %v1876 = vadd.f32 %v1010, %v1875
    %v1877 = vpop.f32.mrb[0].mxu0
    %v1878 = vadd.f32 %v1012, %v1877
    %v1879 = vpop.f32.mrb[0].mxu0
    %v1880 = vadd.f32 %v1014, %v1879
    %v1881 = vpop.f32.mrb[0].mxu0
    %v1882 = vadd.f32 %v1016, %v1881
    %1883 = vmatprep.mubr.bf16.mxu0 0
    %1884 = vmatmul.mubr.bf16.gmra.mrb[0].mxu0 %v189
    %v1885 = vpop.f32.mrb[0].mxu0
    %v1886 = vadd.f32 %v1020, %v1885
    %v1887 = vpop.f32.mrb[0].mxu0
    %v1888 = vadd.f32 %v1022, %v1887
    %v1889 = vpop.f32.mrb[0].mxu0
    %v1890 = vadd.f32 %v1024, %v1889
    %v1891 = vpop.f32.mrb[0].mxu0
    %v1892 = vadd.f32 %v1026, %v1891
    %1893 = vmatprep.mubr.bf16.mxu0 0
    %1894 = vmatmul.mubr.bf16.gmra.mrb[0].mxu0 %v190
    %v1895 = vpop.f32.mrb[0].mxu0
    %v1896 = vadd.f32 %v1030, %v1895
    %v1897 = vpop.f32.mrb[0].mxu0
    %v1898 = vadd.f32 %v1032, %v1897
    %v1899 = vpop.f32.mrb[0].mxu0
    %v1900 = vadd.f32 %v1034, %v1899
    %v1901 = vpop.f32.mrb[0].mxu0
    %v1902 = vadd.f32 %v1036, %v1901
    %1903 = vmatprep.mubr.bf16.mxu0 0
    %1904 = vmatmul.mubr.bf16.gmra.mrb[0].mxu0 %v191
    %v1905 = vpop.f32.mrb[0].mxu0
    %v1906 = vadd.f32 %v1040, %v1905
    %v1907 = vpop.f32.mrb[0].mxu0
    %v1908 = vadd.f32 %v1042, %v1907
    %v1909 = vpop.f32.mrb[0].mxu0
    %v1910 = vadd.f32 %v1044, %v1909
    %v1911 = vpop.f32.mrb[0].mxu0
    %v1912 = vadd.f32 %v1046, %v1911
    %1913 = vmatprep.mubr.bf16.mxu0 0
    %1914 = vmatmul.mubr.bf16.gmra.mrb[0].mxu0 %v192
    %v1915 = vpop.f32.mrb[0].mxu0
    %v1916 = vadd.f32 %v1050, %v1915
    %v1917 = vpop.f32.mrb[0].mxu0
    %v1918 = vadd.f32 %v1052, %v1917
    %v1919 = vpop.f32.mrb[0].mxu0
    %v1920 = vadd.f32 %v1054, %v1919
    %v1921 = vpop.f32.mrb[0].mxu0
    %v1922 = vadd.f32 %v1056, %v1921
    %1923 = vmatprep.mubr.bf16.mxu0 0
    %1924 = vmatmul.mubr.bf16.gmra.mrb[0].mxu0 %v193
    %v1925 = vpop.f32.mrb[0].mxu0
    %v1926 = vadd.f32 %v1060, %v1925
    %v1927 = vpop.f32.mrb[0].mxu0
    %v1928 = vadd.f32 %v1062, %v1927
    %v1929 = vpop.f32.mrb[0].mxu0
    %v1930 = vadd.f32 %v1064, %v1929
    %v1931 = vpop.f32.mrb[0].mxu0
    %v1932 = vadd.f32 %v1066, %v1931
    %1933 = vmatprep.mubr.bf16.mxu0 0
    %1934 = vmatmul.mubr.bf16.gmra.mrb[0].mxu0 %v194
    %v1935 = vpop.f32.mrb[0].mxu0
    %v1936 = vadd.f32 %v1070, %v1935
    %v1937 = vpop.f32.mrb[0].mxu0
    %v1938 = vadd.f32 %v1072, %v1937
    %v1939 = vpop.f32.mrb[0].mxu0
    %v1940 = vadd.f32 %v1074, %v1939
    %v1941 = vpop.f32.mrb[0].mxu0
    %v1942 = vadd.f32 %v1076, %v1941
    %1943 = vmatprep.mubr.bf16.mxu0 0
    %1944 = vmatmul.mubr.bf16.gmra.mrb[0].mxu0 %v195
    %v1945 = vpop.f32.mrb[0].mxu0
    %v1946 = vadd.f32 %v1080, %v1945
    %v1947 = vpop.f32.mrb[0].mxu0
    %v1948 = vadd.f32 %v1082, %v1947
    %v1949 = vpop.f32.mrb[0].mxu0
    %v1950 = vadd.f32 %v1084, %v1949
    %v1951 = vpop.f32.mrb[0].mxu0
    %v1952 = vadd.f32 %v1086, %v1951
    %1953 = vmatprep.mubr.bf16.mxu0 0
    %1954 = vmatmul.mubr.bf16.gmra.mrb[0].mxu0 %v196
    %v1955 = vpop.f32.mrb[0].mxu0
    %v1956 = vadd.f32 %v1090, %v1955
    %v1957 = vpop.f32.mrb[0].mxu0
    %v1958 = vadd.f32 %v1092, %v1957
    %v1959 = vpop.f32.mrb[0].mxu0
    %v1960 = vadd.f32 %v1094, %v1959
    %v1961 = vpop.f32.mrb[0].mxu0
    %v1962 = vadd.f32 %v1096, %v1961
    %1963 = vmatprep.mubr.bf16.mxu0 0
    %1964 = vmatmul.mubr.bf16.gmra.mrb[0].mxu0 %v197
    %v1965 = vpop.f32.mrb[0].mxu0
    %v1966 = vadd.f32 %v1100, %v1965
    %v1967 = vpop.f32.mrb[0].mxu0
    %v1968 = vadd.f32 %v1102, %v1967
    %v1969 = vpop.f32.mrb[0].mxu0
    %v1970 = vadd.f32 %v1104, %v1969
    %v1971 = vpop.f32.mrb[0].mxu0
    %v1972 = vadd.f32 %v1106, %v1971
    %1973 = vmatprep.mubr.bf16.mxu0 0
    %1974 = vmatmul.mubr.bf16.gmra.mrb[0].mxu0 %v198
    %v1975 = vpop.f32.mrb[0].mxu0
    %v1976 = vadd.f32 %v1110, %v1975
    %v1977 = vpop.f32.mrb[0].mxu0
    %v1978 = vadd.f32 %v1112, %v1977
    %v1979 = vpop.f32.mrb[0].mxu0
    %v1980 = vadd.f32 %v1114, %v1979
    %v1981 = vpop.f32.mrb[0].mxu0
    %v1982 = vadd.f32 %v1116, %v1981
    %1983 = vmatprep.mubr.bf16.mxu0 0
    %1984 = vmatmul.mubr.bf16.gmra.mrb[0].mxu0 %v199
    %v1985 = vpop.f32.mrb[0].mxu0
    %v1986 = vadd.f32 %v1120, %v1985
    %v1987 = vpop.f32.mrb[0].mxu0
    %v1988 = vadd.f32 %v1122, %v1987
    %v1989 = vpop.f32.mrb[0].mxu0
    %v1990 = vadd.f32 %v1124, %v1989
    %v1991 = vpop.f32.mrb[0].mxu0
    %v1992 = vadd.f32 %v1126, %v1991
    %1993 = vmatprep.mubr.bf16.mxu0 0
    %1994 = vmatmul.mubr.bf16.gmra.mrb[0].mxu0 %v200
    %v1995 = vpop.f32.mrb[0].mxu0
    %v1996 = vadd.f32 %v1130, %v1995
    %v1997 = vpop.f32.mrb[0].mxu0
    %v1998 = vadd.f32 %v1132, %v1997
    %v1999 = vpop.f32.mrb[0].mxu0
    %v2000 = vadd.f32 %v1134, %v1999
    %v2001 = vpop.f32.mrb[0].mxu0
    %v2002 = vadd.f32 %v1136, %v2001
    %2003 = vmatprep.mubr.bf16.mxu0 0
    %2004 = vmatmul.mubr.bf16.gmra.mrb[0].mxu0 %v201
    %v2005 = vpop.f32.mrb[0].mxu0
    %v2006 = vadd.f32 %v1140, %v2005
    %v2007 = vpop.f32.mrb[0].mxu0
    %v2008 = vadd.f32 %v1142, %v2007
    %v2009 = vpop.f32.mrb[0].mxu0
    %v2010 = vadd.f32 %v1144, %v2009
    %v2011 = vpop.f32.mrb[0].mxu0
    %v2012 = vadd.f32 %v1146, %v2011
    %2013 = vmatprep.mubr.bf16.mxu0 0
    %2014 = vmatmul.mubr.bf16.gmra.mrb[0].mxu0 %v202
    %v2015 = vpop.f32.mrb[0].mxu0
    %v2016 = vadd.f32 %v1150, %v2015
    %v2017 = vpop.f32.mrb[0].mxu0
    %v2018 = vadd.f32 %v1152, %v2017
    %v2019 = vpop.f32.mrb[0].mxu0
    %v2020 = vadd.f32 %v1154, %v2019
    %v2021 = vpop.f32.mrb[0].mxu0
    %v2022 = vadd.f32 %v1156, %v2021
    %2023 = vdwg.mxu0
    %v2024 = vld [vmem:[%s5] sm:$0xf]
    %v2026 = vlaneseq
    %v2027 = vshrl.u32 %v2026, 7
    %v2028 = vsub.s32 0, %v2027
    %v2029 = vrot.slane %v2024, %v2028
    %v2030 = vlaneseq
    %v2031 = vshrl.u32 %v2030, 7
    %v2032 = vsub.s32 1, %v2031
    %v2033 = vrot.slane %v2024, %v2032
    %v2034 = vlaneseq
    %v2035 = vshrl.u32 %v2034, 7
    %v2036 = vsub.s32 2, %v2035
    %v2037 = vrot.slane %v2024, %v2036
    %v2038 = vlaneseq
    %v2039 = vshrl.u32 %v2038, 7
    %v2040 = vsub.s32 3, %v2039
    %v2041 = vrot.slane %v2024, %v2040
    %v2046 = vadd.f32 %v1353, %v2029
    %v2047 = vadd.f32 %v1355, %v2033
    %v2048 = vadd.f32 %v1706, %v2037
    %v2049 = vadd.f32 %v1708, %v2041
    %v2050 = vadd.f32 %v1357, %v2029
    %v2051 = vadd.f32 %v1359, %v2033
    %v2052 = vadd.f32 %v1710, %v2037
    %v2053 = vadd.f32 %v1712, %v2041
    %v2054 = vadd.f32 %v1363, %v2029
    %v2055 = vadd.f32 %v1365, %v2033
    %v2056 = vadd.f32 %v1716, %v2037
    %v2057 = vadd.f32 %v1718, %v2041
    %v2058 = vadd.f32 %v1367, %v2029
    %v2059 = vadd.f32 %v1369, %v2033
    %v2060 = vadd.f32 %v1720, %v2037
    %v2061 = vadd.f32 %v1722, %v2041
    %v2062 = vadd.f32 %v1373, %v2029
    %v2063 = vadd.f32 %v1375, %v2033
    %v2064 = vadd.f32 %v1726, %v2037
    %v2065 = vadd.f32 %v1728, %v2041
    %v2066 = vadd.f32 %v1377, %v2029
    %v2067 = vadd.f32 %v1379, %v2033
    %v2068 = vadd.f32 %v1730, %v2037
    %v2069 = vadd.f32 %v1732, %v2041
    %v2070 = vadd.f32 %v1383, %v2029
    %v2071 = vadd.f32 %v1385, %v2033
    %v2072 = vadd.f32 %v1736, %v2037
    %v2073 = vadd.f32 %v1738, %v2041
    %v2074 = vadd.f32 %v1387, %v2029
    %v2075 = vadd.f32 %v1389, %v2033
    %v2076 = vadd.f32 %v1740, %v2037
    %v2077 = vadd.f32 %v1742, %v2041
    %v2078 = vadd.f32 %v1393, %v2029
    %v2079 = vadd.f32 %v1395, %v2033
    %v2080 = vadd.f32 %v1746, %v2037
    %v2081 = vadd.f32 %v1748, %v2041
    %v2082 = vadd.f32 %v1397, %v2029
    %v2083 = vadd.f32 %v1399, %v2033
    %v2084 = vadd.f32 %v1750, %v2037
    %v2085 = vadd.f32 %v1752, %v2041
    %v2086 = vadd.f32 %v1403, %v2029
    %v2087 = vadd.f32 %v1405, %v2033
    %v2088 = vadd.f32 %v1756, %v2037
    %v2089 = vadd.f32 %v1758, %v2041
    %v2090 = vadd.f32 %v1407, %v2029
    %v2091 = vadd.f32 %v1409, %v2033
    %v2092 = vadd.f32 %v1760, %v2037
    %v2093 = vadd.f32 %v1762, %v2041
    %v2094 = vadd.f32 %v1413, %v2029
    %v2095 = vadd.f32 %v1415, %v2033
    %v2096 = vadd.f32 %v1766, %v2037
    %v2097 = vadd.f32 %v1768, %v2041
    %v2098 = vadd.f32 %v1417, %v2029
    %v2099 = vadd.f32 %v1419, %v2033
    %v2100 = vadd.f32 %v1770, %v2037
    %v2101 = vadd.f32 %v1772, %v2041
    %v2102 = vadd.f32 %v1423, %v2029
    %v2103 = vadd.f32 %v1425, %v2033
    %v2104 = vadd.f32 %v1776, %v2037
    %v2105 = vadd.f32 %v1778, %v2041
    %v2106 = vadd.f32 %v1427, %v2029
    %v2107 = vadd.f32 %v1429, %v2033
    %v2108 = vadd.f32 %v1780, %v2037
    %v2109 = vadd.f32 %v1782, %v2041
    %v2110 = vadd.f32 %v1433, %v2029
    %v2111 = vadd.f32 %v1435, %v2033
    %v2112 = vadd.f32 %v1786, %v2037
    %v2113 = vadd.f32 %v1788, %v2041
    %v2114 = vadd.f32 %v1437, %v2029
    %v2115 = vadd.f32 %v1439, %v2033
    %v2116 = vadd.f32 %v1790, %v2037
    %v2117 = vadd.f32 %v1792, %v2041
    %v2118 = vadd.f32 %v1443, %v2029
    %v2119 = vadd.f32 %v1445, %v2033
    %v2120 = vadd.f32 %v1796, %v2037
    %v2121 = vadd.f32 %v1798, %v2041
    %v2122 = vadd.f32 %v1447, %v2029
    %v2123 = vadd.f32 %v1449, %v2033
    %v2124 = vadd.f32 %v1800, %v2037
    %v2125 = vadd.f32 %v1802, %v2041
    %v2126 = vadd.f32 %v1453, %v2029
    %v2127 = vadd.f32 %v1455, %v2033
    %v2128 = vadd.f32 %v1806, %v2037
    %v2129 = vadd.f32 %v1808, %v2041
    %v2130 = vadd.f32 %v1457, %v2029
    %v2131 = vadd.f32 %v1459, %v2033
    %v2132 = vadd.f32 %v1810, %v2037
    %v2133 = vadd.f32 %v1812, %v2041
    %v2134 = vadd.f32 %v1463, %v2029
    %v2135 = vadd.f32 %v1465, %v2033
    %v2136 = vadd.f32 %v1816, %v2037
    %v2137 = vadd.f32 %v1818, %v2041
    %v2138 = vadd.f32 %v1467, %v2029
    %v2139 = vadd.f32 %v1469, %v2033
    %v2140 = vadd.f32 %v1820, %v2037
    %v2141 = vadd.f32 %v1822, %v2041
    %v2142 = vadd.f32 %v1473, %v2029
    %v2143 = vadd.f32 %v1475, %v2033
    %v2144 = vadd.f32 %v1826, %v2037
    %v2145 = vadd.f32 %v1828, %v2041
    %v2146 = vadd.f32 %v1477, %v2029
    %v2147 = vadd.f32 %v1479, %v2033
    %v2148 = vadd.f32 %v1830, %v2037
    %v2149 = vadd.f32 %v1832, %v2041
    %v2150 = vadd.f32 %v1483, %v2029
    %v2151 = vadd.f32 %v1485, %v2033
    %v2152 = vadd.f32 %v1836, %v2037
    %v2153 = vadd.f32 %v1838, %v2041
    %v2154 = vadd.f32 %v1487, %v2029
    %v2155 = vadd.f32 %v1489, %v2033
    %v2156 = vadd.f32 %v1840, %v2037
    %v2157 = vadd.f32 %v1842, %v2041
    %v2158 = vadd.f32 %v1493, %v2029
    %v2159 = vadd.f32 %v1495, %v2033
    %v2160 = vadd.f32 %v1846, %v2037
    %v2161 = vadd.f32 %v1848, %v2041
    %v2162 = vadd.f32 %v1497, %v2029
    %v2163 = vadd.f32 %v1499, %v2033
    %v2164 = vadd.f32 %v1850, %v2037
    %v2165 = vadd.f32 %v1852, %v2041
    %v2166 = vadd.f32 %v1503, %v2029
    %v2167 = vadd.f32 %v1505, %v2033
    %v2168 = vadd.f32 %v1856, %v2037
    %v2169 = vadd.f32 %v1858, %v2041
    %v2170 = vadd.f32 %v1507, %v2029
    %v2171 = vadd.f32 %v1509, %v2033
    %v2172 = vadd.f32 %v1860, %v2037
    %v2173 = vadd.f32 %v1862, %v2041
    %v2174 = vadd.f32 %v1513, %v2029
    %v2175 = vadd.f32 %v1515, %v2033
    %v2176 = vadd.f32 %v1866, %v2037
    %v2177 = vadd.f32 %v1868, %v2041
    %v2178 = vadd.f32 %v1517, %v2029
    %v2179 = vadd.f32 %v1519, %v2033
    %v2180 = vadd.f32 %v1870, %v2037
    %v2181 = vadd.f32 %v1872, %v2041
    %v2182 = vadd.f32 %v1523, %v2029
    %v2183 = vadd.f32 %v1525, %v2033
    %v2184 = vadd.f32 %v1876, %v2037
    %v2185 = vadd.f32 %v1878, %v2041
    %v2186 = vadd.f32 %v1527, %v2029
    %v2187 = vadd.f32 %v1529, %v2033
    %v2188 = vadd.f32 %v1880, %v2037
    %v2189 = vadd.f32 %v1882, %v2041
    %v2190 = vadd.f32 %v1533, %v2029
    %v2191 = vadd.f32 %v1535, %v2033
    %v2192 = vadd.f32 %v1886, %v2037
    %v2193 = vadd.f32 %v1888, %v2041
    %v2194 = vadd.f32 %v1537, %v2029
    %v2195 = vadd.f32 %v1539, %v2033
    %v2196 = vadd.f32 %v1890, %v2037
    %v2197 = vadd.f32 %v1892, %v2041
    %v2198 = vadd.f32 %v1543, %v2029
    %v2199 = vadd.f32 %v1545, %v2033
    %v2200 = vadd.f32 %v1896, %v2037
    %v2201 = vadd.f32 %v1898, %v2041
    %v2202 = vadd.f32 %v1547, %v2029
    %v2203 = vadd.f32 %v1549, %v2033
    %v2204 = vadd.f32 %v1900, %v2037
    %v2205 = vadd.f32 %v1902, %v2041
    %v2206 = vadd.f32 %v1553, %v2029
    %v2207 = vadd.f32 %v1555, %v2033
    %v2208 = vadd.f32 %v1906, %v2037
    %v2209 = vadd.f32 %v1908, %v2041
    %v2210 = vadd.f32 %v1557, %v2029
    %v2211 = vadd.f32 %v1559, %v2033
    %v2212 = vadd.f32 %v1910, %v2037
    %v2213 = vadd.f32 %v1912, %v2041
    %v2214 = vadd.f32 %v1563, %v2029
    %v2215 = vadd.f32 %v1565, %v2033
    %v2216 = vadd.f32 %v1916, %v2037
    %v2217 = vadd.f32 %v1918, %v2041
    %v2218 = vadd.f32 %v1567, %v2029
    %v2219 = vadd.f32 %v1569, %v2033
    %v2220 = vadd.f32 %v1920, %v2037
    %v2221 = vadd.f32 %v1922, %v2041
    %v2222 = vadd.f32 %v1573, %v2029
    %v2223 = vadd.f32 %v1575, %v2033
    %v2224 = vadd.f32 %v1926, %v2037
    %v2225 = vadd.f32 %v1928, %v2041
    %v2226 = vadd.f32 %v1577, %v2029
    %v2227 = vadd.f32 %v1579, %v2033
    %v2228 = vadd.f32 %v1930, %v2037
    %v2229 = vadd.f32 %v1932, %v2041
    %v2230 = vadd.f32 %v1583, %v2029
    %v2231 = vadd.f32 %v1585, %v2033
    %v2232 = vadd.f32 %v1936, %v2037
    %v2233 = vadd.f32 %v1938, %v2041
    %v2234 = vadd.f32 %v1587, %v2029
    %v2235 = vadd.f32 %v1589, %v2033
    %v2236 = vadd.f32 %v1940, %v2037
    %v2237 = vadd.f32 %v1942, %v2041
    %v2238 = vadd.f32 %v1593, %v2029
    %v2239 = vadd.f32 %v1595, %v2033
    %v2240 = vadd.f32 %v1946, %v2037
    %v2241 = vadd.f32 %v1948, %v2041
    %v2242 = vadd.f32 %v1597, %v2029
    %v2243 = vadd.f32 %v1599, %v2033
    %v2244 = vadd.f32 %v1950, %v2037
    %v2245 = vadd.f32 %v1952, %v2041
    %v2246 = vadd.f32 %v1603, %v2029
    %v2247 = vadd.f32 %v1605, %v2033
    %v2248 = vadd.f32 %v1956, %v2037
    %v2249 = vadd.f32 %v1958, %v2041
    %v2250 = vadd.f32 %v1607, %v2029
    %v2251 = vadd.f32 %v1609, %v2033
    %v2252 = vadd.f32 %v1960, %v2037
    %v2253 = vadd.f32 %v1962, %v2041
    %v2254 = vadd.f32 %v1613, %v2029
    %v2255 = vadd.f32 %v1615, %v2033
    %v2256 = vadd.f32 %v1966, %v2037
    %v2257 = vadd.f32 %v1968, %v2041
    %v2258 = vadd.f32 %v1617, %v2029
    %v2259 = vadd.f32 %v1619, %v2033
    %v2260 = vadd.f32 %v1970, %v2037
    %v2261 = vadd.f32 %v1972, %v2041
    %v2262 = vadd.f32 %v1623, %v2029
    %v2263 = vadd.f32 %v1625, %v2033
    %v2264 = vadd.f32 %v1976, %v2037
    %v2265 = vadd.f32 %v1978, %v2041
    %v2266 = vadd.f32 %v1627, %v2029
    %v2267 = vadd.f32 %v1629, %v2033
    %v2268 = vadd.f32 %v1980, %v2037
    %v2269 = vadd.f32 %v1982, %v2041
    %v2270 = vadd.f32 %v1633, %v2029
    %v2271 = vadd.f32 %v1635, %v2033
    %v2272 = vadd.f32 %v1986, %v2037
    %v2273 = vadd.f32 %v1988, %v2041
    %v2274 = vadd.f32 %v1637, %v2029
    %v2275 = vadd.f32 %v1639, %v2033
    %v2276 = vadd.f32 %v1990, %v2037
    %v2277 = vadd.f32 %v1992, %v2041
    %v2278 = vadd.f32 %v1643, %v2029
    %v2279 = vadd.f32 %v1645, %v2033
    %v2280 = vadd.f32 %v1996, %v2037
    %v2281 = vadd.f32 %v1998, %v2041
    %v2282 = vadd.f32 %v1647, %v2029
    %v2283 = vadd.f32 %v1649, %v2033
    %v2284 = vadd.f32 %v2000, %v2037
    %v2285 = vadd.f32 %v2002, %v2041
    %v2286 = vadd.f32 %v1653, %v2029
    %v2287 = vadd.f32 %v1655, %v2033
    %v2288 = vadd.f32 %v2006, %v2037
    %v2289 = vadd.f32 %v2008, %v2041
    %v2290 = vadd.f32 %v1657, %v2029
    %v2291 = vadd.f32 %v1659, %v2033
    %v2292 = vadd.f32 %v2010, %v2037
    %v2293 = vadd.f32 %v2012, %v2041
    %v2294 = vadd.f32 %v1663, %v2029
    %v2295 = vadd.f32 %v1665, %v2033
    %v2296 = vadd.f32 %v2016, %v2037
    %v2297 = vadd.f32 %v2018, %v2041
    %v2298 = vadd.f32 %v1667, %v2029
    %v2299 = vadd.f32 %v1669, %v2033
    %v2300 = vadd.f32 %v2020, %v2037
    %v2301 = vadd.f32 %v2022, %v2041
    %v2302 = vmax.f32 %v2046, 0.0
    %v2303 = vmax.f32 %v2047, 0.0
    %v2304 = vmax.f32 %v2048, 0.0
    %v2305 = vmax.f32 %v2049, 0.0
    %v2306 = vmax.f32 %v2050, 0.0
    %v2307 = vmax.f32 %v2051, 0.0
    %v2308 = vmax.f32 %v2052, 0.0
    %v2309 = vmax.f32 %v2053, 0.0
    %v2310 = vmax.f32 %v2054, 0.0
    %v2311 = vmax.f32 %v2055, 0.0
    %v2312 = vmax.f32 %v2056, 0.0
    %v2313 = vmax.f32 %v2057, 0.0
    %v2314 = vmax.f32 %v2058, 0.0
    %v2315 = vmax.f32 %v2059, 0.0
    %v2316 = vmax.f32 %v2060, 0.0
    %v2317 = vmax.f32 %v2061, 0.0
    %v2318 = vmax.f32 %v2062, 0.0
    %v2319 = vmax.f32 %v2063, 0.0
    %v2320 = vmax.f32 %v2064, 0.0
    %v2321 = vmax.f32 %v2065, 0.0
    %v2322 = vmax.f32 %v2066, 0.0
    %v2323 = vmax.f32 %v2067, 0.0
    %v2324 = vmax.f32 %v2068, 0.0
    %v2325 = vmax.f32 %v2069, 0.0
    %v2326 = vmax.f32 %v2070, 0.0
    %v2327 = vmax.f32 %v2071, 0.0
    %v2328 = vmax.f32 %v2072, 0.0
    %v2329 = vmax.f32 %v2073, 0.0
    %v2330 = vmax.f32 %v2074, 0.0
    %v2331 = vmax.f32 %v2075, 0.0
    %v2332 = vmax.f32 %v2076, 0.0
    %v2333 = vmax.f32 %v2077, 0.0
    %v2334 = vmax.f32 %v2078, 0.0
    %v2335 = vmax.f32 %v2079, 0.0
    %v2336 = vmax.f32 %v2080, 0.0
    %v2337 = vmax.f32 %v2081, 0.0
    %v2338 = vmax.f32 %v2082, 0.0
    %v2339 = vmax.f32 %v2083, 0.0
    %v2340 = vmax.f32 %v2084, 0.0
    %v2341 = vmax.f32 %v2085, 0.0
    %v2342 = vmax.f32 %v2086, 0.0
    %v2343 = vmax.f32 %v2087, 0.0
    %v2344 = vmax.f32 %v2088, 0.0
    %v2345 = vmax.f32 %v2089, 0.0
    %v2346 = vmax.f32 %v2090, 0.0
    %v2347 = vmax.f32 %v2091, 0.0
    %v2348 = vmax.f32 %v2092, 0.0
    %v2349 = vmax.f32 %v2093, 0.0
    %v2350 = vmax.f32 %v2094, 0.0
    %v2351 = vmax.f32 %v2095, 0.0
    %v2352 = vmax.f32 %v2096, 0.0
    %v2353 = vmax.f32 %v2097, 0.0
    %v2354 = vmax.f32 %v2098, 0.0
    %v2355 = vmax.f32 %v2099, 0.0
    %v2356 = vmax.f32 %v2100, 0.0
    %v2357 = vmax.f32 %v2101, 0.0
    %v2358 = vmax.f32 %v2102, 0.0
    %v2359 = vmax.f32 %v2103, 0.0
    %v2360 = vmax.f32 %v2104, 0.0
    %v2361 = vmax.f32 %v2105, 0.0
    %v2362 = vmax.f32 %v2106, 0.0
    %v2363 = vmax.f32 %v2107, 0.0
    %v2364 = vmax.f32 %v2108, 0.0
    %v2365 = vmax.f32 %v2109, 0.0
    %v2366 = vmax.f32 %v2110, 0.0
    %v2367 = vmax.f32 %v2111, 0.0
    %v2368 = vmax.f32 %v2112, 0.0
    %v2369 = vmax.f32 %v2113, 0.0
    %v2370 = vmax.f32 %v2114, 0.0
    %v2371 = vmax.f32 %v2115, 0.0
    %v2372 = vmax.f32 %v2116, 0.0
    %v2373 = vmax.f32 %v2117, 0.0
    %v2374 = vmax.f32 %v2118, 0.0
    %v2375 = vmax.f32 %v2119, 0.0
    %v2376 = vmax.f32 %v2120, 0.0
    %v2377 = vmax.f32 %v2121, 0.0
    %v2378 = vmax.f32 %v2122, 0.0
    %v2379 = vmax.f32 %v2123, 0.0
    %v2380 = vmax.f32 %v2124, 0.0
    %v2381 = vmax.f32 %v2125, 0.0
    %v2382 = vmax.f32 %v2126, 0.0
    %v2383 = vmax.f32 %v2127, 0.0
    %v2384 = vmax.f32 %v2128, 0.0
    %v2385 = vmax.f32 %v2129, 0.0
    %v2386 = vmax.f32 %v2130, 0.0
    %v2387 = vmax.f32 %v2131, 0.0
    %v2388 = vmax.f32 %v2132, 0.0
    %v2389 = vmax.f32 %v2133, 0.0
    %v2390 = vmax.f32 %v2134, 0.0
    %v2391 = vmax.f32 %v2135, 0.0
    %v2392 = vmax.f32 %v2136, 0.0
    %v2393 = vmax.f32 %v2137, 0.0
    %v2394 = vmax.f32 %v2138, 0.0
    %v2395 = vmax.f32 %v2139, 0.0
    %v2396 = vmax.f32 %v2140, 0.0
    %v2397 = vmax.f32 %v2141, 0.0
    %v2398 = vmax.f32 %v2142, 0.0
    %v2399 = vmax.f32 %v2143, 0.0
    %v2400 = vmax.f32 %v2144, 0.0
    %v2401 = vmax.f32 %v2145, 0.0
    %v2402 = vmax.f32 %v2146, 0.0
    %v2403 = vmax.f32 %v2147, 0.0
    %v2404 = vmax.f32 %v2148, 0.0
    %v2405 = vmax.f32 %v2149, 0.0
    %v2406 = vmax.f32 %v2150, 0.0
    %v2407 = vmax.f32 %v2151, 0.0
    %v2408 = vmax.f32 %v2152, 0.0
    %v2409 = vmax.f32 %v2153, 0.0
    %v2410 = vmax.f32 %v2154, 0.0
    %v2411 = vmax.f32 %v2155, 0.0
    %v2412 = vmax.f32 %v2156, 0.0
    %v2413 = vmax.f32 %v2157, 0.0
    %v2414 = vmax.f32 %v2158, 0.0
    %v2415 = vmax.f32 %v2159, 0.0
    %v2416 = vmax.f32 %v2160, 0.0
    %v2417 = vmax.f32 %v2161, 0.0
    %v2418 = vmax.f32 %v2162, 0.0
    %v2419 = vmax.f32 %v2163, 0.0
    %v2420 = vmax.f32 %v2164, 0.0
    %v2421 = vmax.f32 %v2165, 0.0
    %v2422 = vmax.f32 %v2166, 0.0
    %v2423 = vmax.f32 %v2167, 0.0
    %v2424 = vmax.f32 %v2168, 0.0
    %v2425 = vmax.f32 %v2169, 0.0
    %v2426 = vmax.f32 %v2170, 0.0
    %v2427 = vmax.f32 %v2171, 0.0
    %v2428 = vmax.f32 %v2172, 0.0
    %v2429 = vmax.f32 %v2173, 0.0
    %v2430 = vmax.f32 %v2174, 0.0
    %v2431 = vmax.f32 %v2175, 0.0
    %v2432 = vmax.f32 %v2176, 0.0
    %v2433 = vmax.f32 %v2177, 0.0
    %v2434 = vmax.f32 %v2178, 0.0
    %v2435 = vmax.f32 %v2179, 0.0
    %v2436 = vmax.f32 %v2180, 0.0
    %v2437 = vmax.f32 %v2181, 0.0
    %v2438 = vmax.f32 %v2182, 0.0
    %v2439 = vmax.f32 %v2183, 0.0
    %v2440 = vmax.f32 %v2184, 0.0
    %v2441 = vmax.f32 %v2185, 0.0
    %v2442 = vmax.f32 %v2186, 0.0
    %v2443 = vmax.f32 %v2187, 0.0
    %v2444 = vmax.f32 %v2188, 0.0
    %v2445 = vmax.f32 %v2189, 0.0
    %v2446 = vmax.f32 %v2190, 0.0
    %v2447 = vmax.f32 %v2191, 0.0
    %v2448 = vmax.f32 %v2192, 0.0
    %v2449 = vmax.f32 %v2193, 0.0
    %v2450 = vmax.f32 %v2194, 0.0
    %v2451 = vmax.f32 %v2195, 0.0
    %v2452 = vmax.f32 %v2196, 0.0
    %v2453 = vmax.f32 %v2197, 0.0
    %v2454 = vmax.f32 %v2198, 0.0
    %v2455 = vmax.f32 %v2199, 0.0
    %v2456 = vmax.f32 %v2200, 0.0
    %v2457 = vmax.f32 %v2201, 0.0
    %v2458 = vmax.f32 %v2202, 0.0
    %v2459 = vmax.f32 %v2203, 0.0
    %v2460 = vmax.f32 %v2204, 0.0
    %v2461 = vmax.f32 %v2205, 0.0
    %v2462 = vmax.f32 %v2206, 0.0
    %v2463 = vmax.f32 %v2207, 0.0
    %v2464 = vmax.f32 %v2208, 0.0
    %v2465 = vmax.f32 %v2209, 0.0
    %v2466 = vmax.f32 %v2210, 0.0
    %v2467 = vmax.f32 %v2211, 0.0
    %v2468 = vmax.f32 %v2212, 0.0
    %v2469 = vmax.f32 %v2213, 0.0
    %v2470 = vmax.f32 %v2214, 0.0
    %v2471 = vmax.f32 %v2215, 0.0
    %v2472 = vmax.f32 %v2216, 0.0
    %v2473 = vmax.f32 %v2217, 0.0
    %v2474 = vmax.f32 %v2218, 0.0
    %v2475 = vmax.f32 %v2219, 0.0
    %v2476 = vmax.f32 %v2220, 0.0
    %v2477 = vmax.f32 %v2221, 0.0
    %v2478 = vmax.f32 %v2222, 0.0
    %v2479 = vmax.f32 %v2223, 0.0
    %v2480 = vmax.f32 %v2224, 0.0
    %v2481 = vmax.f32 %v2225, 0.0
    %v2482 = vmax.f32 %v2226, 0.0
    %v2483 = vmax.f32 %v2227, 0.0
    %v2484 = vmax.f32 %v2228, 0.0
    %v2485 = vmax.f32 %v2229, 0.0
    %v2486 = vmax.f32 %v2230, 0.0
    %v2487 = vmax.f32 %v2231, 0.0
    %v2488 = vmax.f32 %v2232, 0.0
    %v2489 = vmax.f32 %v2233, 0.0
    %v2490 = vmax.f32 %v2234, 0.0
    %v2491 = vmax.f32 %v2235, 0.0
    %v2492 = vmax.f32 %v2236, 0.0
    %v2493 = vmax.f32 %v2237, 0.0
    %v2494 = vmax.f32 %v2238, 0.0
    %v2495 = vmax.f32 %v2239, 0.0
    %v2496 = vmax.f32 %v2240, 0.0
    %v2497 = vmax.f32 %v2241, 0.0
    %v2498 = vmax.f32 %v2242, 0.0
    %v2499 = vmax.f32 %v2243, 0.0
    %v2500 = vmax.f32 %v2244, 0.0
    %v2501 = vmax.f32 %v2245, 0.0
    %v2502 = vmax.f32 %v2246, 0.0
    %v2503 = vmax.f32 %v2247, 0.0
    %v2504 = vmax.f32 %v2248, 0.0
    %v2505 = vmax.f32 %v2249, 0.0
    %v2506 = vmax.f32 %v2250, 0.0
    %v2507 = vmax.f32 %v2251, 0.0
    %v2508 = vmax.f32 %v2252, 0.0
    %v2509 = vmax.f32 %v2253, 0.0
    %v2510 = vmax.f32 %v2254, 0.0
    %v2511 = vmax.f32 %v2255, 0.0
    %v2512 = vmax.f32 %v2256, 0.0
    %v2513 = vmax.f32 %v2257, 0.0
    %v2514 = vmax.f32 %v2258, 0.0
    %v2515 = vmax.f32 %v2259, 0.0
    %v2516 = vmax.f32 %v2260, 0.0
    %v2517 = vmax.f32 %v2261, 0.0
    %v2518 = vmax.f32 %v2262, 0.0
    %v2519 = vmax.f32 %v2263, 0.0
    %v2520 = vmax.f32 %v2264, 0.0
    %v2521 = vmax.f32 %v2265, 0.0
    %v2522 = vmax.f32 %v2266, 0.0
    %v2523 = vmax.f32 %v2267, 0.0
    %v2524 = vmax.f32 %v2268, 0.0
    %v2525 = vmax.f32 %v2269, 0.0
    %v2526 = vmax.f32 %v2270, 0.0
    %v2527 = vmax.f32 %v2271, 0.0
    %v2528 = vmax.f32 %v2272, 0.0
    %v2529 = vmax.f32 %v2273, 0.0
    %v2530 = vmax.f32 %v2274, 0.0
    %v2531 = vmax.f32 %v2275, 0.0
    %v2532 = vmax.f32 %v2276, 0.0
    %v2533 = vmax.f32 %v2277, 0.0
    %v2534 = vmax.f32 %v2278, 0.0
    %v2535 = vmax.f32 %v2279, 0.0
    %v2536 = vmax.f32 %v2280, 0.0
    %v2537 = vmax.f32 %v2281, 0.0
    %v2538 = vmax.f32 %v2282, 0.0
    %v2539 = vmax.f32 %v2283, 0.0
    %v2540 = vmax.f32 %v2284, 0.0
    %v2541 = vmax.f32 %v2285, 0.0
    %v2542 = vmax.f32 %v2286, 0.0
    %v2543 = vmax.f32 %v2287, 0.0
    %v2544 = vmax.f32 %v2288, 0.0
    %v2545 = vmax.f32 %v2289, 0.0
    %v2546 = vmax.f32 %v2290, 0.0
    %v2547 = vmax.f32 %v2291, 0.0
    %v2548 = vmax.f32 %v2292, 0.0
    %v2549 = vmax.f32 %v2293, 0.0
    %v2550 = vmax.f32 %v2294, 0.0
    %v2551 = vmax.f32 %v2295, 0.0
    %v2552 = vmax.f32 %v2296, 0.0
    %v2553 = vmax.f32 %v2297, 0.0
    %v2554 = vmax.f32 %v2298, 0.0
    %v2555 = vmax.f32 %v2299, 0.0
    %v2556 = vmax.f32 %v2300, 0.0
    %v2557 = vmax.f32 %v2301, 0.0
    %v2558 = vpack.c.bf16 %v2306, %v2302
    %v2559 = vpack.c.bf16 %v2307, %v2303
    %v2560 = vpack.c.bf16 %v2308, %v2304
    %v2561 = vpack.c.bf16 %v2309, %v2305
    %v2562 = vpack.c.bf16 %v2314, %v2310
    %v2563 = vpack.c.bf16 %v2315, %v2311
    %v2564 = vpack.c.bf16 %v2316, %v2312
    %v2565 = vpack.c.bf16 %v2317, %v2313
    %v2566 = vpack.c.bf16 %v2322, %v2318
    %v2567 = vpack.c.bf16 %v2323, %v2319
    %v2568 = vpack.c.bf16 %v2324, %v2320
    %v2569 = vpack.c.bf16 %v2325, %v2321
    %v2570 = vpack.c.bf16 %v2330, %v2326
    %v2571 = vpack.c.bf16 %v2331, %v2327
    %v2572 = vpack.c.bf16 %v2332, %v2328
    %v2573 = vpack.c.bf16 %v2333, %v2329
    %v2574 = vpack.c.bf16 %v2338, %v2334
    %v2575 = vpack.c.bf16 %v2339, %v2335
    %v2576 = vpack.c.bf16 %v2340, %v2336
    %v2577 = vpack.c.bf16 %v2341, %v2337
    %v2578 = vpack.c.bf16 %v2346, %v2342
    %v2579 = vpack.c.bf16 %v2347, %v2343
    %v2580 = vpack.c.bf16 %v2348, %v2344
    %v2581 = vpack.c.bf16 %v2349, %v2345
    %v2582 = vpack.c.bf16 %v2354, %v2350
    %v2583 = vpack.c.bf16 %v2355, %v2351
    %v2584 = vpack.c.bf16 %v2356, %v2352
    %v2585 = vpack.c.bf16 %v2357, %v2353
    %v2586 = vpack.c.bf16 %v2362, %v2358
    %v2587 = vpack.c.bf16 %v2363, %v2359
    %v2588 = vpack.c.bf16 %v2364, %v2360
    %v2589 = vpack.c.bf16 %v2365, %v2361
    %v2590 = vpack.c.bf16 %v2370, %v2366
    %v2591 = vpack.c.bf16 %v2371, %v2367
    %v2592 = vpack.c.bf16 %v2372, %v2368
    %v2593 = vpack.c.bf16 %v2373, %v2369
    %v2594 = vpack.c.bf16 %v2378, %v2374
    %v2595 = vpack.c.bf16 %v2379, %v2375
    %v2596 = vpack.c.bf16 %v2380, %v2376
    %v2597 = vpack.c.bf16 %v2381, %v2377
    %v2598 = vpack.c.bf16 %v2386, %v2382
    %v2599 = vpack.c.bf16 %v2387, %v2383
    %v2600 = vpack.c.bf16 %v2388, %v2384
    %v2601 = vpack.c.bf16 %v2389, %v2385
    %v2602 = vpack.c.bf16 %v2394, %v2390
    %v2603 = vpack.c.bf16 %v2395, %v2391
    %v2604 = vpack.c.bf16 %v2396, %v2392
    %v2605 = vpack.c.bf16 %v2397, %v2393
    %v2606 = vpack.c.bf16 %v2402, %v2398
    %v2607 = vpack.c.bf16 %v2403, %v2399
    %v2608 = vpack.c.bf16 %v2404, %v2400
    %v2609 = vpack.c.bf16 %v2405, %v2401
    %v2610 = vpack.c.bf16 %v2410, %v2406
    %v2611 = vpack.c.bf16 %v2411, %v2407
    %v2612 = vpack.c.bf16 %v2412, %v2408
    %v2613 = vpack.c.bf16 %v2413, %v2409
    %v2614 = vpack.c.bf16 %v2418, %v2414
    %v2615 = vpack.c.bf16 %v2419, %v2415
    %v2616 = vpack.c.bf16 %v2420, %v2416
    %v2617 = vpack.c.bf16 %v2421, %v2417
    %v2618 = vpack.c.bf16 %v2426, %v2422
    %v2619 = vpack.c.bf16 %v2427, %v2423
    %v2620 = vpack.c.bf16 %v2428, %v2424
    %v2621 = vpack.c.bf16 %v2429, %v2425
    %v2622 = vpack.c.bf16 %v2434, %v2430
    %v2623 = vpack.c.bf16 %v2435, %v2431
    %v2624 = vpack.c.bf16 %v2436, %v2432
    %v2625 = vpack.c.bf16 %v2437, %v2433
    %v2626 = vpack.c.bf16 %v2442, %v2438
    %v2627 = vpack.c.bf16 %v2443, %v2439
    %v2628 = vpack.c.bf16 %v2444, %v2440
    %v2629 = vpack.c.bf16 %v2445, %v2441
    %v2630 = vpack.c.bf16 %v2450, %v2446
    %v2631 = vpack.c.bf16 %v2451, %v2447
    %v2632 = vpack.c.bf16 %v2452, %v2448
    %v2633 = vpack.c.bf16 %v2453, %v2449
    %v2634 = vpack.c.bf16 %v2458, %v2454
    %v2635 = vpack.c.bf16 %v2459, %v2455
    %v2636 = vpack.c.bf16 %v2460, %v2456
    %v2637 = vpack.c.bf16 %v2461, %v2457
    %v2638 = vpack.c.bf16 %v2466, %v2462
    %v2639 = vpack.c.bf16 %v2467, %v2463
    %v2640 = vpack.c.bf16 %v2468, %v2464
    %v2641 = vpack.c.bf16 %v2469, %v2465
    %v2642 = vpack.c.bf16 %v2474, %v2470
    %v2643 = vpack.c.bf16 %v2475, %v2471
    %v2644 = vpack.c.bf16 %v2476, %v2472
    %v2645 = vpack.c.bf16 %v2477, %v2473
    %v2646 = vpack.c.bf16 %v2482, %v2478
    %v2647 = vpack.c.bf16 %v2483, %v2479
    %v2648 = vpack.c.bf16 %v2484, %v2480
    %v2649 = vpack.c.bf16 %v2485, %v2481
    %v2650 = vpack.c.bf16 %v2490, %v2486
    %v2651 = vpack.c.bf16 %v2491, %v2487
    %v2652 = vpack.c.bf16 %v2492, %v2488
    %v2653 = vpack.c.bf16 %v2493, %v2489
    %v2654 = vpack.c.bf16 %v2498, %v2494
    %v2655 = vpack.c.bf16 %v2499, %v2495
    %v2656 = vpack.c.bf16 %v2500, %v2496
    %v2657 = vpack.c.bf16 %v2501, %v2497
    %v2658 = vpack.c.bf16 %v2506, %v2502
    %v2659 = vpack.c.bf16 %v2507, %v2503
    %v2660 = vpack.c.bf16 %v2508, %v2504
    %v2661 = vpack.c.bf16 %v2509, %v2505
    %v2662 = vpack.c.bf16 %v2514, %v2510
    %v2663 = vpack.c.bf16 %v2515, %v2511
    %v2664 = vpack.c.bf16 %v2516, %v2512
    %v2665 = vpack.c.bf16 %v2517, %v2513
    %v2666 = vpack.c.bf16 %v2522, %v2518
    %v2667 = vpack.c.bf16 %v2523, %v2519
    %v2668 = vpack.c.bf16 %v2524, %v2520
    %v2669 = vpack.c.bf16 %v2525, %v2521
    %v2670 = vpack.c.bf16 %v2530, %v2526
    %v2671 = vpack.c.bf16 %v2531, %v2527
    %v2672 = vpack.c.bf16 %v2532, %v2528
    %v2673 = vpack.c.bf16 %v2533, %v2529
    %v2674 = vpack.c.bf16 %v2538, %v2534
    %v2675 = vpack.c.bf16 %v2539, %v2535
    %v2676 = vpack.c.bf16 %v2540, %v2536
    %v2677 = vpack.c.bf16 %v2541, %v2537
    %v2678 = vpack.c.bf16 %v2546, %v2542
    %v2679 = vpack.c.bf16 %v2547, %v2543
    %v2680 = vpack.c.bf16 %v2548, %v2544
    %v2681 = vpack.c.bf16 %v2549, %v2545
    %v2682 = vpack.c.bf16 %v2554, %v2550
    %v2683 = vpack.c.bf16 %v2555, %v2551
    %v2684 = vpack.c.bf16 %v2556, %v2552
    %v2685 = vpack.c.bf16 %v2557, %v2553
    %v2686 = vld [vmem:[%s6] sm:$0xff]
    %v2687 = vld [vmem:[%s6 + $0x8] sm:$0xff]
    %v2688 = vld [vmem:[%s6 + $0x10] sm:$0xff]
    %v2689 = vld [vmem:[%s6 + $0x18] sm:$0xff]
    %v2690 = vld [vmem:[%s6 + $0x20] sm:$0xff]
    %v2691 = vld [vmem:[%s6 + $0x28] sm:$0xff]
    %v2692 = vld [vmem:[%s6 + $0x30] sm:$0xff]
    %v2693 = vld [vmem:[%s6 + $0x38] sm:$0xff]
    %v2694 = vld [vmem:[%s6 + $0x40] sm:$0xff]
    %v2695 = vld [vmem:[%s6 + $0x48] sm:$0xff]
    %v2696 = vld [vmem:[%s6 + $0x50] sm:$0xff]
    %v2697 = vld [vmem:[%s6 + $0x58] sm:$0xff]
    %v2698 = vld [vmem:[%s6 + $0x60] sm:$0xff]
    %v2699 = vld [vmem:[%s6 + $0x68] sm:$0xff]
    %v2700 = vld [vmem:[%s6 + $0x70] sm:$0xff]
    %v2701 = vld [vmem:[%s6 + $0x78] sm:$0xff]
    %v2702 = vld [vmem:[%s6 + $0x80] sm:$0xff]
    %v2703 = vld [vmem:[%s6 + $0x88] sm:$0xff]
    %v2704 = vld [vmem:[%s6 + $0x90] sm:$0xff]
    %v2705 = vld [vmem:[%s6 + $0x98] sm:$0xff]
    %v2706 = vld [vmem:[%s6 + $0xa0] sm:$0xff]
    %v2707 = vld [vmem:[%s6 + $0xa8] sm:$0xff]
    %v2708 = vld [vmem:[%s6 + $0xb0] sm:$0xff]
    %v2709 = vld [vmem:[%s6 + $0xb8] sm:$0xff]
    %v2710 = vld [vmem:[%s6 + $0xc0] sm:$0xff]
    %v2711 = vld [vmem:[%s6 + $0xc8] sm:$0xff]
    %v2712 = vld [vmem:[%s6 + $0xd0] sm:$0xff]
    %v2713 = vld [vmem:[%s6 + $0xd8] sm:$0xff]
    %v2714 = vld [vmem:[%s6 + $0xe0] sm:$0xff]
    %v2715 = vld [vmem:[%s6 + $0xe8] sm:$0xff]
    %v2716 = vld [vmem:[%s6 + $0xf0] sm:$0xff]
    %v2717 = vld [vmem:[%s6 + $0xf8] sm:$0xff]
    %v2718 = vld [vmem:[%s6 + $0x100] sm:$0xff]
    %v2719 = vld [vmem:[%s6 + $0x108] sm:$0xff]
    %v2720 = vld [vmem:[%s6 + $0x110] sm:$0xff]
    %v2721 = vld [vmem:[%s6 + $0x118] sm:$0xff]
    %v2722 = vld [vmem:[%s6 + $0x120] sm:$0xff]
    %v2723 = vld [vmem:[%s6 + $0x128] sm:$0xff]
    %v2724 = vld [vmem:[%s6 + $0x130] sm:$0xff]
    %v2725 = vld [vmem:[%s6 + $0x138] sm:$0xff]
    %v2726 = vld [vmem:[%s6 + $0x140] sm:$0xff]
    %v2727 = vld [vmem:[%s6 + $0x148] sm:$0xff]
    %v2728 = vld [vmem:[%s6 + $0x150] sm:$0xff]
    %v2729 = vld [vmem:[%s6 + $0x158] sm:$0xff]
    %v2730 = vld [vmem:[%s6 + $0x160] sm:$0xff]
    %v2731 = vld [vmem:[%s6 + $0x168] sm:$0xff]
    %v2732 = vld [vmem:[%s6 + $0x170] sm:$0xff]
    %v2733 = vld [vmem:[%s6 + $0x178] sm:$0xff]
    %v2734 = vld [vmem:[%s6 + $0x180] sm:$0xff]
    %v2735 = vld [vmem:[%s6 + $0x188] sm:$0xff]
    %v2736 = vld [vmem:[%s6 + $0x190] sm:$0xff]
    %v2737 = vld [vmem:[%s6 + $0x198] sm:$0xff]
    %v2738 = vld [vmem:[%s6 + $0x1a0] sm:$0xff]
    %v2739 = vld [vmem:[%s6 + $0x1a8] sm:$0xff]
    %v2740 = vld [vmem:[%s6 + $0x1b0] sm:$0xff]
    %v2741 = vld [vmem:[%s6 + $0x1b8] sm:$0xff]
    %v2742 = vld [vmem:[%s6 + $0x1c0] sm:$0xff]
    %v2743 = vld [vmem:[%s6 + $0x1c8] sm:$0xff]
    %v2744 = vld [vmem:[%s6 + $0x1d0] sm:$0xff]
    %v2745 = vld [vmem:[%s6 + $0x1d8] sm:$0xff]
    %v2746 = vld [vmem:[%s6 + $0x1e0] sm:$0xff]
    %v2747 = vld [vmem:[%s6 + $0x1e8] sm:$0xff]
    %v2748 = vld [vmem:[%s6 + $0x1f0] sm:$0xff]
    %v2749 = vld [vmem:[%s6 + $0x1f8] sm:$0xff]
    %v2750 = vld [vmem:[%s7] sm:$0x3]
    %v2752 = vlaneseq
    %v2753 = vshrl.u32 %v2752, 7
    %v2754 = vsub.s32 0, %v2753
    %v2755 = vrot.slane %v2750, %v2754
    %v2756 = vlaneseq
    %v2757 = vshrl.u32 %v2756, 7
    %v2758 = vsub.s32 1, %v2757
    %v2759 = vrot.slane %v2750, %v2758
    %v2826 = vunpack.c.l.b16 %v2686
    %v2827 = vunpack.c.h.b16 %v2686
    %v2828 = vunpack.c.l.b16 %v2687
    %v2829 = vunpack.c.h.b16 %v2687
    %v2830 = vunpack.c.l.b16 %v2688
    %v2831 = vunpack.c.h.b16 %v2688
    %v2832 = vunpack.c.l.b16 %v2689
    %v2833 = vunpack.c.h.b16 %v2689
    %v2834 = vunpack.c.l.b16 %v2690
    %v2835 = vunpack.c.h.b16 %v2690
    %v2836 = vunpack.c.l.b16 %v2691
    %v2837 = vunpack.c.h.b16 %v2691
    %v2838 = vunpack.c.l.b16 %v2692
    %v2839 = vunpack.c.h.b16 %v2692
    %v2840 = vunpack.c.l.b16 %v2693
    %v2841 = vunpack.c.h.b16 %v2693
    %v2842 = vunpack.c.l.b16 %v2694
    %v2843 = vunpack.c.h.b16 %v2694
    %v2844 = vunpack.c.l.b16 %v2695
    %v2845 = vunpack.c.h.b16 %v2695
    %v2846 = vunpack.c.l.b16 %v2696
    %v2847 = vunpack.c.h.b16 %v2696
    %v2848 = vunpack.c.l.b16 %v2697
    %v2849 = vunpack.c.h.b16 %v2697
    %v2850 = vunpack.c.l.b16 %v2698
    %v2851 = vunpack.c.h.b16 %v2698
    %v2852 = vunpack.c.l.b16 %v2699
    %v2853 = vunpack.c.h.b16 %v2699
    %v2854 = vunpack.c.l.b16 %v2700
    %v2855 = vunpack.c.h.b16 %v2700
    %v2856 = vunpack.c.l.b16 %v2701
    %v2857 = vunpack.c.h.b16 %v2701
    %v2858 = vunpack.c.l.b16 %v2702
    %v2859 = vunpack.c.h.b16 %v2702
    %v2860 = vunpack.c.l.b16 %v2703
    %v2861 = vunpack.c.h.b16 %v2703
    %v2862 = vunpack.c.l.b16 %v2704
    %v2863 = vunpack.c.h.b16 %v2704
    %v2864 = vunpack.c.l.b16 %v2705
    %v2865 = vunpack.c.h.b16 %v2705
    %v2866 = vunpack.c.l.b16 %v2706
    %v2867 = vunpack.c.h.b16 %v2706
    %v2868 = vunpack.c.l.b16 %v2707
    %v2869 = vunpack.c.h.b16 %v2707
    %v2870 = vunpack.c.l.b16 %v2708
    %v2871 = vunpack.c.h.b16 %v2708
    %v2872 = vunpack.c.l.b16 %v2709
    %v2873 = vunpack.c.h.b16 %v2709
    %v2874 = vunpack.c.l.b16 %v2710
    %v2875 = vunpack.c.h.b16 %v2710
    %v2876 = vunpack.c.l.b16 %v2711
    %v2877 = vunpack.c.h.b16 %v2711
    %v2878 = vunpack.c.l.b16 %v2712
    %v2879 = vunpack.c.h.b16 %v2712
    %v2880 = vunpack.c.l.b16 %v2713
    %v2881 = vunpack.c.h.b16 %v2713
    %v2882 = vunpack.c.l.b16 %v2714
    %v2883 = vunpack.c.h.b16 %v2714
    %v2884 = vunpack.c.l.b16 %v2715
    %v2885 = vunpack.c.h.b16 %v2715
    %v2886 = vunpack.c.l.b16 %v2716
    %v2887 = vunpack.c.h.b16 %v2716
    %v2888 = vunpack.c.l.b16 %v2717
    %v2889 = vunpack.c.h.b16 %v2717
    %v2890 = vunpack.c.l.b16 %v2718
    %v2891 = vunpack.c.h.b16 %v2718
    %v2892 = vunpack.c.l.b16 %v2719
    %v2893 = vunpack.c.h.b16 %v2719
    %v2894 = vunpack.c.l.b16 %v2720
    %v2895 = vunpack.c.h.b16 %v2720
    %v2896 = vunpack.c.l.b16 %v2721
    %v2897 = vunpack.c.h.b16 %v2721
    %v2898 = vunpack.c.l.b16 %v2722
    %v2899 = vunpack.c.h.b16 %v2722
    %v2900 = vunpack.c.l.b16 %v2723
    %v2901 = vunpack.c.h.b16 %v2723
    %v2902 = vunpack.c.l.b16 %v2724
    %v2903 = vunpack.c.h.b16 %v2724
    %v2904 = vunpack.c.l.b16 %v2725
    %v2905 = vunpack.c.h.b16 %v2725
    %v2906 = vunpack.c.l.b16 %v2726
    %v2907 = vunpack.c.h.b16 %v2726
    %v2908 = vunpack.c.l.b16 %v2727
    %v2909 = vunpack.c.h.b16 %v2727
    %v2910 = vunpack.c.l.b16 %v2728
    %v2911 = vunpack.c.h.b16 %v2728
    %v2912 = vunpack.c.l.b16 %v2729
    %v2913 = vunpack.c.h.b16 %v2729
    %v2914 = vunpack.c.l.b16 %v2730
    %v2915 = vunpack.c.h.b16 %v2730
    %v2916 = vunpack.c.l.b16 %v2731
    %v2917 = vunpack.c.h.b16 %v2731
    %v2918 = vunpack.c.l.b16 %v2732
    %v2919 = vunpack.c.h.b16 %v2732
    %v2920 = vunpack.c.l.b16 %v2733
    %v2921 = vunpack.c.h.b16 %v2733
    %v2922 = vunpack.c.l.b16 %v2734
    %v2923 = vunpack.c.h.b16 %v2734
    %v2924 = vunpack.c.l.b16 %v2735
    %v2925 = vunpack.c.h.b16 %v2735
    %v2926 = vunpack.c.l.b16 %v2736
    %v2927 = vunpack.c.h.b16 %v2736
    %v2928 = vunpack.c.l.b16 %v2737
    %v2929 = vunpack.c.h.b16 %v2737
    %v2930 = vunpack.c.l.b16 %v2738
    %v2931 = vunpack.c.h.b16 %v2738
    %v2932 = vunpack.c.l.b16 %v2739
    %v2933 = vunpack.c.h.b16 %v2739
    %v2934 = vunpack.c.l.b16 %v2740
    %v2935 = vunpack.c.h.b16 %v2740
    %v2936 = vunpack.c.l.b16 %v2741
    %v2937 = vunpack.c.h.b16 %v2741
    %v2938 = vunpack.c.l.b16 %v2742
    %v2939 = vunpack.c.h.b16 %v2742
    %v2940 = vunpack.c.l.b16 %v2743
    %v2941 = vunpack.c.h.b16 %v2743
    %v2942 = vunpack.c.l.b16 %v2744
    %v2943 = vunpack.c.h.b16 %v2744
    %v2944 = vunpack.c.l.b16 %v2745
    %v2945 = vunpack.c.h.b16 %v2745
    %v2946 = vunpack.c.l.b16 %v2746
    %v2947 = vunpack.c.h.b16 %v2746
    %v2948 = vunpack.c.l.b16 %v2747
    %v2949 = vunpack.c.h.b16 %v2747
    %v2950 = vunpack.c.l.b16 %v2748
    %v2951 = vunpack.c.h.b16 %v2748
    %v2952 = vunpack.c.l.b16 %v2749
    %v2953 = vunpack.c.h.b16 %v2749
    %v2954 = vpack.c.b16 %v2828, %v2826
    %v2955 = vpack.c.b16 %v2829, %v2827
    %v2956 = vpack.c.b16 %v2832, %v2830
    %v2957 = vpack.c.b16 %v2833, %v2831
    %v2958 = vpack.c.b16 %v2836, %v2834
    %v2959 = vpack.c.b16 %v2837, %v2835
    %v2960 = vpack.c.b16 %v2840, %v2838
    %v2961 = vpack.c.b16 %v2841, %v2839
    %v2962 = vpack.c.b16 %v2844, %v2842
    %v2963 = vpack.c.b16 %v2845, %v2843
    %v2964 = vpack.c.b16 %v2848, %v2846
    %v2965 = vpack.c.b16 %v2849, %v2847
    %v2966 = vpack.c.b16 %v2852, %v2850
    %v2967 = vpack.c.b16 %v2853, %v2851
    %v2968 = vpack.c.b16 %v2856, %v2854
    %v2969 = vpack.c.b16 %v2857, %v2855
    %v2970 = vpack.c.b16 %v2860, %v2858
    %v2971 = vpack.c.b16 %v2861, %v2859
    %v2972 = vpack.c.b16 %v2864, %v2862
    %v2973 = vpack.c.b16 %v2865, %v2863
    %v2974 = vpack.c.b16 %v2868, %v2866
    %v2975 = vpack.c.b16 %v2869, %v2867
    %v2976 = vpack.c.b16 %v2872, %v2870
    %v2977 = vpack.c.b16 %v2873, %v2871
    %v2978 = vpack.c.b16 %v2876, %v2874
    %v2979 = vpack.c.b16 %v2877, %v2875
    %v2980 = vpack.c.b16 %v2880, %v2878
    %v2981 = vpack.c.b16 %v2881, %v2879
    %v2982 = vpack.c.b16 %v2884, %v2882
    %v2983 = vpack.c.b16 %v2885, %v2883
    %v2984 = vpack.c.b16 %v2888, %v2886
    %v2985 = vpack.c.b16 %v2889, %v2887
    %v2986 = vpack.c.b16 %v2892, %v2890
    %v2987 = vpack.c.b16 %v2893, %v2891
    %v2988 = vpack.c.b16 %v2896, %v2894
    %v2989 = vpack.c.b16 %v2897, %v2895
    %v2990 = vpack.c.b16 %v2900, %v2898
    %v2991 = vpack.c.b16 %v2901, %v2899
    %v2992 = vpack.c.b16 %v2904, %v2902
    %v2993 = vpack.c.b16 %v2905, %v2903
    %v2994 = vpack.c.b16 %v2908, %v2906
    %v2995 = vpack.c.b16 %v2909, %v2907
    %v2996 = vpack.c.b16 %v2912, %v2910
    %v2997 = vpack.c.b16 %v2913, %v2911
    %v2998 = vpack.c.b16 %v2916, %v2914
    %v2999 = vpack.c.b16 %v2917, %v2915
    %v3000 = vpack.c.b16 %v2920, %v2918
    %v3001 = vpack.c.b16 %v2921, %v2919
    %v3002 = vpack.c.b16 %v2924, %v2922
    %v3003 = vpack.c.b16 %v2925, %v2923
    %v3004 = vpack.c.b16 %v2928, %v2926
    %v3005 = vpack.c.b16 %v2929, %v2927
    %v3006 = vpack.c.b16 %v2932, %v2930
    %v3007 = vpack.c.b16 %v2933, %v2931
    %v3008 = vpack.c.b16 %v2936, %v2934
    %v3009 = vpack.c.b16 %v2937, %v2935
    %v3010 = vpack.c.b16 %v2940, %v2938
    %v3011 = vpack.c.b16 %v2941, %v2939
    %v3012 = vpack.c.b16 %v2944, %v2942
    %v3013 = vpack.c.b16 %v2945, %v2943
    %v3014 = vpack.c.b16 %v2948, %v2946
    %v3015 = vpack.c.b16 %v2949, %v2947
    %v3016 = vpack.c.b16 %v2952, %v2950
    %v3017 = vpack.c.b16 %v2953, %v2951
    %3082 = vmatprep.subr.bf16.mxu0 %v2955
    %3083 = vmatpush1.bf16.msra.mxu0 %v2954
    %3084 = vmatprep.subr.bf16.mxu0 %v2957
    %3085 = vmatpush1.bf16.msra.mxu0 %v2956
    %3086 = vmatprep.subr.bf16.mxu0 %v2959
    %3087 = vmatpush1.bf16.msra.mxu0 %v2958
    %3088 = vmatprep.subr.bf16.mxu0 %v2961
    %3089 = vmatpush1.bf16.msra.mxu0 %v2960
    %3090 = vmatprep.subr.bf16.mxu0 %v2963
    %3091 = vmatpush1.bf16.msra.mxu0 %v2962
    %3092 = vmatprep.subr.bf16.mxu0 %v2965
    %3093 = vmatpush1.bf16.msra.mxu0 %v2964
    %3094 = vmatprep.subr.bf16.mxu0 %v2967
    %3095 = vmatpush1.bf16.msra.mxu0 %v2966
    %3096 = vmatprep.subr.bf16.mxu0 %v2969
    %3097 = vmatpush1.bf16.msra.mxu0 %v2968
    %3098 = vmatprep.subr.bf16.mxu0 %v2971
    %3099 = vmatpush1.bf16.msra.mxu0 %v2970
    %3100 = vmatprep.subr.bf16.mxu0 %v2973
    %3101 = vmatpush1.bf16.msra.mxu0 %v2972
    %3102 = vmatprep.subr.bf16.mxu0 %v2975
    %3103 = vmatpush1.bf16.msra.mxu0 %v2974
    %3104 = vmatprep.subr.bf16.mxu0 %v2977
    %3105 = vmatpush1.bf16.msra.mxu0 %v2976
    %3106 = vmatprep.subr.bf16.mxu0 %v2979
    %3107 = vmatpush1.bf16.msra.mxu0 %v2978
    %3108 = vmatprep.subr.bf16.mxu0 %v2981
    %3109 = vmatpush1.bf16.msra.mxu0 %v2980
    %3110 = vmatprep.subr.bf16.mxu0 %v2983
    %3111 = vmatpush1.bf16.msra.mxu0 %v2982
    %3112 = vmatprep.subr.bf16.mxu0 %v2985
    %3113 = vmatpush1.bf16.msra.mxu0 %v2984
    %3114 = vmatprep.mubr.bf16.mxu0 %v2559
    %3115 = vmatmul.mubr.bf16.gmra.mrb[0].mxu0 %v2558
    %v3116 = vpop.f32.mrb[0].mxu0
    %v3117 = vadd.f32 %v2755, %v3116
    %v3118 = vpop.f32.mrb[0].mxu0
    %v3119 = vadd.f32 %v2759, %v3118
    %v3120 = vpop.f32.mrb[0].mxu0
    %v3121 = vadd.f32 %v2755, %v3120
    %v3122 = vpop.f32.mrb[0].mxu0
    %v3123 = vadd.f32 %v2759, %v3122
    %3124 = vmatprep.mubr.bf16.mxu0 %v2563
    %3125 = vmatmul.mubr.bf16.gmra.mrb[0].mxu0 %v2562
    %v3126 = vpop.f32.mrb[0].mxu0
    %v3127 = vadd.f32 %v2755, %v3126
    %v3128 = vpop.f32.mrb[0].mxu0
    %v3129 = vadd.f32 %v2759, %v3128
    %v3130 = vpop.f32.mrb[0].mxu0
    %v3131 = vadd.f32 %v2755, %v3130
    %v3132 = vpop.f32.mrb[0].mxu0
    %v3133 = vadd.f32 %v2759, %v3132
    %3134 = vmatprep.mubr.bf16.mxu0 %v2567
    %3135 = vmatmul.mubr.bf16.gmra.mrb[0].mxu0 %v2566
    %v3136 = vpop.f32.mrb[0].mxu0
    %v3137 = vadd.f32 %v2755, %v3136
    %v3138 = vpop.f32.mrb[0].mxu0
    %v3139 = vadd.f32 %v2759, %v3138
    %v3140 = vpop.f32.mrb[0].mxu0
    %v3141 = vadd.f32 %v2755, %v3140
    %v3142 = vpop.f32.mrb[0].mxu0
    %v3143 = vadd.f32 %v2759, %v3142
    %3144 = vmatprep.mubr.bf16.mxu0 %v2571
    %3145 = vmatmul.mubr.bf16.gmra.mrb[0].mxu0 %v2570
    %v3146 = vpop.f32.mrb[0].mxu0
    %v3147 = vadd.f32 %v2755, %v3146
    %v3148 = vpop.f32.mrb[0].mxu0
    %v3149 = vadd.f32 %v2759, %v3148
    %v3150 = vpop.f32.mrb[0].mxu0
    %v3151 = vadd.f32 %v2755, %v3150
    %v3152 = vpop.f32.mrb[0].mxu0
    %v3153 = vadd.f32 %v2759, %v3152
    %3154 = vmatprep.mubr.bf16.mxu0 %v2575
    %3155 = vmatmul.mubr.bf16.gmra.mrb[0].mxu0 %v2574
    %v3156 = vpop.f32.mrb[0].mxu0
    %v3157 = vadd.f32 %v2755, %v3156
    %v3158 = vpop.f32.mrb[0].mxu0
    %v3159 = vadd.f32 %v2759, %v3158
    %v3160 = vpop.f32.mrb[0].mxu0
    %v3161 = vadd.f32 %v2755, %v3160
    %v3162 = vpop.f32.mrb[0].mxu0
    %v3163 = vadd.f32 %v2759, %v3162
    %3164 = vmatprep.mubr.bf16.mxu0 %v2579
    %3165 = vmatmul.mubr.bf16.gmra.mrb[0].mxu0 %v2578
    %v3166 = vpop.f32.mrb[0].mxu0
    %v3167 = vadd.f32 %v2755, %v3166
    %v3168 = vpop.f32.mrb[0].mxu0
    %v3169 = vadd.f32 %v2759, %v3168
    %v3170 = vpop.f32.mrb[0].mxu0
    %v3171 = vadd.f32 %v2755, %v3170
    %v3172 = vpop.f32.mrb[0].mxu0
    %v3173 = vadd.f32 %v2759, %v3172
    %3174 = vmatprep.mubr.bf16.mxu0 %v2583
    %3175 = vmatmul.mubr.bf16.gmra.mrb[0].mxu0 %v2582
    %v3176 = vpop.f32.mrb[0].mxu0
    %v3177 = vadd.f32 %v2755, %v3176
    %v3178 = vpop.f32.mrb[0].mxu0
    %v3179 = vadd.f32 %v2759, %v3178
    %v3180 = vpop.f32.mrb[0].mxu0
    %v3181 = vadd.f32 %v2755, %v3180
    %v3182 = vpop.f32.mrb[0].mxu0
    %v3183 = vadd.f32 %v2759, %v3182
    %3184 = vmatprep.mubr.bf16.mxu0 %v2587
    %3185 = vmatmul.mubr.bf16.gmra.mrb[0].mxu0 %v2586
    %v3186 = vpop.f32.mrb[0].mxu0
    %v3187 = vadd.f32 %v2755, %v3186
    %v3188 = vpop.f32.mrb[0].mxu0
    %v3189 = vadd.f32 %v2759, %v3188
    %v3190 = vpop.f32.mrb[0].mxu0
    %v3191 = vadd.f32 %v2755, %v3190
    %v3192 = vpop.f32.mrb[0].mxu0
    %v3193 = vadd.f32 %v2759, %v3192
    %3194 = vmatprep.mubr.bf16.mxu0 %v2591
    %3195 = vmatmul.mubr.bf16.gmra.mrb[0].mxu0 %v2590
    %v3196 = vpop.f32.mrb[0].mxu0
    %v3197 = vadd.f32 %v2755, %v3196
    %v3198 = vpop.f32.mrb[0].mxu0
    %v3199 = vadd.f32 %v2759, %v3198
    %v3200 = vpop.f32.mrb[0].mxu0
    %v3201 = vadd.f32 %v2755, %v3200
    %v3202 = vpop.f32.mrb[0].mxu0
    %v3203 = vadd.f32 %v2759, %v3202
    %3204 = vmatprep.mubr.bf16.mxu0 %v2595
    %3205 = vmatmul.mubr.bf16.gmra.mrb[0].mxu0 %v2594
    %v3206 = vpop.f32.mrb[0].mxu0
    %v3207 = vadd.f32 %v2755, %v3206
    %v3208 = vpop.f32.mrb[0].mxu0
    %v3209 = vadd.f32 %v2759, %v3208
    %v3210 = vpop.f32.mrb[0].mxu0
    %v3211 = vadd.f32 %v2755, %v3210
    %v3212 = vpop.f32.mrb[0].mxu0
    %v3213 = vadd.f32 %v2759, %v3212
    %3214 = vmatprep.mubr.bf16.mxu0 %v2599
    %3215 = vmatmul.mubr.bf16.gmra.mrb[0].mxu0 %v2598
    %v3216 = vpop.f32.mrb[0].mxu0
    %v3217 = vadd.f32 %v2755, %v3216
    %v3218 = vpop.f32.mrb[0].mxu0
    %v3219 = vadd.f32 %v2759, %v3218
    %v3220 = vpop.f32.mrb[0].mxu0
    %v3221 = vadd.f32 %v2755, %v3220
    %v3222 = vpop.f32.mrb[0].mxu0
    %v3223 = vadd.f32 %v2759, %v3222
    %3224 = vmatprep.mubr.bf16.mxu0 %v2603
    %3225 = vmatmul.mubr.bf16.gmra.mrb[0].mxu0 %v2602
    %v3226 = vpop.f32.mrb[0].mxu0
    %v3227 = vadd.f32 %v2755, %v3226
    %v3228 = vpop.f32.mrb[0].mxu0
    %v3229 = vadd.f32 %v2759, %v3228
    %v3230 = vpop.f32.mrb[0].mxu0
    %v3231 = vadd.f32 %v2755, %v3230
    %v3232 = vpop.f32.mrb[0].mxu0
    %v3233 = vadd.f32 %v2759, %v3232
    %3234 = vmatprep.mubr.bf16.mxu0 %v2607
    %3235 = vmatmul.mubr.bf16.gmra.mrb[0].mxu0 %v2606
    %v3236 = vpop.f32.mrb[0].mxu0
    %v3237 = vadd.f32 %v2755, %v3236
    %v3238 = vpop.f32.mrb[0].mxu0
    %v3239 = vadd.f32 %v2759, %v3238
    %v3240 = vpop.f32.mrb[0].mxu0
    %v3241 = vadd.f32 %v2755, %v3240
    %v3242 = vpop.f32.mrb[0].mxu0
    %v3243 = vadd.f32 %v2759, %v3242
    %3244 = vmatprep.mubr.bf16.mxu0 %v2611
    %3245 = vmatmul.mubr.bf16.gmra.mrb[0].mxu0 %v2610
    %v3246 = vpop.f32.mrb[0].mxu0
    %v3247 = vadd.f32 %v2755, %v3246
    %v3248 = vpop.f32.mrb[0].mxu0
    %v3249 = vadd.f32 %v2759, %v3248
    %v3250 = vpop.f32.mrb[0].mxu0
    %v3251 = vadd.f32 %v2755, %v3250
    %v3252 = vpop.f32.mrb[0].mxu0
    %v3253 = vadd.f32 %v2759, %v3252
    %3254 = vmatprep.mubr.bf16.mxu0 %v2615
    %3255 = vmatmul.mubr.bf16.gmra.mrb[0].mxu0 %v2614
    %v3256 = vpop.f32.mrb[0].mxu0
    %v3257 = vadd.f32 %v2755, %v3256
    %v3258 = vpop.f32.mrb[0].mxu0
    %v3259 = vadd.f32 %v2759, %v3258
    %v3260 = vpop.f32.mrb[0].mxu0
    %v3261 = vadd.f32 %v2755, %v3260
    %v3262 = vpop.f32.mrb[0].mxu0
    %v3263 = vadd.f32 %v2759, %v3262
    %3264 = vmatprep.mubr.bf16.mxu0 %v2619
    %3265 = vmatmul.mubr.bf16.gmra.mrb[0].mxu0 %v2618
    %v3266 = vpop.f32.mrb[0].mxu0
    %v3267 = vadd.f32 %v2755, %v3266
    %v3268 = vpop.f32.mrb[0].mxu0
    %v3269 = vadd.f32 %v2759, %v3268
    %v3270 = vpop.f32.mrb[0].mxu0
    %v3271 = vadd.f32 %v2755, %v3270
    %v3272 = vpop.f32.mrb[0].mxu0
    %v3273 = vadd.f32 %v2759, %v3272
    %3274 = vmatprep.mubr.bf16.mxu0 %v2623
    %3275 = vmatmul.mubr.bf16.gmra.mrb[0].mxu0 %v2622
    %v3276 = vpop.f32.mrb[0].mxu0
    %v3277 = vadd.f32 %v2755, %v3276
    %v3278 = vpop.f32.mrb[0].mxu0
    %v3279 = vadd.f32 %v2759, %v3278
    %v3280 = vpop.f32.mrb[0].mxu0
    %v3281 = vadd.f32 %v2755, %v3280
    %v3282 = vpop.f32.mrb[0].mxu0
    %v3283 = vadd.f32 %v2759, %v3282
    %3284 = vmatprep.mubr.bf16.mxu0 %v2627
    %3285 = vmatmul.mubr.bf16.gmra.mrb[0].mxu0 %v2626
    %v3286 = vpop.f32.mrb[0].mxu0
    %v3287 = vadd.f32 %v2755, %v3286
    %v3288 = vpop.f32.mrb[0].mxu0
    %v3289 = vadd.f32 %v2759, %v3288
    %v3290 = vpop.f32.mrb[0].mxu0
    %v3291 = vadd.f32 %v2755, %v3290
    %v3292 = vpop.f32.mrb[0].mxu0
    %v3293 = vadd.f32 %v2759, %v3292
    %3294 = vmatprep.mubr.bf16.mxu0 %v2631
    %3295 = vmatmul.mubr.bf16.gmra.mrb[0].mxu0 %v2630
    %v3296 = vpop.f32.mrb[0].mxu0
    %v3297 = vadd.f32 %v2755, %v3296
    %v3298 = vpop.f32.mrb[0].mxu0
    %v3299 = vadd.f32 %v2759, %v3298
    %v3300 = vpop.f32.mrb[0].mxu0
    %v3301 = vadd.f32 %v2755, %v3300
    %v3302 = vpop.f32.mrb[0].mxu0
    %v3303 = vadd.f32 %v2759, %v3302
    %3304 = vmatprep.mubr.bf16.mxu0 %v2635
    %3305 = vmatmul.mubr.bf16.gmra.mrb[0].mxu0 %v2634
    %v3306 = vpop.f32.mrb[0].mxu0
    %v3307 = vadd.f32 %v2755, %v3306
    %v3308 = vpop.f32.mrb[0].mxu0
    %v3309 = vadd.f32 %v2759, %v3308
    %v3310 = vpop.f32.mrb[0].mxu0
    %v3311 = vadd.f32 %v2755, %v3310
    %v3312 = vpop.f32.mrb[0].mxu0
    %v3313 = vadd.f32 %v2759, %v3312
    %3314 = vmatprep.mubr.bf16.mxu0 %v2639
    %3315 = vmatmul.mubr.bf16.gmra.mrb[0].mxu0 %v2638
    %v3316 = vpop.f32.mrb[0].mxu0
    %v3317 = vadd.f32 %v2755, %v3316
    %v3318 = vpop.f32.mrb[0].mxu0
    %v3319 = vadd.f32 %v2759, %v3318
    %v3320 = vpop.f32.mrb[0].mxu0
    %v3321 = vadd.f32 %v2755, %v3320
    %v3322 = vpop.f32.mrb[0].mxu0
    %v3323 = vadd.f32 %v2759, %v3322
    %3324 = vmatprep.mubr.bf16.mxu0 %v2643
    %3325 = vmatmul.mubr.bf16.gmra.mrb[0].mxu0 %v2642
    %v3326 = vpop.f32.mrb[0].mxu0
    %v3327 = vadd.f32 %v2755, %v3326
    %v3328 = vpop.f32.mrb[0].mxu0
    %v3329 = vadd.f32 %v2759, %v3328
    %v3330 = vpop.f32.mrb[0].mxu0
    %v3331 = vadd.f32 %v2755, %v3330
    %v3332 = vpop.f32.mrb[0].mxu0
    %v3333 = vadd.f32 %v2759, %v3332
    %3334 = vmatprep.mubr.bf16.mxu0 %v2647
    %3335 = vmatmul.mubr.bf16.gmra.mrb[0].mxu0 %v2646
    %v3336 = vpop.f32.mrb[0].mxu0
    %v3337 = vadd.f32 %v2755, %v3336
    %v3338 = vpop.f32.mrb[0].mxu0
    %v3339 = vadd.f32 %v2759, %v3338
    %v3340 = vpop.f32.mrb[0].mxu0
    %v3341 = vadd.f32 %v2755, %v3340
    %v3342 = vpop.f32.mrb[0].mxu0
    %v3343 = vadd.f32 %v2759, %v3342
    %3344 = vmatprep.mubr.bf16.mxu0 %v2651
    %3345 = vmatmul.mubr.bf16.gmra.mrb[0].mxu0 %v2650
    %v3346 = vpop.f32.mrb[0].mxu0
    %v3347 = vadd.f32 %v2755, %v3346
    %v3348 = vpop.f32.mrb[0].mxu0
    %v3349 = vadd.f32 %v2759, %v3348
    %v3350 = vpop.f32.mrb[0].mxu0
    %v3351 = vadd.f32 %v2755, %v3350
    %v3352 = vpop.f32.mrb[0].mxu0
    %v3353 = vadd.f32 %v2759, %v3352
    %3354 = vmatprep.mubr.bf16.mxu0 %v2655
    %3355 = vmatmul.mubr.bf16.gmra.mrb[0].mxu0 %v2654
    %v3356 = vpop.f32.mrb[0].mxu0
    %v3357 = vadd.f32 %v2755, %v3356
    %v3358 = vpop.f32.mrb[0].mxu0
    %v3359 = vadd.f32 %v2759, %v3358
    %v3360 = vpop.f32.mrb[0].mxu0
    %v3361 = vadd.f32 %v2755, %v3360
    %v3362 = vpop.f32.mrb[0].mxu0
    %v3363 = vadd.f32 %v2759, %v3362
    %3364 = vmatprep.mubr.bf16.mxu0 %v2659
    %3365 = vmatmul.mubr.bf16.gmra.mrb[0].mxu0 %v2658
    %v3366 = vpop.f32.mrb[0].mxu0
    %v3367 = vadd.f32 %v2755, %v3366
    %v3368 = vpop.f32.mrb[0].mxu0
    %v3369 = vadd.f32 %v2759, %v3368
    %v3370 = vpop.f32.mrb[0].mxu0
    %v3371 = vadd.f32 %v2755, %v3370
    %v3372 = vpop.f32.mrb[0].mxu0
    %v3373 = vadd.f32 %v2759, %v3372
    %3374 = vmatprep.mubr.bf16.mxu0 %v2663
    %3375 = vmatmul.mubr.bf16.gmra.mrb[0].mxu0 %v2662
    %v3376 = vpop.f32.mrb[0].mxu0
    %v3377 = vadd.f32 %v2755, %v3376
    %v3378 = vpop.f32.mrb[0].mxu0
    %v3379 = vadd.f32 %v2759, %v3378
    %v3380 = vpop.f32.mrb[0].mxu0
    %v3381 = vadd.f32 %v2755, %v3380
    %v3382 = vpop.f32.mrb[0].mxu0
    %v3383 = vadd.f32 %v2759, %v3382
    %3384 = vmatprep.mubr.bf16.mxu0 %v2667
    %3385 = vmatmul.mubr.bf16.gmra.mrb[0].mxu0 %v2666
    %v3386 = vpop.f32.mrb[0].mxu0
    %v3387 = vadd.f32 %v2755, %v3386
    %v3388 = vpop.f32.mrb[0].mxu0
    %v3389 = vadd.f32 %v2759, %v3388
    %v3390 = vpop.f32.mrb[0].mxu0
    %v3391 = vadd.f32 %v2755, %v3390
    %v3392 = vpop.f32.mrb[0].mxu0
    %v3393 = vadd.f32 %v2759, %v3392
    %3394 = vmatprep.mubr.bf16.mxu0 %v2671
    %3395 = vmatmul.mubr.bf16.gmra.mrb[0].mxu0 %v2670
    %v3396 = vpop.f32.mrb[0].mxu0
    %v3397 = vadd.f32 %v2755, %v3396
    %v3398 = vpop.f32.mrb[0].mxu0
    %v3399 = vadd.f32 %v2759, %v3398
    %v3400 = vpop.f32.mrb[0].mxu0
    %v3401 = vadd.f32 %v2755, %v3400
    %v3402 = vpop.f32.mrb[0].mxu0
    %v3403 = vadd.f32 %v2759, %v3402
    %3404 = vmatprep.mubr.bf16.mxu0 %v2675
    %3405 = vmatmul.mubr.bf16.gmra.mrb[0].mxu0 %v2674
    %v3406 = vpop.f32.mrb[0].mxu0
    %v3407 = vadd.f32 %v2755, %v3406
    %v3408 = vpop.f32.mrb[0].mxu0
    %v3409 = vadd.f32 %v2759, %v3408
    %v3410 = vpop.f32.mrb[0].mxu0
    %v3411 = vadd.f32 %v2755, %v3410
    %v3412 = vpop.f32.mrb[0].mxu0
    %v3413 = vadd.f32 %v2759, %v3412
    %3414 = vmatprep.mubr.bf16.mxu0 %v2679
    %3415 = vmatmul.mubr.bf16.gmra.mrb[0].mxu0 %v2678
    %v3416 = vpop.f32.mrb[0].mxu0
    %v3417 = vadd.f32 %v2755, %v3416
    %v3418 = vpop.f32.mrb[0].mxu0
    %v3419 = vadd.f32 %v2759, %v3418
    %v3420 = vpop.f32.mrb[0].mxu0
    %v3421 = vadd.f32 %v2755, %v3420
    %v3422 = vpop.f32.mrb[0].mxu0
    %v3423 = vadd.f32 %v2759, %v3422
    %3424 = vmatprep.mubr.bf16.mxu0 %v2683
    %3425 = vmatmul.mubr.bf16.gmra.mrb[0].mxu0 %v2682
    %v3426 = vpop.f32.mrb[0].mxu0
    %v3427 = vadd.f32 %v2755, %v3426
    %v3428 = vpop.f32.mrb[0].mxu0
    %v3429 = vadd.f32 %v2759, %v3428
    %v3430 = vpop.f32.mrb[0].mxu0
    %v3431 = vadd.f32 %v2755, %v3430
    %v3432 = vpop.f32.mrb[0].mxu0
    %v3433 = vadd.f32 %v2759, %v3432
    %3434 = vdwg.mxu0
    %3435 = vmatprep.subr.bf16.mxu0 %v2987
    %3436 = vmatpush1.bf16.msra.mxu0 %v2986
    %3437 = vmatprep.subr.bf16.mxu0 %v2989
    %3438 = vmatpush1.bf16.msra.mxu0 %v2988
    %3439 = vmatprep.subr.bf16.mxu0 %v2991
    %3440 = vmatpush1.bf16.msra.mxu0 %v2990
    %3441 = vmatprep.subr.bf16.mxu0 %v2993
    %3442 = vmatpush1.bf16.msra.mxu0 %v2992
    %3443 = vmatprep.subr.bf16.mxu0 %v2995
    %3444 = vmatpush1.bf16.msra.mxu0 %v2994
    %3445 = vmatprep.subr.bf16.mxu0 %v2997
    %3446 = vmatpush1.bf16.msra.mxu0 %v2996
    %3447 = vmatprep.subr.bf16.mxu0 %v2999
    %3448 = vmatpush1.bf16.msra.mxu0 %v2998
    %3449 = vmatprep.subr.bf16.mxu0 %v3001
    %3450 = vmatpush1.bf16.msra.mxu0 %v3000
    %3451 = vmatprep.subr.bf16.mxu0 %v3003
    %3452 = vmatpush1.bf16.msra.mxu0 %v3002
    %3453 = vmatprep.subr.bf16.mxu0 %v3005
    %3454 = vmatpush1.bf16.msra.mxu0 %v3004
    %3455 = vmatprep.subr.bf16.mxu0 %v3007
    %3456 = vmatpush1.bf16.msra.mxu0 %v3006
    %3457 = vmatprep.subr.bf16.mxu0 %v3009
    %3458 = vmatpush1.bf16.msra.mxu0 %v3008
    %3459 = vmatprep.subr.bf16.mxu0 %v3011
    %3460 = vmatpush1.bf16.msra.mxu0 %v3010
    %3461 = vmatprep.subr.bf16.mxu0 %v3013
    %3462 = vmatpush1.bf16.msra.mxu0 %v3012
    %3463 = vmatprep.subr.bf16.mxu0 %v3015
    %3464 = vmatpush1.bf16.msra.mxu0 %v3014
    %3465 = vmatprep.subr.bf16.mxu0 %v3017
    %3466 = vmatpush1.bf16.msra.mxu0 %v3016
    %3467 = vmatprep.mubr.bf16.mxu0 %v2561
    %3468 = vmatmul.mubr.bf16.gmra.mrb[0].mxu0 %v2560
    %v3469 = vpop.f32.mrb[0].mxu0
    %v3470 = vadd.f32 %v3117, %v3469
    %v3471 = vpop.f32.mrb[0].mxu0
    %v3472 = vadd.f32 %v3119, %v3471
    %v3473 = vpop.f32.mrb[0].mxu0
    %v3474 = vadd.f32 %v3121, %v3473
    %v3475 = vpop.f32.mrb[0].mxu0
    %v3476 = vadd.f32 %v3123, %v3475
    %3477 = vmatprep.mubr.bf16.mxu0 %v2565
    %3478 = vmatmul.mubr.bf16.gmra.mrb[0].mxu0 %v2564
    %v3479 = vpop.f32.mrb[0].mxu0
    %v3480 = vadd.f32 %v3127, %v3479
    %v3481 = vpop.f32.mrb[0].mxu0
    %v3482 = vadd.f32 %v3129, %v3481
    %v3483 = vpop.f32.mrb[0].mxu0
    %v3484 = vadd.f32 %v3131, %v3483
    %v3485 = vpop.f32.mrb[0].mxu0
    %v3486 = vadd.f32 %v3133, %v3485
    %3487 = vmatprep.mubr.bf16.mxu0 %v2569
    %3488 = vmatmul.mubr.bf16.gmra.mrb[0].mxu0 %v2568
    %v3489 = vpop.f32.mrb[0].mxu0
    %v3490 = vadd.f32 %v3137, %v3489
    %v3491 = vpop.f32.mrb[0].mxu0
    %v3492 = vadd.f32 %v3139, %v3491
    %v3493 = vpop.f32.mrb[0].mxu0
    %v3494 = vadd.f32 %v3141, %v3493
    %v3495 = vpop.f32.mrb[0].mxu0
    %v3496 = vadd.f32 %v3143, %v3495
    %3497 = vmatprep.mubr.bf16.mxu0 %v2573
    %3498 = vmatmul.mubr.bf16.gmra.mrb[0].mxu0 %v2572
    %v3499 = vpop.f32.mrb[0].mxu0
    %v3500 = vadd.f32 %v3147, %v3499
    %v3501 = vpop.f32.mrb[0].mxu0
    %v3502 = vadd.f32 %v3149, %v3501
    %v3503 = vpop.f32.mrb[0].mxu0
    %v3504 = vadd.f32 %v3151, %v3503
    %v3505 = vpop.f32.mrb[0].mxu0
    %v3506 = vadd.f32 %v3153, %v3505
    %3507 = vmatprep.mubr.bf16.mxu0 %v2577
    %3508 = vmatmul.mubr.bf16.gmra.mrb[0].mxu0 %v2576
    %v3509 = vpop.f32.mrb[0].mxu0
    %v3510 = vadd.f32 %v3157, %v3509
    %v3511 = vpop.f32.mrb[0].mxu0
    %v3512 = vadd.f32 %v3159, %v3511
    %v3513 = vpop.f32.mrb[0].mxu0
    %v3514 = vadd.f32 %v3161, %v3513
    %v3515 = vpop.f32.mrb[0].mxu0
    %v3516 = vadd.f32 %v3163, %v3515
    %3517 = vmatprep.mubr.bf16.mxu0 %v2581
    %3518 = vmatmul.mubr.bf16.gmra.mrb[0].mxu0 %v2580
    %v3519 = vpop.f32.mrb[0].mxu0
    %v3520 = vadd.f32 %v3167, %v3519
    %v3521 = vpop.f32.mrb[0].mxu0
    %v3522 = vadd.f32 %v3169, %v3521
    %v3523 = vpop.f32.mrb[0].mxu0
    %v3524 = vadd.f32 %v3171, %v3523
    %v3525 = vpop.f32.mrb[0].mxu0
    %v3526 = vadd.f32 %v3173, %v3525
    %3527 = vmatprep.mubr.bf16.mxu0 %v2585
    %3528 = vmatmul.mubr.bf16.gmra.mrb[0].mxu0 %v2584
    %v3529 = vpop.f32.mrb[0].mxu0
    %v3530 = vadd.f32 %v3177, %v3529
    %v3531 = vpop.f32.mrb[0].mxu0
    %v3532 = vadd.f32 %v3179, %v3531
    %v3533 = vpop.f32.mrb[0].mxu0
    %v3534 = vadd.f32 %v3181, %v3533
    %v3535 = vpop.f32.mrb[0].mxu0
    %v3536 = vadd.f32 %v3183, %v3535
    %3537 = vmatprep.mubr.bf16.mxu0 %v2589
    %3538 = vmatmul.mubr.bf16.gmra.mrb[0].mxu0 %v2588
    %v3539 = vpop.f32.mrb[0].mxu0
    %v3540 = vadd.f32 %v3187, %v3539
    %v3541 = vpop.f32.mrb[0].mxu0
    %v3542 = vadd.f32 %v3189, %v3541
    %v3543 = vpop.f32.mrb[0].mxu0
    %v3544 = vadd.f32 %v3191, %v3543
    %v3545 = vpop.f32.mrb[0].mxu0
    %v3546 = vadd.f32 %v3193, %v3545
    %3547 = vmatprep.mubr.bf16.mxu0 %v2593
    %3548 = vmatmul.mubr.bf16.gmra.mrb[0].mxu0 %v2592
    %v3549 = vpop.f32.mrb[0].mxu0
    %v3550 = vadd.f32 %v3197, %v3549
    %v3551 = vpop.f32.mrb[0].mxu0
    %v3552 = vadd.f32 %v3199, %v3551
    %v3553 = vpop.f32.mrb[0].mxu0
    %v3554 = vadd.f32 %v3201, %v3553
    %v3555 = vpop.f32.mrb[0].mxu0
    %v3556 = vadd.f32 %v3203, %v3555
    %3557 = vmatprep.mubr.bf16.mxu0 %v2597
    %3558 = vmatmul.mubr.bf16.gmra.mrb[0].mxu0 %v2596
    %v3559 = vpop.f32.mrb[0].mxu0
    %v3560 = vadd.f32 %v3207, %v3559
    %v3561 = vpop.f32.mrb[0].mxu0
    %v3562 = vadd.f32 %v3209, %v3561
    %v3563 = vpop.f32.mrb[0].mxu0
    %v3564 = vadd.f32 %v3211, %v3563
    %v3565 = vpop.f32.mrb[0].mxu0
    %v3566 = vadd.f32 %v3213, %v3565
    %3567 = vmatprep.mubr.bf16.mxu0 %v2601
    %3568 = vmatmul.mubr.bf16.gmra.mrb[0].mxu0 %v2600
    %v3569 = vpop.f32.mrb[0].mxu0
    %v3570 = vadd.f32 %v3217, %v3569
    %v3571 = vpop.f32.mrb[0].mxu0
    %v3572 = vadd.f32 %v3219, %v3571
    %v3573 = vpop.f32.mrb[0].mxu0
    %v3574 = vadd.f32 %v3221, %v3573
    %v3575 = vpop.f32.mrb[0].mxu0
    %v3576 = vadd.f32 %v3223, %v3575
    %3577 = vmatprep.mubr.bf16.mxu0 %v2605
    %3578 = vmatmul.mubr.bf16.gmra.mrb[0].mxu0 %v2604
    %v3579 = vpop.f32.mrb[0].mxu0
    %v3580 = vadd.f32 %v3227, %v3579
    %v3581 = vpop.f32.mrb[0].mxu0
    %v3582 = vadd.f32 %v3229, %v3581
    %v3583 = vpop.f32.mrb[0].mxu0
    %v3584 = vadd.f32 %v3231, %v3583
    %v3585 = vpop.f32.mrb[0].mxu0
    %v3586 = vadd.f32 %v3233, %v3585
    %3587 = vmatprep.mubr.bf16.mxu0 %v2609
    %3588 = vmatmul.mubr.bf16.gmra.mrb[0].mxu0 %v2608
    %v3589 = vpop.f32.mrb[0].mxu0
    %v3590 = vadd.f32 %v3237, %v3589
    %v3591 = vpop.f32.mrb[0].mxu0
    %v3592 = vadd.f32 %v3239, %v3591
    %v3593 = vpop.f32.mrb[0].mxu0
    %v3594 = vadd.f32 %v3241, %v3593
    %v3595 = vpop.f32.mrb[0].mxu0
    %v3596 = vadd.f32 %v3243, %v3595
    %3597 = vmatprep.mubr.bf16.mxu0 %v2613
    %3598 = vmatmul.mubr.bf16.gmra.mrb[0].mxu0 %v2612
    %v3599 = vpop.f32.mrb[0].mxu0
    %v3600 = vadd.f32 %v3247, %v3599
    %v3601 = vpop.f32.mrb[0].mxu0
    %v3602 = vadd.f32 %v3249, %v3601
    %v3603 = vpop.f32.mrb[0].mxu0
    %v3604 = vadd.f32 %v3251, %v3603
    %v3605 = vpop.f32.mrb[0].mxu0
    %v3606 = vadd.f32 %v3253, %v3605
    %3607 = vmatprep.mubr.bf16.mxu0 %v2617
    %3608 = vmatmul.mubr.bf16.gmra.mrb[0].mxu0 %v2616
    %v3609 = vpop.f32.mrb[0].mxu0
    %v3610 = vadd.f32 %v3257, %v3609
    %v3611 = vpop.f32.mrb[0].mxu0
    %v3612 = vadd.f32 %v3259, %v3611
    %v3613 = vpop.f32.mrb[0].mxu0
    %v3614 = vadd.f32 %v3261, %v3613
    %v3615 = vpop.f32.mrb[0].mxu0
    %v3616 = vadd.f32 %v3263, %v3615
    %3617 = vmatprep.mubr.bf16.mxu0 %v2621
    %3618 = vmatmul.mubr.bf16.gmra.mrb[0].mxu0 %v2620
    %v3619 = vpop.f32.mrb[0].mxu0
    %v3620 = vadd.f32 %v3267, %v3619
    %v3621 = vpop.f32.mrb[0].mxu0
    %v3622 = vadd.f32 %v3269, %v3621
    %v3623 = vpop.f32.mrb[0].mxu0
    %v3624 = vadd.f32 %v3271, %v3623
    %v3625 = vpop.f32.mrb[0].mxu0
    %v3626 = vadd.f32 %v3273, %v3625
    %3627 = vmatprep.mubr.bf16.mxu0 %v2625
    %3628 = vmatmul.mubr.bf16.gmra.mrb[0].mxu0 %v2624
    %v3629 = vpop.f32.mrb[0].mxu0
    %v3630 = vadd.f32 %v3277, %v3629
    %v3631 = vpop.f32.mrb[0].mxu0
    %v3632 = vadd.f32 %v3279, %v3631
    %v3633 = vpop.f32.mrb[0].mxu0
    %v3634 = vadd.f32 %v3281, %v3633
    %v3635 = vpop.f32.mrb[0].mxu0
    %v3636 = vadd.f32 %v3283, %v3635
    %3637 = vmatprep.mubr.bf16.mxu0 %v2629
    %3638 = vmatmul.mubr.bf16.gmra.mrb[0].mxu0 %v2628
    %v3639 = vpop.f32.mrb[0].mxu0
    %v3640 = vadd.f32 %v3287, %v3639
    %v3641 = vpop.f32.mrb[0].mxu0
    %v3642 = vadd.f32 %v3289, %v3641
    %v3643 = vpop.f32.mrb[0].mxu0
    %v3644 = vadd.f32 %v3291, %v3643
    %v3645 = vpop.f32.mrb[0].mxu0
    %v3646 = vadd.f32 %v3293, %v3645
    %3647 = vmatprep.mubr.bf16.mxu0 %v2633
    %3648 = vmatmul.mubr.bf16.gmra.mrb[0].mxu0 %v2632
    %v3649 = vpop.f32.mrb[0].mxu0
    %v3650 = vadd.f32 %v3297, %v3649
    %v3651 = vpop.f32.mrb[0].mxu0
    %v3652 = vadd.f32 %v3299, %v3651
    %v3653 = vpop.f32.mrb[0].mxu0
    %v3654 = vadd.f32 %v3301, %v3653
    %v3655 = vpop.f32.mrb[0].mxu0
    %v3656 = vadd.f32 %v3303, %v3655
    %3657 = vmatprep.mubr.bf16.mxu0 %v2637
    %3658 = vmatmul.mubr.bf16.gmra.mrb[0].mxu0 %v2636
    %v3659 = vpop.f32.mrb[0].mxu0
    %v3660 = vadd.f32 %v3307, %v3659
    %v3661 = vpop.f32.mrb[0].mxu0
    %v3662 = vadd.f32 %v3309, %v3661
    %v3663 = vpop.f32.mrb[0].mxu0
    %v3664 = vadd.f32 %v3311, %v3663
    %v3665 = vpop.f32.mrb[0].mxu0
    %v3666 = vadd.f32 %v3313, %v3665
    %3667 = vmatprep.mubr.bf16.mxu0 %v2641
    %3668 = vmatmul.mubr.bf16.gmra.mrb[0].mxu0 %v2640
    %v3669 = vpop.f32.mrb[0].mxu0
    %v3670 = vadd.f32 %v3317, %v3669
    %v3671 = vpop.f32.mrb[0].mxu0
    %v3672 = vadd.f32 %v3319, %v3671
    %v3673 = vpop.f32.mrb[0].mxu0
    %v3674 = vadd.f32 %v3321, %v3673
    %v3675 = vpop.f32.mrb[0].mxu0
    %v3676 = vadd.f32 %v3323, %v3675
    %3677 = vmatprep.mubr.bf16.mxu0 %v2645
    %3678 = vmatmul.mubr.bf16.gmra.mrb[0].mxu0 %v2644
    %v3679 = vpop.f32.mrb[0].mxu0
    %v3680 = vadd.f32 %v3327, %v3679
    %v3681 = vpop.f32.mrb[0].mxu0
    %v3682 = vadd.f32 %v3329, %v3681
    %v3683 = vpop.f32.mrb[0].mxu0
    %v3684 = vadd.f32 %v3331, %v3683
    %v3685 = vpop.f32.mrb[0].mxu0
    %v3686 = vadd.f32 %v3333, %v3685
    %3687 = vmatprep.mubr.bf16.mxu0 %v2649
    %3688 = vmatmul.mubr.bf16.gmra.mrb[0].mxu0 %v2648
    %v3689 = vpop.f32.mrb[0].mxu0
    %v3690 = vadd.f32 %v3337, %v3689
    %v3691 = vpop.f32.mrb[0].mxu0
    %v3692 = vadd.f32 %v3339, %v3691
    %v3693 = vpop.f32.mrb[0].mxu0
    %v3694 = vadd.f32 %v3341, %v3693
    %v3695 = vpop.f32.mrb[0].mxu0
    %v3696 = vadd.f32 %v3343, %v3695
    %3697 = vmatprep.mubr.bf16.mxu0 %v2653
    %3698 = vmatmul.mubr.bf16.gmra.mrb[0].mxu0 %v2652
    %v3699 = vpop.f32.mrb[0].mxu0
    %v3700 = vadd.f32 %v3347, %v3699
    %v3701 = vpop.f32.mrb[0].mxu0
    %v3702 = vadd.f32 %v3349, %v3701
    %v3703 = vpop.f32.mrb[0].mxu0
    %v3704 = vadd.f32 %v3351, %v3703
    %v3705 = vpop.f32.mrb[0].mxu0
    %v3706 = vadd.f32 %v3353, %v3705
    %3707 = vmatprep.mubr.bf16.mxu0 %v2657
    %3708 = vmatmul.mubr.bf16.gmra.mrb[0].mxu0 %v2656
    %v3709 = vpop.f32.mrb[0].mxu0
    %v3710 = vadd.f32 %v3357, %v3709
    %v3711 = vpop.f32.mrb[0].mxu0
    %v3712 = vadd.f32 %v3359, %v3711
    %v3713 = vpop.f32.mrb[0].mxu0
    %v3714 = vadd.f32 %v3361, %v3713
    %v3715 = vpop.f32.mrb[0].mxu0
    %v3716 = vadd.f32 %v3363, %v3715
    %3717 = vmatprep.mubr.bf16.mxu0 %v2661
    %3718 = vmatmul.mubr.bf16.gmra.mrb[0].mxu0 %v2660
    %v3719 = vpop.f32.mrb[0].mxu0
    %v3720 = vadd.f32 %v3367, %v3719
    %v3721 = vpop.f32.mrb[0].mxu0
    %v3722 = vadd.f32 %v3369, %v3721
    %v3723 = vpop.f32.mrb[0].mxu0
    %v3724 = vadd.f32 %v3371, %v3723
    %v3725 = vpop.f32.mrb[0].mxu0
    %v3726 = vadd.f32 %v3373, %v3725
    %3727 = vmatprep.mubr.bf16.mxu0 %v2665
    %3728 = vmatmul.mubr.bf16.gmra.mrb[0].mxu0 %v2664
    %v3729 = vpop.f32.mrb[0].mxu0
    %v3730 = vadd.f32 %v3377, %v3729
    %v3731 = vpop.f32.mrb[0].mxu0
    %v3732 = vadd.f32 %v3379, %v3731
    %v3733 = vpop.f32.mrb[0].mxu0
    %v3734 = vadd.f32 %v3381, %v3733
    %v3735 = vpop.f32.mrb[0].mxu0
    %v3736 = vadd.f32 %v3383, %v3735
    %3737 = vmatprep.mubr.bf16.mxu0 %v2669
    %3738 = vmatmul.mubr.bf16.gmra.mrb[0].mxu0 %v2668
    %v3739 = vpop.f32.mrb[0].mxu0
    %v3740 = vadd.f32 %v3387, %v3739
    %v3741 = vpop.f32.mrb[0].mxu0
    %v3742 = vadd.f32 %v3389, %v3741
    %v3743 = vpop.f32.mrb[0].mxu0
    %v3744 = vadd.f32 %v3391, %v3743
    %v3745 = vpop.f32.mrb[0].mxu0
    %v3746 = vadd.f32 %v3393, %v3745
    %3747 = vmatprep.mubr.bf16.mxu0 %v2673
    %3748 = vmatmul.mubr.bf16.gmra.mrb[0].mxu0 %v2672
    %v3749 = vpop.f32.mrb[0].mxu0
    %v3750 = vadd.f32 %v3397, %v3749
    %v3751 = vpop.f32.mrb[0].mxu0
    %v3752 = vadd.f32 %v3399, %v3751
    %v3753 = vpop.f32.mrb[0].mxu0
    %v3754 = vadd.f32 %v3401, %v3753
    %v3755 = vpop.f32.mrb[0].mxu0
    %v3756 = vadd.f32 %v3403, %v3755
    %3757 = vmatprep.mubr.bf16.mxu0 %v2677
    %3758 = vmatmul.mubr.bf16.gmra.mrb[0].mxu0 %v2676
    %v3759 = vpop.f32.mrb[0].mxu0
    %v3760 = vadd.f32 %v3407, %v3759
    %v3761 = vpop.f32.mrb[0].mxu0
    %v3762 = vadd.f32 %v3409, %v3761
    %v3763 = vpop.f32.mrb[0].mxu0
    %v3764 = vadd.f32 %v3411, %v3763
    %v3765 = vpop.f32.mrb[0].mxu0
    %v3766 = vadd.f32 %v3413, %v3765
    %3767 = vmatprep.mubr.bf16.mxu0 %v2681
    %3768 = vmatmul.mubr.bf16.gmra.mrb[0].mxu0 %v2680
    %v3769 = vpop.f32.mrb[0].mxu0
    %v3770 = vadd.f32 %v3417, %v3769
    %v3771 = vpop.f32.mrb[0].mxu0
    %v3772 = vadd.f32 %v3419, %v3771
    %v3773 = vpop.f32.mrb[0].mxu0
    %v3774 = vadd.f32 %v3421, %v3773
    %v3775 = vpop.f32.mrb[0].mxu0
    %v3776 = vadd.f32 %v3423, %v3775
    %3777 = vmatprep.mubr.bf16.mxu0 %v2685
    %3778 = vmatmul.mubr.bf16.gmra.mrb[0].mxu0 %v2684
    %v3779 = vpop.f32.mrb[0].mxu0
    %v3780 = vadd.f32 %v3427, %v3779
    %v3781 = vpop.f32.mrb[0].mxu0
    %v3782 = vadd.f32 %v3429, %v3781
    %v3783 = vpop.f32.mrb[0].mxu0
    %v3784 = vadd.f32 %v3431, %v3783
    %v3785 = vpop.f32.mrb[0].mxu0
    %v3786 = vadd.f32 %v3433, %v3785
    %3787 = vdwg.mxu0
    %v3788 = vmax.f32 %v3470, 0.0
    %v3789 = vmax.f32 %v3472, 0.0
    %v3790 = vmax.f32 %v3474, 0.0
    %v3791 = vmax.f32 %v3476, 0.0
    %v3792 = vmax.f32 %v3480, 0.0
    %v3793 = vmax.f32 %v3482, 0.0
    %v3794 = vmax.f32 %v3484, 0.0
    %v3795 = vmax.f32 %v3486, 0.0
    %v3796 = vmax.f32 %v3490, 0.0
    %v3797 = vmax.f32 %v3492, 0.0
    %v3798 = vmax.f32 %v3494, 0.0
    %v3799 = vmax.f32 %v3496, 0.0
    %v3800 = vmax.f32 %v3500, 0.0
    %v3801 = vmax.f32 %v3502, 0.0
    %v3802 = vmax.f32 %v3504, 0.0
    %v3803 = vmax.f32 %v3506, 0.0
    %v3804 = vmax.f32 %v3510, 0.0
    %v3805 = vmax.f32 %v3512, 0.0
    %v3806 = vmax.f32 %v3514, 0.0
    %v3807 = vmax.f32 %v3516, 0.0
    %v3808 = vmax.f32 %v3520, 0.0
    %v3809 = vmax.f32 %v3522, 0.0
    %v3810 = vmax.f32 %v3524, 0.0
    %v3811 = vmax.f32 %v3526, 0.0
    %v3812 = vmax.f32 %v3530, 0.0
    %v3813 = vmax.f32 %v3532, 0.0
    %v3814 = vmax.f32 %v3534, 0.0
    %v3815 = vmax.f32 %v3536, 0.0
    %v3816 = vmax.f32 %v3540, 0.0
    %v3817 = vmax.f32 %v3542, 0.0
    %v3818 = vmax.f32 %v3544, 0.0
    %v3819 = vmax.f32 %v3546, 0.0
    %v3820 = vmax.f32 %v3550, 0.0
    %v3821 = vmax.f32 %v3552, 0.0
    %v3822 = vmax.f32 %v3554, 0.0
    %v3823 = vmax.f32 %v3556, 0.0
    %v3824 = vmax.f32 %v3560, 0.0
    %v3825 = vmax.f32 %v3562, 0.0
    %v3826 = vmax.f32 %v3564, 0.0
    %v3827 = vmax.f32 %v3566, 0.0
    %v3828 = vmax.f32 %v3570, 0.0
    %v3829 = vmax.f32 %v3572, 0.0
    %v3830 = vmax.f32 %v3574, 0.0
    %v3831 = vmax.f32 %v3576, 0.0
    %v3832 = vmax.f32 %v3580, 0.0
    %v3833 = vmax.f32 %v3582, 0.0
    %v3834 = vmax.f32 %v3584, 0.0
    %v3835 = vmax.f32 %v3586, 0.0
    %v3836 = vmax.f32 %v3590, 0.0
    %v3837 = vmax.f32 %v3592, 0.0
    %v3838 = vmax.f32 %v3594, 0.0
    %v3839 = vmax.f32 %v3596, 0.0
    %v3840 = vmax.f32 %v3600, 0.0
    %v3841 = vmax.f32 %v3602, 0.0
    %v3842 = vmax.f32 %v3604, 0.0
    %v3843 = vmax.f32 %v3606, 0.0
    %v3844 = vmax.f32 %v3610, 0.0
    %v3845 = vmax.f32 %v3612, 0.0
    %v3846 = vmax.f32 %v3614, 0.0
    %v3847 = vmax.f32 %v3616, 0.0
    %v3848 = vmax.f32 %v3620, 0.0
    %v3849 = vmax.f32 %v3622, 0.0
    %v3850 = vmax.f32 %v3624, 0.0
    %v3851 = vmax.f32 %v3626, 0.0
    %v3852 = vmax.f32 %v3630, 0.0
    %v3853 = vmax.f32 %v3632, 0.0
    %v3854 = vmax.f32 %v3634, 0.0
    %v3855 = vmax.f32 %v3636, 0.0
    %v3856 = vmax.f32 %v3640, 0.0
    %v3857 = vmax.f32 %v3642, 0.0
    %v3858 = vmax.f32 %v3644, 0.0
    %v3859 = vmax.f32 %v3646, 0.0
    %v3860 = vmax.f32 %v3650, 0.0
    %v3861 = vmax.f32 %v3652, 0.0
    %v3862 = vmax.f32 %v3654, 0.0
    %v3863 = vmax.f32 %v3656, 0.0
    %v3864 = vmax.f32 %v3660, 0.0
    %v3865 = vmax.f32 %v3662, 0.0
    %v3866 = vmax.f32 %v3664, 0.0
    %v3867 = vmax.f32 %v3666, 0.0
    %v3868 = vmax.f32 %v3670, 0.0
    %v3869 = vmax.f32 %v3672, 0.0
    %v3870 = vmax.f32 %v3674, 0.0
    %v3871 = vmax.f32 %v3676, 0.0
    %v3872 = vmax.f32 %v3680, 0.0
    %v3873 = vmax.f32 %v3682, 0.0
    %v3874 = vmax.f32 %v3684, 0.0
    %v3875 = vmax.f32 %v3686, 0.0
    %v3876 = vmax.f32 %v3690, 0.0
    %v3877 = vmax.f32 %v3692, 0.0
    %v3878 = vmax.f32 %v3694, 0.0
    %v3879 = vmax.f32 %v3696, 0.0
    %v3880 = vmax.f32 %v3700, 0.0
    %v3881 = vmax.f32 %v3702, 0.0
    %v3882 = vmax.f32 %v3704, 0.0
    %v3883 = vmax.f32 %v3706, 0.0
    %v3884 = vmax.f32 %v3710, 0.0
    %v3885 = vmax.f32 %v3712, 0.0
    %v3886 = vmax.f32 %v3714, 0.0
    %v3887 = vmax.f32 %v3716, 0.0
    %v3888 = vmax.f32 %v3720, 0.0
    %v3889 = vmax.f32 %v3722, 0.0
    %v3890 = vmax.f32 %v3724, 0.0
    %v3891 = vmax.f32 %v3726, 0.0
    %v3892 = vmax.f32 %v3730, 0.0
    %v3893 = vmax.f32 %v3732, 0.0
    %v3894 = vmax.f32 %v3734, 0.0
    %v3895 = vmax.f32 %v3736, 0.0
    %v3896 = vmax.f32 %v3740, 0.0
    %v3897 = vmax.f32 %v3742, 0.0
    %v3898 = vmax.f32 %v3744, 0.0
    %v3899 = vmax.f32 %v3746, 0.0
    %v3900 = vmax.f32 %v3750, 0.0
    %v3901 = vmax.f32 %v3752, 0.0
    %v3902 = vmax.f32 %v3754, 0.0
    %v3903 = vmax.f32 %v3756, 0.0
    %v3904 = vmax.f32 %v3760, 0.0
    %v3905 = vmax.f32 %v3762, 0.0
    %v3906 = vmax.f32 %v3764, 0.0
    %v3907 = vmax.f32 %v3766, 0.0
    %v3908 = vmax.f32 %v3770, 0.0
    %v3909 = vmax.f32 %v3772, 0.0
    %v3910 = vmax.f32 %v3774, 0.0
    %v3911 = vmax.f32 %v3776, 0.0
    %v3912 = vmax.f32 %v3780, 0.0
    %v3913 = vmax.f32 %v3782, 0.0
    %v3914 = vmax.f32 %v3784, 0.0
    %v3915 = vmax.f32 %v3786, 0.0
    %v3916 = vpack.c.bf16 %v3790, %v3788
    %v3917 = vpack.c.bf16 %v3791, %v3789
    %v3918 = vpack.c.bf16 %v3794, %v3792
    %v3919 = vpack.c.bf16 %v3795, %v3793
    %v3920 = vpack.c.bf16 %v3798, %v3796
    %v3921 = vpack.c.bf16 %v3799, %v3797
    %v3922 = vpack.c.bf16 %v3802, %v3800
    %v3923 = vpack.c.bf16 %v3803, %v3801
    %v3924 = vpack.c.bf16 %v3806, %v3804
    %v3925 = vpack.c.bf16 %v3807, %v3805
    %v3926 = vpack.c.bf16 %v3810, %v3808
    %v3927 = vpack.c.bf16 %v3811, %v3809
    %v3928 = vpack.c.bf16 %v3814, %v3812
    %v3929 = vpack.c.bf16 %v3815, %v3813
    %v3930 = vpack.c.bf16 %v3818, %v3816
    %v3931 = vpack.c.bf16 %v3819, %v3817
    %v3932 = vpack.c.bf16 %v3822, %v3820
    %v3933 = vpack.c.bf16 %v3823, %v3821
    %v3934 = vpack.c.bf16 %v3826, %v3824
    %v3935 = vpack.c.bf16 %v3827, %v3825
    %v3936 = vpack.c.bf16 %v3830, %v3828
    %v3937 = vpack.c.bf16 %v3831, %v3829
    %v3938 = vpack.c.bf16 %v3834, %v3832
    %v3939 = vpack.c.bf16 %v3835, %v3833
    %v3940 = vpack.c.bf16 %v3838, %v3836
    %v3941 = vpack.c.bf16 %v3839, %v3837
    %v3942 = vpack.c.bf16 %v3842, %v3840
    %v3943 = vpack.c.bf16 %v3843, %v3841
    %v3944 = vpack.c.bf16 %v3846, %v3844
    %v3945 = vpack.c.bf16 %v3847, %v3845
    %v3946 = vpack.c.bf16 %v3850, %v3848
    %v3947 = vpack.c.bf16 %v3851, %v3849
    %v3948 = vpack.c.bf16 %v3854, %v3852
    %v3949 = vpack.c.bf16 %v3855, %v3853
    %v3950 = vpack.c.bf16 %v3858, %v3856
    %v3951 = vpack.c.bf16 %v3859, %v3857
    %v3952 = vpack.c.bf16 %v3862, %v3860
    %v3953 = vpack.c.bf16 %v3863, %v3861
    %v3954 = vpack.c.bf16 %v3866, %v3864
    %v3955 = vpack.c.bf16 %v3867, %v3865
    %v3956 = vpack.c.bf16 %v3870, %v3868
    %v3957 = vpack.c.bf16 %v3871, %v3869
    %v3958 = vpack.c.bf16 %v3874, %v3872
    %v3959 = vpack.c.bf16 %v3875, %v3873
    %v3960 = vpack.c.bf16 %v3878, %v3876
    %v3961 = vpack.c.bf16 %v3879, %v3877
    %v3962 = vpack.c.bf16 %v3882, %v3880
    %v3963 = vpack.c.bf16 %v3883, %v3881
    %v3964 = vpack.c.bf16 %v3886, %v3884
    %v3965 = vpack.c.bf16 %v3887, %v3885
    %v3966 = vpack.c.bf16 %v3890, %v3888
    %v3967 = vpack.c.bf16 %v3891, %v3889
    %v3968 = vpack.c.bf16 %v3894, %v3892
    %v3969 = vpack.c.bf16 %v3895, %v3893
    %v3970 = vpack.c.bf16 %v3898, %v3896
    %v3971 = vpack.c.bf16 %v3899, %v3897
    %v3972 = vpack.c.bf16 %v3902, %v3900
    %v3973 = vpack.c.bf16 %v3903, %v3901
    %v3974 = vpack.c.bf16 %v3906, %v3904
    %v3975 = vpack.c.bf16 %v3907, %v3905
    %v3976 = vpack.c.bf16 %v3910, %v3908
    %v3977 = vpack.c.bf16 %v3911, %v3909
    %v3978 = vpack.c.bf16 %v3914, %v3912
    %v3979 = vpack.c.bf16 %v3915, %v3913
    %v3980 = vld [vmem:[#allocation5] sm:$0xf]
    %v3981 = vld [vmem:[#allocation5 + $0x4] sm:$0xf]
    %v3982 = vld [vmem:[#allocation5 + $0x8] sm:$0xf]
    %v3983 = vld [vmem:[#allocation5 + $0xc] sm:$0xf]
    %v3984 = vld [vmem:[#allocation5 + $0x10] sm:$0xf]
    %v3985 = vld [vmem:[#allocation5 + $0x14] sm:$0xf]
    %v3986 = vld [vmem:[#allocation5 + $0x18] sm:$0xf]
    %v3987 = vld [vmem:[#allocation5 + $0x1c] sm:$0xf]
    %v3988 = vld [vmem:[#allocation5 + $0x20] sm:$0xf]
    %v3989 = vld [vmem:[#allocation5 + $0x24] sm:$0xf]
    %v3990 = vld [vmem:[#allocation5 + $0x28] sm:$0xf]
    %v3991 = vld [vmem:[#allocation5 + $0x2c] sm:$0xf]
    %v3992 = vld [vmem:[#allocation5 + $0x30] sm:$0xf]
    %v3993 = vld [vmem:[#allocation5 + $0x34] sm:$0xf]
    %v3994 = vld [vmem:[#allocation5 + $0x38] sm:$0xf]
    %v3995 = vld [vmem:[#allocation5 + $0x3c] sm:$0xf]
    %v3996 = vld [vmem:[#allocation5 + $0x40] sm:$0xf]
    %v3997 = vld [vmem:[#allocation5 + $0x44] sm:$0xf]
    %v3998 = vld [vmem:[#allocation5 + $0x48] sm:$0xf]
    %v3999 = vld [vmem:[#allocation5 + $0x4c] sm:$0xf]
    %v4000 = vld [vmem:[#allocation5 + $0x50] sm:$0xf]
    %v4001 = vld [vmem:[#allocation5 + $0x54] sm:$0xf]
    %v4002 = vld [vmem:[#allocation5 + $0x58] sm:$0xf]
    %v4003 = vld [vmem:[#allocation5 + $0x5c] sm:$0xf]
    %v4004 = vld [vmem:[#allocation5 + $0x60] sm:$0xf]
    %v4005 = vld [vmem:[#allocation5 + $0x64] sm:$0xf]
    %v4006 = vld [vmem:[#allocation5 + $0x68] sm:$0xf]
    %v4007 = vld [vmem:[#allocation5 + $0x6c] sm:$0xf]
    %v4008 = vld [vmem:[#allocation5 + $0x70] sm:$0xf]
    %v4009 = vld [vmem:[#allocation5 + $0x74] sm:$0xf]
    %v4010 = vld [vmem:[#allocation5 + $0x78] sm:$0xf]
    %v4011 = vld [vmem:[#allocation5 + $0x7c] sm:$0xf]
    %v4012 = vld [vmem:[%s9] sm:$0x1]
    %v4014 = vlaneseq
    %v4015 = vshrl.u32 %v4014, 7
    %v4016 = vsub.s32 0, %v4015
    %v4017 = vrot.slane %v4012, %v4016
    %v4051 = vunpack.c.l.b16 %v3980
    %v4052 = vunpack.c.l.b16 %v3981
    %v4053 = vunpack.c.l.b16 %v3982
    %v4054 = vunpack.c.l.b16 %v3983
    %v4055 = vunpack.c.l.b16 %v3984
    %v4056 = vunpack.c.l.b16 %v3985
    %v4057 = vunpack.c.l.b16 %v3986
    %v4058 = vunpack.c.l.b16 %v3987
    %v4059 = vunpack.c.l.b16 %v3988
    %v4060 = vunpack.c.l.b16 %v3989
    %v4061 = vunpack.c.l.b16 %v3990
    %v4062 = vunpack.c.l.b16 %v3991
    %v4063 = vunpack.c.l.b16 %v3992
    %v4064 = vunpack.c.l.b16 %v3993
    %v4065 = vunpack.c.l.b16 %v3994
    %v4066 = vunpack.c.l.b16 %v3995
    %v4067 = vunpack.c.l.b16 %v3996
    %v4068 = vunpack.c.l.b16 %v3997
    %v4069 = vunpack.c.l.b16 %v3998
    %v4070 = vunpack.c.l.b16 %v3999
    %v4071 = vunpack.c.l.b16 %v4000
    %v4072 = vunpack.c.l.b16 %v4001
    %v4073 = vunpack.c.l.b16 %v4002
    %v4074 = vunpack.c.l.b16 %v4003
    %v4075 = vunpack.c.l.b16 %v4004
    %v4076 = vunpack.c.l.b16 %v4005
    %v4077 = vunpack.c.l.b16 %v4006
    %v4078 = vunpack.c.l.b16 %v4007
    %v4079 = vunpack.c.l.b16 %v4008
    %v4080 = vunpack.c.l.b16 %v4009
    %v4081 = vunpack.c.l.b16 %v4010
    %v4082 = vunpack.c.l.b16 %v4011
    %v4083 = vpack.c.b16 %v4052, %v4051
    %v4084 = vpack.c.b16 %v4054, %v4053
    %v4085 = vpack.c.b16 %v4056, %v4055
    %v4086 = vpack.c.b16 %v4058, %v4057
    %v4087 = vpack.c.b16 %v4060, %v4059
    %v4088 = vpack.c.b16 %v4062, %v4061
    %v4089 = vpack.c.b16 %v4064, %v4063
    %v4090 = vpack.c.b16 %v4066, %v4065
    %v4091 = vpack.c.b16 %v4068, %v4067
    %v4092 = vpack.c.b16 %v4070, %v4069
    %v4093 = vpack.c.b16 %v4072, %v4071
    %v4094 = vpack.c.b16 %v4074, %v4073
    %v4095 = vpack.c.b16 %v4076, %v4075
    %v4096 = vpack.c.b16 %v4078, %v4077
    %v4097 = vpack.c.b16 %v4080, %v4079
    %v4098 = vpack.c.b16 %v4082, %v4081
    %4115 = vmatprep.subr.bf16.mxu0 0
    %4116 = vmatpush1.bf16.msra.mxu0 %v4083
    %4117 = vmatprep.subr.bf16.mxu0 0
    %4118 = vmatpush1.bf16.msra.mxu0 %v4084
    %4119 = vmatprep.subr.bf16.mxu0 0
    %4120 = vmatpush1.bf16.msra.mxu0 %v4085
    %4121 = vmatprep.subr.bf16.mxu0 0
    %4122 = vmatpush1.bf16.msra.mxu0 %v4086
    %4123 = vmatprep.subr.bf16.mxu0 0
    %4124 = vmatpush1.bf16.msra.mxu0 %v4087
    %4125 = vmatprep.subr.bf16.mxu0 0
    %4126 = vmatpush1.bf16.msra.mxu0 %v4088
    %4127 = vmatprep.subr.bf16.mxu0 0
    %4128 = vmatpush1.bf16.msra.mxu0 %v4089
    %4129 = vmatprep.subr.bf16.mxu0 0
    %4130 = vmatpush1.bf16.msra.mxu0 %v4090
    %4131 = vmatprep.subr.bf16.mxu0 0
    %4132 = vmatpush1.bf16.msra.mxu0 %v4091
    %4133 = vmatprep.subr.bf16.mxu0 0
    %4134 = vmatpush1.bf16.msra.mxu0 %v4092
    %4135 = vmatprep.subr.bf16.mxu0 0
    %4136 = vmatpush1.bf16.msra.mxu0 %v4093
    %4137 = vmatprep.subr.bf16.mxu0 0
    %4138 = vmatpush1.bf16.msra.mxu0 %v4094
    %4139 = vmatprep.subr.bf16.mxu0 0
    %4140 = vmatpush1.bf16.msra.mxu0 %v4095
    %4141 = vmatprep.subr.bf16.mxu0 0
    %4142 = vmatpush1.bf16.msra.mxu0 %v4096
    %4143 = vmatprep.subr.bf16.mxu0 0
    %4144 = vmatpush1.bf16.msra.mxu0 %v4097
    %4145 = vmatprep.subr.bf16.mxu0 0
    %4146 = vmatpush1.bf16.msra.mxu0 %v4098
    %4147 = vmatprep.mubr.bf16.mxu0 %v3917
    %4148 = vmatmul.mubr.bf16.gmra.mrb[0].mxu0 %v3916
    %v4149 = vpop.f32.mrb[0].mxu0
    %v4150 = vadd.f32 %v4017, %v4149
    %v4151 = vpop.f32.mrb[0].mxu0
    %v4152 = vpop.f32.mrb[0].mxu0
    %v4153 = vadd.f32 %v4017, %v4152
    %v4154 = vpop.f32.mrb[0].mxu0
    %4155 = vmatprep.mubr.bf16.mxu0 %v3919
    %4156 = vmatmul.mubr.bf16.gmra.mrb[0].mxu0 %v3918
    %v4157 = vpop.f32.mrb[0].mxu0
    %v4158 = vadd.f32 %v4017, %v4157
    %v4159 = vpop.f32.mrb[0].mxu0
    %v4160 = vpop.f32.mrb[0].mxu0
    %v4161 = vadd.f32 %v4017, %v4160
    %v4162 = vpop.f32.mrb[0].mxu0
    %4163 = vmatprep.mubr.bf16.mxu0 %v3921
    %4164 = vmatmul.mubr.bf16.gmra.mrb[0].mxu0 %v3920
    %v4165 = vpop.f32.mrb[0].mxu0
    %v4166 = vadd.f32 %v4017, %v4165
    %v4167 = vpop.f32.mrb[0].mxu0
    %v4168 = vpop.f32.mrb[0].mxu0
    %v4169 = vadd.f32 %v4017, %v4168
    %v4170 = vpop.f32.mrb[0].mxu0
    %4171 = vmatprep.mubr.bf16.mxu0 %v3923
    %4172 = vmatmul.mubr.bf16.gmra.mrb[0].mxu0 %v3922
    %v4173 = vpop.f32.mrb[0].mxu0
    %v4174 = vadd.f32 %v4017, %v4173
    %v4175 = vpop.f32.mrb[0].mxu0
    %v4176 = vpop.f32.mrb[0].mxu0
    %v4177 = vadd.f32 %v4017, %v4176
    %v4178 = vpop.f32.mrb[0].mxu0
    %4179 = vmatprep.mubr.bf16.mxu0 %v3925
    %4180 = vmatmul.mubr.bf16.gmra.mrb[0].mxu0 %v3924
    %v4181 = vpop.f32.mrb[0].mxu0
    %v4182 = vadd.f32 %v4017, %v4181
    %v4183 = vpop.f32.mrb[0].mxu0
    %v4184 = vpop.f32.mrb[0].mxu0
    %v4185 = vadd.f32 %v4017, %v4184
    %v4186 = vpop.f32.mrb[0].mxu0
    %4187 = vmatprep.mubr.bf16.mxu0 %v3927
    %4188 = vmatmul.mubr.bf16.gmra.mrb[0].mxu0 %v3926
    %v4189 = vpop.f32.mrb[0].mxu0
    %v4190 = vadd.f32 %v4017, %v4189
    %v4191 = vpop.f32.mrb[0].mxu0
    %v4192 = vpop.f32.mrb[0].mxu0
    %v4193 = vadd.f32 %v4017, %v4192
    %v4194 = vpop.f32.mrb[0].mxu0
    %4195 = vmatprep.mubr.bf16.mxu0 %v3929
    %4196 = vmatmul.mubr.bf16.gmra.mrb[0].mxu0 %v3928
    %v4197 = vpop.f32.mrb[0].mxu0
    %v4198 = vadd.f32 %v4017, %v4197
    %v4199 = vpop.f32.mrb[0].mxu0
    %v4200 = vpop.f32.mrb[0].mxu0
    %v4201 = vadd.f32 %v4017, %v4200
    %v4202 = vpop.f32.mrb[0].mxu0
    %4203 = vmatprep.mubr.bf16.mxu0 %v3931
    %4204 = vmatmul.mubr.bf16.gmra.mrb[0].mxu0 %v3930
    %v4205 = vpop.f32.mrb[0].mxu0
    %v4206 = vadd.f32 %v4017, %v4205
    %v4207 = vpop.f32.mrb[0].mxu0
    %v4208 = vpop.f32.mrb[0].mxu0
    %v4209 = vadd.f32 %v4017, %v4208
    %v4210 = vpop.f32.mrb[0].mxu0
    %4211 = vmatprep.mubr.bf16.mxu0 %v3933
    %4212 = vmatmul.mubr.bf16.gmra.mrb[0].mxu0 %v3932
    %v4213 = vpop.f32.mrb[0].mxu0
    %v4214 = vadd.f32 %v4017, %v4213
    %v4215 = vpop.f32.mrb[0].mxu0
    %v4216 = vpop.f32.mrb[0].mxu0
    %v4217 = vadd.f32 %v4017, %v4216
    %v4218 = vpop.f32.mrb[0].mxu0
    %4219 = vmatprep.mubr.bf16.mxu0 %v3935
    %4220 = vmatmul.mubr.bf16.gmra.mrb[0].mxu0 %v3934
    %v4221 = vpop.f32.mrb[0].mxu0
    %v4222 = vadd.f32 %v4017, %v4221
    %v4223 = vpop.f32.mrb[0].mxu0
    %v4224 = vpop.f32.mrb[0].mxu0
    %v4225 = vadd.f32 %v4017, %v4224
    %v4226 = vpop.f32.mrb[0].mxu0
    %4227 = vmatprep.mubr.bf16.mxu0 %v3937
    %4228 = vmatmul.mubr.bf16.gmra.mrb[0].mxu0 %v3936
    %v4229 = vpop.f32.mrb[0].mxu0
    %v4230 = vadd.f32 %v4017, %v4229
    %v4231 = vpop.f32.mrb[0].mxu0
    %v4232 = vpop.f32.mrb[0].mxu0
    %v4233 = vadd.f32 %v4017, %v4232
    %v4234 = vpop.f32.mrb[0].mxu0
    %4235 = vmatprep.mubr.bf16.mxu0 %v3939
    %4236 = vmatmul.mubr.bf16.gmra.mrb[0].mxu0 %v3938
    %v4237 = vpop.f32.mrb[0].mxu0
    %v4238 = vadd.f32 %v4017, %v4237
    %v4239 = vpop.f32.mrb[0].mxu0
    %v4240 = vpop.f32.mrb[0].mxu0
    %v4241 = vadd.f32 %v4017, %v4240
    %v4242 = vpop.f32.mrb[0].mxu0
    %4243 = vmatprep.mubr.bf16.mxu0 %v3941
    %4244 = vmatmul.mubr.bf16.gmra.mrb[0].mxu0 %v3940
    %v4245 = vpop.f32.mrb[0].mxu0
    %v4246 = vadd.f32 %v4017, %v4245
    %v4247 = vpop.f32.mrb[0].mxu0
    %v4248 = vpop.f32.mrb[0].mxu0
    %v4249 = vadd.f32 %v4017, %v4248
    %v4250 = vpop.f32.mrb[0].mxu0
    %4251 = vmatprep.mubr.bf16.mxu0 %v3943
    %4252 = vmatmul.mubr.bf16.gmra.mrb[0].mxu0 %v3942
    %v4253 = vpop.f32.mrb[0].mxu0
    %v4254 = vadd.f32 %v4017, %v4253
    %v4255 = vpop.f32.mrb[0].mxu0
    %v4256 = vpop.f32.mrb[0].mxu0
    %v4257 = vadd.f32 %v4017, %v4256
    %v4258 = vpop.f32.mrb[0].mxu0
    %4259 = vmatprep.mubr.bf16.mxu0 %v3945
    %4260 = vmatmul.mubr.bf16.gmra.mrb[0].mxu0 %v3944
    %v4261 = vpop.f32.mrb[0].mxu0
    %v4262 = vadd.f32 %v4017, %v4261
    %v4263 = vpop.f32.mrb[0].mxu0
    %v4264 = vpop.f32.mrb[0].mxu0
    %v4265 = vadd.f32 %v4017, %v4264
    %v4266 = vpop.f32.mrb[0].mxu0
    %4267 = vmatprep.mubr.bf16.mxu0 %v3947
    %4268 = vmatmul.mubr.bf16.gmra.mrb[0].mxu0 %v3946
    %v4269 = vpop.f32.mrb[0].mxu0
    %v4270 = vadd.f32 %v4017, %v4269
    %v4271 = vpop.f32.mrb[0].mxu0
    %v4272 = vpop.f32.mrb[0].mxu0
    %v4273 = vadd.f32 %v4017, %v4272
    %v4274 = vpop.f32.mrb[0].mxu0
    %4275 = vmatprep.mubr.bf16.mxu0 %v3949
    %4276 = vmatmul.mubr.bf16.gmra.mrb[0].mxu0 %v3948
    %v4277 = vpop.f32.mrb[0].mxu0
    %v4278 = vadd.f32 %v4017, %v4277
    %v4279 = vpop.f32.mrb[0].mxu0
    %v4280 = vpop.f32.mrb[0].mxu0
    %v4281 = vadd.f32 %v4017, %v4280
    %v4282 = vpop.f32.mrb[0].mxu0
    %4283 = vmatprep.mubr.bf16.mxu0 %v3951
    %4284 = vmatmul.mubr.bf16.gmra.mrb[0].mxu0 %v3950
    %v4285 = vpop.f32.mrb[0].mxu0
    %v4286 = vadd.f32 %v4017, %v4285
    %v4287 = vpop.f32.mrb[0].mxu0
    %v4288 = vpop.f32.mrb[0].mxu0
    %v4289 = vadd.f32 %v4017, %v4288
    %v4290 = vpop.f32.mrb[0].mxu0
    %4291 = vmatprep.mubr.bf16.mxu0 %v3953
    %4292 = vmatmul.mubr.bf16.gmra.mrb[0].mxu0 %v3952
    %v4293 = vpop.f32.mrb[0].mxu0
    %v4294 = vadd.f32 %v4017, %v4293
    %v4295 = vpop.f32.mrb[0].mxu0
    %v4296 = vpop.f32.mrb[0].mxu0
    %v4297 = vadd.f32 %v4017, %v4296
    %v4298 = vpop.f32.mrb[0].mxu0
    %4299 = vmatprep.mubr.bf16.mxu0 %v3955
    %4300 = vmatmul.mubr.bf16.gmra.mrb[0].mxu0 %v3954
    %v4301 = vpop.f32.mrb[0].mxu0
    %v4302 = vadd.f32 %v4017, %v4301
    %v4303 = vpop.f32.mrb[0].mxu0
    %v4304 = vpop.f32.mrb[0].mxu0
    %v4305 = vadd.f32 %v4017, %v4304
    %v4306 = vpop.f32.mrb[0].mxu0
    %4307 = vmatprep.mubr.bf16.mxu0 %v3957
    %4308 = vmatmul.mubr.bf16.gmra.mrb[0].mxu0 %v3956
    %v4309 = vpop.f32.mrb[0].mxu0
    %v4310 = vadd.f32 %v4017, %v4309
    %v4311 = vpop.f32.mrb[0].mxu0
    %v4312 = vpop.f32.mrb[0].mxu0
    %v4313 = vadd.f32 %v4017, %v4312
    %v4314 = vpop.f32.mrb[0].mxu0
    %4315 = vmatprep.mubr.bf16.mxu0 %v3959
    %4316 = vmatmul.mubr.bf16.gmra.mrb[0].mxu0 %v3958
    %v4317 = vpop.f32.mrb[0].mxu0
    %v4318 = vadd.f32 %v4017, %v4317
    %v4319 = vpop.f32.mrb[0].mxu0
    %v4320 = vpop.f32.mrb[0].mxu0
    %v4321 = vadd.f32 %v4017, %v4320
    %v4322 = vpop.f32.mrb[0].mxu0
    %4323 = vmatprep.mubr.bf16.mxu0 %v3961
    %4324 = vmatmul.mubr.bf16.gmra.mrb[0].mxu0 %v3960
    %v4325 = vpop.f32.mrb[0].mxu0
    %v4326 = vadd.f32 %v4017, %v4325
    %v4327 = vpop.f32.mrb[0].mxu0
    %v4328 = vpop.f32.mrb[0].mxu0
    %v4329 = vadd.f32 %v4017, %v4328
    %v4330 = vpop.f32.mrb[0].mxu0
    %4331 = vmatprep.mubr.bf16.mxu0 %v3963
    %4332 = vmatmul.mubr.bf16.gmra.mrb[0].mxu0 %v3962
    %v4333 = vpop.f32.mrb[0].mxu0
    %v4334 = vadd.f32 %v4017, %v4333
    %v4335 = vpop.f32.mrb[0].mxu0
    %v4336 = vpop.f32.mrb[0].mxu0
    %v4337 = vadd.f32 %v4017, %v4336
    %v4338 = vpop.f32.mrb[0].mxu0
    %4339 = vmatprep.mubr.bf16.mxu0 %v3965
    %4340 = vmatmul.mubr.bf16.gmra.mrb[0].mxu0 %v3964
    %v4341 = vpop.f32.mrb[0].mxu0
    %v4342 = vadd.f32 %v4017, %v4341
    %v4343 = vpop.f32.mrb[0].mxu0
    %v4344 = vpop.f32.mrb[0].mxu0
    %v4345 = vadd.f32 %v4017, %v4344
    %v4346 = vpop.f32.mrb[0].mxu0
    %4347 = vmatprep.mubr.bf16.mxu0 %v3967
    %4348 = vmatmul.mubr.bf16.gmra.mrb[0].mxu0 %v3966
    %v4349 = vpop.f32.mrb[0].mxu0
    %v4350 = vadd.f32 %v4017, %v4349
    %v4351 = vpop.f32.mrb[0].mxu0
    %v4352 = vpop.f32.mrb[0].mxu0
    %v4353 = vadd.f32 %v4017, %v4352
    %v4354 = vpop.f32.mrb[0].mxu0
    %4355 = vmatprep.mubr.bf16.mxu0 %v3969
    %4356 = vmatmul.mubr.bf16.gmra.mrb[0].mxu0 %v3968
    %v4357 = vpop.f32.mrb[0].mxu0
    %v4358 = vadd.f32 %v4017, %v4357
    %v4359 = vpop.f32.mrb[0].mxu0
    %v4360 = vpop.f32.mrb[0].mxu0
    %v4361 = vadd.f32 %v4017, %v4360
    %v4362 = vpop.f32.mrb[0].mxu0
    %4363 = vmatprep.mubr.bf16.mxu0 %v3971
    %4364 = vmatmul.mubr.bf16.gmra.mrb[0].mxu0 %v3970
    %v4365 = vpop.f32.mrb[0].mxu0
    %v4366 = vadd.f32 %v4017, %v4365
    %v4367 = vpop.f32.mrb[0].mxu0
    %v4368 = vpop.f32.mrb[0].mxu0
    %v4369 = vadd.f32 %v4017, %v4368
    %v4370 = vpop.f32.mrb[0].mxu0
    %4371 = vmatprep.mubr.bf16.mxu0 %v3973
    %4372 = vmatmul.mubr.bf16.gmra.mrb[0].mxu0 %v3972
    %v4373 = vpop.f32.mrb[0].mxu0
    %v4374 = vadd.f32 %v4017, %v4373
    %v4375 = vpop.f32.mrb[0].mxu0
    %v4376 = vpop.f32.mrb[0].mxu0
    %v4377 = vadd.f32 %v4017, %v4376
    %v4378 = vpop.f32.mrb[0].mxu0
    %4379 = vmatprep.mubr.bf16.mxu0 %v3975
    %4380 = vmatmul.mubr.bf16.gmra.mrb[0].mxu0 %v3974
    %v4381 = vpop.f32.mrb[0].mxu0
    %v4382 = vadd.f32 %v4017, %v4381
    %v4383 = vpop.f32.mrb[0].mxu0
    %v4384 = vpop.f32.mrb[0].mxu0
    %v4385 = vadd.f32 %v4017, %v4384
    %v4386 = vpop.f32.mrb[0].mxu0
    %4387 = vmatprep.mubr.bf16.mxu0 %v3977
    %4388 = vmatmul.mubr.bf16.gmra.mrb[0].mxu0 %v3976
    %v4389 = vpop.f32.mrb[0].mxu0
    %v4390 = vadd.f32 %v4017, %v4389
    %v4391 = vpop.f32.mrb[0].mxu0
    %v4392 = vpop.f32.mrb[0].mxu0
    %v4393 = vadd.f32 %v4017, %v4392
    %v4394 = vpop.f32.mrb[0].mxu0
    %4395 = vmatprep.mubr.bf16.mxu0 %v3979
    %4396 = vmatmul.mubr.bf16.gmra.mrb[0].mxu0 %v3978
    %v4397 = vpop.f32.mrb[0].mxu0
    %v4398 = vadd.f32 %v4017, %v4397
    %v4399 = vpop.f32.mrb[0].mxu0
    %v4400 = vpop.f32.mrb[0].mxu0
    %v4401 = vadd.f32 %v4017, %v4400
    %v4402 = vpop.f32.mrb[0].mxu0
    %4403 = vdwg.mxu0
    %4404 = vst [vmem:[%s16] sm:$0xff] %v4150
    %4405 = vst [vmem:[%s16 + $0x8] sm:$0xff] %v4153
    %4406 = vst [vmem:[%s16 + $0x10] sm:$0xff] %v4158
    %4407 = vst [vmem:[%s16 + $0x18] sm:$0xff] %v4161
    %4408 = vst [vmem:[%s16 + $0x20] sm:$0xff] %v4166
    %4409 = vst [vmem:[%s16 + $0x28] sm:$0xff] %v4169
    %4410 = vst [vmem:[%s16 + $0x30] sm:$0xff] %v4174
    %4411 = vst [vmem:[%s16 + $0x38] sm:$0xff] %v4177
    %4412 = vst [vmem:[%s16 + $0x40] sm:$0xff] %v4182
    %4413 = vst [vmem:[%s16 + $0x48] sm:$0xff] %v4185
    %4414 = vst [vmem:[%s16 + $0x50] sm:$0xff] %v4190
    %4415 = vst [vmem:[%s16 + $0x58] sm:$0xff] %v4193
    %4416 = vst [vmem:[%s16 + $0x60] sm:$0xff] %v4198
    %4417 = vst [vmem:[%s16 + $0x68] sm:$0xff] %v4201
    %4418 = vst [vmem:[%s16 + $0x70] sm:$0xff] %v4206
    %4419 = vst [vmem:[%s16 + $0x78] sm:$0xff] %v4209
    %4420 = vst [vmem:[%s16 + $0x80] sm:$0xff] %v4214
    %4421 = vst [vmem:[%s16 + $0x88] sm:$0xff] %v4217
    %4422 = vst [vmem:[%s16 + $0x90] sm:$0xff] %v4222
    %4423 = vst [vmem:[%s16 + $0x98] sm:$0xff] %v4225
    %4424 = vst [vmem:[%s16 + $0xa0] sm:$0xff] %v4230
    %4425 = vst [vmem:[%s16 + $0xa8] sm:$0xff] %v4233
    %4426 = vst [vmem:[%s16 + $0xb0] sm:$0xff] %v4238
    %4427 = vst [vmem:[%s16 + $0xb8] sm:$0xff] %v4241
    %4428 = vst [vmem:[%s16 + $0xc0] sm:$0xff] %v4246
    %4429 = vst [vmem:[%s16 + $0xc8] sm:$0xff] %v4249
    %4430 = vst [vmem:[%s16 + $0xd0] sm:$0xff] %v4254
    %4431 = vst [vmem:[%s16 + $0xd8] sm:$0xff] %v4257
    %4432 = vst [vmem:[%s16 + $0xe0] sm:$0xff] %v4262
    %4433 = vst [vmem:[%s16 + $0xe8] sm:$0xff] %v4265
    %4434 = vst [vmem:[%s16 + $0xf0] sm:$0xff] %v4270
    %4435 = vst [vmem:[%s16 + $0xf8] sm:$0xff] %v4273
    %4436 = vst [vmem:[%s16 + $0x100] sm:$0xff] %v4278
    %4437 = vst [vmem:[%s16 + $0x108] sm:$0xff] %v4281
    %4438 = vst [vmem:[%s16 + $0x110] sm:$0xff] %v4286
    %4439 = vst [vmem:[%s16 + $0x118] sm:$0xff] %v4289
    %4440 = vst [vmem:[%s16 + $0x120] sm:$0xff] %v4294
    %4441 = vst [vmem:[%s16 + $0x128] sm:$0xff] %v4297
    %4442 = vst [vmem:[%s16 + $0x130] sm:$0xff] %v4302
    %4443 = vst [vmem:[%s16 + $0x138] sm:$0xff] %v4305
    %4444 = vst [vmem:[%s16 + $0x140] sm:$0xff] %v4310
    %4445 = vst [vmem:[%s16 + $0x148] sm:$0xff] %v4313
    %4446 = vst [vmem:[%s16 + $0x150] sm:$0xff] %v4318
    %4447 = vst [vmem:[%s16 + $0x158] sm:$0xff] %v4321
    %4448 = vst [vmem:[%s16 + $0x160] sm:$0xff] %v4326
    %4449 = vst [vmem:[%s16 + $0x168] sm:$0xff] %v4329
    %4450 = vst [vmem:[%s16 + $0x170] sm:$0xff] %v4334
    %4451 = vst [vmem:[%s16 + $0x178] sm:$0xff] %v4337
    %4452 = vst [vmem:[%s16 + $0x180] sm:$0xff] %v4342
    %4453 = vst [vmem:[%s16 + $0x188] sm:$0xff] %v4345
    %4454 = vst [vmem:[%s16 + $0x190] sm:$0xff] %v4350
    %4455 = vst [vmem:[%s16 + $0x198] sm:$0xff] %v4353
    %4456 = vst [vmem:[%s16 + $0x1a0] sm:$0xff] %v4358
    %4457 = vst [vmem:[%s16 + $0x1a8] sm:$0xff] %v4361
    %4458 = vst [vmem:[%s16 + $0x1b0] sm:$0xff] %v4366
    %4459 = vst [vmem:[%s16 + $0x1b8] sm:$0xff] %v4369
    %4460 = vst [vmem:[%s16 + $0x1c0] sm:$0xff] %v4374
    %4461 = vst [vmem:[%s16 + $0x1c8] sm:$0xff] %v4377
    %4462 = vst [vmem:[%s16 + $0x1d0] sm:$0xff] %v4382
    %4463 = vst [vmem:[%s16 + $0x1d8] sm:$0xff] %v4385
    %4464 = vst [vmem:[%s16 + $0x1e0] sm:$0xff] %v4390
    %4465 = vst [vmem:[%s16 + $0x1e8] sm:$0xff] %v4393
    %4466 = vst [vmem:[%s16 + $0x1f0] sm:$0xff] %v4398
    %4467 = vst [vmem:[%s16 + $0x1f8] sm:$0xff] %v4401
    %v4468 = vld [vmem:[%s2] sm:$0xff]
    %v4469 = vld [vmem:[%s2 + $0x8] sm:$0xff]
    %v4470 = vld [vmem:[%s2 + $0x10] sm:$0xff]
    %v4471 = vld [vmem:[%s2 + $0x18] sm:$0xff]
    %v4472 = vld [vmem:[%s2 + $0x20] sm:$0xff]
    %v4473 = vld [vmem:[%s2 + $0x28] sm:$0xff]
    %v4474 = vld [vmem:[%s2 + $0x30] sm:$0xff]
    %v4475 = vld [vmem:[%s2 + $0x38] sm:$0xff]
    %v4476 = vld [vmem:[%s2 + $0x40] sm:$0xff]
    %v4477 = vld [vmem:[%s2 + $0x48] sm:$0xff]
    %v4478 = vld [vmem:[%s2 + $0x50] sm:$0xff]
    %v4479 = vld [vmem:[%s2 + $0x58] sm:$0xff]
    %v4480 = vld [vmem:[%s2 + $0x60] sm:$0xff]
    %v4481 = vld [vmem:[%s2 + $0x68] sm:$0xff]
    %v4482 = vld [vmem:[%s2 + $0x70] sm:$0xff]
    %v4483 = vld [vmem:[%s2 + $0x78] sm:$0xff]
    %v4484 = vld [vmem:[%s2 + $0x80] sm:$0xff]
    %v4485 = vld [vmem:[%s2 + $0x88] sm:$0xff]
    %v4486 = vld [vmem:[%s2 + $0x90] sm:$0xff]
    %v4487 = vld [vmem:[%s2 + $0x98] sm:$0xff]
    %v4488 = vld [vmem:[%s2 + $0xa0] sm:$0xff]
    %v4489 = vld [vmem:[%s2 + $0xa8] sm:$0xff]
    %v4490 = vld [vmem:[%s2 + $0xb0] sm:$0xff]
    %v4491 = vld [vmem:[%s2 + $0xb8] sm:$0xff]
    %v4492 = vld [vmem:[%s2 + $0xc0] sm:$0xff]
    %v4493 = vld [vmem:[%s2 + $0xc8] sm:$0xff]
    %v4494 = vld [vmem:[%s2 + $0xd0] sm:$0xff]
    %v4495 = vld [vmem:[%s2 + $0xd8] sm:$0xff]
    %v4496 = vld [vmem:[%s2 + $0xe0] sm:$0xff]
    %v4497 = vld [vmem:[%s2 + $0xe8] sm:$0xff]
    %v4498 = vld [vmem:[%s2 + $0xf0] sm:$0xff]
    %v4499 = vld [vmem:[%s2 + $0xf8] sm:$0xff]
    %v4500 = vld [vmem:[%s2 + $0x100] sm:$0xff]
    %v4501 = vld [vmem:[%s2 + $0x108] sm:$0xff]
    %v4502 = vld [vmem:[%s2 + $0x110] sm:$0xff]
    %v4503 = vld [vmem:[%s2 + $0x118] sm:$0xff]
    %v4504 = vld [vmem:[%s2 + $0x120] sm:$0xff]
    %v4505 = vld [vmem:[%s2 + $0x128] sm:$0xff]
    %v4506 = vld [vmem:[%s2 + $0x130] sm:$0xff]
    %v4507 = vld [vmem:[%s2 + $0x138] sm:$0xff]
    %v4508 = vld [vmem:[%s2 + $0x140] sm:$0xff]
    %v4509 = vld [vmem:[%s2 + $0x148] sm:$0xff]
    %v4510 = vld [vmem:[%s2 + $0x150] sm:$0xff]
    %v4511 = vld [vmem:[%s2 + $0x158] sm:$0xff]
    %v4512 = vld [vmem:[%s2 + $0x160] sm:$0xff]
    %v4513 = vld [vmem:[%s2 + $0x168] sm:$0xff]
    %v4514 = vld [vmem:[%s2 + $0x170] sm:$0xff]
    %v4515 = vld [vmem:[%s2 + $0x178] sm:$0xff]
    %v4516 = vld [vmem:[%s2 + $0x180] sm:$0xff]
    %v4517 = vld [vmem:[%s2 + $0x188] sm:$0xff]
    %v4518 = vld [vmem:[%s2 + $0x190] sm:$0xff]
    %v4519 = vld [vmem:[%s2 + $0x198] sm:$0xff]
    %v4520 = vld [vmem:[%s2 + $0x1a0] sm:$0xff]
    %v4521 = vld [vmem:[%s2 + $0x1a8] sm:$0xff]
    %v4522 = vld [vmem:[%s2 + $0x1b0] sm:$0xff]
    %v4523 = vld [vmem:[%s2 + $0x1b8] sm:$0xff]
    %v4524 = vld [vmem:[%s2 + $0x1c0] sm:$0xff]
    %v4525 = vld [vmem:[%s2 + $0x1c8] sm:$0xff]
    %v4526 = vld [vmem:[%s2 + $0x1d0] sm:$0xff]
    %v4527 = vld [vmem:[%s2 + $0x1d8] sm:$0xff]
    %v4528 = vld [vmem:[%s2 + $0x1e0] sm:$0xff]
    %v4529 = vld [vmem:[%s2 + $0x1e8] sm:$0xff]
    %v4530 = vld [vmem:[%s2 + $0x1f0] sm:$0xff]
    %v4531 = vld [vmem:[%s2 + $0x1f8] sm:$0xff]
    %v4532 = vmul.f32 %v4150, 0.5
    %v4533 = vmul.f32 %v4153, 0.5
    %v4534 = vmul.f32 %v4158, 0.5
    %v4535 = vmul.f32 %v4161, 0.5
    %v4536 = vmul.f32 %v4166, 0.5
    %v4537 = vmul.f32 %v4169, 0.5
    %v4538 = vmul.f32 %v4174, 0.5
    %v4539 = vmul.f32 %v4177, 0.5
    %v4540 = vmul.f32 %v4182, 0.5
    %v4541 = vmul.f32 %v4185, 0.5
    %v4542 = vmul.f32 %v4190, 0.5
    %v4543 = vmul.f32 %v4193, 0.5
    %v4544 = vmul.f32 %v4198, 0.5
    %v4545 = vmul.f32 %v4201, 0.5
    %v4546 = vmul.f32 %v4206, 0.5
    %v4547 = vmul.f32 %v4209, 0.5
    %v4548 = vmul.f32 %v4214, 0.5
    %v4549 = vmul.f32 %v4217, 0.5
    %v4550 = vmul.f32 %v4222, 0.5
    %v4551 = vmul.f32 %v4225, 0.5
    %v4552 = vmul.f32 %v4230, 0.5
    %v4553 = vmul.f32 %v4233, 0.5
    %v4554 = vmul.f32 %v4238, 0.5
    %v4555 = vmul.f32 %v4241, 0.5
    %v4556 = vmul.f32 %v4246, 0.5
    %v4557 = vmul.f32 %v4249, 0.5
    %v4558 = vmul.f32 %v4254, 0.5
    %v4559 = vmul.f32 %v4257, 0.5
    %v4560 = vmul.f32 %v4262, 0.5
    %v4561 = vmul.f32 %v4265, 0.5
    %v4562 = vmul.f32 %v4270, 0.5
    %v4563 = vmul.f32 %v4273, 0.5
    %v4564 = vmul.f32 %v4278, 0.5
    %v4565 = vmul.f32 %v4281, 0.5
    %v4566 = vmul.f32 %v4286, 0.5
    %v4567 = vmul.f32 %v4289, 0.5
    %v4568 = vmul.f32 %v4294, 0.5
    %v4569 = vmul.f32 %v4297, 0.5
    %v4570 = vmul.f32 %v4302, 0.5
    %v4571 = vmul.f32 %v4305, 0.5
    %v4572 = vmul.f32 %v4310, 0.5
    %v4573 = vmul.f32 %v4313, 0.5
    %v4574 = vmul.f32 %v4318, 0.5
    %v4575 = vmul.f32 %v4321, 0.5
    %v4576 = vmul.f32 %v4326, 0.5
    %v4577 = vmul.f32 %v4329, 0.5
    %v4578 = vmul.f32 %v4334, 0.5
    %v4579 = vmul.f32 %v4337, 0.5
    %v4580 = vmul.f32 %v4342, 0.5
    %v4581 = vmul.f32 %v4345, 0.5
    %v4582 = vmul.f32 %v4350, 0.5
    %v4583 = vmul.f32 %v4353, 0.5
    %v4584 = vmul.f32 %v4358, 0.5
    %v4585 = vmul.f32 %v4361, 0.5
    %v4586 = vmul.f32 %v4366, 0.5
    %v4587 = vmul.f32 %v4369, 0.5
    %v4588 = vmul.f32 %v4374, 0.5
    %v4589 = vmul.f32 %v4377, 0.5
    %v4590 = vmul.f32 %v4382, 0.5
    %v4591 = vmul.f32 %v4385, 0.5
    %v4592 = vmul.f32 %v4390, 0.5
    %v4593 = vmul.f32 %v4393, 0.5
    %v4594 = vmul.f32 %v4398, 0.5
    %v4595 = vmul.f32 %v4401, 0.5
    %v4596 = vmul.f32 %v4532, 1.442695
    %v4597 = vpow.pop %v4596
    %v4598 = vmul.f32 %v4533, 1.442695
    %v4599 = vpow.pop %v4598
    %v4600 = vmul.f32 %v4534, 1.442695
    %v4601 = vpow.pop %v4600
    %v4602 = vmul.f32 %v4535, 1.442695
    %v4603 = vpow.pop %v4602
    %v4604 = vmul.f32 %v4536, 1.442695
    %v4605 = vpow.pop %v4604
    %v4606 = vmul.f32 %v4537, 1.442695
    %v4607 = vpow.pop %v4606
    %v4608 = vmul.f32 %v4538, 1.442695
    %v4609 = vpow.pop %v4608
    %v4610 = vmul.f32 %v4539, 1.442695
    %v4611 = vpow.pop %v4610
    %v4612 = vmul.f32 %v4540, 1.442695
    %v4613 = vpow.pop %v4612
    %v4614 = vmul.f32 %v4541, 1.442695
    %v4615 = vpow.pop %v4614
    %v4616 = vmul.f32 %v4542, 1.442695
    %v4617 = vpow.pop %v4616
    %v4618 = vmul.f32 %v4543, 1.442695
    %v4619 = vpow.pop %v4618
    %v4620 = vmul.f32 %v4544, 1.442695
    %v4621 = vpow.pop %v4620
    %v4622 = vmul.f32 %v4545, 1.442695
    %v4623 = vpow.pop %v4622
    %v4624 = vmul.f32 %v4546, 1.442695
    %v4625 = vpow.pop %v4624
    %v4626 = vmul.f32 %v4547, 1.442695
    %v4627 = vpow.pop %v4626
    %v4628 = vmul.f32 %v4548, 1.442695
    %v4629 = vpow.pop %v4628
    %v4630 = vmul.f32 %v4549, 1.442695
    %v4631 = vpow.pop %v4630
    %v4632 = vmul.f32 %v4550, 1.442695
    %v4633 = vpow.pop %v4632
    %v4634 = vmul.f32 %v4551, 1.442695
    %v4635 = vpow.pop %v4634
    %v4636 = vmul.f32 %v4552, 1.442695
    %v4637 = vpow.pop %v4636
    %v4638 = vmul.f32 %v4553, 1.442695
    %v4639 = vpow.pop %v4638
    %v4640 = vmul.f32 %v4554, 1.442695
    %v4641 = vpow.pop %v4640
    %v4642 = vmul.f32 %v4555, 1.442695
    %v4643 = vpow.pop %v4642
    %v4644 = vmul.f32 %v4556, 1.442695
    %v4645 = vpow.pop %v4644
    %v4646 = vmul.f32 %v4557, 1.442695
    %v4647 = vpow.pop %v4646
    %v4648 = vmul.f32 %v4558, 1.442695
    %v4649 = vpow.pop %v4648
    %v4650 = vmul.f32 %v4559, 1.442695
    %v4651 = vpow.pop %v4650
    %v4652 = vmul.f32 %v4560, 1.442695
    %v4653 = vpow.pop %v4652
    %v4654 = vmul.f32 %v4561, 1.442695
    %v4655 = vpow.pop %v4654
    %v4656 = vmul.f32 %v4562, 1.442695
    %v4657 = vpow.pop %v4656
    %v4658 = vmul.f32 %v4563, 1.442695
    %v4659 = vpow.pop %v4658
    %v4660 = vmul.f32 %v4564, 1.442695
    %v4661 = vpow.pop %v4660
    %v4662 = vmul.f32 %v4565, 1.442695
    %v4663 = vpow.pop %v4662
    %v4664 = vmul.f32 %v4566, 1.442695
    %v4665 = vpow.pop %v4664
    %v4666 = vmul.f32 %v4567, 1.442695
    %v4667 = vpow.pop %v4666
    %v4668 = vmul.f32 %v4568, 1.442695
    %v4669 = vpow.pop %v4668
    %v4670 = vmul.f32 %v4569, 1.442695
    %v4671 = vpow.pop %v4670
    %v4672 = vmul.f32 %v4570, 1.442695
    %v4673 = vpow.pop %v4672
    %v4674 = vmul.f32 %v4571, 1.442695
    %v4675 = vpow.pop %v4674
    %v4676 = vmul.f32 %v4572, 1.442695
    %v4677 = vpow.pop %v4676
    %v4678 = vmul.f32 %v4573, 1.442695
    %v4679 = vpow.pop %v4678
    %v4680 = vmul.f32 %v4574, 1.442695
    %v4681 = vpow.pop %v4680
    %v4682 = vmul.f32 %v4575, 1.442695
    %v4683 = vpow.pop %v4682
    %v4684 = vmul.f32 %v4576, 1.442695
    %v4685 = vpow.pop %v4684
    %v4686 = vmul.f32 %v4577, 1.442695
    %v4687 = vpow.pop %v4686
    %v4688 = vmul.f32 %v4578, 1.442695
    %v4689 = vpow.pop %v4688
    %v4690 = vmul.f32 %v4579, 1.442695
    %v4691 = vpow.pop %v4690
    %v4692 = vmul.f32 %v4580, 1.442695
    %v4693 = vpow.pop %v4692
    %v4694 = vmul.f32 %v4581, 1.442695
    %v4695 = vpow.pop %v4694
    %v4696 = vmul.f32 %v4582, 1.442695
    %v4697 = vpow.pop %v4696
    %v4698 = vmul.f32 %v4583, 1.442695
    %v4699 = vpow.pop %v4698
    %v4700 = vmul.f32 %v4584, 1.442695
    %v4701 = vpow.pop %v4700
    %v4702 = vmul.f32 %v4585, 1.442695
    %v4703 = vpow.pop %v4702
    %v4704 = vmul.f32 %v4586, 1.442695
    %v4705 = vpow.pop %v4704
    %v4706 = vmul.f32 %v4587, 1.442695
    %v4707 = vpow.pop %v4706
    %v4708 = vmul.f32 %v4588, 1.442695
    %v4709 = vpow.pop %v4708
    %v4710 = vmul.f32 %v4589, 1.442695
    %v4711 = vpow.pop %v4710
    %v4712 = vmul.f32 %v4590, 1.442695
    %v4713 = vpow.pop %v4712
    %v4714 = vmul.f32 %v4591, 1.442695
    %v4715 = vpow.pop %v4714
    %v4716 = vmul.f32 %v4592, 1.442695
    %v4717 = vpow.pop %v4716
    %v4718 = vmul.f32 %v4593, 1.442695
    %v4719 = vpow.pop %v4718
    %v4720 = vmul.f32 %v4594, 1.442695
    %v4721 = vpow.pop %v4720
    %v4722 = vmul.f32 %v4595, 1.442695
    %v4723 = vpow.pop %v4722
    %4788 = vrot.lane.b32.xlu0 %v4597, 96
    %v4789 = vpop.permute.xlu0 %4788
    %4790 = vrot.lane.b32.xlu0 %v4599, 96
    %v4791 = vpop.permute.xlu0 %4790
    %4792 = vrot.lane.b32.xlu0 %v4601, 96
    %v4793 = vpop.permute.xlu0 %4792
    %4794 = vrot.lane.b32.xlu0 %v4603, 96
    %v4795 = vpop.permute.xlu0 %4794
    %4796 = vrot.lane.b32.xlu0 %v4605, 96
    %v4797 = vpop.permute.xlu0 %4796
    %4798 = vrot.lane.b32.xlu0 %v4607, 96
    %v4799 = vpop.permute.xlu0 %4798
    %4800 = vrot.lane.b32.xlu0 %v4609, 96
    %v4801 = vpop.permute.xlu0 %4800
    %4802 = vrot.lane.b32.xlu0 %v4611, 96
    %v4803 = vpop.permute.xlu0 %4802
    %4804 = vrot.lane.b32.xlu0 %v4613, 96
    %v4805 = vpop.permute.xlu0 %4804
    %4806 = vrot.lane.b32.xlu0 %v4615, 96
    %v4807 = vpop.permute.xlu0 %4806
    %4808 = vrot.lane.b32.xlu0 %v4617, 96
    %v4809 = vpop.permute.xlu0 %4808
    %4810 = vrot.lane.b32.xlu0 %v4619, 96
    %v4811 = vpop.permute.xlu0 %4810
    %4812 = vrot.lane.b32.xlu0 %v4621, 96
    %v4813 = vpop.permute.xlu0 %4812
    %4814 = vrot.lane.b32.xlu0 %v4623, 96
    %v4815 = vpop.permute.xlu0 %4814
    %4816 = vrot.lane.b32.xlu0 %v4625, 96
    %v4817 = vpop.permute.xlu0 %4816
    %4818 = vrot.lane.b32.xlu0 %v4627, 96
    %v4819 = vpop.permute.xlu0 %4818
    %4820 = vrot.lane.b32.xlu0 %v4629, 96
    %v4821 = vpop.permute.xlu0 %4820
    %4822 = vrot.lane.b32.xlu0 %v4631, 96
    %v4823 = vpop.permute.xlu0 %4822
    %4824 = vrot.lane.b32.xlu0 %v4633, 96
    %v4825 = vpop.permute.xlu0 %4824
    %4826 = vrot.lane.b32.xlu0 %v4635, 96
    %v4827 = vpop.permute.xlu0 %4826
    %4828 = vrot.lane.b32.xlu0 %v4637, 96
    %v4829 = vpop.permute.xlu0 %4828
    %4830 = vrot.lane.b32.xlu0 %v4639, 96
    %v4831 = vpop.permute.xlu0 %4830
    %4832 = vrot.lane.b32.xlu0 %v4641, 96
    %v4833 = vpop.permute.xlu0 %4832
    %4834 = vrot.lane.b32.xlu0 %v4643, 96
    %v4835 = vpop.permute.xlu0 %4834
    %4836 = vrot.lane.b32.xlu0 %v4645, 96
    %v4837 = vpop.permute.xlu0 %4836
    %4838 = vrot.lane.b32.xlu0 %v4647, 96
    %v4839 = vpop.permute.xlu0 %4838
    %4840 = vrot.lane.b32.xlu0 %v4649, 96
    %v4841 = vpop.permute.xlu0 %4840
    %4842 = vrot.lane.b32.xlu0 %v4651, 96
    %v4843 = vpop.permute.xlu0 %4842
    %4844 = vrot.lane.b32.xlu0 %v4653, 96
    %v4845 = vpop.permute.xlu0 %4844
    %4846 = vrot.lane.b32.xlu0 %v4655, 96
    %v4847 = vpop.permute.xlu0 %4846
    %4848 = vrot.lane.b32.xlu0 %v4657, 96
    %v4849 = vpop.permute.xlu0 %4848
    %4850 = vrot.lane.b32.xlu0 %v4659, 96
    %v4851 = vpop.permute.xlu0 %4850
    %4852 = vrot.lane.b32.xlu0 %v4661, 96
    %v4853 = vpop.permute.xlu0 %4852
    %4854 = vrot.lane.b32.xlu0 %v4663, 96
    %v4855 = vpop.permute.xlu0 %4854
    %4856 = vrot.lane.b32.xlu0 %v4665, 96
    %v4857 = vpop.permute.xlu0 %4856
    %4858 = vrot.lane.b32.xlu0 %v4667, 96
    %v4859 = vpop.permute.xlu0 %4858
    %4860 = vrot.lane.b32.xlu0 %v4669, 96
    %v4861 = vpop.permute.xlu0 %4860
    %4862 = vrot.lane.b32.xlu0 %v4671, 96
    %v4863 = vpop.permute.xlu0 %4862
    %4864 = vrot.lane.b32.xlu0 %v4673, 96
    %v4865 = vpop.permute.xlu0 %4864
    %4866 = vrot.lane.b32.xlu0 %v4675, 96
    %v4867 = vpop.permute.xlu0 %4866
    %4868 = vrot.lane.b32.xlu0 %v4677, 96
    %v4869 = vpop.permute.xlu0 %4868
    %4870 = vrot.lane.b32.xlu0 %v4679, 96
    %v4871 = vpop.permute.xlu0 %4870
    %4872 = vrot.lane.b32.xlu0 %v4681, 96
    %v4873 = vpop.permute.xlu0 %4872
    %4874 = vrot.lane.b32.xlu0 %v4683, 96
    %v4875 = vpop.permute.xlu0 %4874
    %4876 = vrot.lane.b32.xlu0 %v4685, 96
    %v4877 = vpop.permute.xlu0 %4876
    %4878 = vrot.lane.b32.xlu0 %v4687, 96
    %v4879 = vpop.permute.xlu0 %4878
    %4880 = vrot.lane.b32.xlu0 %v4689, 96
    %v4881 = vpop.permute.xlu0 %4880
    %4882 = vrot.lane.b32.xlu0 %v4691, 96
    %v4883 = vpop.permute.xlu0 %4882
    %4884 = vrot.lane.b32.xlu0 %v4693, 96
    %v4885 = vpop.permute.xlu0 %4884
    %4886 = vrot.lane.b32.xlu0 %v4695, 96
    %v4887 = vpop.permute.xlu0 %4886
    %4888 = vrot.lane.b32.xlu0 %v4697, 96
    %v4889 = vpop.permute.xlu0 %4888
    %4890 = vrot.lane.b32.xlu0 %v4699, 96
    %v4891 = vpop.permute.xlu0 %4890
    %4892 = vrot.lane.b32.xlu0 %v4701, 96
    %v4893 = vpop.permute.xlu0 %4892
    %4894 = vrot.lane.b32.xlu0 %v4703, 96
    %v4895 = vpop.permute.xlu0 %4894
    %4896 = vrot.lane.b32.xlu0 %v4705, 96
    %v4897 = vpop.permute.xlu0 %4896
    %4898 = vrot.lane.b32.xlu0 %v4707, 96
    %v4899 = vpop.permute.xlu0 %4898
    %4900 = vrot.lane.b32.xlu0 %v4709, 96
    %v4901 = vpop.permute.xlu0 %4900
    %4902 = vrot.lane.b32.xlu0 %v4711, 96
    %v4903 = vpop.permute.xlu0 %4902
    %4904 = vrot.lane.b32.xlu0 %v4713, 96
    %v4905 = vpop.permute.xlu0 %4904
    %4906 = vrot.lane.b32.xlu0 %v4715, 96
    %v4907 = vpop.permute.xlu0 %4906
    %4908 = vrot.lane.b32.xlu0 %v4717, 96
    %v4909 = vpop.permute.xlu0 %4908
    %4910 = vrot.lane.b32.xlu0 %v4719, 96
    %v4911 = vpop.permute.xlu0 %4910
    %4912 = vrot.lane.b32.xlu0 %v4721, 96
    %v4913 = vpop.permute.xlu0 %4912
    %4914 = vrot.lane.b32.xlu0 %v4723, 96
    %v4915 = vpop.permute.xlu0 %4914
    %v4980 = vmul.f32 %v4468, %v4789
    %v4981 = vmul.f32 %v4469, %v4791
    %v4982 = vmul.f32 %v4470, %v4793
    %v4983 = vmul.f32 %v4471, %v4795
    %v4984 = vmul.f32 %v4472, %v4797
    %v4985 = vmul.f32 %v4473, %v4799
    %v4986 = vmul.f32 %v4474, %v4801
    %v4987 = vmul.f32 %v4475, %v4803
    %v4988 = vmul.f32 %v4476, %v4805
    %v4989 = vmul.f32 %v4477, %v4807
    %v4990 = vmul.f32 %v4478, %v4809
    %v4991 = vmul.f32 %v4479, %v4811
    %v4992 = vmul.f32 %v4480, %v4813
    %v4993 = vmul.f32 %v4481, %v4815
    %v4994 = vmul.f32 %v4482, %v4817
    %v4995 = vmul.f32 %v4483, %v4819
    %v4996 = vmul.f32 %v4484, %v4821
    %v4997 = vmul.f32 %v4485, %v4823
    %v4998 = vmul.f32 %v4486, %v4825
    %v4999 = vmul.f32 %v4487, %v4827
    %v5000 = vmul.f32 %v4488, %v4829
    %v5001 = vmul.f32 %v4489, %v4831
    %v5002 = vmul.f32 %v4490, %v4833
    %v5003 = vmul.f32 %v4491, %v4835
    %v5004 = vmul.f32 %v4492, %v4837
    %v5005 = vmul.f32 %v4493, %v4839
    %v5006 = vmul.f32 %v4494, %v4841
    %v5007 = vmul.f32 %v4495, %v4843
    %v5008 = vmul.f32 %v4496, %v4845
    %v5009 = vmul.f32 %v4497, %v4847
    %v5010 = vmul.f32 %v4498, %v4849
    %v5011 = vmul.f32 %v4499, %v4851
    %v5012 = vmul.f32 %v4500, %v4853
    %v5013 = vmul.f32 %v4501, %v4855
    %v5014 = vmul.f32 %v4502, %v4857
    %v5015 = vmul.f32 %v4503, %v4859
    %v5016 = vmul.f32 %v4504, %v4861
    %v5017 = vmul.f32 %v4505, %v4863
    %v5018 = vmul.f32 %v4506, %v4865
    %v5019 = vmul.f32 %v4507, %v4867
    %v5020 = vmul.f32 %v4508, %v4869
    %v5021 = vmul.f32 %v4509, %v4871
    %v5022 = vmul.f32 %v4510, %v4873
    %v5023 = vmul.f32 %v4511, %v4875
    %v5024 = vmul.f32 %v4512, %v4877
    %v5025 = vmul.f32 %v4513, %v4879
    %v5026 = vmul.f32 %v4514, %v4881
    %v5027 = vmul.f32 %v4515, %v4883
    %v5028 = vmul.f32 %v4516, %v4885
    %v5029 = vmul.f32 %v4517, %v4887
    %v5030 = vmul.f32 %v4518, %v4889
    %v5031 = vmul.f32 %v4519, %v4891
    %v5032 = vmul.f32 %v4520, %v4893
    %v5033 = vmul.f32 %v4521, %v4895
    %v5034 = vmul.f32 %v4522, %v4897
    %v5035 = vmul.f32 %v4523, %v4899
    %v5036 = vmul.f32 %v4524, %v4901
    %v5037 = vmul.f32 %v4525, %v4903
    %v5038 = vmul.f32 %v4526, %v4905
    %v5039 = vmul.f32 %v4527, %v4907
    %v5040 = vmul.f32 %v4528, %v4909
    %v5041 = vmul.f32 %v4529, %v4911
    %v5042 = vmul.f32 %v4530, %v4913
    %v5043 = vmul.f32 %v4531, %v4915
    %v5044 = vadd.f32 %v4150, %v4980
    %v5045 = vadd.f32 %v4153, %v4981
    %v5046 = vadd.f32 %v4158, %v4982
    %v5047 = vadd.f32 %v4161, %v4983
    %v5048 = vadd.f32 %v4166, %v4984
    %v5049 = vadd.f32 %v4169, %v4985
    %v5050 = vadd.f32 %v4174, %v4986
    %v5051 = vadd.f32 %v4177, %v4987
    %v5052 = vadd.f32 %v4182, %v4988
    %v5053 = vadd.f32 %v4185, %v4989
    %v5054 = vadd.f32 %v4190, %v4990
    %v5055 = vadd.f32 %v4193, %v4991
    %v5056 = vadd.f32 %v4198, %v4992
    %v5057 = vadd.f32 %v4201, %v4993
    %v5058 = vadd.f32 %v4206, %v4994
    %v5059 = vadd.f32 %v4209, %v4995
    %v5060 = vadd.f32 %v4214, %v4996
    %v5061 = vadd.f32 %v4217, %v4997
    %v5062 = vadd.f32 %v4222, %v4998
    %v5063 = vadd.f32 %v4225, %v4999
    %v5064 = vadd.f32 %v4230, %v5000
    %v5065 = vadd.f32 %v4233, %v5001
    %v5066 = vadd.f32 %v4238, %v5002
    %v5067 = vadd.f32 %v4241, %v5003
    %v5068 = vadd.f32 %v4246, %v5004
    %v5069 = vadd.f32 %v4249, %v5005
    %v5070 = vadd.f32 %v4254, %v5006
    %v5071 = vadd.f32 %v4257, %v5007
    %v5072 = vadd.f32 %v4262, %v5008
    %v5073 = vadd.f32 %v4265, %v5009
    %v5074 = vadd.f32 %v4270, %v5010
    %v5075 = vadd.f32 %v4273, %v5011
    %v5076 = vadd.f32 %v4278, %v5012
    %v5077 = vadd.f32 %v4281, %v5013
    %v5078 = vadd.f32 %v4286, %v5014
    %v5079 = vadd.f32 %v4289, %v5015
    %v5080 = vadd.f32 %v4294, %v5016
    %v5081 = vadd.f32 %v4297, %v5017
    %v5082 = vadd.f32 %v4302, %v5018
    %v5083 = vadd.f32 %v4305, %v5019
    %v5084 = vadd.f32 %v4310, %v5020
    %v5085 = vadd.f32 %v4313, %v5021
    %v5086 = vadd.f32 %v4318, %v5022
    %v5087 = vadd.f32 %v4321, %v5023
    %v5088 = vadd.f32 %v4326, %v5024
    %v5089 = vadd.f32 %v4329, %v5025
    %v5090 = vadd.f32 %v4334, %v5026
    %v5091 = vadd.f32 %v4337, %v5027
    %v5092 = vadd.f32 %v4342, %v5028
    %v5093 = vadd.f32 %v4345, %v5029
    %v5094 = vadd.f32 %v4350, %v5030
    %v5095 = vadd.f32 %v4353, %v5031
    %v5096 = vadd.f32 %v4358, %v5032
    %v5097 = vadd.f32 %v4361, %v5033
    %v5098 = vadd.f32 %v4366, %v5034
    %v5099 = vadd.f32 %v4369, %v5035
    %v5100 = vadd.f32 %v4374, %v5036
    %v5101 = vadd.f32 %v4377, %v5037
    %v5102 = vadd.f32 %v4382, %v5038
    %v5103 = vadd.f32 %v4385, %v5039
    %v5104 = vadd.f32 %v4390, %v5040
    %v5105 = vadd.f32 %v4393, %v5041
    %v5106 = vadd.f32 %v4398, %v5042
    %v5107 = vadd.f32 %v4401, %v5043
    %v5108 = vpack.c.bf16 %v5045, %v5044
    %v5109 = vpack.c.bf16 %v5047, %v5046
    %v5110 = vpack.c.bf16 %v5049, %v5048
    %v5111 = vpack.c.bf16 %v5051, %v5050
    %v5112 = vpack.c.bf16 %v5053, %v5052
    %v5113 = vpack.c.bf16 %v5055, %v5054
    %v5114 = vpack.c.bf16 %v5057, %v5056
    %v5115 = vpack.c.bf16 %v5059, %v5058
    %v5116 = vpack.c.bf16 %v5061, %v5060
    %v5117 = vpack.c.bf16 %v5063, %v5062
    %v5118 = vpack.c.bf16 %v5065, %v5064
    %v5119 = vpack.c.bf16 %v5067, %v5066
    %v5120 = vpack.c.bf16 %v5069, %v5068
    %v5121 = vpack.c.bf16 %v5071, %v5070
    %v5122 = vpack.c.bf16 %v5073, %v5072
    %v5123 = vpack.c.bf16 %v5075, %v5074
    %v5124 = vpack.c.bf16 %v5077, %v5076
    %v5125 = vpack.c.bf16 %v5079, %v5078
    %v5126 = vpack.c.bf16 %v5081, %v5080
    %v5127 = vpack.c.bf16 %v5083, %v5082
    %v5128 = vpack.c.bf16 %v5085, %v5084
    %v5129 = vpack.c.bf16 %v5087, %v5086
    %v5130 = vpack.c.bf16 %v5089, %v5088
    %v5131 = vpack.c.bf16 %v5091, %v5090
    %v5132 = vpack.c.bf16 %v5093, %v5092
    %v5133 = vpack.c.bf16 %v5095, %v5094
    %v5134 = vpack.c.bf16 %v5097, %v5096
    %v5135 = vpack.c.bf16 %v5099, %v5098
    %v5136 = vpack.c.bf16 %v5101, %v5100
    %v5137 = vpack.c.bf16 %v5103, %v5102
    %v5138 = vpack.c.bf16 %v5105, %v5104
    %v5139 = vpack.c.bf16 %v5107, %v5106
    %v5140 = vld [vmem:[%s10] sm:$0xff]
    %v5141 = vld [vmem:[%s10 + $0x8] sm:$0xff]
    %v5142 = vld [vmem:[%s10 + $0x10] sm:$0xff]
    %v5143 = vld [vmem:[%s10 + $0x18] sm:$0xff]
    %v5144 = vld [vmem:[%s11] sm:$0xff]
    %v5145 = vld [vmem:[%s11 + $0x8] sm:$0xff]
    %v5148 = vunpack.c.l.b16 %v5144
    %v5149 = vunpack.c.h.b16 %v5144
    %v5150 = vunpack.c.l.b16 %v5145
    %v5151 = vunpack.c.h.b16 %v5145
    %v5152 = vpack.c.b16 %v5150, %v5148
    %v5153 = vpack.c.b16 %v5151, %v5149
    %5156 = vmatprep.subr.bf16.mxu0 %v5153
    %5157 = vmatpush1.bf16.msra.mxu0 %v5152
    %5158 = vmatprep.subr.bf16.mxu0 0
    %5159 = vmatpush1.bf16.msra.mxu0 0
    %5160 = vmatprep.subr.bf16.mxu0 0
    %5161 = vmatpush1.bf16.msra.mxu0 0
    %5162 = vmatprep.subr.bf16.mxu0 0
    %5163 = vmatpush1.bf16.msra.mxu0 0
    %5164 = vmatprep.subr.bf16.mxu0 0
    %5165 = vmatpush1.bf16.msra.mxu0 0
    %5166 = vmatprep.subr.bf16.mxu0 0
    %5167 = vmatpush1.bf16.msra.mxu0 0
    %5168 = vmatprep.subr.bf16.mxu0 0
    %5169 = vmatpush1.bf16.msra.mxu0 0
    %5170 = vmatprep.subr.bf16.mxu0 0
    %5171 = vmatpush1.bf16.msra.mxu0 0
    %5172 = vmatprep.subr.bf16.mxu0 0
    %5173 = vmatpush1.bf16.msra.mxu0 0
    %5174 = vmatprep.subr.bf16.mxu0 0
    %5175 = vmatpush1.bf16.msra.mxu0 0
    %5176 = vmatprep.subr.bf16.mxu0 0
    %5177 = vmatpush1.bf16.msra.mxu0 0
    %5178 = vmatprep.subr.bf16.mxu0 0
    %5179 = vmatpush1.bf16.msra.mxu0 0
    %5180 = vmatprep.subr.bf16.mxu0 0
    %5181 = vmatpush1.bf16.msra.mxu0 0
    %5182 = vmatprep.subr.bf16.mxu0 0
    %5183 = vmatpush1.bf16.msra.mxu0 0
    %5184 = vmatprep.subr.bf16.mxu0 0
    %5185 = vmatpush1.bf16.msra.mxu0 0
    %5186 = vmatprep.subr.bf16.mxu0 0
    %5187 = vmatpush1.bf16.msra.mxu0 0
    %5188 = vmatprep.mubr.bf16.mxu0 0
    %5189 = vmatmul.mubr.bf16.gmra.mrb[0].mxu0 %v357
    %v5190 = vpop.f32.mrb[0].mxu0
    %v5191 = vadd.f32 0.0, %v5190
    %v5192 = vpop.f32.mrb[0].mxu0
    %v5193 = vadd.f32 0.0, %v5192
    %v5194 = vpop.f32.mrb[0].mxu0
    %v5195 = vadd.f32 0.0, %v5194
    %v5196 = vpop.f32.mrb[0].mxu0
    %v5197 = vadd.f32 0.0, %v5196
    %5198 = vmatprep.mubr.bf16.mxu0 0
    %5199 = vmatmul.mubr.bf16.gmra.mrb[0].mxu0 %v360
    %v5200 = vpop.f32.mrb[0].mxu0
    %v5201 = vadd.f32 0.0, %v5200
    %v5202 = vpop.f32.mrb[0].mxu0
    %v5203 = vadd.f32 0.0, %v5202
    %v5204 = vpop.f32.mrb[0].mxu0
    %v5205 = vadd.f32 0.0, %v5204
    %v5206 = vpop.f32.mrb[0].mxu0
    %v5207 = vadd.f32 0.0, %v5206
    %5208 = vmatprep.mubr.bf16.mxu0 0
    %5209 = vmatmul.mubr.bf16.gmra.mrb[0].mxu0 %v363
    %v5210 = vpop.f32.mrb[0].mxu0
    %v5211 = vadd.f32 0.0, %v5210
    %v5212 = vpop.f32.mrb[0].mxu0
    %v5213 = vadd.f32 0.0, %v5212
    %v5214 = vpop.f32.mrb[0].mxu0
    %v5215 = vadd.f32 0.0, %v5214
    %v5216 = vpop.f32.mrb[0].mxu0
    %v5217 = vadd.f32 0.0, %v5216
    %5218 = vmatprep.mubr.bf16.mxu0 0
    %5219 = vmatmul.mubr.bf16.gmra.mrb[0].mxu0 %v366
    %v5220 = vpop.f32.mrb[0].mxu0
    %v5221 = vadd.f32 0.0, %v5220
    %v5222 = vpop.f32.mrb[0].mxu0
    %v5223 = vadd.f32 0.0, %v5222
    %v5224 = vpop.f32.mrb[0].mxu0
    %v5225 = vadd.f32 0.0, %v5224
    %v5226 = vpop.f32.mrb[0].mxu0
    %v5227 = vadd.f32 0.0, %v5226
    %5228 = vmatprep.mubr.bf16.mxu0 0
    %5229 = vmatmul.mubr.bf16.gmra.mrb[0].mxu0 %v369
    %v5230 = vpop.f32.mrb[0].mxu0
    %v5231 = vadd.f32 0.0, %v5230
    %v5232 = vpop.f32.mrb[0].mxu0
    %v5233 = vadd.f32 0.0, %v5232
    %v5234 = vpop.f32.mrb[0].mxu0
    %v5235 = vadd.f32 0.0, %v5234
    %v5236 = vpop.f32.mrb[0].mxu0
    %v5237 = vadd.f32 0.0, %v5236
    %5238 = vmatprep.mubr.bf16.mxu0 0
    %5239 = vmatmul.mubr.bf16.gmra.mrb[0].mxu0 %v372
    %v5240 = vpop.f32.mrb[0].mxu0
    %v5241 = vadd.f32 0.0, %v5240
    %v5242 = vpop.f32.mrb[0].mxu0
    %v5243 = vadd.f32 0.0, %v5242
    %v5244 = vpop.f32.mrb[0].mxu0
    %v5245 = vadd.f32 0.0, %v5244
    %v5246 = vpop.f32.mrb[0].mxu0
    %v5247 = vadd.f32 0.0, %v5246
    %5248 = vmatprep.mubr.bf16.mxu0 0
    %5249 = vmatmul.mubr.bf16.gmra.mrb[0].mxu0 %v375
    %v5250 = vpop.f32.mrb[0].mxu0
    %v5251 = vadd.f32 0.0, %v5250
    %v5252 = vpop.f32.mrb[0].mxu0
    %v5253 = vadd.f32 0.0, %v5252
    %v5254 = vpop.f32.mrb[0].mxu0
    %v5255 = vadd.f32 0.0, %v5254
    %v5256 = vpop.f32.mrb[0].mxu0
    %v5257 = vadd.f32 0.0, %v5256
    %5258 = vmatprep.mubr.bf16.mxu0 0
    %5259 = vmatmul.mubr.bf16.gmra.mrb[0].mxu0 %v378
    %v5260 = vpop.f32.mrb[0].mxu0
    %v5261 = vadd.f32 0.0, %v5260
    %v5262 = vpop.f32.mrb[0].mxu0
    %v5263 = vadd.f32 0.0, %v5262
    %v5264 = vpop.f32.mrb[0].mxu0
    %v5265 = vadd.f32 0.0, %v5264
    %v5266 = vpop.f32.mrb[0].mxu0
    %v5267 = vadd.f32 0.0, %v5266
    %5268 = vmatprep.mubr.bf16.mxu0 0
    %5269 = vmatmul.mubr.bf16.gmra.mrb[0].mxu0 %v381
    %v5270 = vpop.f32.mrb[0].mxu0
    %v5271 = vadd.f32 0.0, %v5270
    %v5272 = vpop.f32.mrb[0].mxu0
    %v5273 = vadd.f32 0.0, %v5272
    %v5274 = vpop.f32.mrb[0].mxu0
    %v5275 = vadd.f32 0.0, %v5274
    %v5276 = vpop.f32.mrb[0].mxu0
    %v5277 = vadd.f32 0.0, %v5276
    %5278 = vmatprep.mubr.bf16.mxu0 0
    %5279 = vmatmul.mubr.bf16.gmra.mrb[0].mxu0 %v384
    %v5280 = vpop.f32.mrb[0].mxu0
    %v5281 = vadd.f32 0.0, %v5280
    %v5282 = vpop.f32.mrb[0].mxu0
    %v5283 = vadd.f32 0.0, %v5282
    %v5284 = vpop.f32.mrb[0].mxu0
    %v5285 = vadd.f32 0.0, %v5284
    %v5286 = vpop.f32.mrb[0].mxu0
    %v5287 = vadd.f32 0.0, %v5286
    %5288 = vmatprep.mubr.bf16.mxu0 0
    %5289 = vmatmul.mubr.bf16.gmra.mrb[0].mxu0 %v387
    %v5290 = vpop.f32.mrb[0].mxu0
    %v5291 = vadd.f32 0.0, %v5290
    %v5292 = vpop.f32.mrb[0].mxu0
    %v5293 = vadd.f32 0.0, %v5292
    %v5294 = vpop.f32.mrb[0].mxu0
    %v5295 = vadd.f32 0.0, %v5294
    %v5296 = vpop.f32.mrb[0].mxu0
    %v5297 = vadd.f32 0.0, %v5296
    %5298 = vmatprep.mubr.bf16.mxu0 0
    %5299 = vmatmul.mubr.bf16.gmra.mrb[0].mxu0 %v390
    %v5300 = vpop.f32.mrb[0].mxu0
    %v5301 = vadd.f32 0.0, %v5300
    %v5302 = vpop.f32.mrb[0].mxu0
    %v5303 = vadd.f32 0.0, %v5302
    %v5304 = vpop.f32.mrb[0].mxu0
    %v5305 = vadd.f32 0.0, %v5304
    %v5306 = vpop.f32.mrb[0].mxu0
    %v5307 = vadd.f32 0.0, %v5306
    %5308 = vmatprep.mubr.bf16.mxu0 0
    %5309 = vmatmul.mubr.bf16.gmra.mrb[0].mxu0 %v393
    %v5310 = vpop.f32.mrb[0].mxu0
    %v5311 = vadd.f32 0.0, %v5310
    %v5312 = vpop.f32.mrb[0].mxu0
    %v5313 = vadd.f32 0.0, %v5312
    %v5314 = vpop.f32.mrb[0].mxu0
    %v5315 = vadd.f32 0.0, %v5314
    %v5316 = vpop.f32.mrb[0].mxu0
    %v5317 = vadd.f32 0.0, %v5316
    %5318 = vmatprep.mubr.bf16.mxu0 0
    %5319 = vmatmul.mubr.bf16.gmra.mrb[0].mxu0 %v396
    %v5320 = vpop.f32.mrb[0].mxu0
    %v5321 = vadd.f32 0.0, %v5320
    %v5322 = vpop.f32.mrb[0].mxu0
    %v5323 = vadd.f32 0.0, %v5322
    %v5324 = vpop.f32.mrb[0].mxu0
    %v5325 = vadd.f32 0.0, %v5324
    %v5326 = vpop.f32.mrb[0].mxu0
    %v5327 = vadd.f32 0.0, %v5326
    %5328 = vmatprep.mubr.bf16.mxu0 0
    %5329 = vmatmul.mubr.bf16.gmra.mrb[0].mxu0 %v399
    %v5330 = vpop.f32.mrb[0].mxu0
    %v5331 = vadd.f32 0.0, %v5330
    %v5332 = vpop.f32.mrb[0].mxu0
    %v5333 = vadd.f32 0.0, %v5332
    %v5334 = vpop.f32.mrb[0].mxu0
    %v5335 = vadd.f32 0.0, %v5334
    %v5336 = vpop.f32.mrb[0].mxu0
    %v5337 = vadd.f32 0.0, %v5336
    %5338 = vmatprep.mubr.bf16.mxu0 0
    %5339 = vmatmul.mubr.bf16.gmra.mrb[0].mxu0 %v402
    %v5340 = vpop.f32.mrb[0].mxu0
    %v5341 = vadd.f32 0.0, %v5340
    %v5342 = vpop.f32.mrb[0].mxu0
    %v5343 = vadd.f32 0.0, %v5342
    %v5344 = vpop.f32.mrb[0].mxu0
    %v5345 = vadd.f32 0.0, %v5344
    %v5346 = vpop.f32.mrb[0].mxu0
    %v5347 = vadd.f32 0.0, %v5346
    %5348 = vmatprep.mubr.bf16.mxu0 0
    %5349 = vmatmul.mubr.bf16.gmra.mrb[0].mxu0 %v405
    %v5350 = vpop.f32.mrb[0].mxu0
    %v5351 = vadd.f32 0.0, %v5350
    %v5352 = vpop.f32.mrb[0].mxu0
    %v5353 = vadd.f32 0.0, %v5352
    %v5354 = vpop.f32.mrb[0].mxu0
    %v5355 = vadd.f32 0.0, %v5354
    %v5356 = vpop.f32.mrb[0].mxu0
    %v5357 = vadd.f32 0.0, %v5356
    %5358 = vmatprep.mubr.bf16.mxu0 0
    %5359 = vmatmul.mubr.bf16.gmra.mrb[0].mxu0 %v408
    %v5360 = vpop.f32.mrb[0].mxu0
    %v5361 = vadd.f32 0.0, %v5360
    %v5362 = vpop.f32.mrb[0].mxu0
    %v5363 = vadd.f32 0.0, %v5362
    %v5364 = vpop.f32.mrb[0].mxu0
    %v5365 = vadd.f32 0.0, %v5364
    %v5366 = vpop.f32.mrb[0].mxu0
    %v5367 = vadd.f32 0.0, %v5366
    %5368 = vmatprep.mubr.bf16.mxu0 0
    %5369 = vmatmul.mubr.bf16.gmra.mrb[0].mxu0 %v411
    %v5370 = vpop.f32.mrb[0].mxu0
    %v5371 = vadd.f32 0.0, %v5370
    %v5372 = vpop.f32.mrb[0].mxu0
    %v5373 = vadd.f32 0.0, %v5372
    %v5374 = vpop.f32.mrb[0].mxu0
    %v5375 = vadd.f32 0.0, %v5374
    %v5376 = vpop.f32.mrb[0].mxu0
    %v5377 = vadd.f32 0.0, %v5376
    %5378 = vmatprep.mubr.bf16.mxu0 0
    %5379 = vmatmul.mubr.bf16.gmra.mrb[0].mxu0 %v414
    %v5380 = vpop.f32.mrb[0].mxu0
    %v5381 = vadd.f32 0.0, %v5380
    %v5382 = vpop.f32.mrb[0].mxu0
    %v5383 = vadd.f32 0.0, %v5382
    %v5384 = vpop.f32.mrb[0].mxu0
    %v5385 = vadd.f32 0.0, %v5384
    %v5386 = vpop.f32.mrb[0].mxu0
    %v5387 = vadd.f32 0.0, %v5386
    %5388 = vmatprep.mubr.bf16.mxu0 0
    %5389 = vmatmul.mubr.bf16.gmra.mrb[0].mxu0 %v417
    %v5390 = vpop.f32.mrb[0].mxu0
    %v5391 = vadd.f32 0.0, %v5390
    %v5392 = vpop.f32.mrb[0].mxu0
    %v5393 = vadd.f32 0.0, %v5392
    %v5394 = vpop.f32.mrb[0].mxu0
    %v5395 = vadd.f32 0.0, %v5394
    %v5396 = vpop.f32.mrb[0].mxu0
    %v5397 = vadd.f32 0.0, %v5396
    %5398 = vmatprep.mubr.bf16.mxu0 0
    %5399 = vmatmul.mubr.bf16.gmra.mrb[0].mxu0 %v420
    %v5400 = vpop.f32.mrb[0].mxu0
    %v5401 = vadd.f32 0.0, %v5400
    %v5402 = vpop.f32.mrb[0].mxu0
    %v5403 = vadd.f32 0.0, %v5402
    %v5404 = vpop.f32.mrb[0].mxu0
    %v5405 = vadd.f32 0.0, %v5404
    %v5406 = vpop.f32.mrb[0].mxu0
    %v5407 = vadd.f32 0.0, %v5406
    %5408 = vmatprep.mubr.bf16.mxu0 0
    %5409 = vmatmul.mubr.bf16.gmra.mrb[0].mxu0 %v423
    %v5410 = vpop.f32.mrb[0].mxu0
    %v5411 = vadd.f32 0.0, %v5410
    %v5412 = vpop.f32.mrb[0].mxu0
    %v5413 = vadd.f32 0.0, %v5412
    %v5414 = vpop.f32.mrb[0].mxu0
    %v5415 = vadd.f32 0.0, %v5414
    %v5416 = vpop.f32.mrb[0].mxu0
    %v5417 = vadd.f32 0.0, %v5416
    %5418 = vmatprep.mubr.bf16.mxu0 0
    %5419 = vmatmul.mubr.bf16.gmra.mrb[0].mxu0 %v426
    %v5420 = vpop.f32.mrb[0].mxu0
    %v5421 = vadd.f32 0.0, %v5420
    %v5422 = vpop.f32.mrb[0].mxu0
    %v5423 = vadd.f32 0.0, %v5422
    %v5424 = vpop.f32.mrb[0].mxu0
    %v5425 = vadd.f32 0.0, %v5424
    %v5426 = vpop.f32.mrb[0].mxu0
    %v5427 = vadd.f32 0.0, %v5426
    %5428 = vmatprep.mubr.bf16.mxu0 0
    %5429 = vmatmul.mubr.bf16.gmra.mrb[0].mxu0 %v429
    %v5430 = vpop.f32.mrb[0].mxu0
    %v5431 = vadd.f32 0.0, %v5430
    %v5432 = vpop.f32.mrb[0].mxu0
    %v5433 = vadd.f32 0.0, %v5432
    %v5434 = vpop.f32.mrb[0].mxu0
    %v5435 = vadd.f32 0.0, %v5434
    %v5436 = vpop.f32.mrb[0].mxu0
    %v5437 = vadd.f32 0.0, %v5436
    %5438 = vmatprep.mubr.bf16.mxu0 0
    %5439 = vmatmul.mubr.bf16.gmra.mrb[0].mxu0 %v432
    %v5440 = vpop.f32.mrb[0].mxu0
    %v5441 = vadd.f32 0.0, %v5440
    %v5442 = vpop.f32.mrb[0].mxu0
    %v5443 = vadd.f32 0.0, %v5442
    %v5444 = vpop.f32.mrb[0].mxu0
    %v5445 = vadd.f32 0.0, %v5444
    %v5446 = vpop.f32.mrb[0].mxu0
    %v5447 = vadd.f32 0.0, %v5446
    %5448 = vmatprep.mubr.bf16.mxu0 0
    %5449 = vmatmul.mubr.bf16.gmra.mrb[0].mxu0 %v435
    %v5450 = vpop.f32.mrb[0].mxu0
    %v5451 = vadd.f32 0.0, %v5450
    %v5452 = vpop.f32.mrb[0].mxu0
    %v5453 = vadd.f32 0.0, %v5452
    %v5454 = vpop.f32.mrb[0].mxu0
    %v5455 = vadd.f32 0.0, %v5454
    %v5456 = vpop.f32.mrb[0].mxu0
    %v5457 = vadd.f32 0.0, %v5456
    %5458 = vmatprep.mubr.bf16.mxu0 0
    %5459 = vmatmul.mubr.bf16.gmra.mrb[0].mxu0 %v438
    %v5460 = vpop.f32.mrb[0].mxu0
    %v5461 = vadd.f32 0.0, %v5460
    %v5462 = vpop.f32.mrb[0].mxu0
    %v5463 = vadd.f32 0.0, %v5462
    %v5464 = vpop.f32.mrb[0].mxu0
    %v5465 = vadd.f32 0.0, %v5464
    %v5466 = vpop.f32.mrb[0].mxu0
    %v5467 = vadd.f32 0.0, %v5466
    %5468 = vmatprep.mubr.bf16.mxu0 0
    %5469 = vmatmul.mubr.bf16.gmra.mrb[0].mxu0 %v441
    %v5470 = vpop.f32.mrb[0].mxu0
    %v5471 = vadd.f32 0.0, %v5470
    %v5472 = vpop.f32.mrb[0].mxu0
    %v5473 = vadd.f32 0.0, %v5472
    %v5474 = vpop.f32.mrb[0].mxu0
    %v5475 = vadd.f32 0.0, %v5474
    %v5476 = vpop.f32.mrb[0].mxu0
    %v5477 = vadd.f32 0.0, %v5476
    %5478 = vmatprep.mubr.bf16.mxu0 0
    %5479 = vmatmul.mubr.bf16.gmra.mrb[0].mxu0 %v444
    %v5480 = vpop.f32.mrb[0].mxu0
    %v5481 = vadd.f32 0.0, %v5480
    %v5482 = vpop.f32.mrb[0].mxu0
    %v5483 = vadd.f32 0.0, %v5482
    %v5484 = vpop.f32.mrb[0].mxu0
    %v5485 = vadd.f32 0.0, %v5484
    %v5486 = vpop.f32.mrb[0].mxu0
    %v5487 = vadd.f32 0.0, %v5486
    %5488 = vmatprep.mubr.bf16.mxu0 0
    %5489 = vmatmul.mubr.bf16.gmra.mrb[0].mxu0 %v447
    %v5490 = vpop.f32.mrb[0].mxu0
    %v5491 = vadd.f32 0.0, %v5490
    %v5492 = vpop.f32.mrb[0].mxu0
    %v5493 = vadd.f32 0.0, %v5492
    %v5494 = vpop.f32.mrb[0].mxu0
    %v5495 = vadd.f32 0.0, %v5494
    %v5496 = vpop.f32.mrb[0].mxu0
    %v5497 = vadd.f32 0.0, %v5496
    %5498 = vmatprep.mubr.bf16.mxu0 0
    %5499 = vmatmul.mubr.bf16.gmra.mrb[0].mxu0 %v450
    %v5500 = vpop.f32.mrb[0].mxu0
    %v5501 = vadd.f32 0.0, %v5500
    %v5502 = vpop.f32.mrb[0].mxu0
    %v5503 = vadd.f32 0.0, %v5502
    %v5504 = vpop.f32.mrb[0].mxu0
    %v5505 = vadd.f32 0.0, %v5504
    %v5506 = vpop.f32.mrb[0].mxu0
    %v5507 = vadd.f32 0.0, %v5506
    %5508 = vdwg.mxu0
    %v5513 = vunpack.c.l.b16 %v5140
    %v5514 = vunpack.c.h.b16 %v5140
    %v5515 = vunpack.c.l.b16 %v5141
    %v5516 = vunpack.c.h.b16 %v5141
    %v5517 = vunpack.c.l.b16 %v5142
    %v5518 = vunpack.c.h.b16 %v5142
    %v5519 = vunpack.c.l.b16 %v5143
    %v5520 = vunpack.c.h.b16 %v5143
    %v5521 = vpack.c.b16 %v5515, %v5513
    %v5522 = vpack.c.b16 %v5516, %v5514
    %v5523 = vpack.c.b16 %v5519, %v5517
    %v5524 = vpack.c.b16 %v5520, %v5518
    %vm5529 = vcmask 261120
    %v5531 = vsel %vm5529, %v5108, 0
    %v5534 = vsel %vm5529, %v5109, 0
    %v5537 = vsel %vm5529, %v5110, 0
    %v5540 = vsel %vm5529, %v5111, 0
    %v5543 = vsel %vm5529, %v5112, 0
    %v5546 = vsel %vm5529, %v5113, 0
    %v5549 = vsel %vm5529, %v5114, 0
    %v5552 = vsel %vm5529, %v5115, 0
    %v5555 = vsel %vm5529, %v5116, 0
    %v5558 = vsel %vm5529, %v5117, 0
    %v5561 = vsel %vm5529, %v5118, 0
    %v5564 = vsel %vm5529, %v5119, 0
    %v5567 = vsel %vm5529, %v5120, 0
    %v5570 = vsel %vm5529, %v5121, 0
    %v5573 = vsel %vm5529, %v5122, 0
    %v5576 = vsel %vm5529, %v5123, 0
    %v5579 = vsel %vm5529, %v5124, 0
    %v5582 = vsel %vm5529, %v5125, 0
    %v5585 = vsel %vm5529, %v5126, 0
    %v5588 = vsel %vm5529, %v5127, 0
    %v5591 = vsel %vm5529, %v5128, 0
    %v5594 = vsel %vm5529, %v5129, 0
    %v5597 = vsel %vm5529, %v5130, 0
    %v5600 = vsel %vm5529, %v5131, 0
    %v5603 = vsel %vm5529, %v5132, 0
    %v5606 = vsel %vm5529, %v5133, 0
    %v5609 = vsel %vm5529, %v5134, 0
    %v5612 = vsel %vm5529, %v5135, 0
    %v5615 = vsel %vm5529, %v5136, 0
    %v5618 = vsel %vm5529, %v5137, 0
    %v5621 = vsel %vm5529, %v5138, 0
    %v5624 = vsel %vm5529, %v5139, 0
    %5626 = vmatprep.subr.bf16.mxu0 %v5522
    %5627 = vmatpush1.bf16.msra.mxu0 %v5521
    %5628 = vmatprep.subr.bf16.mxu0 %v5524
    %5629 = vmatpush1.bf16.msra.mxu0 %v5523
    %5630 = vmatprep.subr.bf16.mxu0 0
    %5631 = vmatpush1.bf16.msra.mxu0 0
    %5632 = vmatprep.subr.bf16.mxu0 0
    %5633 = vmatpush1.bf16.msra.mxu0 0
    %5634 = vmatprep.subr.bf16.mxu0 0
    %5635 = vmatpush1.bf16.msra.mxu0 0
    %5636 = vmatprep.subr.bf16.mxu0 0
    %5637 = vmatpush1.bf16.msra.mxu0 0
    %5638 = vmatprep.subr.bf16.mxu0 0
    %5639 = vmatpush1.bf16.msra.mxu0 0
    %5640 = vmatprep.subr.bf16.mxu0 0
    %5641 = vmatpush1.bf16.msra.mxu0 0
    %5642 = vmatprep.subr.bf16.mxu0 0
    %5643 = vmatpush1.bf16.msra.mxu0 0
    %5644 = vmatprep.subr.bf16.mxu0 0
    %5645 = vmatpush1.bf16.msra.mxu0 0
    %5646 = vmatprep.subr.bf16.mxu0 0
    %5647 = vmatpush1.bf16.msra.mxu0 0
    %5648 = vmatprep.subr.bf16.mxu0 0
    %5649 = vmatpush1.bf16.msra.mxu0 0
    %5650 = vmatprep.subr.bf16.mxu0 0
    %5651 = vmatpush1.bf16.msra.mxu0 0
    %5652 = vmatprep.subr.bf16.mxu0 0
    %5653 = vmatpush1.bf16.msra.mxu0 0
    %5654 = vmatprep.subr.bf16.mxu0 0
    %5655 = vmatpush1.bf16.msra.mxu0 0
    %5656 = vmatprep.subr.bf16.mxu0 0
    %5657 = vmatpush1.bf16.msra.mxu0 0
    %5658 = vmatprep.mubr.bf16.mxu0 0
    %5659 = vmatmul.mubr.bf16.gmra.mrb[0].mxu0 %v5531
    %v5660 = vpop.f32.mrb[0].mxu0
    %v5661 = vadd.f32 %v5191, %v5660
    %v5662 = vpop.f32.mrb[0].mxu0
    %v5663 = vadd.f32 %v5193, %v5662
    %v5664 = vpop.f32.mrb[0].mxu0
    %v5665 = vadd.f32 %v5195, %v5664
    %v5666 = vpop.f32.mrb[0].mxu0
    %v5667 = vadd.f32 %v5197, %v5666
    %5668 = vmatprep.mubr.bf16.mxu0 0
    %5669 = vmatmul.mubr.bf16.gmra.mrb[0].mxu0 %v5534
    %v5670 = vpop.f32.mrb[0].mxu0
    %v5671 = vadd.f32 %v5201, %v5670
    %v5672 = vpop.f32.mrb[0].mxu0
    %v5673 = vadd.f32 %v5203, %v5672
    %v5674 = vpop.f32.mrb[0].mxu0
    %v5675 = vadd.f32 %v5205, %v5674
    %v5676 = vpop.f32.mrb[0].mxu0
    %v5677 = vadd.f32 %v5207, %v5676
    %5678 = vmatprep.mubr.bf16.mxu0 0
    %5679 = vmatmul.mubr.bf16.gmra.mrb[0].mxu0 %v5537
    %v5680 = vpop.f32.mrb[0].mxu0
    %v5681 = vadd.f32 %v5211, %v5680
    %v5682 = vpop.f32.mrb[0].mxu0
    %v5683 = vadd.f32 %v5213, %v5682
    %v5684 = vpop.f32.mrb[0].mxu0
    %v5685 = vadd.f32 %v5215, %v5684
    %v5686 = vpop.f32.mrb[0].mxu0
    %v5687 = vadd.f32 %v5217, %v5686
    %5688 = vmatprep.mubr.bf16.mxu0 0
    %5689 = vmatmul.mubr.bf16.gmra.mrb[0].mxu0 %v5540
    %v5690 = vpop.f32.mrb[0].mxu0
    %v5691 = vadd.f32 %v5221, %v5690
    %v5692 = vpop.f32.mrb[0].mxu0
    %v5693 = vadd.f32 %v5223, %v5692
    %v5694 = vpop.f32.mrb[0].mxu0
    %v5695 = vadd.f32 %v5225, %v5694
    %v5696 = vpop.f32.mrb[0].mxu0
    %v5697 = vadd.f32 %v5227, %v5696
    %5698 = vmatprep.mubr.bf16.mxu0 0
    %5699 = vmatmul.mubr.bf16.gmra.mrb[0].mxu0 %v5543
    %v5700 = vpop.f32.mrb[0].mxu0
    %v5701 = vadd.f32 %v5231, %v5700
    %v5702 = vpop.f32.mrb[0].mxu0
    %v5703 = vadd.f32 %v5233, %v5702
    %v5704 = vpop.f32.mrb[0].mxu0
    %v5705 = vadd.f32 %v5235, %v5704
    %v5706 = vpop.f32.mrb[0].mxu0
    %v5707 = vadd.f32 %v5237, %v5706
    %5708 = vmatprep.mubr.bf16.mxu0 0
    %5709 = vmatmul.mubr.bf16.gmra.mrb[0].mxu0 %v5546
    %v5710 = vpop.f32.mrb[0].mxu0
    %v5711 = vadd.f32 %v5241, %v5710
    %v5712 = vpop.f32.mrb[0].mxu0
    %v5713 = vadd.f32 %v5243, %v5712
    %v5714 = vpop.f32.mrb[0].mxu0
    %v5715 = vadd.f32 %v5245, %v5714
    %v5716 = vpop.f32.mrb[0].mxu0
    %v5717 = vadd.f32 %v5247, %v5716
    %5718 = vmatprep.mubr.bf16.mxu0 0
    %5719 = vmatmul.mubr.bf16.gmra.mrb[0].mxu0 %v5549
    %v5720 = vpop.f32.mrb[0].mxu0
    %v5721 = vadd.f32 %v5251, %v5720
    %v5722 = vpop.f32.mrb[0].mxu0
    %v5723 = vadd.f32 %v5253, %v5722
    %v5724 = vpop.f32.mrb[0].mxu0
    %v5725 = vadd.f32 %v5255, %v5724
    %v5726 = vpop.f32.mrb[0].mxu0
    %v5727 = vadd.f32 %v5257, %v5726
    %5728 = vmatprep.mubr.bf16.mxu0 0
    %5729 = vmatmul.mubr.bf16.gmra.mrb[0].mxu0 %v5552
    %v5730 = vpop.f32.mrb[0].mxu0
    %v5731 = vadd.f32 %v5261, %v5730
    %v5732 = vpop.f32.mrb[0].mxu0
    %v5733 = vadd.f32 %v5263, %v5732
    %v5734 = vpop.f32.mrb[0].mxu0
    %v5735 = vadd.f32 %v5265, %v5734
    %v5736 = vpop.f32.mrb[0].mxu0
    %v5737 = vadd.f32 %v5267, %v5736
    %5738 = vmatprep.mubr.bf16.mxu0 0
    %5739 = vmatmul.mubr.bf16.gmra.mrb[0].mxu0 %v5555
    %v5740 = vpop.f32.mrb[0].mxu0
    %v5741 = vadd.f32 %v5271, %v5740
    %v5742 = vpop.f32.mrb[0].mxu0
    %v5743 = vadd.f32 %v5273, %v5742
    %v5744 = vpop.f32.mrb[0].mxu0
    %v5745 = vadd.f32 %v5275, %v5744
    %v5746 = vpop.f32.mrb[0].mxu0
    %v5747 = vadd.f32 %v5277, %v5746
    %5748 = vmatprep.mubr.bf16.mxu0 0
    %5749 = vmatmul.mubr.bf16.gmra.mrb[0].mxu0 %v5558
    %v5750 = vpop.f32.mrb[0].mxu0
    %v5751 = vadd.f32 %v5281, %v5750
    %v5752 = vpop.f32.mrb[0].mxu0
    %v5753 = vadd.f32 %v5283, %v5752
    %v5754 = vpop.f32.mrb[0].mxu0
    %v5755 = vadd.f32 %v5285, %v5754
    %v5756 = vpop.f32.mrb[0].mxu0
    %v5757 = vadd.f32 %v5287, %v5756
    %5758 = vmatprep.mubr.bf16.mxu0 0
    %5759 = vmatmul.mubr.bf16.gmra.mrb[0].mxu0 %v5561
    %v5760 = vpop.f32.mrb[0].mxu0
    %v5761 = vadd.f32 %v5291, %v5760
    %v5762 = vpop.f32.mrb[0].mxu0
    %v5763 = vadd.f32 %v5293, %v5762
    %v5764 = vpop.f32.mrb[0].mxu0
    %v5765 = vadd.f32 %v5295, %v5764
    %v5766 = vpop.f32.mrb[0].mxu0
    %v5767 = vadd.f32 %v5297, %v5766
    %5768 = vmatprep.mubr.bf16.mxu0 0
    %5769 = vmatmul.mubr.bf16.gmra.mrb[0].mxu0 %v5564
    %v5770 = vpop.f32.mrb[0].mxu0
    %v5771 = vadd.f32 %v5301, %v5770
    %v5772 = vpop.f32.mrb[0].mxu0
    %v5773 = vadd.f32 %v5303, %v5772
    %v5774 = vpop.f32.mrb[0].mxu0
    %v5775 = vadd.f32 %v5305, %v5774
    %v5776 = vpop.f32.mrb[0].mxu0
    %v5777 = vadd.f32 %v5307, %v5776
    %5778 = vmatprep.mubr.bf16.mxu0 0
    %5779 = vmatmul.mubr.bf16.gmra.mrb[0].mxu0 %v5567
    %v5780 = vpop.f32.mrb[0].mxu0
    %v5781 = vadd.f32 %v5311, %v5780
    %v5782 = vpop.f32.mrb[0].mxu0
    %v5783 = vadd.f32 %v5313, %v5782
    %v5784 = vpop.f32.mrb[0].mxu0
    %v5785 = vadd.f32 %v5315, %v5784
    %v5786 = vpop.f32.mrb[0].mxu0
    %v5787 = vadd.f32 %v5317, %v5786
    %5788 = vmatprep.mubr.bf16.mxu0 0
    %5789 = vmatmul.mubr.bf16.gmra.mrb[0].mxu0 %v5570
    %v5790 = vpop.f32.mrb[0].mxu0
    %v5791 = vadd.f32 %v5321, %v5790
    %v5792 = vpop.f32.mrb[0].mxu0
    %v5793 = vadd.f32 %v5323, %v5792
    %v5794 = vpop.f32.mrb[0].mxu0
    %v5795 = vadd.f32 %v5325, %v5794
    %v5796 = vpop.f32.mrb[0].mxu0
    %v5797 = vadd.f32 %v5327, %v5796
    %5798 = vmatprep.mubr.bf16.mxu0 0
    %5799 = vmatmul.mubr.bf16.gmra.mrb[0].mxu0 %v5573
    %v5800 = vpop.f32.mrb[0].mxu0
    %v5801 = vadd.f32 %v5331, %v5800
    %v5802 = vpop.f32.mrb[0].mxu0
    %v5803 = vadd.f32 %v5333, %v5802
    %v5804 = vpop.f32.mrb[0].mxu0
    %v5805 = vadd.f32 %v5335, %v5804
    %v5806 = vpop.f32.mrb[0].mxu0
    %v5807 = vadd.f32 %v5337, %v5806
    %5808 = vmatprep.mubr.bf16.mxu0 0
    %5809 = vmatmul.mubr.bf16.gmra.mrb[0].mxu0 %v5576
    %v5810 = vpop.f32.mrb[0].mxu0
    %v5811 = vadd.f32 %v5341, %v5810
    %v5812 = vpop.f32.mrb[0].mxu0
    %v5813 = vadd.f32 %v5343, %v5812
    %v5814 = vpop.f32.mrb[0].mxu0
    %v5815 = vadd.f32 %v5345, %v5814
    %v5816 = vpop.f32.mrb[0].mxu0
    %v5817 = vadd.f32 %v5347, %v5816
    %5818 = vmatprep.mubr.bf16.mxu0 0
    %5819 = vmatmul.mubr.bf16.gmra.mrb[0].mxu0 %v5579
    %v5820 = vpop.f32.mrb[0].mxu0
    %v5821 = vadd.f32 %v5351, %v5820
    %v5822 = vpop.f32.mrb[0].mxu0
    %v5823 = vadd.f32 %v5353, %v5822
    %v5824 = vpop.f32.mrb[0].mxu0
    %v5825 = vadd.f32 %v5355, %v5824
    %v5826 = vpop.f32.mrb[0].mxu0
    %v5827 = vadd.f32 %v5357, %v5826
    %5828 = vmatprep.mubr.bf16.mxu0 0
    %5829 = vmatmul.mubr.bf16.gmra.mrb[0].mxu0 %v5582
    %v5830 = vpop.f32.mrb[0].mxu0
    %v5831 = vadd.f32 %v5361, %v5830
    %v5832 = vpop.f32.mrb[0].mxu0
    %v5833 = vadd.f32 %v5363, %v5832
    %v5834 = vpop.f32.mrb[0].mxu0
    %v5835 = vadd.f32 %v5365, %v5834
    %v5836 = vpop.f32.mrb[0].mxu0
    %v5837 = vadd.f32 %v5367, %v5836
    %5838 = vmatprep.mubr.bf16.mxu0 0
    %5839 = vmatmul.mubr.bf16.gmra.mrb[0].mxu0 %v5585
    %v5840 = vpop.f32.mrb[0].mxu0
    %v5841 = vadd.f32 %v5371, %v5840
    %v5842 = vpop.f32.mrb[0].mxu0
    %v5843 = vadd.f32 %v5373, %v5842
    %v5844 = vpop.f32.mrb[0].mxu0
    %v5845 = vadd.f32 %v5375, %v5844
    %v5846 = vpop.f32.mrb[0].mxu0
    %v5847 = vadd.f32 %v5377, %v5846
    %5848 = vmatprep.mubr.bf16.mxu0 0
    %5849 = vmatmul.mubr.bf16.gmra.mrb[0].mxu0 %v5588
    %v5850 = vpop.f32.mrb[0].mxu0
    %v5851 = vadd.f32 %v5381, %v5850
    %v5852 = vpop.f32.mrb[0].mxu0
    %v5853 = vadd.f32 %v5383, %v5852
    %v5854 = vpop.f32.mrb[0].mxu0
    %v5855 = vadd.f32 %v5385, %v5854
    %v5856 = vpop.f32.mrb[0].mxu0
    %v5857 = vadd.f32 %v5387, %v5856
    %5858 = vmatprep.mubr.bf16.mxu0 0
    %5859 = vmatmul.mubr.bf16.gmra.mrb[0].mxu0 %v5591
    %v5860 = vpop.f32.mrb[0].mxu0
    %v5861 = vadd.f32 %v5391, %v5860
    %v5862 = vpop.f32.mrb[0].mxu0
    %v5863 = vadd.f32 %v5393, %v5862
    %v5864 = vpop.f32.mrb[0].mxu0
    %v5865 = vadd.f32 %v5395, %v5864
    %v5866 = vpop.f32.mrb[0].mxu0
    %v5867 = vadd.f32 %v5397, %v5866
    %5868 = vmatprep.mubr.bf16.mxu0 0
    %5869 = vmatmul.mubr.bf16.gmra.mrb[0].mxu0 %v5594
    %v5870 = vpop.f32.mrb[0].mxu0
    %v5871 = vadd.f32 %v5401, %v5870
    %v5872 = vpop.f32.mrb[0].mxu0
    %v5873 = vadd.f32 %v5403, %v5872
    %v5874 = vpop.f32.mrb[0].mxu0
    %v5875 = vadd.f32 %v5405, %v5874
    %v5876 = vpop.f32.mrb[0].mxu0
    %v5877 = vadd.f32 %v5407, %v5876
    %5878 = vmatprep.mubr.bf16.mxu0 0
    %5879 = vmatmul.mubr.bf16.gmra.mrb[0].mxu0 %v5597
    %v5880 = vpop.f32.mrb[0].mxu0
    %v5881 = vadd.f32 %v5411, %v5880
    %v5882 = vpop.f32.mrb[0].mxu0
    %v5883 = vadd.f32 %v5413, %v5882
    %v5884 = vpop.f32.mrb[0].mxu0
    %v5885 = vadd.f32 %v5415, %v5884
    %v5886 = vpop.f32.mrb[0].mxu0
    %v5887 = vadd.f32 %v5417, %v5886
    %5888 = vmatprep.mubr.bf16.mxu0 0
    %5889 = vmatmul.mubr.bf16.gmra.mrb[0].mxu0 %v5600
    %v5890 = vpop.f32.mrb[0].mxu0
    %v5891 = vadd.f32 %v5421, %v5890
    %v5892 = vpop.f32.mrb[0].mxu0
    %v5893 = vadd.f32 %v5423, %v5892
    %v5894 = vpop.f32.mrb[0].mxu0
    %v5895 = vadd.f32 %v5425, %v5894
    %v5896 = vpop.f32.mrb[0].mxu0
    %v5897 = vadd.f32 %v5427, %v5896
    %5898 = vmatprep.mubr.bf16.mxu0 0
    %5899 = vmatmul.mubr.bf16.gmra.mrb[0].mxu0 %v5603
    %v5900 = vpop.f32.mrb[0].mxu0
    %v5901 = vadd.f32 %v5431, %v5900
    %v5902 = vpop.f32.mrb[0].mxu0
    %v5903 = vadd.f32 %v5433, %v5902
    %v5904 = vpop.f32.mrb[0].mxu0
    %v5905 = vadd.f32 %v5435, %v5904
    %v5906 = vpop.f32.mrb[0].mxu0
    %v5907 = vadd.f32 %v5437, %v5906
    %5908 = vmatprep.mubr.bf16.mxu0 0
    %5909 = vmatmul.mubr.bf16.gmra.mrb[0].mxu0 %v5606
    %v5910 = vpop.f32.mrb[0].mxu0
    %v5911 = vadd.f32 %v5441, %v5910
    %v5912 = vpop.f32.mrb[0].mxu0
    %v5913 = vadd.f32 %v5443, %v5912
    %v5914 = vpop.f32.mrb[0].mxu0
    %v5915 = vadd.f32 %v5445, %v5914
    %v5916 = vpop.f32.mrb[0].mxu0
    %v5917 = vadd.f32 %v5447, %v5916
    %5918 = vmatprep.mubr.bf16.mxu0 0
    %5919 = vmatmul.mubr.bf16.gmra.mrb[0].mxu0 %v5609
    %v5920 = vpop.f32.mrb[0].mxu0
    %v5921 = vadd.f32 %v5451, %v5920
    %v5922 = vpop.f32.mrb[0].mxu0
    %v5923 = vadd.f32 %v5453, %v5922
    %v5924 = vpop.f32.mrb[0].mxu0
    %v5925 = vadd.f32 %v5455, %v5924
    %v5926 = vpop.f32.mrb[0].mxu0
    %v5927 = vadd.f32 %v5457, %v5926
    %5928 = vmatprep.mubr.bf16.mxu0 0
    %5929 = vmatmul.mubr.bf16.gmra.mrb[0].mxu0 %v5612
    %v5930 = vpop.f32.mrb[0].mxu0
    %v5931 = vadd.f32 %v5461, %v5930
    %v5932 = vpop.f32.mrb[0].mxu0
    %v5933 = vadd.f32 %v5463, %v5932
    %v5934 = vpop.f32.mrb[0].mxu0
    %v5935 = vadd.f32 %v5465, %v5934
    %v5936 = vpop.f32.mrb[0].mxu0
    %v5937 = vadd.f32 %v5467, %v5936
    %5938 = vmatprep.mubr.bf16.mxu0 0
    %5939 = vmatmul.mubr.bf16.gmra.mrb[0].mxu0 %v5615
    %v5940 = vpop.f32.mrb[0].mxu0
    %v5941 = vadd.f32 %v5471, %v5940
    %v5942 = vpop.f32.mrb[0].mxu0
    %v5943 = vadd.f32 %v5473, %v5942
    %v5944 = vpop.f32.mrb[0].mxu0
    %v5945 = vadd.f32 %v5475, %v5944
    %v5946 = vpop.f32.mrb[0].mxu0
    %v5947 = vadd.f32 %v5477, %v5946
    %5948 = vmatprep.mubr.bf16.mxu0 0
    %5949 = vmatmul.mubr.bf16.gmra.mrb[0].mxu0 %v5618
    %v5950 = vpop.f32.mrb[0].mxu0
    %v5951 = vadd.f32 %v5481, %v5950
    %v5952 = vpop.f32.mrb[0].mxu0
    %v5953 = vadd.f32 %v5483, %v5952
    %v5954 = vpop.f32.mrb[0].mxu0
    %v5955 = vadd.f32 %v5485, %v5954
    %v5956 = vpop.f32.mrb[0].mxu0
    %v5957 = vadd.f32 %v5487, %v5956
    %5958 = vmatprep.mubr.bf16.mxu0 0
    %5959 = vmatmul.mubr.bf16.gmra.mrb[0].mxu0 %v5621
    %v5960 = vpop.f32.mrb[0].mxu0
    %v5961 = vadd.f32 %v5491, %v5960
    %v5962 = vpop.f32.mrb[0].mxu0
    %v5963 = vadd.f32 %v5493, %v5962
    %v5964 = vpop.f32.mrb[0].mxu0
    %v5965 = vadd.f32 %v5495, %v5964
    %v5966 = vpop.f32.mrb[0].mxu0
    %v5967 = vadd.f32 %v5497, %v5966
    %5968 = vmatprep.mubr.bf16.mxu0 0
    %5969 = vmatmul.mubr.bf16.gmra.mrb[0].mxu0 %v5624
    %v5970 = vpop.f32.mrb[0].mxu0
    %v5971 = vadd.f32 %v5501, %v5970
    %v5972 = vpop.f32.mrb[0].mxu0
    %v5973 = vadd.f32 %v5503, %v5972
    %v5974 = vpop.f32.mrb[0].mxu0
    %v5975 = vadd.f32 %v5505, %v5974
    %v5976 = vpop.f32.mrb[0].mxu0
    %v5977 = vadd.f32 %v5507, %v5976
    %5978 = vdwg.mxu0
    %v5979 = vld [vmem:[#allocation7] sm:$0x3]
    %v5981 = vlaneseq
    %v5982 = vshrl.u32 %v5981, 7
    %v5983 = vsub.s32 0, %v5982
    %v5984 = vrot.slane %v5979, %v5983
    %v5985 = vlaneseq
    %v5986 = vshrl.u32 %v5985, 7
    %v5987 = vsub.s32 1, %v5986
    %v5988 = vrot.slane %v5979, %v5987
    %v5991 = vadd.f32 %v5661, %v5984
    %v5992 = vadd.f32 %v5663, %v5988
    %v5993 = vadd.f32 %v5665, %v5984
    %v5994 = vadd.f32 %v5667, %v5988
    %v5995 = vadd.f32 %v5671, %v5984
    %v5996 = vadd.f32 %v5673, %v5988
    %v5997 = vadd.f32 %v5675, %v5984
    %v5998 = vadd.f32 %v5677, %v5988
    %v5999 = vadd.f32 %v5681, %v5984
    %v6000 = vadd.f32 %v5683, %v5988
    %v6001 = vadd.f32 %v5685, %v5984
    %v6002 = vadd.f32 %v5687, %v5988
    %v6003 = vadd.f32 %v5691, %v5984
    %v6004 = vadd.f32 %v5693, %v5988
    %v6005 = vadd.f32 %v5695, %v5984
    %v6006 = vadd.f32 %v5697, %v5988
    %v6007 = vadd.f32 %v5701, %v5984
    %v6008 = vadd.f32 %v5703, %v5988
    %v6009 = vadd.f32 %v5705, %v5984
    %v6010 = vadd.f32 %v5707, %v5988
    %v6011 = vadd.f32 %v5711, %v5984
    %v6012 = vadd.f32 %v5713, %v5988
    %v6013 = vadd.f32 %v5715, %v5984
    %v6014 = vadd.f32 %v5717, %v5988
    %v6015 = vadd.f32 %v5721, %v5984
    %v6016 = vadd.f32 %v5723, %v5988
    %v6017 = vadd.f32 %v5725, %v5984
    %v6018 = vadd.f32 %v5727, %v5988
    %v6019 = vadd.f32 %v5731, %v5984
    %v6020 = vadd.f32 %v5733, %v5988
    %v6021 = vadd.f32 %v5735, %v5984
    %v6022 = vadd.f32 %v5737, %v5988
    %v6023 = vadd.f32 %v5741, %v5984
    %v6024 = vadd.f32 %v5743, %v5988
    %v6025 = vadd.f32 %v5745, %v5984
    %v6026 = vadd.f32 %v5747, %v5988
    %v6027 = vadd.f32 %v5751, %v5984
    %v6028 = vadd.f32 %v5753, %v5988
    %v6029 = vadd.f32 %v5755, %v5984
    %v6030 = vadd.f32 %v5757, %v5988
    %v6031 = vadd.f32 %v5761, %v5984
    %v6032 = vadd.f32 %v5763, %v5988
    %v6033 = vadd.f32 %v5765, %v5984
    %v6034 = vadd.f32 %v5767, %v5988
    %v6035 = vadd.f32 %v5771, %v5984
    %v6036 = vadd.f32 %v5773, %v5988
    %v6037 = vadd.f32 %v5775, %v5984
    %v6038 = vadd.f32 %v5777, %v5988
    %v6039 = vadd.f32 %v5781, %v5984
    %v6040 = vadd.f32 %v5783, %v5988
    %v6041 = vadd.f32 %v5785, %v5984
    %v6042 = vadd.f32 %v5787, %v5988
    %v6043 = vadd.f32 %v5791, %v5984
    %v6044 = vadd.f32 %v5793, %v5988
    %v6045 = vadd.f32 %v5795, %v5984
    %v6046 = vadd.f32 %v5797, %v5988
    %v6047 = vadd.f32 %v5801, %v5984
    %v6048 = vadd.f32 %v5803, %v5988
    %v6049 = vadd.f32 %v5805, %v5984
    %v6050 = vadd.f32 %v5807, %v5988
    %v6051 = vadd.f32 %v5811, %v5984
    %v6052 = vadd.f32 %v5813, %v5988
    %v6053 = vadd.f32 %v5815, %v5984
    %v6054 = vadd.f32 %v5817, %v5988
    %v6055 = vadd.f32 %v5821, %v5984
    %v6056 = vadd.f32 %v5823, %v5988
    %v6057 = vadd.f32 %v5825, %v5984
    %v6058 = vadd.f32 %v5827, %v5988
    %v6059 = vadd.f32 %v5831, %v5984
    %v6060 = vadd.f32 %v5833, %v5988
    %v6061 = vadd.f32 %v5835, %v5984
    %v6062 = vadd.f32 %v5837, %v5988
    %v6063 = vadd.f32 %v5841, %v5984
    %v6064 = vadd.f32 %v5843, %v5988
    %v6065 = vadd.f32 %v5845, %v5984
    %v6066 = vadd.f32 %v5847, %v5988
    %v6067 = vadd.f32 %v5851, %v5984
    %v6068 = vadd.f32 %v5853, %v5988
    %v6069 = vadd.f32 %v5855, %v5984
    %v6070 = vadd.f32 %v5857, %v5988
    %v6071 = vadd.f32 %v5861, %v5984
    %v6072 = vadd.f32 %v5863, %v5988
    %v6073 = vadd.f32 %v5865, %v5984
    %v6074 = vadd.f32 %v5867, %v5988
    %v6075 = vadd.f32 %v5871, %v5984
    %v6076 = vadd.f32 %v5873, %v5988
    %v6077 = vadd.f32 %v5875, %v5984
    %v6078 = vadd.f32 %v5877, %v5988
    %v6079 = vadd.f32 %v5881, %v5984
    %v6080 = vadd.f32 %v5883, %v5988
    %v6081 = vadd.f32 %v5885, %v5984
    %v6082 = vadd.f32 %v5887, %v5988
    %v6083 = vadd.f32 %v5891, %v5984
    %v6084 = vadd.f32 %v5893, %v5988
    %v6085 = vadd.f32 %v5895, %v5984
    %v6086 = vadd.f32 %v5897, %v5988
    %v6087 = vadd.f32 %v5901, %v5984
    %v6088 = vadd.f32 %v5903, %v5988
    %v6089 = vadd.f32 %v5905, %v5984
    %v6090 = vadd.f32 %v5907, %v5988
    %v6091 = vadd.f32 %v5911, %v5984
    %v6092 = vadd.f32 %v5913, %v5988
    %v6093 = vadd.f32 %v5915, %v5984
    %v6094 = vadd.f32 %v5917, %v5988
    %v6095 = vadd.f32 %v5921, %v5984
    %v6096 = vadd.f32 %v5923, %v5988
    %v6097 = vadd.f32 %v5925, %v5984
    %v6098 = vadd.f32 %v5927, %v5988
    %v6099 = vadd.f32 %v5931, %v5984
    %v6100 = vadd.f32 %v5933, %v5988
    %v6101 = vadd.f32 %v5935, %v5984
    %v6102 = vadd.f32 %v5937, %v5988
    %v6103 = vadd.f32 %v5941, %v5984
    %v6104 = vadd.f32 %v5943, %v5988
    %v6105 = vadd.f32 %v5945, %v5984
    %v6106 = vadd.f32 %v5947, %v5988
    %v6107 = vadd.f32 %v5951, %v5984
    %v6108 = vadd.f32 %v5953, %v5988
    %v6109 = vadd.f32 %v5955, %v5984
    %v6110 = vadd.f32 %v5957, %v5988
    %v6111 = vadd.f32 %v5961, %v5984
    %v6112 = vadd.f32 %v5963, %v5988
    %v6113 = vadd.f32 %v5965, %v5984
    %v6114 = vadd.f32 %v5967, %v5988
    %v6115 = vadd.f32 %v5971, %v5984
    %v6116 = vadd.f32 %v5973, %v5988
    %v6117 = vadd.f32 %v5975, %v5984
    %v6118 = vadd.f32 %v5977, %v5988
    %v6119 = vmax.f32 %v5991, 0.0
    %v6120 = vmax.f32 %v5992, 0.0
    %v6121 = vmax.f32 %v5993, 0.0
    %v6122 = vmax.f32 %v5994, 0.0
    %v6123 = vmax.f32 %v5995, 0.0
    %v6124 = vmax.f32 %v5996, 0.0
    %v6125 = vmax.f32 %v5997, 0.0
    %v6126 = vmax.f32 %v5998, 0.0
    %v6127 = vmax.f32 %v5999, 0.0
    %v6128 = vmax.f32 %v6000, 0.0
    %v6129 = vmax.f32 %v6001, 0.0
    %v6130 = vmax.f32 %v6002, 0.0
    %v6131 = vmax.f32 %v6003, 0.0
    %v6132 = vmax.f32 %v6004, 0.0
    %v6133 = vmax.f32 %v6005, 0.0
    %v6134 = vmax.f32 %v6006, 0.0
    %v6135 = vmax.f32 %v6007, 0.0
    %v6136 = vmax.f32 %v6008, 0.0
    %v6137 = vmax.f32 %v6009, 0.0
    %v6138 = vmax.f32 %v6010, 0.0
    %v6139 = vmax.f32 %v6011, 0.0
    %v6140 = vmax.f32 %v6012, 0.0
    %v6141 = vmax.f32 %v6013, 0.0
    %v6142 = vmax.f32 %v6014, 0.0
    %v6143 = vmax.f32 %v6015, 0.0
    %v6144 = vmax.f32 %v6016, 0.0
    %v6145 = vmax.f32 %v6017, 0.0
    %v6146 = vmax.f32 %v6018, 0.0
    %v6147 = vmax.f32 %v6019, 0.0
    %v6148 = vmax.f32 %v6020, 0.0
    %v6149 = vmax.f32 %v6021, 0.0
    %v6150 = vmax.f32 %v6022, 0.0
    %v6151 = vmax.f32 %v6023, 0.0
    %v6152 = vmax.f32 %v6024, 0.0
    %v6153 = vmax.f32 %v6025, 0.0
    %v6154 = vmax.f32 %v6026, 0.0
    %v6155 = vmax.f32 %v6027, 0.0
    %v6156 = vmax.f32 %v6028, 0.0
    %v6157 = vmax.f32 %v6029, 0.0
    %v6158 = vmax.f32 %v6030, 0.0
    %v6159 = vmax.f32 %v6031, 0.0
    %v6160 = vmax.f32 %v6032, 0.0
    %v6161 = vmax.f32 %v6033, 0.0
    %v6162 = vmax.f32 %v6034, 0.0
    %v6163 = vmax.f32 %v6035, 0.0
    %v6164 = vmax.f32 %v6036, 0.0
    %v6165 = vmax.f32 %v6037, 0.0
    %v6166 = vmax.f32 %v6038, 0.0
    %v6167 = vmax.f32 %v6039, 0.0
    %v6168 = vmax.f32 %v6040, 0.0
    %v6169 = vmax.f32 %v6041, 0.0
    %v6170 = vmax.f32 %v6042, 0.0
    %v6171 = vmax.f32 %v6043, 0.0
    %v6172 = vmax.f32 %v6044, 0.0
    %v6173 = vmax.f32 %v6045, 0.0
    %v6174 = vmax.f32 %v6046, 0.0
    %v6175 = vmax.f32 %v6047, 0.0
    %v6176 = vmax.f32 %v6048, 0.0
    %v6177 = vmax.f32 %v6049, 0.0
    %v6178 = vmax.f32 %v6050, 0.0
    %v6179 = vmax.f32 %v6051, 0.0
    %v6180 = vmax.f32 %v6052, 0.0
    %v6181 = vmax.f32 %v6053, 0.0
    %v6182 = vmax.f32 %v6054, 0.0
    %v6183 = vmax.f32 %v6055, 0.0
    %v6184 = vmax.f32 %v6056, 0.0
    %v6185 = vmax.f32 %v6057, 0.0
    %v6186 = vmax.f32 %v6058, 0.0
    %v6187 = vmax.f32 %v6059, 0.0
    %v6188 = vmax.f32 %v6060, 0.0
    %v6189 = vmax.f32 %v6061, 0.0
    %v6190 = vmax.f32 %v6062, 0.0
    %v6191 = vmax.f32 %v6063, 0.0
    %v6192 = vmax.f32 %v6064, 0.0
    %v6193 = vmax.f32 %v6065, 0.0
    %v6194 = vmax.f32 %v6066, 0.0
    %v6195 = vmax.f32 %v6067, 0.0
    %v6196 = vmax.f32 %v6068, 0.0
    %v6197 = vmax.f32 %v6069, 0.0
    %v6198 = vmax.f32 %v6070, 0.0
    %v6199 = vmax.f32 %v6071, 0.0
    %v6200 = vmax.f32 %v6072, 0.0
    %v6201 = vmax.f32 %v6073, 0.0
    %v6202 = vmax.f32 %v6074, 0.0
    %v6203 = vmax.f32 %v6075, 0.0
    %v6204 = vmax.f32 %v6076, 0.0
    %v6205 = vmax.f32 %v6077, 0.0
    %v6206 = vmax.f32 %v6078, 0.0
    %v6207 = vmax.f32 %v6079, 0.0
    %v6208 = vmax.f32 %v6080, 0.0
    %v6209 = vmax.f32 %v6081, 0.0
    %v6210 = vmax.f32 %v6082, 0.0
    %v6211 = vmax.f32 %v6083, 0.0
    %v6212 = vmax.f32 %v6084, 0.0
    %v6213 = vmax.f32 %v6085, 0.0
    %v6214 = vmax.f32 %v6086, 0.0
    %v6215 = vmax.f32 %v6087, 0.0
    %v6216 = vmax.f32 %v6088, 0.0
    %v6217 = vmax.f32 %v6089, 0.0
    %v6218 = vmax.f32 %v6090, 0.0
    %v6219 = vmax.f32 %v6091, 0.0
    %v6220 = vmax.f32 %v6092, 0.0
    %v6221 = vmax.f32 %v6093, 0.0
    %v6222 = vmax.f32 %v6094, 0.0
    %v6223 = vmax.f32 %v6095, 0.0
    %v6224 = vmax.f32 %v6096, 0.0
    %v6225 = vmax.f32 %v6097, 0.0
    %v6226 = vmax.f32 %v6098, 0.0
    %v6227 = vmax.f32 %v6099, 0.0
    %v6228 = vmax.f32 %v6100, 0.0
    %v6229 = vmax.f32 %v6101, 0.0
    %v6230 = vmax.f32 %v6102, 0.0
    %v6231 = vmax.f32 %v6103, 0.0
    %v6232 = vmax.f32 %v6104, 0.0
    %v6233 = vmax.f32 %v6105, 0.0
    %v6234 = vmax.f32 %v6106, 0.0
    %v6235 = vmax.f32 %v6107, 0.0
    %v6236 = vmax.f32 %v6108, 0.0
    %v6237 = vmax.f32 %v6109, 0.0
    %v6238 = vmax.f32 %v6110, 0.0
    %v6239 = vmax.f32 %v6111, 0.0
    %v6240 = vmax.f32 %v6112, 0.0
    %v6241 = vmax.f32 %v6113, 0.0
    %v6242 = vmax.f32 %v6114, 0.0
    %v6243 = vmax.f32 %v6115, 0.0
    %v6244 = vmax.f32 %v6116, 0.0
    %v6245 = vmax.f32 %v6117, 0.0
    %v6246 = vmax.f32 %v6118, 0.0
    %v6247 = vpack.c.bf16 %v6121, %v6119
    %v6248 = vpack.c.bf16 %v6122, %v6120
    %v6249 = vpack.c.bf16 %v6125, %v6123
    %v6250 = vpack.c.bf16 %v6126, %v6124
    %v6251 = vpack.c.bf16 %v6129, %v6127
    %v6252 = vpack.c.bf16 %v6130, %v6128
    %v6253 = vpack.c.bf16 %v6133, %v6131
    %v6254 = vpack.c.bf16 %v6134, %v6132
    %v6255 = vpack.c.bf16 %v6137, %v6135
    %v6256 = vpack.c.bf16 %v6138, %v6136
    %v6257 = vpack.c.bf16 %v6141, %v6139
    %v6258 = vpack.c.bf16 %v6142, %v6140
    %v6259 = vpack.c.bf16 %v6145, %v6143
    %v6260 = vpack.c.bf16 %v6146, %v6144
    %v6261 = vpack.c.bf16 %v6149, %v6147
    %v6262 = vpack.c.bf16 %v6150, %v6148
    %v6263 = vpack.c.bf16 %v6153, %v6151
    %v6264 = vpack.c.bf16 %v6154, %v6152
    %v6265 = vpack.c.bf16 %v6157, %v6155
    %v6266 = vpack.c.bf16 %v6158, %v6156
    %v6267 = vpack.c.bf16 %v6161, %v6159
    %v6268 = vpack.c.bf16 %v6162, %v6160
    %v6269 = vpack.c.bf16 %v6165, %v6163
    %v6270 = vpack.c.bf16 %v6166, %v6164
    %v6271 = vpack.c.bf16 %v6169, %v6167
    %v6272 = vpack.c.bf16 %v6170, %v6168
    %v6273 = vpack.c.bf16 %v6173, %v6171
    %v6274 = vpack.c.bf16 %v6174, %v6172
    %v6275 = vpack.c.bf16 %v6177, %v6175
    %v6276 = vpack.c.bf16 %v6178, %v6176
    %v6277 = vpack.c.bf16 %v6181, %v6179
    %v6278 = vpack.c.bf16 %v6182, %v6180
    %v6279 = vpack.c.bf16 %v6185, %v6183
    %v6280 = vpack.c.bf16 %v6186, %v6184
    %v6281 = vpack.c.bf16 %v6189, %v6187
    %v6282 = vpack.c.bf16 %v6190, %v6188
    %v6283 = vpack.c.bf16 %v6193, %v6191
    %v6284 = vpack.c.bf16 %v6194, %v6192
    %v6285 = vpack.c.bf16 %v6197, %v6195
    %v6286 = vpack.c.bf16 %v6198, %v6196
    %v6287 = vpack.c.bf16 %v6201, %v6199
    %v6288 = vpack.c.bf16 %v6202, %v6200
    %v6289 = vpack.c.bf16 %v6205, %v6203
    %v6290 = vpack.c.bf16 %v6206, %v6204
    %v6291 = vpack.c.bf16 %v6209, %v6207
    %v6292 = vpack.c.bf16 %v6210, %v6208
    %v6293 = vpack.c.bf16 %v6213, %v6211
    %v6294 = vpack.c.bf16 %v6214, %v6212
    %v6295 = vpack.c.bf16 %v6217, %v6215
    %v6296 = vpack.c.bf16 %v6218, %v6216
    %v6297 = vpack.c.bf16 %v6221, %v6219
    %v6298 = vpack.c.bf16 %v6222, %v6220
    %v6299 = vpack.c.bf16 %v6225, %v6223
    %v6300 = vpack.c.bf16 %v6226, %v6224
    %v6301 = vpack.c.bf16 %v6229, %v6227
    %v6302 = vpack.c.bf16 %v6230, %v6228
    %v6303 = vpack.c.bf16 %v6233, %v6231
    %v6304 = vpack.c.bf16 %v6234, %v6232
    %v6305 = vpack.c.bf16 %v6237, %v6235
    %v6306 = vpack.c.bf16 %v6238, %v6236
    %v6307 = vpack.c.bf16 %v6241, %v6239
    %v6308 = vpack.c.bf16 %v6242, %v6240
    %v6309 = vpack.c.bf16 %v6245, %v6243
    %v6310 = vpack.c.bf16 %v6246, %v6244
    %v6311 = vld [vmem:[#allocation8] sm:$0xf]
    %v6312 = vld [vmem:[#allocation8 + $0x4] sm:$0xf]
    %v6313 = vld [vmem:[#allocation8 + $0x8] sm:$0xf]
    %v6314 = vld [vmem:[#allocation8 + $0xc] sm:$0xf]
    %v6315 = vld [vmem:[#allocation8 + $0x10] sm:$0xf]
    %v6316 = vld [vmem:[#allocation8 + $0x14] sm:$0xf]
    %v6317 = vld [vmem:[#allocation8 + $0x18] sm:$0xf]
    %v6318 = vld [vmem:[#allocation8 + $0x1c] sm:$0xf]
    %v6319 = vld [vmem:[#allocation8 + $0x20] sm:$0xf]
    %v6320 = vld [vmem:[#allocation8 + $0x24] sm:$0xf]
    %v6321 = vld [vmem:[#allocation8 + $0x28] sm:$0xf]
    %v6322 = vld [vmem:[#allocation8 + $0x2c] sm:$0xf]
    %v6323 = vld [vmem:[#allocation8 + $0x30] sm:$0xf]
    %v6324 = vld [vmem:[#allocation8 + $0x34] sm:$0xf]
    %v6325 = vld [vmem:[#allocation8 + $0x38] sm:$0xf]
    %v6326 = vld [vmem:[#allocation8 + $0x3c] sm:$0xf]
    %v6327 = vld [vmem:[#allocation8 + $0x40] sm:$0xf]
    %v6328 = vld [vmem:[#allocation8 + $0x44] sm:$0xf]
    %v6329 = vld [vmem:[#allocation8 + $0x48] sm:$0xf]
    %v6330 = vld [vmem:[#allocation8 + $0x4c] sm:$0xf]
    %v6331 = vld [vmem:[#allocation8 + $0x50] sm:$0xf]
    %v6332 = vld [vmem:[#allocation8 + $0x54] sm:$0xf]
    %v6333 = vld [vmem:[#allocation8 + $0x58] sm:$0xf]
    %v6334 = vld [vmem:[#allocation8 + $0x5c] sm:$0xf]
    %v6335 = vld [vmem:[#allocation8 + $0x60] sm:$0xf]
    %v6336 = vld [vmem:[#allocation8 + $0x64] sm:$0xf]
    %v6337 = vld [vmem:[#allocation8 + $0x68] sm:$0xf]
    %v6338 = vld [vmem:[#allocation8 + $0x6c] sm:$0xf]
    %v6339 = vld [vmem:[#allocation8 + $0x70] sm:$0xf]
    %v6340 = vld [vmem:[#allocation8 + $0x74] sm:$0xf]
    %v6341 = vld [vmem:[#allocation8 + $0x78] sm:$0xf]
    %v6342 = vld [vmem:[#allocation8 + $0x7c] sm:$0xf]
    %v6343 = vld [vmem:[%s14] sm:$0x1]
    %v6345 = vlaneseq
    %v6346 = vshrl.u32 %v6345, 7
    %v6347 = vsub.s32 0, %v6346
    %v6348 = vrot.slane %v6343, %v6347
    %v6382 = vunpack.c.l.b16 %v6311
    %v6383 = vunpack.c.l.b16 %v6312
    %v6384 = vunpack.c.l.b16 %v6313
    %v6385 = vunpack.c.l.b16 %v6314
    %v6386 = vunpack.c.l.b16 %v6315
    %v6387 = vunpack.c.l.b16 %v6316
    %v6388 = vunpack.c.l.b16 %v6317
    %v6389 = vunpack.c.l.b16 %v6318
    %v6390 = vunpack.c.l.b16 %v6319
    %v6391 = vunpack.c.l.b16 %v6320
    %v6392 = vunpack.c.l.b16 %v6321
    %v6393 = vunpack.c.l.b16 %v6322
    %v6394 = vunpack.c.l.b16 %v6323
    %v6395 = vunpack.c.l.b16 %v6324
    %v6396 = vunpack.c.l.b16 %v6325
    %v6397 = vunpack.c.l.b16 %v6326
    %v6398 = vunpack.c.l.b16 %v6327
    %v6399 = vunpack.c.l.b16 %v6328
    %v6400 = vunpack.c.l.b16 %v6329
    %v6401 = vunpack.c.l.b16 %v6330
    %v6402 = vunpack.c.l.b16 %v6331
    %v6403 = vunpack.c.l.b16 %v6332
    %v6404 = vunpack.c.l.b16 %v6333
    %v6405 = vunpack.c.l.b16 %v6334
    %v6406 = vunpack.c.l.b16 %v6335
    %v6407 = vunpack.c.l.b16 %v6336
    %v6408 = vunpack.c.l.b16 %v6337
    %v6409 = vunpack.c.l.b16 %v6338
    %v6410 = vunpack.c.l.b16 %v6339
    %v6411 = vunpack.c.l.b16 %v6340
    %v6412 = vunpack.c.l.b16 %v6341
    %v6413 = vunpack.c.l.b16 %v6342
    %v6414 = vpack.c.b16 %v6383, %v6382
    %v6415 = vpack.c.b16 %v6385, %v6384
    %v6416 = vpack.c.b16 %v6387, %v6386
    %v6417 = vpack.c.b16 %v6389, %v6388
    %v6418 = vpack.c.b16 %v6391, %v6390
    %v6419 = vpack.c.b16 %v6393, %v6392
    %v6420 = vpack.c.b16 %v6395, %v6394
    %v6421 = vpack.c.b16 %v6397, %v6396
    %v6422 = vpack.c.b16 %v6399, %v6398
    %v6423 = vpack.c.b16 %v6401, %v6400
    %v6424 = vpack.c.b16 %v6403, %v6402
    %v6425 = vpack.c.b16 %v6405, %v6404
    %v6426 = vpack.c.b16 %v6407, %v6406
    %v6427 = vpack.c.b16 %v6409, %v6408
    %v6428 = vpack.c.b16 %v6411, %v6410
    %v6429 = vpack.c.b16 %v6413, %v6412
    %6446 = vmatprep.subr.bf16.mxu0 0
    %6447 = vmatpush1.bf16.msra.mxu0 %v6414
    %6448 = vmatprep.subr.bf16.mxu0 0
    %6449 = vmatpush1.bf16.msra.mxu0 %v6415
    %6450 = vmatprep.subr.bf16.mxu0 0
    %6451 = vmatpush1.bf16.msra.mxu0 %v6416
    %6452 = vmatprep.subr.bf16.mxu0 0
    %6453 = vmatpush1.bf16.msra.mxu0 %v6417
    %6454 = vmatprep.subr.bf16.mxu0 0
    %6455 = vmatpush1.bf16.msra.mxu0 %v6418
    %6456 = vmatprep.subr.bf16.mxu0 0
    %6457 = vmatpush1.bf16.msra.mxu0 %v6419
    %6458 = vmatprep.subr.bf16.mxu0 0
    %6459 = vmatpush1.bf16.msra.mxu0 %v6420
    %6460 = vmatprep.subr.bf16.mxu0 0
    %6461 = vmatpush1.bf16.msra.mxu0 %v6421
    %6462 = vmatprep.subr.bf16.mxu0 0
    %6463 = vmatpush1.bf16.msra.mxu0 %v6422
    %6464 = vmatprep.subr.bf16.mxu0 0
    %6465 = vmatpush1.bf16.msra.mxu0 %v6423
    %6466 = vmatprep.subr.bf16.mxu0 0
    %6467 = vmatpush1.bf16.msra.mxu0 %v6424
    %6468 = vmatprep.subr.bf16.mxu0 0
    %6469 = vmatpush1.bf16.msra.mxu0 %v6425
    %6470 = vmatprep.subr.bf16.mxu0 0
    %6471 = vmatpush1.bf16.msra.mxu0 %v6426
    %6472 = vmatprep.subr.bf16.mxu0 0
    %6473 = vmatpush1.bf16.msra.mxu0 %v6427
    %6474 = vmatprep.subr.bf16.mxu0 0
    %6475 = vmatpush1.bf16.msra.mxu0 %v6428
    %6476 = vmatprep.subr.bf16.mxu0 0
    %6477 = vmatpush1.bf16.msra.mxu0 %v6429
    %6478 = vmatprep.mubr.bf16.mxu0 %v6248
    %6479 = vmatmul.mubr.bf16.gmra.mrb[0].mxu0 %v6247
    %v6480 = vpop.f32.mrb[0].mxu0
    %v6481 = vadd.f32 %v6348, %v6480
    %v6482 = vpop.f32.mrb[0].mxu0
    %v6483 = vpop.f32.mrb[0].mxu0
    %v6484 = vadd.f32 %v6348, %v6483
    %v6485 = vpop.f32.mrb[0].mxu0
    %6486 = vmatprep.mubr.bf16.mxu0 %v6250
    %6487 = vmatmul.mubr.bf16.gmra.mrb[0].mxu0 %v6249
    %v6488 = vpop.f32.mrb[0].mxu0
    %v6489 = vadd.f32 %v6348, %v6488
    %v6490 = vpop.f32.mrb[0].mxu0
    %v6491 = vpop.f32.mrb[0].mxu0
    %v6492 = vadd.f32 %v6348, %v6491
    %v6493 = vpop.f32.mrb[0].mxu0
    %6494 = vmatprep.mubr.bf16.mxu0 %v6252
    %6495 = vmatmul.mubr.bf16.gmra.mrb[0].mxu0 %v6251
    %v6496 = vpop.f32.mrb[0].mxu0
    %v6497 = vadd.f32 %v6348, %v6496
    %v6498 = vpop.f32.mrb[0].mxu0
    %v6499 = vpop.f32.mrb[0].mxu0
    %v6500 = vadd.f32 %v6348, %v6499
    %v6501 = vpop.f32.mrb[0].mxu0
    %6502 = vmatprep.mubr.bf16.mxu0 %v6254
    %6503 = vmatmul.mubr.bf16.gmra.mrb[0].mxu0 %v6253
    %v6504 = vpop.f32.mrb[0].mxu0
    %v6505 = vadd.f32 %v6348, %v6504
    %v6506 = vpop.f32.mrb[0].mxu0
    %v6507 = vpop.f32.mrb[0].mxu0
    %v6508 = vadd.f32 %v6348, %v6507
    %v6509 = vpop.f32.mrb[0].mxu0
    %6510 = vmatprep.mubr.bf16.mxu0 %v6256
    %6511 = vmatmul.mubr.bf16.gmra.mrb[0].mxu0 %v6255
    %v6512 = vpop.f32.mrb[0].mxu0
    %v6513 = vadd.f32 %v6348, %v6512
    %v6514 = vpop.f32.mrb[0].mxu0
    %v6515 = vpop.f32.mrb[0].mxu0
    %v6516 = vadd.f32 %v6348, %v6515
    %v6517 = vpop.f32.mrb[0].mxu0
    %6518 = vmatprep.mubr.bf16.mxu0 %v6258
    %6519 = vmatmul.mubr.bf16.gmra.mrb[0].mxu0 %v6257
    %v6520 = vpop.f32.mrb[0].mxu0
    %v6521 = vadd.f32 %v6348, %v6520
    %v6522 = vpop.f32.mrb[0].mxu0
    %v6523 = vpop.f32.mrb[0].mxu0
    %v6524 = vadd.f32 %v6348, %v6523
    %v6525 = vpop.f32.mrb[0].mxu0
    %6526 = vmatprep.mubr.bf16.mxu0 %v6260
    %6527 = vmatmul.mubr.bf16.gmra.mrb[0].mxu0 %v6259
    %v6528 = vpop.f32.mrb[0].mxu0
    %v6529 = vadd.f32 %v6348, %v6528
    %v6530 = vpop.f32.mrb[0].mxu0
    %v6531 = vpop.f32.mrb[0].mxu0
    %v6532 = vadd.f32 %v6348, %v6531
    %v6533 = vpop.f32.mrb[0].mxu0
    %6534 = vmatprep.mubr.bf16.mxu0 %v6262
    %6535 = vmatmul.mubr.bf16.gmra.mrb[0].mxu0 %v6261
    %v6536 = vpop.f32.mrb[0].mxu0
    %v6537 = vadd.f32 %v6348, %v6536
    %v6538 = vpop.f32.mrb[0].mxu0
    %v6539 = vpop.f32.mrb[0].mxu0
    %v6540 = vadd.f32 %v6348, %v6539
    %v6541 = vpop.f32.mrb[0].mxu0
    %6542 = vmatprep.mubr.bf16.mxu0 %v6264
    %6543 = vmatmul.mubr.bf16.gmra.mrb[0].mxu0 %v6263
    %v6544 = vpop.f32.mrb[0].mxu0
    %v6545 = vadd.f32 %v6348, %v6544
    %v6546 = vpop.f32.mrb[0].mxu0
    %v6547 = vpop.f32.mrb[0].mxu0
    %v6548 = vadd.f32 %v6348, %v6547
    %v6549 = vpop.f32.mrb[0].mxu0
    %6550 = vmatprep.mubr.bf16.mxu0 %v6266
    %6551 = vmatmul.mubr.bf16.gmra.mrb[0].mxu0 %v6265
    %v6552 = vpop.f32.mrb[0].mxu0
    %v6553 = vadd.f32 %v6348, %v6552
    %v6554 = vpop.f32.mrb[0].mxu0
    %v6555 = vpop.f32.mrb[0].mxu0
    %v6556 = vadd.f32 %v6348, %v6555
    %v6557 = vpop.f32.mrb[0].mxu0
    %6558 = vmatprep.mubr.bf16.mxu0 %v6268
    %6559 = vmatmul.mubr.bf16.gmra.mrb[0].mxu0 %v6267
    %v6560 = vpop.f32.mrb[0].mxu0
    %v6561 = vadd.f32 %v6348, %v6560
    %v6562 = vpop.f32.mrb[0].mxu0
    %v6563 = vpop.f32.mrb[0].mxu0
    %v6564 = vadd.f32 %v6348, %v6563
    %v6565 = vpop.f32.mrb[0].mxu0
    %6566 = vmatprep.mubr.bf16.mxu0 %v6270
    %6567 = vmatmul.mubr.bf16.gmra.mrb[0].mxu0 %v6269
    %v6568 = vpop.f32.mrb[0].mxu0
    %v6569 = vadd.f32 %v6348, %v6568
    %v6570 = vpop.f32.mrb[0].mxu0
    %v6571 = vpop.f32.mrb[0].mxu0
    %v6572 = vadd.f32 %v6348, %v6571
    %v6573 = vpop.f32.mrb[0].mxu0
    %6574 = vmatprep.mubr.bf16.mxu0 %v6272
    %6575 = vmatmul.mubr.bf16.gmra.mrb[0].mxu0 %v6271
    %v6576 = vpop.f32.mrb[0].mxu0
    %v6577 = vadd.f32 %v6348, %v6576
    %v6578 = vpop.f32.mrb[0].mxu0
    %v6579 = vpop.f32.mrb[0].mxu0
    %v6580 = vadd.f32 %v6348, %v6579
    %v6581 = vpop.f32.mrb[0].mxu0
    %6582 = vmatprep.mubr.bf16.mxu0 %v6274
    %6583 = vmatmul.mubr.bf16.gmra.mrb[0].mxu0 %v6273
    %v6584 = vpop.f32.mrb[0].mxu0
    %v6585 = vadd.f32 %v6348, %v6584
    %v6586 = vpop.f32.mrb[0].mxu0
    %v6587 = vpop.f32.mrb[0].mxu0
    %v6588 = vadd.f32 %v6348, %v6587
    %v6589 = vpop.f32.mrb[0].mxu0
    %6590 = vmatprep.mubr.bf16.mxu0 %v6276
    %6591 = vmatmul.mubr.bf16.gmra.mrb[0].mxu0 %v6275
    %v6592 = vpop.f32.mrb[0].mxu0
    %v6593 = vadd.f32 %v6348, %v6592
    %v6594 = vpop.f32.mrb[0].mxu0
    %v6595 = vpop.f32.mrb[0].mxu0
    %v6596 = vadd.f32 %v6348, %v6595
    %v6597 = vpop.f32.mrb[0].mxu0
    %6598 = vmatprep.mubr.bf16.mxu0 %v6278
    %6599 = vmatmul.mubr.bf16.gmra.mrb[0].mxu0 %v6277
    %v6600 = vpop.f32.mrb[0].mxu0
    %v6601 = vadd.f32 %v6348, %v6600
    %v6602 = vpop.f32.mrb[0].mxu0
    %v6603 = vpop.f32.mrb[0].mxu0
    %v6604 = vadd.f32 %v6348, %v6603
    %v6605 = vpop.f32.mrb[0].mxu0
    %6606 = vmatprep.mubr.bf16.mxu0 %v6280
    %6607 = vmatmul.mubr.bf16.gmra.mrb[0].mxu0 %v6279
    %v6608 = vpop.f32.mrb[0].mxu0
    %v6609 = vadd.f32 %v6348, %v6608
    %v6610 = vpop.f32.mrb[0].mxu0
    %v6611 = vpop.f32.mrb[0].mxu0
    %v6612 = vadd.f32 %v6348, %v6611
    %v6613 = vpop.f32.mrb[0].mxu0
    %6614 = vmatprep.mubr.bf16.mxu0 %v6282
    %6615 = vmatmul.mubr.bf16.gmra.mrb[0].mxu0 %v6281
    %v6616 = vpop.f32.mrb[0].mxu0
    %v6617 = vadd.f32 %v6348, %v6616
    %v6618 = vpop.f32.mrb[0].mxu0
    %v6619 = vpop.f32.mrb[0].mxu0
    %v6620 = vadd.f32 %v6348, %v6619
    %v6621 = vpop.f32.mrb[0].mxu0
    %6622 = vmatprep.mubr.bf16.mxu0 %v6284
    %6623 = vmatmul.mubr.bf16.gmra.mrb[0].mxu0 %v6283
    %v6624 = vpop.f32.mrb[0].mxu0
    %v6625 = vadd.f32 %v6348, %v6624
    %v6626 = vpop.f32.mrb[0].mxu0
    %v6627 = vpop.f32.mrb[0].mxu0
    %v6628 = vadd.f32 %v6348, %v6627
    %v6629 = vpop.f32.mrb[0].mxu0
    %6630 = vmatprep.mubr.bf16.mxu0 %v6286
    %6631 = vmatmul.mubr.bf16.gmra.mrb[0].mxu0 %v6285
    %v6632 = vpop.f32.mrb[0].mxu0
    %v6633 = vadd.f32 %v6348, %v6632
    %v6634 = vpop.f32.mrb[0].mxu0
    %v6635 = vpop.f32.mrb[0].mxu0
    %v6636 = vadd.f32 %v6348, %v6635
    %v6637 = vpop.f32.mrb[0].mxu0
    %6638 = vmatprep.mubr.bf16.mxu0 %v6288
    %6639 = vmatmul.mubr.bf16.gmra.mrb[0].mxu0 %v6287
    %v6640 = vpop.f32.mrb[0].mxu0
    %v6641 = vadd.f32 %v6348, %v6640
    %v6642 = vpop.f32.mrb[0].mxu0
    %v6643 = vpop.f32.mrb[0].mxu0
    %v6644 = vadd.f32 %v6348, %v6643
    %v6645 = vpop.f32.mrb[0].mxu0
    %6646 = vmatprep.mubr.bf16.mxu0 %v6290
    %6647 = vmatmul.mubr.bf16.gmra.mrb[0].mxu0 %v6289
    %v6648 = vpop.f32.mrb[0].mxu0
    %v6649 = vadd.f32 %v6348, %v6648
    %v6650 = vpop.f32.mrb[0].mxu0
    %v6651 = vpop.f32.mrb[0].mxu0
    %v6652 = vadd.f32 %v6348, %v6651
    %v6653 = vpop.f32.mrb[0].mxu0
    %6654 = vmatprep.mubr.bf16.mxu0 %v6292
    %6655 = vmatmul.mubr.bf16.gmra.mrb[0].mxu0 %v6291
    %v6656 = vpop.f32.mrb[0].mxu0
    %v6657 = vadd.f32 %v6348, %v6656
    %v6658 = vpop.f32.mrb[0].mxu0
    %v6659 = vpop.f32.mrb[0].mxu0
    %v6660 = vadd.f32 %v6348, %v6659
    %v6661 = vpop.f32.mrb[0].mxu0
    %6662 = vmatprep.mubr.bf16.mxu0 %v6294
    %6663 = vmatmul.mubr.bf16.gmra.mrb[0].mxu0 %v6293
    %v6664 = vpop.f32.mrb[0].mxu0
    %v6665 = vadd.f32 %v6348, %v6664
    %v6666 = vpop.f32.mrb[0].mxu0
    %v6667 = vpop.f32.mrb[0].mxu0
    %v6668 = vadd.f32 %v6348, %v6667
    %v6669 = vpop.f32.mrb[0].mxu0
    %6670 = vmatprep.mubr.bf16.mxu0 %v6296
    %6671 = vmatmul.mubr.bf16.gmra.mrb[0].mxu0 %v6295
    %v6672 = vpop.f32.mrb[0].mxu0
    %v6673 = vadd.f32 %v6348, %v6672
    %v6674 = vpop.f32.mrb[0].mxu0
    %v6675 = vpop.f32.mrb[0].mxu0
    %v6676 = vadd.f32 %v6348, %v6675
    %v6677 = vpop.f32.mrb[0].mxu0
    %6678 = vmatprep.mubr.bf16.mxu0 %v6298
    %6679 = vmatmul.mubr.bf16.gmra.mrb[0].mxu0 %v6297
    %v6680 = vpop.f32.mrb[0].mxu0
    %v6681 = vadd.f32 %v6348, %v6680
    %v6682 = vpop.f32.mrb[0].mxu0
    %v6683 = vpop.f32.mrb[0].mxu0
    %v6684 = vadd.f32 %v6348, %v6683
    %v6685 = vpop.f32.mrb[0].mxu0
    %6686 = vmatprep.mubr.bf16.mxu0 %v6300
    %6687 = vmatmul.mubr.bf16.gmra.mrb[0].mxu0 %v6299
    %v6688 = vpop.f32.mrb[0].mxu0
    %v6689 = vadd.f32 %v6348, %v6688
    %v6690 = vpop.f32.mrb[0].mxu0
    %v6691 = vpop.f32.mrb[0].mxu0
    %v6692 = vadd.f32 %v6348, %v6691
    %v6693 = vpop.f32.mrb[0].mxu0
    %6694 = vmatprep.mubr.bf16.mxu0 %v6302
    %6695 = vmatmul.mubr.bf16.gmra.mrb[0].mxu0 %v6301
    %v6696 = vpop.f32.mrb[0].mxu0
    %v6697 = vadd.f32 %v6348, %v6696
    %v6698 = vpop.f32.mrb[0].mxu0
    %v6699 = vpop.f32.mrb[0].mxu0
    %v6700 = vadd.f32 %v6348, %v6699
    %v6701 = vpop.f32.mrb[0].mxu0
    %6702 = vmatprep.mubr.bf16.mxu0 %v6304
    %6703 = vmatmul.mubr.bf16.gmra.mrb[0].mxu0 %v6303
    %v6704 = vpop.f32.mrb[0].mxu0
    %v6705 = vadd.f32 %v6348, %v6704
    %v6706 = vpop.f32.mrb[0].mxu0
    %v6707 = vpop.f32.mrb[0].mxu0
    %v6708 = vadd.f32 %v6348, %v6707
    %v6709 = vpop.f32.mrb[0].mxu0
    %6710 = vmatprep.mubr.bf16.mxu0 %v6306
    %6711 = vmatmul.mubr.bf16.gmra.mrb[0].mxu0 %v6305
    %v6712 = vpop.f32.mrb[0].mxu0
    %v6713 = vadd.f32 %v6348, %v6712
    %v6714 = vpop.f32.mrb[0].mxu0
    %v6715 = vpop.f32.mrb[0].mxu0
    %v6716 = vadd.f32 %v6348, %v6715
    %v6717 = vpop.f32.mrb[0].mxu0
    %6718 = vmatprep.mubr.bf16.mxu0 %v6308
    %6719 = vmatmul.mubr.bf16.gmra.mrb[0].mxu0 %v6307
    %v6720 = vpop.f32.mrb[0].mxu0
    %v6721 = vadd.f32 %v6348, %v6720
    %v6722 = vpop.f32.mrb[0].mxu0
    %v6723 = vpop.f32.mrb[0].mxu0
    %v6724 = vadd.f32 %v6348, %v6723
    %v6725 = vpop.f32.mrb[0].mxu0
    %6726 = vmatprep.mubr.bf16.mxu0 %v6310
    %6727 = vmatmul.mubr.bf16.gmra.mrb[0].mxu0 %v6309
    %v6728 = vpop.f32.mrb[0].mxu0
    %v6729 = vadd.f32 %v6348, %v6728
    %v6730 = vpop.f32.mrb[0].mxu0
    %v6731 = vpop.f32.mrb[0].mxu0
    %v6732 = vadd.f32 %v6348, %v6731
    %v6733 = vpop.f32.mrb[0].mxu0
    %6734 = vdwg.mxu0
    %v6735 = vxor.u32 %v6481, 2147483648
    %v6736 = vxor.u32 %v6484, 2147483648
    %v6737 = vxor.u32 %v6489, 2147483648
    %v6738 = vxor.u32 %v6492, 2147483648
    %v6739 = vxor.u32 %v6497, 2147483648
    %v6740 = vxor.u32 %v6500, 2147483648
    %v6741 = vxor.u32 %v6505, 2147483648
    %v6742 = vxor.u32 %v6508, 2147483648
    %v6743 = vxor.u32 %v6513, 2147483648
    %v6744 = vxor.u32 %v6516, 2147483648
    %v6745 = vxor.u32 %v6521, 2147483648
    %v6746 = vxor.u32 %v6524, 2147483648
    %v6747 = vxor.u32 %v6529, 2147483648
    %v6748 = vxor.u32 %v6532, 2147483648
    %v6749 = vxor.u32 %v6537, 2147483648
    %v6750 = vxor.u32 %v6540, 2147483648
    %v6751 = vxor.u32 %v6545, 2147483648
    %v6752 = vxor.u32 %v6548, 2147483648
    %v6753 = vxor.u32 %v6553, 2147483648
    %v6754 = vxor.u32 %v6556, 2147483648
    %v6755 = vxor.u32 %v6561, 2147483648
    %v6756 = vxor.u32 %v6564, 2147483648
    %v6757 = vxor.u32 %v6569, 2147483648
    %v6758 = vxor.u32 %v6572, 2147483648
    %v6759 = vxor.u32 %v6577, 2147483648
    %v6760 = vxor.u32 %v6580, 2147483648
    %v6761 = vxor.u32 %v6585, 2147483648
    %v6762 = vxor.u32 %v6588, 2147483648
    %v6763 = vxor.u32 %v6593, 2147483648
    %v6764 = vxor.u32 %v6596, 2147483648
    %v6765 = vxor.u32 %v6601, 2147483648
    %v6766 = vxor.u32 %v6604, 2147483648
    %v6767 = vxor.u32 %v6609, 2147483648
    %v6768 = vxor.u32 %v6612, 2147483648
    %v6769 = vxor.u32 %v6617, 2147483648
    %v6770 = vxor.u32 %v6620, 2147483648
    %v6771 = vxor.u32 %v6625, 2147483648
    %v6772 = vxor.u32 %v6628, 2147483648
    %v6773 = vxor.u32 %v6633, 2147483648
    %v6774 = vxor.u32 %v6636, 2147483648
    %v6775 = vxor.u32 %v6641, 2147483648
    %v6776 = vxor.u32 %v6644, 2147483648
    %v6777 = vxor.u32 %v6649, 2147483648
    %v6778 = vxor.u32 %v6652, 2147483648
    %v6779 = vxor.u32 %v6657, 2147483648
    %v6780 = vxor.u32 %v6660, 2147483648
    %v6781 = vxor.u32 %v6665, 2147483648
    %v6782 = vxor.u32 %v6668, 2147483648
    %v6783 = vxor.u32 %v6673, 2147483648
    %v6784 = vxor.u32 %v6676, 2147483648
    %v6785 = vxor.u32 %v6681, 2147483648
    %v6786 = vxor.u32 %v6684, 2147483648
    %v6787 = vxor.u32 %v6689, 2147483648
    %v6788 = vxor.u32 %v6692, 2147483648
    %v6789 = vxor.u32 %v6697, 2147483648
    %v6790 = vxor.u32 %v6700, 2147483648
    %v6791 = vxor.u32 %v6705, 2147483648
    %v6792 = vxor.u32 %v6708, 2147483648
    %v6793 = vxor.u32 %v6713, 2147483648
    %v6794 = vxor.u32 %v6716, 2147483648
    %v6795 = vxor.u32 %v6721, 2147483648
    %v6796 = vxor.u32 %v6724, 2147483648
    %v6797 = vxor.u32 %v6729, 2147483648
    %v6798 = vxor.u32 %v6732, 2147483648
    %v6799 = vmul.f32 %v6735, 1.442695
    %v6800 = vpow.pop %v6799
    %v6801 = vmul.f32 %v6736, 1.442695
    %v6802 = vpow.pop %v6801
    %v6803 = vmul.f32 %v6737, 1.442695
    %v6804 = vpow.pop %v6803
    %v6805 = vmul.f32 %v6738, 1.442695
    %v6806 = vpow.pop %v6805
    %v6807 = vmul.f32 %v6739, 1.442695
    %v6808 = vpow.pop %v6807
    %v6809 = vmul.f32 %v6740, 1.442695
    %v6810 = vpow.pop %v6809
    %v6811 = vmul.f32 %v6741, 1.442695
    %v6812 = vpow.pop %v6811
    %v6813 = vmul.f32 %v6742, 1.442695
    %v6814 = vpow.pop %v6813
    %v6815 = vmul.f32 %v6743, 1.442695
    %v6816 = vpow.pop %v6815
    %v6817 = vmul.f32 %v6744, 1.442695
    %v6818 = vpow.pop %v6817
    %v6819 = vmul.f32 %v6745, 1.442695
    %v6820 = vpow.pop %v6819
    %v6821 = vmul.f32 %v6746, 1.442695
    %v6822 = vpow.pop %v6821
    %v6823 = vmul.f32 %v6747, 1.442695
    %v6824 = vpow.pop %v6823
    %v6825 = vmul.f32 %v6748, 1.442695
    %v6826 = vpow.pop %v6825
    %v6827 = vmul.f32 %v6749, 1.442695
    %v6828 = vpow.pop %v6827
    %v6829 = vmul.f32 %v6750, 1.442695
    %v6830 = vpow.pop %v6829
    %v6831 = vmul.f32 %v6751, 1.442695
    %v6832 = vpow.pop %v6831
    %v6833 = vmul.f32 %v6752, 1.442695
    %v6834 = vpow.pop %v6833
    %v6835 = vmul.f32 %v6753, 1.442695
    %v6836 = vpow.pop %v6835
    %v6837 = vmul.f32 %v6754, 1.442695
    %v6838 = vpow.pop %v6837
    %v6839 = vmul.f32 %v6755, 1.442695
    %v6840 = vpow.pop %v6839
    %v6841 = vmul.f32 %v6756, 1.442695
    %v6842 = vpow.pop %v6841
    %v6843 = vmul.f32 %v6757, 1.442695
    %v6844 = vpow.pop %v6843
    %v6845 = vmul.f32 %v6758, 1.442695
    %v6846 = vpow.pop %v6845
    %v6847 = vmul.f32 %v6759, 1.442695
    %v6848 = vpow.pop %v6847
    %v6849 = vmul.f32 %v6760, 1.442695
    %v6850 = vpow.pop %v6849
    %v6851 = vmul.f32 %v6761, 1.442695
    %v6852 = vpow.pop %v6851
    %v6853 = vmul.f32 %v6762, 1.442695
    %v6854 = vpow.pop %v6853
    %v6855 = vmul.f32 %v6763, 1.442695
    %v6856 = vpow.pop %v6855
    %v6857 = vmul.f32 %v6764, 1.442695
    %v6858 = vpow.pop %v6857
    %v6859 = vmul.f32 %v6765, 1.442695
    %v6860 = vpow.pop %v6859
    %v6861 = vmul.f32 %v6766, 1.442695
    %v6862 = vpow.pop %v6861
    %v6863 = vmul.f32 %v6767, 1.442695
    %v6864 = vpow.pop %v6863
    %v6865 = vmul.f32 %v6768, 1.442695
    %v6866 = vpow.pop %v6865
    %v6867 = vmul.f32 %v6769, 1.442695
    %v6868 = vpow.pop %v6867
    %v6869 = vmul.f32 %v6770, 1.442695
    %v6870 = vpow.pop %v6869
    %v6871 = vmul.f32 %v6771, 1.442695
    %v6872 = vpow.pop %v6871
    %v6873 = vmul.f32 %v6772, 1.442695
    %v6874 = vpow.pop %v6873
    %v6875 = vmul.f32 %v6773, 1.442695
    %v6876 = vpow.pop %v6875
    %v6877 = vmul.f32 %v6774, 1.442695
    %v6878 = vpow.pop %v6877
    %v6879 = vmul.f32 %v6775, 1.442695
    %v6880 = vpow.pop %v6879
    %v6881 = vmul.f32 %v6776, 1.442695
    %v6882 = vpow.pop %v6881
    %v6883 = vmul.f32 %v6777, 1.442695
    %v6884 = vpow.pop %v6883
    %v6885 = vmul.f32 %v6778, 1.442695
    %v6886 = vpow.pop %v6885
    %v6887 = vmul.f32 %v6779, 1.442695
    %v6888 = vpow.pop %v6887
    %v6889 = vmul.f32 %v6780, 1.442695
    %v6890 = vpow.pop %v6889
    %v6891 = vmul.f32 %v6781, 1.442695
    %v6892 = vpow.pop %v6891
    %v6893 = vmul.f32 %v6782, 1.442695
    %v6894 = vpow.pop %v6893
    %v6895 = vmul.f32 %v6783, 1.442695
    %v6896 = vpow.pop %v6895
    %v6897 = vmul.f32 %v6784, 1.442695
    %v6898 = vpow.pop %v6897
    %v6899 = vmul.f32 %v6785, 1.442695
    %v6900 = vpow.pop %v6899
    %v6901 = vmul.f32 %v6786, 1.442695
    %v6902 = vpow.pop %v6901
    %v6903 = vmul.f32 %v6787, 1.442695
    %v6904 = vpow.pop %v6903
    %v6905 = vmul.f32 %v6788, 1.442695
    %v6906 = vpow.pop %v6905
    %v6907 = vmul.f32 %v6789, 1.442695
    %v6908 = vpow.pop %v6907
    %v6909 = vmul.f32 %v6790, 1.442695
    %v6910 = vpow.pop %v6909
    %v6911 = vmul.f32 %v6791, 1.442695
    %v6912 = vpow.pop %v6911
    %v6913 = vmul.f32 %v6792, 1.442695
    %v6914 = vpow.pop %v6913
    %v6915 = vmul.f32 %v6793, 1.442695
    %v6916 = vpow.pop %v6915
    %v6917 = vmul.f32 %v6794, 1.442695
    %v6918 = vpow.pop %v6917
    %v6919 = vmul.f32 %v6795, 1.442695
    %v6920 = vpow.pop %v6919
    %v6921 = vmul.f32 %v6796, 1.442695
    %v6922 = vpow.pop %v6921
    %v6923 = vmul.f32 %v6797, 1.442695
    %v6924 = vpow.pop %v6923
    %v6925 = vmul.f32 %v6798, 1.442695
    %v6926 = vpow.pop %v6925
    %v6927 = vadd.f32 %v6800, 1.0
    %v6928 = vadd.f32 %v6802, 1.0
    %v6929 = vadd.f32 %v6804, 1.0
    %v6930 = vadd.f32 %v6806, 1.0
    %v6931 = vadd.f32 %v6808, 1.0
    %v6932 = vadd.f32 %v6810, 1.0
    %v6933 = vadd.f32 %v6812, 1.0
    %v6934 = vadd.f32 %v6814, 1.0
    %v6935 = vadd.f32 %v6816, 1.0
    %v6936 = vadd.f32 %v6818, 1.0
    %v6937 = vadd.f32 %v6820, 1.0
    %v6938 = vadd.f32 %v6822, 1.0
    %v6939 = vadd.f32 %v6824, 1.0
    %v6940 = vadd.f32 %v6826, 1.0
    %v6941 = vadd.f32 %v6828, 1.0
    %v6942 = vadd.f32 %v6830, 1.0
    %v6943 = vadd.f32 %v6832, 1.0
    %v6944 = vadd.f32 %v6834, 1.0
    %v6945 = vadd.f32 %v6836, 1.0
    %v6946 = vadd.f32 %v6838, 1.0
    %v6947 = vadd.f32 %v6840, 1.0
    %v6948 = vadd.f32 %v6842, 1.0
    %v6949 = vadd.f32 %v6844, 1.0
    %v6950 = vadd.f32 %v6846, 1.0
    %v6951 = vadd.f32 %v6848, 1.0
    %v6952 = vadd.f32 %v6850, 1.0
    %v6953 = vadd.f32 %v6852, 1.0
    %v6954 = vadd.f32 %v6854, 1.0
    %v6955 = vadd.f32 %v6856, 1.0
    %v6956 = vadd.f32 %v6858, 1.0
    %v6957 = vadd.f32 %v6860, 1.0
    %v6958 = vadd.f32 %v6862, 1.0
    %v6959 = vadd.f32 %v6864, 1.0
    %v6960 = vadd.f32 %v6866, 1.0
    %v6961 = vadd.f32 %v6868, 1.0
    %v6962 = vadd.f32 %v6870, 1.0
    %v6963 = vadd.f32 %v6872, 1.0
    %v6964 = vadd.f32 %v6874, 1.0
    %v6965 = vadd.f32 %v6876, 1.0
    %v6966 = vadd.f32 %v6878, 1.0
    %v6967 = vadd.f32 %v6880, 1.0
    %v6968 = vadd.f32 %v6882, 1.0
    %v6969 = vadd.f32 %v6884, 1.0
    %v6970 = vadd.f32 %v6886, 1.0
    %v6971 = vadd.f32 %v6888, 1.0
    %v6972 = vadd.f32 %v6890, 1.0
    %v6973 = vadd.f32 %v6892, 1.0
    %v6974 = vadd.f32 %v6894, 1.0
    %v6975 = vadd.f32 %v6896, 1.0
    %v6976 = vadd.f32 %v6898, 1.0
    %v6977 = vadd.f32 %v6900, 1.0
    %v6978 = vadd.f32 %v6902, 1.0
    %v6979 = vadd.f32 %v6904, 1.0
    %v6980 = vadd.f32 %v6906, 1.0
    %v6981 = vadd.f32 %v6908, 1.0
    %v6982 = vadd.f32 %v6910, 1.0
    %v6983 = vadd.f32 %v6912, 1.0
    %v6984 = vadd.f32 %v6914, 1.0
    %v6985 = vadd.f32 %v6916, 1.0
    %v6986 = vadd.f32 %v6918, 1.0
    %v6987 = vadd.f32 %v6920, 1.0
    %v6988 = vadd.f32 %v6922, 1.0
    %v6989 = vadd.f32 %v6924, 1.0
    %v6990 = vadd.f32 %v6926, 1.0
    %v6991 = vrcp.pop %v6927
    %v6992 = vmul.f32 1.0, %v6991
    %v6993 = vrcp.pop %v6928
    %v6994 = vmul.f32 1.0, %v6993
    %v6995 = vrcp.pop %v6929
    %v6996 = vmul.f32 1.0, %v6995
    %v6997 = vrcp.pop %v6930
    %v6998 = vmul.f32 1.0, %v6997
    %v6999 = vrcp.pop %v6931
    %v7000 = vmul.f32 1.0, %v6999
    %v7001 = vrcp.pop %v6932
    %v7002 = vmul.f32 1.0, %v7001
    %v7003 = vrcp.pop %v6933
    %v7004 = vmul.f32 1.0, %v7003
    %v7005 = vrcp.pop %v6934
    %v7006 = vmul.f32 1.0, %v7005
    %v7007 = vrcp.pop %v6935
    %v7008 = vmul.f32 1.0, %v7007
    %v7009 = vrcp.pop %v6936
    %v7010 = vmul.f32 1.0, %v7009
    %v7011 = vrcp.pop %v6937
    %v7012 = vmul.f32 1.0, %v7011
    %v7013 = vrcp.pop %v6938
    %v7014 = vmul.f32 1.0, %v7013
    %v7015 = vrcp.pop %v6939
    %v7016 = vmul.f32 1.0, %v7015
    %v7017 = vrcp.pop %v6940
    %v7018 = vmul.f32 1.0, %v7017
    %v7019 = vrcp.pop %v6941
    %v7020 = vmul.f32 1.0, %v7019
    %v7021 = vrcp.pop %v6942
    %v7022 = vmul.f32 1.0, %v7021
    %v7023 = vrcp.pop %v6943
    %v7024 = vmul.f32 1.0, %v7023
    %v7025 = vrcp.pop %v6944
    %v7026 = vmul.f32 1.0, %v7025
    %v7027 = vrcp.pop %v6945
    %v7028 = vmul.f32 1.0, %v7027
    %v7029 = vrcp.pop %v6946
    %v7030 = vmul.f32 1.0, %v7029
    %v7031 = vrcp.pop %v6947
    %v7032 = vmul.f32 1.0, %v7031
    %v7033 = vrcp.pop %v6948
    %v7034 = vmul.f32 1.0, %v7033
    %v7035 = vrcp.pop %v6949
    %v7036 = vmul.f32 1.0, %v7035
    %v7037 = vrcp.pop %v6950
    %v7038 = vmul.f32 1.0, %v7037
    %v7039 = vrcp.pop %v6951
    %v7040 = vmul.f32 1.0, %v7039
    %v7041 = vrcp.pop %v6952
    %v7042 = vmul.f32 1.0, %v7041
    %v7043 = vrcp.pop %v6953
    %v7044 = vmul.f32 1.0, %v7043
    %v7045 = vrcp.pop %v6954
    %v7046 = vmul.f32 1.0, %v7045
    %v7047 = vrcp.pop %v6955
    %v7048 = vmul.f32 1.0, %v7047
    %v7049 = vrcp.pop %v6956
    %v7050 = vmul.f32 1.0, %v7049
    %v7051 = vrcp.pop %v6957
    %v7052 = vmul.f32 1.0, %v7051
    %v7053 = vrcp.pop %v6958
    %v7054 = vmul.f32 1.0, %v7053
    %v7055 = vrcp.pop %v6959
    %v7056 = vmul.f32 1.0, %v7055
    %v7057 = vrcp.pop %v6960
    %v7058 = vmul.f32 1.0, %v7057
    %v7059 = vrcp.pop %v6961
    %v7060 = vmul.f32 1.0, %v7059
    %v7061 = vrcp.pop %v6962
    %v7062 = vmul.f32 1.0, %v7061
    %v7063 = vrcp.pop %v6963
    %v7064 = vmul.f32 1.0, %v7063
    %v7065 = vrcp.pop %v6964
    %v7066 = vmul.f32 1.0, %v7065
    %v7067 = vrcp.pop %v6965
    %v7068 = vmul.f32 1.0, %v7067
    %v7069 = vrcp.pop %v6966
    %v7070 = vmul.f32 1.0, %v7069
    %v7071 = vrcp.pop %v6967
    %v7072 = vmul.f32 1.0, %v7071
    %v7073 = vrcp.pop %v6968
    %v7074 = vmul.f32 1.0, %v7073
    %v7075 = vrcp.pop %v6969
    %v7076 = vmul.f32 1.0, %v7075
    %v7077 = vrcp.pop %v6970
    %v7078 = vmul.f32 1.0, %v7077
    %v7079 = vrcp.pop %v6971
    %v7080 = vmul.f32 1.0, %v7079
    %v7081 = vrcp.pop %v6972
    %v7082 = vmul.f32 1.0, %v7081
    %v7083 = vrcp.pop %v6973
    %v7084 = vmul.f32 1.0, %v7083
    %v7085 = vrcp.pop %v6974
    %v7086 = vmul.f32 1.0, %v7085
    %v7087 = vrcp.pop %v6975
    %v7088 = vmul.f32 1.0, %v7087
    %v7089 = vrcp.pop %v6976
    %v7090 = vmul.f32 1.0, %v7089
    %v7091 = vrcp.pop %v6977
    %v7092 = vmul.f32 1.0, %v7091
    %v7093 = vrcp.pop %v6978
    %v7094 = vmul.f32 1.0, %v7093
    %v7095 = vrcp.pop %v6979
    %v7096 = vmul.f32 1.0, %v7095
    %v7097 = vrcp.pop %v6980
    %v7098 = vmul.f32 1.0, %v7097
    %v7099 = vrcp.pop %v6981
    %v7100 = vmul.f32 1.0, %v7099
    %v7101 = vrcp.pop %v6982
    %v7102 = vmul.f32 1.0, %v7101
    %v7103 = vrcp.pop %v6983
    %v7104 = vmul.f32 1.0, %v7103
    %v7105 = vrcp.pop %v6984
    %v7106 = vmul.f32 1.0, %v7105
    %v7107 = vrcp.pop %v6985
    %v7108 = vmul.f32 1.0, %v7107
    %v7109 = vrcp.pop %v6986
    %v7110 = vmul.f32 1.0, %v7109
    %v7111 = vrcp.pop %v6987
    %v7112 = vmul.f32 1.0, %v7111
    %v7113 = vrcp.pop %v6988
    %v7114 = vmul.f32 1.0, %v7113
    %v7115 = vrcp.pop %v6989
    %v7116 = vmul.f32 1.0, %v7115
    %v7117 = vrcp.pop %v6990
    %v7118 = vmul.f32 1.0, %v7117
    %7119 = vst [vmem:[#allocation10] sm:$0xff] %v6992
    %7120 = vst [vmem:[#allocation10 + $0x8] sm:$0xff] %v6994
    %7121 = vst [vmem:[#allocation10 + $0x10] sm:$0xff] %v6996
    %7122 = vst [vmem:[#allocation10 + $0x18] sm:$0xff] %v6998
    %7123 = vst [vmem:[#allocation10 + $0x20] sm:$0xff] %v7000
    %7124 = vst [vmem:[#allocation10 + $0x28] sm:$0xff] %v7002
    %7125 = vst [vmem:[#allocation10 + $0x30] sm:$0xff] %v7004
    %7126 = vst [vmem:[#allocation10 + $0x38] sm:$0xff] %v7006
    %7127 = vst [vmem:[#allocation10 + $0x40] sm:$0xff] %v7008
    %7128 = vst [vmem:[#allocation10 + $0x48] sm:$0xff] %v7010
    %7129 = vst [vmem:[#allocation10 + $0x50] sm:$0xff] %v7012
    %7130 = vst [vmem:[#allocation10 + $0x58] sm:$0xff] %v7014
    %7131 = vst [vmem:[#allocation10 + $0x60] sm:$0xff] %v7016
    %7132 = vst [vmem:[#allocation10 + $0x68] sm:$0xff] %v7018
    %7133 = vst [vmem:[#allocation10 + $0x70] sm:$0xff] %v7020
    %7134 = vst [vmem:[#allocation10 + $0x78] sm:$0xff] %v7022
    %7135 = vst [vmem:[#allocation10 + $0x80] sm:$0xff] %v7024
    %7136 = vst [vmem:[#allocation10 + $0x88] sm:$0xff] %v7026
    %7137 = vst [vmem:[#allocation10 + $0x90] sm:$0xff] %v7028
    %7138 = vst [vmem:[#allocation10 + $0x98] sm:$0xff] %v7030
    %7139 = vst [vmem:[#allocation10 + $0xa0] sm:$0xff] %v7032
    %7140 = vst [vmem:[#allocation10 + $0xa8] sm:$0xff] %v7034
    %7141 = vst [vmem:[#allocation10 + $0xb0] sm:$0xff] %v7036
    %7142 = vst [vmem:[#allocation10 + $0xb8] sm:$0xff] %v7038
    %7143 = vst [vmem:[#allocation10 + $0xc0] sm:$0xff] %v7040
    %7144 = vst [vmem:[#allocation10 + $0xc8] sm:$0xff] %v7042
    %7145 = vst [vmem:[#allocation10 + $0xd0] sm:$0xff] %v7044
    %7146 = vst [vmem:[#allocation10 + $0xd8] sm:$0xff] %v7046
    %7147 = vst [vmem:[#allocation10 + $0xe0] sm:$0xff] %v7048
    %7148 = vst [vmem:[#allocation10 + $0xe8] sm:$0xff] %v7050
    %7149 = vst [vmem:[#allocation10 + $0xf0] sm:$0xff] %v7052
    %7150 = vst [vmem:[#allocation10 + $0xf8] sm:$0xff] %v7054
    %7151 = vst [vmem:[#allocation10 + $0x100] sm:$0xff] %v7056
    %7152 = vst [vmem:[#allocation10 + $0x108] sm:$0xff] %v7058
    %7153 = vst [vmem:[#allocation10 + $0x110] sm:$0xff] %v7060
    %7154 = vst [vmem:[#allocation10 + $0x118] sm:$0xff] %v7062
    %7155 = vst [vmem:[#allocation10 + $0x120] sm:$0xff] %v7064
    %7156 = vst [vmem:[#allocation10 + $0x128] sm:$0xff] %v7066
    %7157 = vst [vmem:[#allocation10 + $0x130] sm:$0xff] %v7068
    %7158 = vst [vmem:[#allocation10 + $0x138] sm:$0xff] %v7070
    %7159 = vst [vmem:[#allocation10 + $0x140] sm:$0xff] %v7072
    %7160 = vst [vmem:[#allocation10 + $0x148] sm:$0xff] %v7074
    %7161 = vst [vmem:[#allocation10 + $0x150] sm:$0xff] %v7076
    %7162 = vst [vmem:[#allocation10 + $0x158] sm:$0xff] %v7078
    %7163 = vst [vmem:[#allocation10 + $0x160] sm:$0xff] %v7080
    %7164 = vst [vmem:[#allocation10 + $0x168] sm:$0xff] %v7082
    %7165 = vst [vmem:[#allocation10 + $0x170] sm:$0xff] %v7084
    %7166 = vst [vmem:[#allocation10 + $0x178] sm:$0xff] %v7086
    %7167 = vst [vmem:[#allocation10 + $0x180] sm:$0xff] %v7088
    %7168 = vst [vmem:[#allocation10 + $0x188] sm:$0xff] %v7090
    %7169 = vst [vmem:[#allocation10 + $0x190] sm:$0xff] %v7092
    %7170 = vst [vmem:[#allocation10 + $0x198] sm:$0xff] %v7094
    %7171 = vst [vmem:[#allocation10 + $0x1a0] sm:$0xff] %v7096
    %7172 = vst [vmem:[#allocation10 + $0x1a8] sm:$0xff] %v7098
    %7173 = vst [vmem:[#allocation10 + $0x1b0] sm:$0xff] %v7100
    %7174 = vst [vmem:[#allocation10 + $0x1b8] sm:$0xff] %v7102
    %7175 = vst [vmem:[#allocation10 + $0x1c0] sm:$0xff] %v7104
    %7176 = vst [vmem:[#allocation10 + $0x1c8] sm:$0xff] %v7106
    %7177 = vst [vmem:[#allocation10 + $0x1d0] sm:$0xff] %v7108
    %7178 = vst [vmem:[#allocation10 + $0x1d8] sm:$0xff] %v7110
    %7179 = vst [vmem:[#allocation10 + $0x1e0] sm:$0xff] %v7112
    %7180 = vst [vmem:[#allocation10 + $0x1e8] sm:$0xff] %v7114
    %7181 = vst [vmem:[#allocation10 + $0x1f0] sm:$0xff] %v7116
    %7182 = vst [vmem:[#allocation10 + $0x1f8] sm:$0xff] %v7118
    // Predicated region
    $region78: #{music_cvae_forward.1} parent=1 // pred_check
      _
    $region79: #{music_cvae_forward.1} parent=1 // pred_check_branch
      %7184 = sbr.rel (0) target = $region81
    $region80: #{music_cvae_forward.1} parent=1 // pred_region
      %s7186 = ssub.s32 8192, 8192
      %7187 = vsyncadd [#allocation4], %s7186
      %s7188 = sshll.u32 [#allocation10], 4
      %s7189 = int_to_ptr.vmem [resolvable:$true] %s7188
      %7194 = dma.vmem_to_hbm [thread:$0]  %s7189, 8192, %s15, [#allocation4], 128, 128, 8
    $region81: #{music_cvae_forward.1} parent=1 // pred_fallthru
      _
    // Predicated region
    $region82: #{music_cvae_forward.1} parent=1 // pred_check
      _
    $region83: #{music_cvae_forward.1} parent=1 // pred_check_branch
      %7196 = sbr.rel (0) target = $region85
    $region84: #{music_cvae_forward.1} parent=1 // pred_region
      _
    $region85: #{music_cvae_forward.1} parent=1 // pred_fallthru
      _
    // Predicated region
    $region86: #{music_cvae_forward.1} parent=1 // pred_check
      _
    $region87: #{music_cvae_forward.1} parent=1 // pred_check_branch
      %7198 = sbr.rel (0) target = $region89
    $region88: #{music_cvae_forward.1} parent=1 // pred_region
      %7199 = dma.done [#allocation4], 8192
    $region89: #{music_cvae_forward.1} parent=1 // pred_fallthru
      _
    // Predicated region
    $region90: #{music_cvae_forward.1} parent=1 // pred_check
      _
    $region91: #{music_cvae_forward.1} parent=1 // pred_check_branch
      %7201 = sbr.rel (0) target = $region93
    $region92: #{music_cvae_forward.1} parent=1 // pred_region
      _
    $region93: #{music_cvae_forward.1} parent=1 // pred_fallthru
      _
    %7202 = vsyncpa [#allocation3], 1
    %7203 = vsyncpa [#allocation6], 1
    %7204 = vsyncpa [#allocation9], 1
    %7205 = vsyncpa [#allocation4], 1

</llo_original>
